<compile_context>
chip_gen: v6e
topology: v6e:2x2x1
jax: 0.10.0
libtpu: 0.0.40
codegen_flags: <defaults>
</compile_context>

<pallas_src>
import jax
import jax.numpy as jnp
from jax.experimental import pallas as pl
from jax.experimental.pallas import tpu as pltpu


# ----------------------------------------------------------------------------
# Fused Conv2d(k=3, stride=1, pad=1) + bias + ReLU + MaxPool2d(2,2).
# ----------------------------------------------------------------------------
def _conv_relu_pool_kernel(p_ref, w_ref, b_ref, o_ref):
    # p_ref: (1, 4, R, K)   R = (H/2)*(W/2), K = 9*Cin
    # w_ref: (K, Cout)      b_ref: (1, Cout)
    # o_ref: (1, R, Cout)   pooled output
    w = w_ref[...]
    # conv output for quadrant q of every 2x2 pooling window; max over q == pool.
    m = jnp.dot(p_ref[0, 0], w, preferred_element_type=jnp.float32)
    for q in range(1, 4):
        m = jnp.maximum(
            m, jnp.dot(p_ref[0, q], w, preferred_element_type=jnp.float32))
    # bias is identical across quadrants and ReLU is monotone, so both commute
    # with the max above.
    o_ref[0] = jnp.maximum(m + b_ref[...], 0.0).astype(o_ref.dtype)


def _im2col_pool_quadrants(x):
    """x: (N, H, W, Cin) -> patches (N, 4, (H//2)*(W//2), 9*Cin).

    patches[n, 2*py+px, yh*Wh+xh, :] is the flattened 3x3xCin receptive field
    of conv output position (2*yh+py, 2*xh+px), i.e. quadrant (py,px) of the
    2x2 pooling window (yh, xh).  Tap order is (dy, dx, cin) row-major.
    """
    n, h, w, cin = x.shape
    hh, wh = h // 2, w // 2
    xp = jnp.pad(x, ((0, 0), (1, 1), (1, 1), (0, 0)))          # zero padding=1
    taps = [xp[:, dy:dy + h, dx:dx + w, :] for dy in range(3) for dx in range(3)]
    patches = jnp.concatenate(taps, axis=-1)                    # (N, H, W, 9*Cin)
    quads = [
        patches[:, py::2, px::2, :].reshape(n, hh * wh, 9 * cin)
        for py in range(2) for px in range(2)
    ]
    return jnp.stack(quads, axis=1)                             # (N, 4, R, 9*Cin)


def conv3x3_relu_pool(x, w, b):
    """x: (N,H,W,Cin) f32, w: (3,3,Cin,Cout), b: (Cout,) -> (N,H/2,W/2,Cout)."""
    n, h, wd, cin = x.shape
    cout = w.shape[-1]
    hh, wh = h // 2, wd // 2
    r = hh * wh
    k = 9 * cin

    patches = _im2col_pool_quadrants(x)          # glue (XLA): im2col + quadrants
    w2d = w.reshape(k, cout)                     # (dy, dx, cin) -> K, matches patches
    b2 = b.reshape(1, cout)

    out = pl.pallas_call(
        _conv_relu_pool_kernel,
        out_shape=jax.ShapeDtypeStruct((n, r, cout), jnp.float32),
        grid_spec=pltpu.PrefetchScalarGridSpec(
            num_scalar_prefetch=0,
            grid=(n,),
            in_specs=[
                pl.BlockSpec((1, 4, r, k), lambda i: (i, 0, 0, 0)),
                pl.BlockSpec((k, cout), lambda i: (0, 0)),
                pl.BlockSpec((1, cout), lambda i: (0, 0)),
            ],
            out_specs=pl.BlockSpec((1, r, cout), lambda i: (i, 0, 0)),
        ),
        compiler_params=pltpu.CompilerParams(
            dimension_semantics=("parallel",),           # batch is independent
            vmem_limit_bytes=32 * 1024 * 1024,           # fits v7x 64 MiB VMEM
        ),
    )(patches, w2d, b2)
    return out.reshape(n, hh, wh, cout)


# ----------------------------------------------------------------------------
# fc1 + ReLU + fc2 + sigmoid, pipelined over the K=16384 reduction so the fc1
# weight DMA overlaps the matmul.  f32 accumulator lives in VMEM scratch.
# ----------------------------------------------------------------------------
def _mlp_head_kernel(x_ref, w1_ref, b1_ref, w2_ref, b2_ref, o_ref, acc_ref):
    # x_ref: (N, KB)   w1_ref: (KB, 128)  b1_ref: (1, 128)
    # w2_ref: (128, 1) b2_ref: (1, 1)     o_ref: (N, 1)  acc_ref: (N, 128) f32
    k = pl.program_id(0)

    @pl.when(k == 0)
    def _():
        acc_ref[...] = jnp.zeros_like(acc_ref)

    acc_ref[...] += jnp.dot(x_ref[...], w1_ref[...],
                            preferred_element_type=jnp.float32)

    @pl.when(k == pl.num_programs(0) - 1)
    def _():
        h = jnp.maximum(acc_ref[...] + b1_ref[...], 0.0)
        z = jnp.dot(h, w2_ref[...], preferred_element_type=jnp.float32) + b2_ref[...]
        # numerically-stable sigmoid: 0.5 * (tanh(z/2) + 1)  (EUP tanh)
        o_ref[...] = 0.5 * (jnp.tanh(0.5 * z) + 1.0)


def mlp_head(x, w1, b1, w2, b2, *, kb=2048):
    n, kdim = x.shape
    dh = w1.shape[1]
    nk = kdim // kb
    assert nk * kb == kdim

    return pl.pallas_call(
        _mlp_head_kernel,
        out_shape=jax.ShapeDtypeStruct((n, 1), jnp.float32),
        grid_spec=pltpu.PrefetchScalarGridSpec(
            num_scalar_prefetch=0,
            grid=(nk,),
            in_specs=[
                pl.BlockSpec((n, kb), lambda k: (0, k)),
                pl.BlockSpec((kb, dh), lambda k: (k, 0)),
                pl.BlockSpec((1, dh), lambda k: (0, 0)),
                pl.BlockSpec((dh, 1), lambda k: (0, 0)),
                pl.BlockSpec((1, 1), lambda k: (0, 0)),
            ],
            out_specs=pl.BlockSpec((n, 1), lambda k: (0, 0)),
            scratch_shapes=[pltpu.VMEM((n, dh), jnp.float32)],
        ),
        compiler_params=pltpu.CompilerParams(
            dimension_semantics=("arbitrary",),          # K is a reduction axis
            vmem_limit_bytes=32 * 1024 * 1024,
        ),
    )(x, w1, b1.reshape(1, -1), w2, b2.reshape(1, -1))


# ----------------------------------------------------------------------------
# Parameters (deterministic, synthetic).  Generated in PyTorch layouts, then
# transposed to the kernel layouts, to keep axis conventions explicit.
# ----------------------------------------------------------------------------
def init_params(key):
    ks = jax.random.split(key, 8)

    def conv_w(k, cout, cin):
        # torch: (Cout, Cin, 3, 3) -> kernel layout (3, 3, Cin, Cout)
        w = jax.random.normal(k, (cout, cin, 3, 3), jnp.float32)
        w = w * (1.0 / jnp.sqrt(cin * 9.0))
        return jnp.transpose(w, (2, 3, 1, 0))

    def lin_w(k, dout, din):
        # torch: (Dout, Din) -> kernel layout (Din, Dout)
        w = jax.random.normal(k, (dout, din), jnp.float32) * (1.0 / jnp.sqrt(din))
        return jnp.transpose(w, (1, 0))

    return dict(
        w1=conv_w(ks[0], 32, 3),
        b1=jax.random.normal(ks[1], (32,), jnp.float32) * 0.01,
        w2=conv_w(ks[2], 64, 32),
        b2=jax.random.normal(ks[3], (64,), jnp.float32) * 0.01,
        wf1=lin_w(ks[4], 128, 64 * 16 * 16),
        bf1=jax.random.normal(ks[5], (128,), jnp.float32) * 0.01,
        wf2=lin_w(ks[6], 1, 128),
        bf2=jax.random.normal(ks[7], (1,), jnp.float32) * 0.01,
    )


def cnn_forward(x_nchw, params):
    n = x_nchw.shape[0]
    x = jnp.transpose(x_nchw, (0, 2, 3, 1))                 # glue: NCHW -> NHWC
    x = conv3x3_relu_pool(x, params["w1"], params["b1"])    # (N, 32, 32, 32)
    x = conv3x3_relu_pool(x, params["w2"], params["b2"])    # (N, 16, 16, 64)
    # match torch's x.view(-1, 64*16*16): flatten in NCHW order
    x = jnp.transpose(x, (0, 3, 1, 2)).reshape(n, 64 * 16 * 16)
    return mlp_head(x, params["wf1"], params["bf1"],
                    params["wf2"], params["bf2"])           # (N, 1)


if __name__ == "__main__":
    key = jax.random.PRNGKey(0)
    pkey, xkey = jax.random.split(key)
    params = init_params(pkey)

    # Spatial size 64x64 is required so fc1's 64*16*16 input dim is satisfied.
    x = jax.random.normal(xkey, (2, 3, 64, 64), jnp.float32)

    fwd = jax.jit(lambda inp: cnn_forward(inp, params))
    out = jax.block_until_ready(fwd(x))

    assert out.shape == (2, 1), out.shape
    assert bool(jnp.all(jnp.isfinite(out)))
    assert bool(jnp.all((out >= 0.0) & (out <= 1.0)))       # sigmoid range
    print("KERNEL_OK")
</pallas_src>

<mosaic_0001>
module attributes {stable_mosaic.version = 11 : i64} {
  func.func @_conv_relu_pool_kernel(%arg0: i32, %arg1: memref<1x4x1024x27xf32, #tpu.memory_space<vmem>>, %arg2: memref<27x32xf32, #tpu.memory_space<vmem>>, %arg3: memref<1x32xf32, #tpu.memory_space<vmem>>, %arg4: memref<1x1024x32xf32, #tpu.memory_space<vmem>>) attributes {dimension_semantics = [#tpu.dimension_semantics<parallel>], iteration_bounds = array<i64: 2>, scalar_prefetch = 0 : i64, scratch_operands = 0 : i64, tpu.core_type = #tpu.core_type<tc>, window_params = [{transform_indices = @transform_0, window_bounds = array<i64: 1, 4, 1024, 27>}, {pipeline_mode = #tpu.pipeline_mode<synchronous>, transform_indices = @transform_1, window_bounds = array<i64: 27, 32>}, {pipeline_mode = #tpu.pipeline_mode<synchronous>, transform_indices = @transform_2, window_bounds = array<i64: 1, 32>}, {transform_indices = @transform_3, window_bounds = array<i64: 1, 1024, 32>}]} {
    %c0 = arith.constant 0 : index
    %c0_0 = arith.constant 0 : index
    %0 = vector.load %arg2[%c0, %c0_0] : memref<27x32xf32, #tpu.memory_space<vmem>>, vector<27x32xf32>
    %c0_1 = arith.constant 0 : index
    %c0_2 = arith.constant 0 : index
    %c0_3 = arith.constant 0 : index
    %c0_4 = arith.constant 0 : index
    %1 = vector.load %arg1[%c0_1, %c0_2, %c0_3, %c0_4] : memref<1x4x1024x27xf32, #tpu.memory_space<vmem>>, vector<1x1x1024x27xf32>
    %2 = vector.shape_cast %1 : vector<1x1x1024x27xf32> to vector<1024x27xf32>
    %cst = arith.constant dense<0.000000e+00> : vector<1024x32xf32>
    %3 = tpu.matmul %2, %0, %cst {dimension_numbers = #tpu.dot_dimension_numbers<[1], [0], [0], [1], [0, 0, 1, 1], [], []>} : vector<1024x27xf32>, vector<27x32xf32>, vector<1024x32xf32> -> vector<1024x32xf32>
    %c0_5 = arith.constant 0 : index
    %c1 = arith.constant 1 : index
    %c0_6 = arith.constant 0 : index
    %c0_7 = arith.constant 0 : index
    %4 = vector.load %arg1[%c0_5, %c1, %c0_6, %c0_7] : memref<1x4x1024x27xf32, #tpu.memory_space<vmem>>, vector<1x1x1024x27xf32>
    %5 = vector.shape_cast %4 : vector<1x1x1024x27xf32> to vector<1024x27xf32>
    %cst_8 = arith.constant dense<0.000000e+00> : vector<1024x32xf32>
    %6 = tpu.matmul %5, %0, %cst_8 {dimension_numbers = #tpu.dot_dimension_numbers<[1], [0], [0], [1], [0, 0, 1, 1], [], []>} : vector<1024x27xf32>, vector<27x32xf32>, vector<1024x32xf32> -> vector<1024x32xf32>
    %7 = arith.maximumf %3, %6 : vector<1024x32xf32>
    %c0_9 = arith.constant 0 : index
    %c2 = arith.constant 2 : index
    %c0_10 = arith.constant 0 : index
    %c0_11 = arith.constant 0 : index
    %8 = vector.load %arg1[%c0_9, %c2, %c0_10, %c0_11] : memref<1x4x1024x27xf32, #tpu.memory_space<vmem>>, vector<1x1x1024x27xf32>
    %9 = vector.shape_cast %8 : vector<1x1x1024x27xf32> to vector<1024x27xf32>
    %cst_12 = arith.constant dense<0.000000e+00> : vector<1024x32xf32>
    %10 = tpu.matmul %9, %0, %cst_12 {dimension_numbers = #tpu.dot_dimension_numbers<[1], [0], [0], [1], [0, 0, 1, 1], [], []>} : vector<1024x27xf32>, vector<27x32xf32>, vector<1024x32xf32> -> vector<1024x32xf32>
    %11 = arith.maximumf %7, %10 : vector<1024x32xf32>
    %c0_13 = arith.constant 0 : index
    %c3 = arith.constant 3 : index
    %c0_14 = arith.constant 0 : index
    %c0_15 = arith.constant 0 : index
    %12 = vector.load %arg1[%c0_13, %c3, %c0_14, %c0_15] : memref<1x4x1024x27xf32, #tpu.memory_space<vmem>>, vector<1x1x1024x27xf32>
    %13 = vector.shape_cast %12 : vector<1x1x1024x27xf32> to vector<1024x27xf32>
    %cst_16 = arith.constant dense<0.000000e+00> : vector<1024x32xf32>
    %14 = tpu.matmul %13, %0, %cst_16 {dimension_numbers = #tpu.dot_dimension_numbers<[1], [0], [0], [1], [0, 0, 1, 1], [], []>} : vector<1024x27xf32>, vector<27x32xf32>, vector<1024x32xf32> -> vector<1024x32xf32>
    %15 = arith.maximumf %11, %14 : vector<1024x32xf32>
    %c0_17 = arith.constant 0 : index
    %c0_18 = arith.constant 0 : index
    %16 = vector.load %arg3[%c0_17, %c0_18] : memref<1x32xf32, #tpu.memory_space<vmem>>, vector<1x32xf32>
    %17 = vector.broadcast %16 : vector<1x32xf32> to vector<1024x32xf32>
    %18 = arith.addf %15, %17 : vector<1024x32xf32>
    %cst_19 = arith.constant 0.000000e+00 : f32
    %19 = vector.broadcast %cst_19 : f32 to vector<1024x32xf32>
    %20 = arith.maximumf %18, %19 : vector<1024x32xf32>
    %c0_20 = arith.constant 0 : index
    %c0_21 = arith.constant 0 : index
    %c0_22 = arith.constant 0 : index
    %21 = vector.load %arg4[%c0_20, %c0_21, %c0_22] : memref<1x1024x32xf32, #tpu.memory_space<vmem>>, vector<1x1024x32xf32>
    %22 = vector.shape_cast %21 : vector<1x1024x32xf32> to vector<1024x32xf32>
    %23 = vector.shape_cast %20 : vector<1024x32xf32> to vector<1x1024x32xf32>
    tpu.vector_store %arg4[%c0_20, %c0_21, %c0_22], %23 {strides = array<i32>} : memref<1x1024x32xf32, #tpu.memory_space<vmem>>, vector<1x1024x32xf32>,
    return
  }
  func.func @transform_0(%arg0: i32) -> (i32, i32, i32, i32) {
    %c0_i32 = arith.constant 0 : i32
    %c0_i32_0 = arith.constant 0 : i32
    %c0_i32_1 = arith.constant 0 : i32
    %c0_i32_2 = arith.constant 0 : i32
    return %arg0, %c0_i32, %c0_i32_0, %c0_i32_1 : i32, i32, i32, i32
  }
  func.func @transform_1(%arg0: i32) -> (i32, i32) {
    %c0_i32 = arith.constant 0 : i32
    %c0_i32_0 = arith.constant 0 : i32
    %c0_i32_1 = arith.constant 0 : i32
    return %c0_i32, %c0_i32_0 : i32, i32
  }
  func.func @transform_2(%arg0: i32) -> (i32, i32) {
    %c0_i32 = arith.constant 0 : i32
    %c0_i32_0 = arith.constant 0 : i32
    %c0_i32_1 = arith.constant 0 : i32
    return %c0_i32, %c0_i32_0 : i32, i32
  }
  func.func @transform_3(%arg0: i32) -> (i32, i32, i32) {
    %c0_i32 = arith.constant 0 : i32
    %c0_i32_0 = arith.constant 0 : i32
    %c0_i32_1 = arith.constant 0 : i32
    return %arg0, %c0_i32, %c0_i32_0 : i32, i32, i32
  }
}

module attributes {stable_mosaic.version = 11 : i64} {
  func.func @_conv_relu_pool_kernel(%arg0: i32, %arg1: memref<1x4x256x288xf32, #tpu.memory_space<vmem>>, %arg2: memref<288x64xf32, #tpu.memory_space<vmem>>, %arg3: memref<1x64xf32, #tpu.memory_space<vmem>>, %arg4: memref<1x256x64xf32, #tpu.memory_space<vmem>>) attributes {dimension_semantics = [#tpu.dimension_semantics<parallel>], iteration_bounds = array<i64: 2>, scalar_prefetch = 0 : i64, scratch_operands = 0 : i64, tpu.core_type = #tpu.core_type<tc>, window_params = [{transform_indices = @transform_0, window_bounds = array<i64: 1, 4, 256, 288>}, {pipeline_mode = #tpu.pipeline_mode<synchronous>, transform_indices = @transform_1, window_bounds = array<i64: 288, 64>}, {pipeline_mode = #tpu.pipeline_mode<synchronous>, transform_indices = @transform_2, window_bounds = array<i64: 1, 64>}, {transform_indices = @transform_3, window_bounds = array<i64: 1, 256, 64>}]} {
    %c0 = arith.constant 0 : index
    %c0_0 = arith.constant 0 : index
    %0 = vector.load %arg2[%c0, %c0_0] : memref<288x64xf32, #tpu.memory_space<vmem>>, vector<288x64xf32>
    %c0_1 = arith.constant 0 : index
    %c0_2 = arith.constant 0 : index
    %c0_3 = arith.constant 0 : index
    %c0_4 = arith.constant 0 : index
    %1 = vector.load %arg1[%c0_1, %c0_2, %c0_3, %c0_4] : memref<1x4x256x288xf32, #tpu.memory_space<vmem>>, vector<1x1x256x288xf32>
    %2 = vector.shape_cast %1 : vector<1x1x256x288xf32> to vector<256x288xf32>
    %cst = arith.constant dense<0.000000e+00> : vector<256x64xf32>
    %3 = tpu.matmul %2, %0, %cst {dimension_numbers = #tpu.dot_dimension_numbers<[1], [0], [0], [1], [0, 0, 1, 1], [], []>} : vector<256x288xf32>, vector<288x64xf32>, vector<256x64xf32> -> vector<256x64xf32>
    %c0_5 = arith.constant 0 : index
    %c1 = arith.constant 1 : index
    %c0_6 = arith.constant 0 : index
    %c0_7 = arith.constant 0 : index
    %4 = vector.load %arg1[%c0_5, %c1, %c0_6, %c0_7] : memref<1x4x256x288xf32, #tpu.memory_space<vmem>>, vector<1x1x256x288xf32>
    %5 = vector.shape_cast %4 : vector<1x1x256x288xf32> to vector<256x288xf32>
    %cst_8 = arith.constant dense<0.000000e+00> : vector<256x64xf32>
    %6 = tpu.matmul %5, %0, %cst_8 {dimension_numbers = #tpu.dot_dimension_numbers<[1], [0], [0], [1], [0, 0, 1, 1], [], []>} : vector<256x288xf32>, vector<288x64xf32>, vector<256x64xf32> -> vector<256x64xf32>
    %7 = arith.maximumf %3, %6 : vector<256x64xf32>
    %c0_9 = arith.constant 0 : index
    %c2 = arith.constant 2 : index
    %c0_10 = arith.constant 0 : index
    %c0_11 = arith.constant 0 : index
    %8 = vector.load %arg1[%c0_9, %c2, %c0_10, %c0_11] : memref<1x4x256x288xf32, #tpu.memory_space<vmem>>, vector<1x1x256x288xf32>
    %9 = vector.shape_cast %8 : vector<1x1x256x288xf32> to vector<256x288xf32>
    %cst_12 = arith.constant dense<0.000000e+00> : vector<256x64xf32>
    %10 = tpu.matmul %9, %0, %cst_12 {dimension_numbers = #tpu.dot_dimension_numbers<[1], [0], [0], [1], [0, 0, 1, 1], [], []>} : vector<256x288xf32>, vector<288x64xf32>, vector<256x64xf32> -> vector<256x64xf32>
    %11 = arith.maximumf %7, %10 : vector<256x64xf32>
    %c0_13 = arith.constant 0 : index
    %c3 = arith.constant 3 : index
    %c0_14 = arith.constant 0 : index
    %c0_15 = arith.constant 0 : index
    %12 = vector.load %arg1[%c0_13, %c3, %c0_14, %c0_15] : memref<1x4x256x288xf32, #tpu.memory_space<vmem>>, vector<1x1x256x288xf32>
    %13 = vector.shape_cast %12 : vector<1x1x256x288xf32> to vector<256x288xf32>
    %cst_16 = arith.constant dense<0.000000e+00> : vector<256x64xf32>
    %14 = tpu.matmul %13, %0, %cst_16 {dimension_numbers = #tpu.dot_dimension_numbers<[1], [0], [0], [1], [0, 0, 1, 1], [], []>} : vector<256x288xf32>, vector<288x64xf32>, vector<256x64xf32> -> vector<256x64xf32>
    %15 = arith.maximumf %11, %14 : vector<256x64xf32>
    %c0_17 = arith.constant 0 : index
    %c0_18 = arith.constant 0 : index
    %16 = vector.load %arg3[%c0_17, %c0_18] : memref<1x64xf32, #tpu.memory_space<vmem>>, vector<1x64xf32>
    %17 = vector.broadcast %16 : vector<1x64xf32> to vector<256x64xf32>
    %18 = arith.addf %15, %17 : vector<256x64xf32>
    %cst_19 = arith.constant 0.000000e+00 : f32
    %19 = vector.broadcast %cst_19 : f32 to vector<256x64xf32>
    %20 = arith.maximumf %18, %19 : vector<256x64xf32>
    %c0_20 = arith.constant 0 : index
    %c0_21 = arith.constant 0 : index
    %c0_22 = arith.constant 0 : index
    %21 = vector.load %arg4[%c0_20, %c0_21, %c0_22] : memref<1x256x64xf32, #tpu.memory_space<vmem>>, vector<1x256x64xf32>
    %22 = vector.shape_cast %21 : vector<1x256x64xf32> to vector<256x64xf32>
    %23 = vector.shape_cast %20 : vector<256x64xf32> to vector<1x256x64xf32>
    tpu.vector_store %arg4[%c0_20, %c0_21, %c0_22], %23 {strides = array<i32>} : memref<1x256x64xf32, #tpu.memory_space<vmem>>, vector<1x256x64xf32>,
    return
  }
  func.func @transform_0(%arg0: i32) -> (i32, i32, i32, i32) {
    %c0_i32 = arith.constant 0 : i32
    %c0_i32_0 = arith.constant 0 : i32
    %c0_i32_1 = arith.constant 0 : i32
    %c0_i32_2 = arith.constant 0 : i32
    return %arg0, %c0_i32, %c0_i32_0, %c0_i32_1 : i32, i32, i32, i32
  }
  func.func @transform_1(%arg0: i32) -> (i32, i32) {
    %c0_i32 = arith.constant 0 : i32
    %c0_i32_0 = arith.constant 0 : i32
    %c0_i32_1 = arith.constant 0 : i32
    return %c0_i32, %c0_i32_0 : i32, i32
  }
  func.func @transform_2(%arg0: i32) -> (i32, i32) {
    %c0_i32 = arith.constant 0 : i32
    %c0_i32_0 = arith.constant 0 : i32
    %c0_i32_1 = arith.constant 0 : i32
    return %c0_i32, %c0_i32_0 : i32, i32
  }
  func.func @transform_3(%arg0: i32) -> (i32, i32, i32) {
    %c0_i32 = arith.constant 0 : i32
    %c0_i32_0 = arith.constant 0 : i32
    %c0_i32_1 = arith.constant 0 : i32
    return %arg0, %c0_i32, %c0_i32_0 : i32, i32, i32
  }
}

module attributes {stable_mosaic.version = 11 : i64} {
  func.func @_mlp_head_kernel(%arg0: i32, %arg1: memref<2x2048xf32, #tpu.memory_space<vmem>>, %arg2: memref<2048x128xf32, #tpu.memory_space<vmem>>, %arg3: memref<1x128xf32, #tpu.memory_space<vmem>>, %arg4: memref<128x1xf32, #tpu.memory_space<vmem>>, %arg5: memref<1x1xf32, #tpu.memory_space<vmem>>, %arg6: memref<2x1xf32, #tpu.memory_space<vmem>>, %arg7: memref<2x128xf32, #tpu.memory_space<vmem>>) attributes {dimension_semantics = [#tpu.dimension_semantics<arbitrary>], iteration_bounds = array<i64: 8>, scalar_prefetch = 0 : i64, scratch_operands = 1 : i64, tpu.core_type = #tpu.core_type<tc>, window_params = [{transform_indices = @transform_0, window_bounds = array<i64: 2, 2048>}, {transform_indices = @transform_1, window_bounds = array<i64: 2048, 128>}, {pipeline_mode = #tpu.pipeline_mode<synchronous>, transform_indices = @transform_2, window_bounds = array<i64: 1, 128>}, {pipeline_mode = #tpu.pipeline_mode<synchronous>, transform_indices = @transform_3, window_bounds = array<i64: 128, 1>}, {pipeline_mode = #tpu.pipeline_mode<synchronous>, transform_indices = @transform_4, window_bounds = array<i64: 1, 1>}, {pipeline_mode = #tpu.pipeline_mode<synchronous>, transform_indices = @transform_5, window_bounds = array<i64: 2, 1>}]} {
    %c0_i32 = arith.constant 0 : i32
    %0 = arith.cmpi eq, %arg0, %c0_i32 : i32
    %1 = arith.extui %0 : i1 to i32
    %c0_i32_0 = arith.constant 0 : i32
    %2 = arith.cmpi ne, %1, %c0_i32_0 : i32
    scf.if %2 {
      %cst_9 = arith.constant 0.000000e+00 : f32
      %12 = vector.broadcast %cst_9 : f32 to vector<2x128xf32>
      %c0_10 = arith.constant 0 : index
      %c0_11 = arith.constant 0 : index
      %13 = vector.load %arg7[%c0_10, %c0_11] : memref<2x128xf32, #tpu.memory_space<vmem>>, vector<2x128xf32>
      tpu.vector_store %arg7[%c0_10, %c0_11], %12 {strides = array<i32>} : memref<2x128xf32, #tpu.memory_space<vmem>>, vector<2x128xf32>,
    } else {
    }
    %c0 = arith.constant 0 : index
    %c0_1 = arith.constant 0 : index
    %3 = vector.load %arg7[%c0, %c0_1] : memref<2x128xf32, #tpu.memory_space<vmem>>, vector<2x128xf32>
    %c0_2 = arith.constant 0 : index
    %c0_3 = arith.constant 0 : index
    %4 = vector.load %arg1[%c0_2, %c0_3] : memref<2x2048xf32, #tpu.memory_space<vmem>>, vector<2x2048xf32>
    %c0_4 = arith.constant 0 : index
    %c0_5 = arith.constant 0 : index
    %5 = vector.load %arg2[%c0_4, %c0_5] : memref<2048x128xf32, #tpu.memory_space<vmem>>, vector<2048x128xf32>
    %cst = arith.constant dense<0.000000e+00> : vector<2x128xf32>
    %6 = tpu.matmul %4, %5, %cst {dimension_numbers = #tpu.dot_dimension_numbers<[1], [0], [0], [1], [0, 0, 1, 1], [], []>} : vector<2x2048xf32>, vector<2048x128xf32>, vector<2x128xf32> -> vector<2x128xf32>
    %7 = arith.addf %3, %6 : vector<2x128xf32>
    %c0_6 = arith.constant 0 : index
    %c0_7 = arith.constant 0 : index
    %8 = vector.load %arg7[%c0_6, %c0_7] : memref<2x128xf32, #tpu.memory_space<vmem>>, vector<2x128xf32>
    tpu.vector_store %arg7[%c0_6, %c0_7], %7 {strides = array<i32>} : memref<2x128xf32, #tpu.memory_space<vmem>>, vector<2x128xf32>,
    %c7_i32 = arith.constant 7 : i32
    %9 = arith.cmpi eq, %arg0, %c7_i32 : i32
    %10 = arith.extui %9 : i1 to i32
    %c0_i32_8 = arith.constant 0 : i32
    %11 = arith.cmpi ne, %10, %c0_i32_8 : i32
    scf.if %11 {
      %c0_9 = arith.constant 0 : index
      %c0_10 = arith.constant 0 : index
      %12 = vector.load %arg7[%c0_9, %c0_10] : memref<2x128xf32, #tpu.memory_space<vmem>>, vector<2x128xf32>
      %c0_11 = arith.constant 0 : index
      %c0_12 = arith.constant 0 : index
      %13 = vector.load %arg3[%c0_11, %c0_12] : memref<1x128xf32, #tpu.memory_space<vmem>>, vector<1x128xf32>
      %14 = vector.broadcast %13 : vector<1x128xf32> to vector<2x128xf32>
      %15 = arith.addf %12, %14 : vector<2x128xf32>
      %cst_13 = arith.constant 0.000000e+00 : f32
      %16 = vector.broadcast %cst_13 : f32 to vector<2x128xf32>
      %17 = arith.maximumf %15, %16 : vector<2x128xf32>
      %c0_14 = arith.constant 0 : index
      %c0_15 = arith.constant 0 : index
      %18 = vector.load %arg4[%c0_14, %c0_15] : memref<128x1xf32, #tpu.memory_space<vmem>>, vector<128x1xf32>
      %cst_16 = arith.constant dense<0.000000e+00> : vector<2x1xf32>
      %19 = tpu.matmul %17, %18, %cst_16 {dimension_numbers = #tpu.dot_dimension_numbers<[1], [0], [0], [1], [0, 0, 1, 1], [], []>} : vector<2x128xf32>, vector<128x1xf32>, vector<2x1xf32> -> vector<2x1xf32>
      %c0_17 = arith.constant 0 : index
      %c0_18 = arith.constant 0 : index
      %20 = vector.load %arg5[%c0_17, %c0_18] : memref<1x1xf32, #tpu.memory_space<vmem>>, vector<1x1xf32>
      %21 = vector.broadcast %20 : vector<1x1xf32> to vector<2x1xf32>
      %22 = arith.addf %19, %21 : vector<2x1xf32>
      %cst_19 = arith.constant 5.000000e-01 : f32
      %23 = vector.broadcast %cst_19 : f32 to vector<2x1xf32>
      %24 = arith.mulf %23, %22 : vector<2x1xf32>
      %25 = math.tanh %24 : vector<2x1xf32>
      %cst_20 = arith.constant 1.000000e+00 : f32
      %26 = vector.broadcast %cst_20 : f32 to vector<2x1xf32>
      %27 = arith.addf %25, %26 : vector<2x1xf32>
      %cst_21 = arith.constant 5.000000e-01 : f32
      %28 = vector.broadcast %cst_21 : f32 to vector<2x1xf32>
      %29 = arith.mulf %28, %27 : vector<2x1xf32>
      %c0_22 = arith.constant 0 : index
      %c0_23 = arith.constant 0 : index
      %30 = vector.load %arg6[%c0_22, %c0_23] : memref<2x1xf32, #tpu.memory_space<vmem>>, vector<2x1xf32>
      tpu.vector_store %arg6[%c0_22, %c0_23], %29 {strides = array<i32>} : memref<2x1xf32, #tpu.memory_space<vmem>>, vector<2x1xf32>,
    } else {
    }
    return
  }
  func.func @transform_0(%arg0: i32) -> (i32, i32) {
    %c0_i32 = arith.constant 0 : i32
    %c0_i32_0 = arith.constant 0 : i32
    return %c0_i32, %arg0 : i32, i32
  }
  func.func @transform_1(%arg0: i32) -> (i32, i32) {
    %c0_i32 = arith.constant 0 : i32
    %c0_i32_0 = arith.constant 0 : i32
    return %arg0, %c0_i32 : i32, i32
  }
  func.func @transform_2(%arg0: i32) -> (i32, i32) {
    %c0_i32 = arith.constant 0 : i32
    %c0_i32_0 = arith.constant 0 : i32
    %c0_i32_1 = arith.constant 0 : i32
    return %c0_i32, %c0_i32_0 : i32, i32
  }
  func.func @transform_3(%arg0: i32) -> (i32, i32) {
    %c0_i32 = arith.constant 0 : i32
    %c0_i32_0 = arith.constant 0 : i32
    %c0_i32_1 = arith.constant 0 : i32
    return %c0_i32, %c0_i32_0 : i32, i32
  }
  func.func @transform_4(%arg0: i32) -> (i32, i32) {
    %c0_i32 = arith.constant 0 : i32
    %c0_i32_0 = arith.constant 0 : i32
    %c0_i32_1 = arith.constant 0 : i32
    return %c0_i32, %c0_i32_0 : i32, i32
  }
  func.func @transform_5(%arg0: i32) -> (i32, i32) {
    %c0_i32 = arith.constant 0 : i32
    %c0_i32_0 = arith.constant 0 : i32
    %c0_i32_1 = arith.constant 0 : i32
    return %c0_i32, %c0_i32_0 : i32, i32
  }
}

</mosaic_0001>

<llo_original>
// kernel: _lambda_.3
$region0: #{_lambda_.3}
  #allocation0 [shape = 'u32[]', space=smem, size = 0x4, offset = 0x4, fixed_abs, tag = 'smem constant byte address 0x4 - core index']
  #allocation1 [shape = 'u32[144,128]{1,0:T(1,128)}', space=vmem, size = 0x12000, scoped, tag = 'internal scratch']
  %s0 = inlined_call_operand.vmem [shape: f32[2,4,1024,27], index: 0, kind: input, shape index: {}]
  %s1 = inlined_call_operand.vmem [shape: f32[27,32], index: 1, kind: input, shape index: {}]
  %s2 = inlined_call_operand.vmem [shape: f32[1,32], index: 2, kind: input, shape index: {}]
  %s3 = inlined_call_operand.vmem [shape: f32[2,1024,32], index: 3, kind: output, shape index: {}]
  %s4 = sld [smem:[#allocation0]]
  $region45: #{_lambda_.3} parent=0
    _
  %s6 = ssub.s32 1, %s4
  %s7 = scalar_select 0, %s6, %s4
  loop: start=0, step=1, limit=4
  $region2: #{_lambda_.3} parent=0 // loop_pre_header
    _
  $region3: #{_lambda_.3} parent=0 // loop_header
    %s9 = sphi 0, %s13
    %p10 = scmp.ge.s32.totalorder %s9, 4
    %s19 = sphi 0, %s21
    %s22 = sphi 0, %s19
    %s23 = sphi 0, %s22
    %s39 = sphi 0, %s23
    %s43 = sphi 0, %s43
    %s45 = sphi 0, %s43
    %s46 = sphi 0, %s45
    %s60 = sphi 0, %s46
    %s64 = sphi 0, %s64
    %s66 = sphi 0, %s64
    %s67 = sphi 0, %s66
    %s81 = sphi 0, %s67
    %s87 = sphi 0, %s89
    %s90 = sphi 0, %s87
    %s91 = sphi 0, %s90
    %s107 = sphi 0, %s91
  $region4: #{_lambda_.3} parent=0 // loop_header_branch
    %12 = sbr.rel (%p10) target = $region8
  $region5: #{_lambda_.3} parent=0 // loop_body
    %s14 = ssub.s32 %s9, 1
    %s15 = ssub.s32 %s9, 2
    %s16 = sadd.s32 %s9, 1
    %s17 = ssub.s32 %s9, %s16
    %p18 = scmp.eq.s32.totalorder %s17, 0
    %s20 = sadd.s32 %s19, 1
    %s21 = scalar_select %p18, %s19, %s20
    %p24 = pneg %p18
    %p25 = scmp.eq.s32.totalorder %s9, 1
    %p26 = por %p24, %p25
    %p27 = scmp.ne.s32.totalorder %s19, %s22
    %p28 = scmp.eq.s32.totalorder %s9, 0
    %p29 = por %p27, %p28
    %p30 = scmp.ne.s32.totalorder %s19, %s22
    %p31 = scmp.eq.s32.totalorder %s14, 1
    %p32 = por %p30, %p31
    %p33 = scmp.ne.s32.totalorder %s22, %s23
    %p34 = scmp.eq.s32.totalorder %s14, 0
    %p35 = por %p33, %p34
    %p36 = scmp.ne.s32.totalorder %s22, %s23
    %p37 = scmp.eq.s32.totalorder %s15, 1
    %p38 = por %p36, %p37
    %p40 = scmp.ne.s32.totalorder %s23, %s39
    %p41 = scmp.eq.s32.totalorder %s15, 0
    %p42 = por %p40, %p41
    %s44 = sadd.s32 %s43, 1
    %p47 = scmp.eq.s32.totalorder %s9, 1
    %p48 = scmp.ne.s32.totalorder %s43, %s45
    %p49 = scmp.eq.s32.totalorder %s9, 0
    %p50 = por %p48, %p49
    %p51 = scmp.ne.s32.totalorder %s43, %s45
    %p52 = scmp.eq.s32.totalorder %s14, 1
    %p53 = por %p51, %p52
    %p54 = scmp.ne.s32.totalorder %s45, %s46
    %p55 = scmp.eq.s32.totalorder %s14, 0
    %p56 = por %p54, %p55
    %p57 = scmp.ne.s32.totalorder %s45, %s46
    %p58 = scmp.eq.s32.totalorder %s15, 1
    %p59 = por %p57, %p58
    %p61 = scmp.ne.s32.totalorder %s46, %s60
    %p62 = scmp.eq.s32.totalorder %s15, 0
    %p63 = por %p61, %p62
    %s65 = sadd.s32 %s64, 1
    %p68 = scmp.eq.s32.totalorder %s9, 1
    %p69 = scmp.ne.s32.totalorder %s64, %s66
    %p70 = scmp.eq.s32.totalorder %s9, 0
    %p71 = por %p69, %p70
    %p72 = scmp.ne.s32.totalorder %s64, %s66
    %p73 = scmp.eq.s32.totalorder %s14, 1
    %p74 = por %p72, %p73
    %p75 = scmp.ne.s32.totalorder %s66, %s67
    %p76 = scmp.eq.s32.totalorder %s14, 0
    %p77 = por %p75, %p76
    %p78 = scmp.ne.s32.totalorder %s66, %s67
    %p79 = scmp.eq.s32.totalorder %s15, 1
    %p80 = por %p78, %p79
    %p82 = scmp.ne.s32.totalorder %s67, %s81
    %p83 = scmp.eq.s32.totalorder %s15, 0
    %p84 = por %p82, %p83
    %s85 = ssub.s32 %s9, %s16
    %p86 = scmp.eq.s32.totalorder %s85, 0
    %s88 = sadd.s32 %s87, 1
    %s89 = scalar_select %p86, %s87, %s88
    %p92 = pneg %p86
    %p93 = scmp.eq.s32.totalorder %s9, 1
    %p94 = por %p92, %p93
    %p95 = scmp.ne.s32.totalorder %s87, %s90
    %p96 = scmp.eq.s32.totalorder %s9, 0
    %p97 = por %p95, %p96
    %p98 = scmp.ne.s32.totalorder %s87, %s90
    %p99 = scmp.eq.s32.totalorder %s14, 1
    %p100 = por %p98, %p99
    %p101 = scmp.ne.s32.totalorder %s90, %s91
    %p102 = scmp.eq.s32.totalorder %s14, 0
    %p103 = por %p101, %p102
    %p104 = scmp.ne.s32.totalorder %s90, %s91
    %p105 = scmp.eq.s32.totalorder %s15, 1
    %p106 = por %p104, %p105
    %p108 = scmp.ne.s32.totalorder %s91, %s107
    %p109 = scmp.eq.s32.totalorder %s15, 0
    %p110 = por %p108, %p109
    %p111 = scmp.le.s32.totalorder 1, %s9
    %p112 = scmp.lt.s32.totalorder %s9, 3
    %p113 = pnand %p111, %p112
    %p114 = pneg %p113
    // Predicated region
    $region9: #{_lambda_.3} parent=5 // pred_check
      _
    $region10: #{_lambda_.3} parent=5 // pred_check_branch
      %116 = sbr.rel (%p113) target = $region12
    $region11: #{_lambda_.3} parent=5 // pred_region
      %s117 = ssub.s32 %s9, 1
      // Predicated region
      $region13: #{_lambda_.3} parent=11 // pred_check
        %p118 = pneg %p56
      $region14: #{_lambda_.3} parent=11 // pred_check_branch
        %120 = sbr.rel (%p118) target = $region16
      $region15: #{_lambda_.3} parent=11 // pred_region
        _
      $region16: #{_lambda_.3} parent=11 // pred_fallthru
        _
      // Predicated region
      $region17: #{_lambda_.3} parent=11 // pred_check
        %p121 = pneg %p77
      $region18: #{_lambda_.3} parent=11 // pred_check_branch
        %123 = sbr.rel (%p121) target = $region20
      $region19: #{_lambda_.3} parent=11 // pred_region
        _
      $region20: #{_lambda_.3} parent=11 // pred_fallthru
        _
    $region12: #{_lambda_.3} parent=5 // pred_fallthru
      _
    %p124 = scmp.lt.s32.totalorder %s9, 2
    // Predicated region
    $region21: #{_lambda_.3} parent=5 // pred_check
      %p125 = pneg %p124
    $region22: #{_lambda_.3} parent=5 // pred_check_branch
      %127 = sbr.rel (%p125) target = $region24
    $region23: #{_lambda_.3} parent=5 // pred_region
      // Predicated region
      $region25: #{_lambda_.3} parent=23 // pred_check
        %p128 = pneg %p29
      $region26: #{_lambda_.3} parent=23 // pred_check_branch
        %130 = sbr.rel (%p128) target = $region28
      $region27: #{_lambda_.3} parent=23 // pred_region
        %p131 = scmp.lt.s32.totalorder %s9, 1
        %s132 = scalar_select %p131, %s9, 1
        %s133 = smul.addr %s132, 512
        %s134 = smul.addr %s133, 8
        %s135 = scalar_lea.vmem %s0, %s134
      $region28: #{_lambda_.3} parent=23 // pred_fallthru
        _
    $region24: #{_lambda_.3} parent=5 // pred_fallthru
      _
    %p136 = scmp.le.s32.totalorder 1, %s9
    %p137 = scmp.lt.s32.totalorder %s9, 3
    %p138 = pnand %p136, %p137
    %p139 = pneg %p138
    // Predicated region
    $region29: #{_lambda_.3} parent=5 // pred_check
      _
    $region30: #{_lambda_.3} parent=5 // pred_check_branch
      %141 = sbr.rel (%p138) target = $region32
    $region31: #{_lambda_.3} parent=5 // pred_region
      %s142 = ssub.s32 %s9, 1
      %p143 = scmp.lt.s32.totalorder %s14, 1
      %s144 = scalar_select %p143, %s14, 1
      %s145 = smul.addr %s144, 512
      %s146 = smul.addr %s145, 8
      %s147 = scalar_lea.vmem %s0, %s146
      %p148 = pneg %p35
      %p149 = pneg %p32
      %p150 = pneg %p56
      %p151 = pneg %p53
      %p152 = pneg %p77
      %p153 = pneg %p74
      %p154 = pneg %p103
      %p155 = pneg %p100
      %p156 = scmp.lt.s32.totalorder %s14, 1
      %s157 = scalar_select %p156, %s14, 1
      %s158 = smul.addr %s157, 128
      %s159 = smul.addr %s158, 8
      %s160 = scalar_lea.vmem %s3, %s159
      %p161 = scmp.lt.s32.totalorder %s14, 1
      %s162 = scalar_select %p161, %s14, 1
      %s163 = smul.addr %s162, 512
      %s164 = smul.addr %s163, 8
      %s165 = scalar_lea.vmem %s0, %s164
      %p166 = scmp.lt.s32.totalorder %s14, 1
      %s167 = scalar_select %p166, %s14, 1
      %s168 = smul.addr %s167, 128
      %s169 = smul.addr %s168, 8
      %s170 = scalar_lea.vmem %s3, %s169
      %v171 = vld [vmem:[%s1] sm:$0xff]
      %v172 = vld [vmem:[%s1 + $0x8] sm:$0xff]
      %v173 = vld [vmem:[%s1 + $0x10] sm:$0xff]
      %v174 = vld [vmem:[%s1 + $0x18] sm:$0x7]
      %v175 = vld [vmem:[%s165] sm:$0xff]
      %v176 = vld [vmem:[%s165 + $0x8] sm:$0xff]
      %v177 = vld [vmem:[%s165 + $0x10] sm:$0xff]
      %v178 = vld [vmem:[%s165 + $0x18] sm:$0xff]
      %v179 = vld [vmem:[%s165 + $0x20] sm:$0xff]
      %v180 = vld [vmem:[%s165 + $0x28] sm:$0xff]
      %v181 = vld [vmem:[%s165 + $0x30] sm:$0xff]
      %v182 = vld [vmem:[%s165 + $0x38] sm:$0xff]
      %v183 = vld [vmem:[%s165 + $0x40] sm:$0xff]
      %v184 = vld [vmem:[%s165 + $0x48] sm:$0xff]
      %v185 = vld [vmem:[%s165 + $0x50] sm:$0xff]
      %v186 = vld [vmem:[%s165 + $0x58] sm:$0xff]
      %v187 = vld [vmem:[%s165 + $0x60] sm:$0xff]
      %v188 = vld [vmem:[%s165 + $0x68] sm:$0xff]
      %v189 = vld [vmem:[%s165 + $0x70] sm:$0xff]
      %v190 = vld [vmem:[%s165 + $0x78] sm:$0xff]
      %v191 = vld [vmem:[%s165 + $0x80] sm:$0xff]
      %v192 = vld [vmem:[%s165 + $0x88] sm:$0xff]
      %v193 = vld [vmem:[%s165 + $0x90] sm:$0xff]
      %v194 = vld [vmem:[%s165 + $0x98] sm:$0xff]
      %v195 = vld [vmem:[%s165 + $0xa0] sm:$0xff]
      %v196 = vld [vmem:[%s165 + $0xa8] sm:$0xff]
      %v197 = vld [vmem:[%s165 + $0xb0] sm:$0xff]
      %v198 = vld [vmem:[%s165 + $0xb8] sm:$0xff]
      %v199 = vld [vmem:[%s165 + $0xc0] sm:$0xff]
      %v200 = vld [vmem:[%s165 + $0xc8] sm:$0xff]
      %v201 = vld [vmem:[%s165 + $0xd0] sm:$0xff]
      %v202 = vld [vmem:[%s165 + $0xd8] sm:$0xff]
      %v203 = vld [vmem:[%s165 + $0xe0] sm:$0xff]
      %v204 = vld [vmem:[%s165 + $0xe8] sm:$0xff]
      %v205 = vld [vmem:[%s165 + $0xf0] sm:$0xff]
      %v206 = vld [vmem:[%s165 + $0xf8] sm:$0xff]
      %v207 = vld [vmem:[%s165 + $0x100] sm:$0xff]
      %v208 = vld [vmem:[%s165 + $0x108] sm:$0xff]
      %v209 = vld [vmem:[%s165 + $0x110] sm:$0xff]
      %v210 = vld [vmem:[%s165 + $0x118] sm:$0xff]
      %v211 = vld [vmem:[%s165 + $0x120] sm:$0xff]
      %v212 = vld [vmem:[%s165 + $0x128] sm:$0xff]
      %v213 = vld [vmem:[%s165 + $0x130] sm:$0xff]
      %v214 = vld [vmem:[%s165 + $0x138] sm:$0xff]
      %v215 = vld [vmem:[%s165 + $0x140] sm:$0xff]
      %v216 = vld [vmem:[%s165 + $0x148] sm:$0xff]
      %v217 = vld [vmem:[%s165 + $0x150] sm:$0xff]
      %v218 = vld [vmem:[%s165 + $0x158] sm:$0xff]
      %v219 = vld [vmem:[%s165 + $0x160] sm:$0xff]
      %v220 = vld [vmem:[%s165 + $0x168] sm:$0xff]
      %v221 = vld [vmem:[%s165 + $0x170] sm:$0xff]
      %v222 = vld [vmem:[%s165 + $0x178] sm:$0xff]
      %v223 = vld [vmem:[%s165 + $0x180] sm:$0xff]
      %v224 = vld [vmem:[%s165 + $0x188] sm:$0xff]
      %v225 = vld [vmem:[%s165 + $0x190] sm:$0xff]
      %v226 = vld [vmem:[%s165 + $0x198] sm:$0xff]
      %v227 = vld [vmem:[%s165 + $0x1a0] sm:$0xff]
      %v228 = vld [vmem:[%s165 + $0x1a8] sm:$0xff]
      %v229 = vld [vmem:[%s165 + $0x1b0] sm:$0xff]
      %v230 = vld [vmem:[%s165 + $0x1b8] sm:$0xff]
      %v231 = vld [vmem:[%s165 + $0x1c0] sm:$0xff]
      %v232 = vld [vmem:[%s165 + $0x1c8] sm:$0xff]
      %v233 = vld [vmem:[%s165 + $0x1d0] sm:$0xff]
      %v234 = vld [vmem:[%s165 + $0x1d8] sm:$0xff]
      %v235 = vld [vmem:[%s165 + $0x1e0] sm:$0xff]
      %v236 = vld [vmem:[%s165 + $0x1e8] sm:$0xff]
      %v237 = vld [vmem:[%s165 + $0x1f0] sm:$0xff]
      %v238 = vld [vmem:[%s165 + $0x1f8] sm:$0xff]
      %v239 = vld [vmem:[%s165 + $0x200] sm:$0xff]
      %v240 = vld [vmem:[%s165 + $0x208] sm:$0xff]
      %v241 = vld [vmem:[%s165 + $0x210] sm:$0xff]
      %v242 = vld [vmem:[%s165 + $0x218] sm:$0xff]
      %v243 = vld [vmem:[%s165 + $0x220] sm:$0xff]
      %v244 = vld [vmem:[%s165 + $0x228] sm:$0xff]
      %v245 = vld [vmem:[%s165 + $0x230] sm:$0xff]
      %v246 = vld [vmem:[%s165 + $0x238] sm:$0xff]
      %v247 = vld [vmem:[%s165 + $0x240] sm:$0xff]
      %v248 = vld [vmem:[%s165 + $0x248] sm:$0xff]
      %v249 = vld [vmem:[%s165 + $0x250] sm:$0xff]
      %v250 = vld [vmem:[%s165 + $0x258] sm:$0xff]
      %v251 = vld [vmem:[%s165 + $0x260] sm:$0xff]
      %v252 = vld [vmem:[%s165 + $0x268] sm:$0xff]
      %v253 = vld [vmem:[%s165 + $0x270] sm:$0xff]
      %v254 = vld [vmem:[%s165 + $0x278] sm:$0xff]
      %v255 = vld [vmem:[%s165 + $0x280] sm:$0xff]
      %v256 = vld [vmem:[%s165 + $0x288] sm:$0xff]
      %v257 = vld [vmem:[%s165 + $0x290] sm:$0xff]
      %v258 = vld [vmem:[%s165 + $0x298] sm:$0xff]
      %v259 = vld [vmem:[%s165 + $0x2a0] sm:$0xff]
      %v260 = vld [vmem:[%s165 + $0x2a8] sm:$0xff]
      %v261 = vld [vmem:[%s165 + $0x2b0] sm:$0xff]
      %v262 = vld [vmem:[%s165 + $0x2b8] sm:$0xff]
      %v263 = vld [vmem:[%s165 + $0x2c0] sm:$0xff]
      %v264 = vld [vmem:[%s165 + $0x2c8] sm:$0xff]
      %v265 = vld [vmem:[%s165 + $0x2d0] sm:$0xff]
      %v266 = vld [vmem:[%s165 + $0x2d8] sm:$0xff]
      %v267 = vld [vmem:[%s165 + $0x2e0] sm:$0xff]
      %v268 = vld [vmem:[%s165 + $0x2e8] sm:$0xff]
      %v269 = vld [vmem:[%s165 + $0x2f0] sm:$0xff]
      %v270 = vld [vmem:[%s165 + $0x2f8] sm:$0xff]
      %v271 = vld [vmem:[%s165 + $0x300] sm:$0xff]
      %v272 = vld [vmem:[%s165 + $0x308] sm:$0xff]
      %v273 = vld [vmem:[%s165 + $0x310] sm:$0xff]
      %v274 = vld [vmem:[%s165 + $0x318] sm:$0xff]
      %v275 = vld [vmem:[%s165 + $0x320] sm:$0xff]
      %v276 = vld [vmem:[%s165 + $0x328] sm:$0xff]
      %v277 = vld [vmem:[%s165 + $0x330] sm:$0xff]
      %v278 = vld [vmem:[%s165 + $0x338] sm:$0xff]
      %v279 = vld [vmem:[%s165 + $0x340] sm:$0xff]
      %v280 = vld [vmem:[%s165 + $0x348] sm:$0xff]
      %v281 = vld [vmem:[%s165 + $0x350] sm:$0xff]
      %v282 = vld [vmem:[%s165 + $0x358] sm:$0xff]
      %v283 = vld [vmem:[%s165 + $0x360] sm:$0xff]
      %v284 = vld [vmem:[%s165 + $0x368] sm:$0xff]
      %v285 = vld [vmem:[%s165 + $0x370] sm:$0xff]
      %v286 = vld [vmem:[%s165 + $0x378] sm:$0xff]
      %v287 = vld [vmem:[%s165 + $0x380] sm:$0xff]
      %v288 = vld [vmem:[%s165 + $0x388] sm:$0xff]
      %v289 = vld [vmem:[%s165 + $0x390] sm:$0xff]
      %v290 = vld [vmem:[%s165 + $0x398] sm:$0xff]
      %v291 = vld [vmem:[%s165 + $0x3a0] sm:$0xff]
      %v292 = vld [vmem:[%s165 + $0x3a8] sm:$0xff]
      %v293 = vld [vmem:[%s165 + $0x3b0] sm:$0xff]
      %v294 = vld [vmem:[%s165 + $0x3b8] sm:$0xff]
      %v295 = vld [vmem:[%s165 + $0x3c0] sm:$0xff]
      %v296 = vld [vmem:[%s165 + $0x3c8] sm:$0xff]
      %v297 = vld [vmem:[%s165 + $0x3d0] sm:$0xff]
      %v298 = vld [vmem:[%s165 + $0x3d8] sm:$0xff]
      %v299 = vld [vmem:[%s165 + $0x3e0] sm:$0xff]
      %v300 = vld [vmem:[%s165 + $0x3e8] sm:$0xff]
      %v301 = vld [vmem:[%s165 + $0x3f0] sm:$0xff]
      %v302 = vld [vmem:[%s165 + $0x3f8] sm:$0xff]
      %vm303 = vcmask 220160
      %v305 = vsel %vm303, %v175, 0
      %v308 = vsel %vm303, %v176, 0
      %v311 = vsel %vm303, %v177, 0
      %v314 = vsel %vm303, %v178, 0
      %v317 = vsel %vm303, %v179, 0
      %v320 = vsel %vm303, %v180, 0
      %v323 = vsel %vm303, %v181, 0
      %v326 = vsel %vm303, %v182, 0
      %v329 = vsel %vm303, %v183, 0
      %v332 = vsel %vm303, %v184, 0
      %v335 = vsel %vm303, %v185, 0
      %v338 = vsel %vm303, %v186, 0
      %v341 = vsel %vm303, %v187, 0
      %v344 = vsel %vm303, %v188, 0
      %v347 = vsel %vm303, %v189, 0
      %v350 = vsel %vm303, %v190, 0
      %v353 = vsel %vm303, %v191, 0
      %v356 = vsel %vm303, %v192, 0
      %v359 = vsel %vm303, %v193, 0
      %v362 = vsel %vm303, %v194, 0
      %v365 = vsel %vm303, %v195, 0
      %v368 = vsel %vm303, %v196, 0
      %v371 = vsel %vm303, %v197, 0
      %v374 = vsel %vm303, %v198, 0
      %v377 = vsel %vm303, %v199, 0
      %v380 = vsel %vm303, %v200, 0
      %v383 = vsel %vm303, %v201, 0
      %v386 = vsel %vm303, %v202, 0
      %v389 = vsel %vm303, %v203, 0
      %v392 = vsel %vm303, %v204, 0
      %v395 = vsel %vm303, %v205, 0
      %v398 = vsel %vm303, %v206, 0
      %v401 = vsel %vm303, %v207, 0
      %v404 = vsel %vm303, %v208, 0
      %v407 = vsel %vm303, %v209, 0
      %v410 = vsel %vm303, %v210, 0
      %v413 = vsel %vm303, %v211, 0
      %v416 = vsel %vm303, %v212, 0
      %v419 = vsel %vm303, %v213, 0
      %v422 = vsel %vm303, %v214, 0
      %v425 = vsel %vm303, %v215, 0
      %v428 = vsel %vm303, %v216, 0
      %v431 = vsel %vm303, %v217, 0
      %v434 = vsel %vm303, %v218, 0
      %v437 = vsel %vm303, %v219, 0
      %v440 = vsel %vm303, %v220, 0
      %v443 = vsel %vm303, %v221, 0
      %v446 = vsel %vm303, %v222, 0
      %v449 = vsel %vm303, %v223, 0
      %v452 = vsel %vm303, %v224, 0
      %v455 = vsel %vm303, %v225, 0
      %v458 = vsel %vm303, %v226, 0
      %v461 = vsel %vm303, %v227, 0
      %v464 = vsel %vm303, %v228, 0
      %v467 = vsel %vm303, %v229, 0
      %v470 = vsel %vm303, %v230, 0
      %v473 = vsel %vm303, %v231, 0
      %v476 = vsel %vm303, %v232, 0
      %v479 = vsel %vm303, %v233, 0
      %v482 = vsel %vm303, %v234, 0
      %v485 = vsel %vm303, %v235, 0
      %v488 = vsel %vm303, %v236, 0
      %v491 = vsel %vm303, %v237, 0
      %v494 = vsel %vm303, %v238, 0
      %v497 = vsel %vm303, %v239, 0
      %v500 = vsel %vm303, %v240, 0
      %v503 = vsel %vm303, %v241, 0
      %v506 = vsel %vm303, %v242, 0
      %v509 = vsel %vm303, %v243, 0
      %v512 = vsel %vm303, %v244, 0
      %v515 = vsel %vm303, %v245, 0
      %v518 = vsel %vm303, %v246, 0
      %v521 = vsel %vm303, %v247, 0
      %v524 = vsel %vm303, %v248, 0
      %v527 = vsel %vm303, %v249, 0
      %v530 = vsel %vm303, %v250, 0
      %v533 = vsel %vm303, %v251, 0
      %v536 = vsel %vm303, %v252, 0
      %v539 = vsel %vm303, %v253, 0
      %v542 = vsel %vm303, %v254, 0
      %v545 = vsel %vm303, %v255, 0
      %v548 = vsel %vm303, %v256, 0
      %v551 = vsel %vm303, %v257, 0
      %v554 = vsel %vm303, %v258, 0
      %v557 = vsel %vm303, %v259, 0
      %v560 = vsel %vm303, %v260, 0
      %v563 = vsel %vm303, %v261, 0
      %v566 = vsel %vm303, %v262, 0
      %v569 = vsel %vm303, %v263, 0
      %v572 = vsel %vm303, %v264, 0
      %v575 = vsel %vm303, %v265, 0
      %v578 = vsel %vm303, %v266, 0
      %v581 = vsel %vm303, %v267, 0
      %v584 = vsel %vm303, %v268, 0
      %v587 = vsel %vm303, %v269, 0
      %v590 = vsel %vm303, %v270, 0
      %v593 = vsel %vm303, %v271, 0
      %v596 = vsel %vm303, %v272, 0
      %v599 = vsel %vm303, %v273, 0
      %v602 = vsel %vm303, %v274, 0
      %v605 = vsel %vm303, %v275, 0
      %v608 = vsel %vm303, %v276, 0
      %v611 = vsel %vm303, %v277, 0
      %v614 = vsel %vm303, %v278, 0
      %v617 = vsel %vm303, %v279, 0
      %v620 = vsel %vm303, %v280, 0
      %v623 = vsel %vm303, %v281, 0
      %v626 = vsel %vm303, %v282, 0
      %v629 = vsel %vm303, %v283, 0
      %v632 = vsel %vm303, %v284, 0
      %v635 = vsel %vm303, %v285, 0
      %v638 = vsel %vm303, %v286, 0
      %v641 = vsel %vm303, %v287, 0
      %v644 = vsel %vm303, %v288, 0
      %v647 = vsel %vm303, %v289, 0
      %v650 = vsel %vm303, %v290, 0
      %v653 = vsel %vm303, %v291, 0
      %v656 = vsel %vm303, %v292, 0
      %v659 = vsel %vm303, %v293, 0
      %v662 = vsel %vm303, %v294, 0
      %v665 = vsel %vm303, %v295, 0
      %v668 = vsel %vm303, %v296, 0
      %v671 = vsel %vm303, %v297, 0
      %v674 = vsel %vm303, %v298, 0
      %v677 = vsel %vm303, %v299, 0
      %v680 = vsel %vm303, %v300, 0
      %v683 = vsel %vm303, %v301, 0
      %v686 = vsel %vm303, %v302, 0
      %vm688 = vcmask 1042432
      %v690 = vsel %vm688, %v174, 0
      %692 = vmatprep.subr.mxu0 0.0
      %693 = vmatpush1.msra.mxu0 0.0
      %694 = vmatprep.subr.mxu0 0.0
      %695 = vmatpush1.msra.mxu0 0.0
      %696 = vmatprep.subr.mxu0 0.0
      %697 = vmatpush1.msra.mxu0 0.0
      %698 = vmatprep.subr.mxu0 0.0
      %699 = vmatpush1.msra.mxu0 0.0
      %700 = vmatprep.subr.mxu0 0.0
      %701 = vmatpush1.msra.mxu0 0.0
      %702 = vmatprep.subr.mxu0 0.0
      %703 = vmatpush1.msra.mxu0 0.0
      %704 = vmatprep.subr.mxu0 0.0
      %705 = vmatpush1.msra.mxu0 0.0
      %706 = vmatprep.subr.mxu0 0.0
      %707 = vmatpush1.msra.mxu0 0.0
      %708 = vmatprep.subr.mxu0 0.0
      %709 = vmatpush1.msra.mxu0 0.0
      %710 = vmatprep.subr.mxu0 0.0
      %711 = vmatpush1.msra.mxu0 0.0
      %712 = vmatprep.subr.mxu0 0.0
      %713 = vmatpush1.msra.mxu0 0.0
      %714 = vmatprep.subr.mxu0 0.0
      %715 = vmatpush1.msra.mxu0 0.0
      %716 = vmatprep.subr.mxu0 0.0
      %717 = vmatpush1.msra.mxu0 %v690
      %718 = vmatprep.subr.mxu0 0.0
      %719 = vmatpush1.msra.mxu0 %v173
      %720 = vmatprep.subr.mxu0 0.0
      %721 = vmatpush1.msra.mxu0 %v172
      %722 = vmatprep.subr.mxu0 0.0
      %723 = vmatpush1.msra.mxu0 %v171
      %724 = vmatprep.subr.mxu0 0.0
      %725 = vmatpush2.msra.mxu0 0.0
      %726 = vmatprep.subr.mxu0 0.0
      %727 = vmatpush2.msra.mxu0 0.0
      %728 = vmatprep.subr.mxu0 0.0
      %729 = vmatpush2.msra.mxu0 0.0
      %730 = vmatprep.subr.mxu0 0.0
      %731 = vmatpush2.msra.mxu0 0.0
      %732 = vmatprep.subr.mxu0 0.0
      %733 = vmatpush2.msra.mxu0 0.0
      %734 = vmatprep.subr.mxu0 0.0
      %735 = vmatpush2.msra.mxu0 0.0
      %736 = vmatprep.subr.mxu0 0.0
      %737 = vmatpush2.msra.mxu0 0.0
      %738 = vmatprep.subr.mxu0 0.0
      %739 = vmatpush2.msra.mxu0 0.0
      %740 = vmatprep.subr.mxu0 0.0
      %741 = vmatpush2.msra.mxu0 0.0
      %742 = vmatprep.subr.mxu0 0.0
      %743 = vmatpush2.msra.mxu0 0.0
      %744 = vmatprep.subr.mxu0 0.0
      %745 = vmatpush2.msra.mxu0 0.0
      %746 = vmatprep.subr.mxu0 0.0
      %747 = vmatpush2.msra.mxu0 0.0
      %748 = vmatprep.subr.mxu0 0.0
      %749 = vmatpush2.msra.mxu0 0.0
      %750 = vmatprep.subr.mxu0 0.0
      %751 = vmatpush2.msra.mxu0 0.0
      %752 = vmatprep.subr.mxu0 0.0
      %753 = vmatpush2.msra.mxu0 0.0
      %754 = vmatprep.subr.mxu0 0.0
      %755 = vmatpush2.msra.mxu0 0.0
      %756 = vmatprep.mubr.f32.mxu0 0.0
      %757 = vmatmul.mubr.f32.gmra.mxu0 %v305
      %v758 = vpop.f32.mrf.mxu0
      %v759 = vadd.f32 0.0, %v758
      %v760 = vpop.f32.mrf.mxu0
      %761 = vmatprep.mubr.f32.mxu0 0.0
      %762 = vmatmul.mubr.f32.gmra.mxu0 %v308
      %v763 = vpop.f32.mrf.mxu0
      %v764 = vadd.f32 0.0, %v763
      %v765 = vpop.f32.mrf.mxu0
      %766 = vmatprep.mubr.f32.mxu0 0.0
      %767 = vmatmul.mubr.f32.gmra.mxu0 %v311
      %v768 = vpop.f32.mrf.mxu0
      %v769 = vadd.f32 0.0, %v768
      %v770 = vpop.f32.mrf.mxu0
      %771 = vmatprep.mubr.f32.mxu0 0.0
      %772 = vmatmul.mubr.f32.gmra.mxu0 %v314
      %v773 = vpop.f32.mrf.mxu0
      %v774 = vadd.f32 0.0, %v773
      %v775 = vpop.f32.mrf.mxu0
      %776 = vmatprep.mubr.f32.mxu0 0.0
      %777 = vmatmul.mubr.f32.gmra.mxu0 %v317
      %v778 = vpop.f32.mrf.mxu0
      %v779 = vadd.f32 0.0, %v778
      %v780 = vpop.f32.mrf.mxu0
      %781 = vmatprep.mubr.f32.mxu0 0.0
      %782 = vmatmul.mubr.f32.gmra.mxu0 %v320
      %v783 = vpop.f32.mrf.mxu0
      %v784 = vadd.f32 0.0, %v783
      %v785 = vpop.f32.mrf.mxu0
      %786 = vmatprep.mubr.f32.mxu0 0.0
      %787 = vmatmul.mubr.f32.gmra.mxu0 %v323
      %v788 = vpop.f32.mrf.mxu0
      %v789 = vadd.f32 0.0, %v788
      %v790 = vpop.f32.mrf.mxu0
      %791 = vmatprep.mubr.f32.mxu0 0.0
      %792 = vmatmul.mubr.f32.gmra.mxu0 %v326
      %v793 = vpop.f32.mrf.mxu0
      %v794 = vadd.f32 0.0, %v793
      %v795 = vpop.f32.mrf.mxu0
      %796 = vmatprep.mubr.f32.mxu0 0.0
      %797 = vmatmul.mubr.f32.gmra.mxu0 %v329
      %v798 = vpop.f32.mrf.mxu0
      %v799 = vadd.f32 0.0, %v798
      %v800 = vpop.f32.mrf.mxu0
      %801 = vmatprep.mubr.f32.mxu0 0.0
      %802 = vmatmul.mubr.f32.gmra.mxu0 %v332
      %v803 = vpop.f32.mrf.mxu0
      %v804 = vadd.f32 0.0, %v803
      %v805 = vpop.f32.mrf.mxu0
      %806 = vmatprep.mubr.f32.mxu0 0.0
      %807 = vmatmul.mubr.f32.gmra.mxu0 %v335
      %v808 = vpop.f32.mrf.mxu0
      %v809 = vadd.f32 0.0, %v808
      %v810 = vpop.f32.mrf.mxu0
      %811 = vmatprep.mubr.f32.mxu0 0.0
      %812 = vmatmul.mubr.f32.gmra.mxu0 %v338
      %v813 = vpop.f32.mrf.mxu0
      %v814 = vadd.f32 0.0, %v813
      %v815 = vpop.f32.mrf.mxu0
      %816 = vmatprep.mubr.f32.mxu0 0.0
      %817 = vmatmul.mubr.f32.gmra.mxu0 %v341
      %v818 = vpop.f32.mrf.mxu0
      %v819 = vadd.f32 0.0, %v818
      %v820 = vpop.f32.mrf.mxu0
      %821 = vmatprep.mubr.f32.mxu0 0.0
      %822 = vmatmul.mubr.f32.gmra.mxu0 %v344
      %v823 = vpop.f32.mrf.mxu0
      %v824 = vadd.f32 0.0, %v823
      %v825 = vpop.f32.mrf.mxu0
      %826 = vmatprep.mubr.f32.mxu0 0.0
      %827 = vmatmul.mubr.f32.gmra.mxu0 %v347
      %v828 = vpop.f32.mrf.mxu0
      %v829 = vadd.f32 0.0, %v828
      %v830 = vpop.f32.mrf.mxu0
      %831 = vmatprep.mubr.f32.mxu0 0.0
      %832 = vmatmul.mubr.f32.gmra.mxu0 %v350
      %v833 = vpop.f32.mrf.mxu0
      %v834 = vadd.f32 0.0, %v833
      %v835 = vpop.f32.mrf.mxu0
      %836 = vmatprep.mubr.f32.mxu0 0.0
      %837 = vmatmul.mubr.f32.gmra.mxu0 %v353
      %v838 = vpop.f32.mrf.mxu0
      %v839 = vadd.f32 0.0, %v838
      %v840 = vpop.f32.mrf.mxu0
      %841 = vmatprep.mubr.f32.mxu0 0.0
      %842 = vmatmul.mubr.f32.gmra.mxu0 %v356
      %v843 = vpop.f32.mrf.mxu0
      %v844 = vadd.f32 0.0, %v843
      %v845 = vpop.f32.mrf.mxu0
      %846 = vmatprep.mubr.f32.mxu0 0.0
      %847 = vmatmul.mubr.f32.gmra.mxu0 %v359
      %v848 = vpop.f32.mrf.mxu0
      %v849 = vadd.f32 0.0, %v848
      %v850 = vpop.f32.mrf.mxu0
      %851 = vmatprep.mubr.f32.mxu0 0.0
      %852 = vmatmul.mubr.f32.gmra.mxu0 %v362
      %v853 = vpop.f32.mrf.mxu0
      %v854 = vadd.f32 0.0, %v853
      %v855 = vpop.f32.mrf.mxu0
      %856 = vmatprep.mubr.f32.mxu0 0.0
      %857 = vmatmul.mubr.f32.gmra.mxu0 %v365
      %v858 = vpop.f32.mrf.mxu0
      %v859 = vadd.f32 0.0, %v858
      %v860 = vpop.f32.mrf.mxu0
      %861 = vmatprep.mubr.f32.mxu0 0.0
      %862 = vmatmul.mubr.f32.gmra.mxu0 %v368
      %v863 = vpop.f32.mrf.mxu0
      %v864 = vadd.f32 0.0, %v863
      %v865 = vpop.f32.mrf.mxu0
      %866 = vmatprep.mubr.f32.mxu0 0.0
      %867 = vmatmul.mubr.f32.gmra.mxu0 %v371
      %v868 = vpop.f32.mrf.mxu0
      %v869 = vadd.f32 0.0, %v868
      %v870 = vpop.f32.mrf.mxu0
      %871 = vmatprep.mubr.f32.mxu0 0.0
      %872 = vmatmul.mubr.f32.gmra.mxu0 %v374
      %v873 = vpop.f32.mrf.mxu0
      %v874 = vadd.f32 0.0, %v873
      %v875 = vpop.f32.mrf.mxu0
      %876 = vmatprep.mubr.f32.mxu0 0.0
      %877 = vmatmul.mubr.f32.gmra.mxu0 %v377
      %v878 = vpop.f32.mrf.mxu0
      %v879 = vadd.f32 0.0, %v878
      %v880 = vpop.f32.mrf.mxu0
      %881 = vmatprep.mubr.f32.mxu0 0.0
      %882 = vmatmul.mubr.f32.gmra.mxu0 %v380
      %v883 = vpop.f32.mrf.mxu0
      %v884 = vadd.f32 0.0, %v883
      %v885 = vpop.f32.mrf.mxu0
      %886 = vmatprep.mubr.f32.mxu0 0.0
      %887 = vmatmul.mubr.f32.gmra.mxu0 %v383
      %v888 = vpop.f32.mrf.mxu0
      %v889 = vadd.f32 0.0, %v888
      %v890 = vpop.f32.mrf.mxu0
      %891 = vmatprep.mubr.f32.mxu0 0.0
      %892 = vmatmul.mubr.f32.gmra.mxu0 %v386
      %v893 = vpop.f32.mrf.mxu0
      %v894 = vadd.f32 0.0, %v893
      %v895 = vpop.f32.mrf.mxu0
      %896 = vmatprep.mubr.f32.mxu0 0.0
      %897 = vmatmul.mubr.f32.gmra.mxu0 %v389
      %v898 = vpop.f32.mrf.mxu0
      %v899 = vadd.f32 0.0, %v898
      %v900 = vpop.f32.mrf.mxu0
      %901 = vmatprep.mubr.f32.mxu0 0.0
      %902 = vmatmul.mubr.f32.gmra.mxu0 %v392
      %v903 = vpop.f32.mrf.mxu0
      %v904 = vadd.f32 0.0, %v903
      %v905 = vpop.f32.mrf.mxu0
      %906 = vmatprep.mubr.f32.mxu0 0.0
      %907 = vmatmul.mubr.f32.gmra.mxu0 %v395
      %v908 = vpop.f32.mrf.mxu0
      %v909 = vadd.f32 0.0, %v908
      %v910 = vpop.f32.mrf.mxu0
      %911 = vmatprep.mubr.f32.mxu0 0.0
      %912 = vmatmul.mubr.f32.gmra.mxu0 %v398
      %v913 = vpop.f32.mrf.mxu0
      %v914 = vadd.f32 0.0, %v913
      %v915 = vpop.f32.mrf.mxu0
      %916 = vmatprep.mubr.f32.mxu0 0.0
      %917 = vmatmul.mubr.f32.gmra.mxu0 %v401
      %v918 = vpop.f32.mrf.mxu0
      %v919 = vadd.f32 0.0, %v918
      %v920 = vpop.f32.mrf.mxu0
      %921 = vmatprep.mubr.f32.mxu0 0.0
      %922 = vmatmul.mubr.f32.gmra.mxu0 %v404
      %v923 = vpop.f32.mrf.mxu0
      %v924 = vadd.f32 0.0, %v923
      %v925 = vpop.f32.mrf.mxu0
      %926 = vmatprep.mubr.f32.mxu0 0.0
      %927 = vmatmul.mubr.f32.gmra.mxu0 %v407
      %v928 = vpop.f32.mrf.mxu0
      %v929 = vadd.f32 0.0, %v928
      %v930 = vpop.f32.mrf.mxu0
      %931 = vmatprep.mubr.f32.mxu0 0.0
      %932 = vmatmul.mubr.f32.gmra.mxu0 %v410
      %v933 = vpop.f32.mrf.mxu0
      %v934 = vadd.f32 0.0, %v933
      %v935 = vpop.f32.mrf.mxu0
      %936 = vmatprep.mubr.f32.mxu0 0.0
      %937 = vmatmul.mubr.f32.gmra.mxu0 %v413
      %v938 = vpop.f32.mrf.mxu0
      %v939 = vadd.f32 0.0, %v938
      %v940 = vpop.f32.mrf.mxu0
      %941 = vmatprep.mubr.f32.mxu0 0.0
      %942 = vmatmul.mubr.f32.gmra.mxu0 %v416
      %v943 = vpop.f32.mrf.mxu0
      %v944 = vadd.f32 0.0, %v943
      %v945 = vpop.f32.mrf.mxu0
      %946 = vmatprep.mubr.f32.mxu0 0.0
      %947 = vmatmul.mubr.f32.gmra.mxu0 %v419
      %v948 = vpop.f32.mrf.mxu0
      %v949 = vadd.f32 0.0, %v948
      %v950 = vpop.f32.mrf.mxu0
      %951 = vmatprep.mubr.f32.mxu0 0.0
      %952 = vmatmul.mubr.f32.gmra.mxu0 %v422
      %v953 = vpop.f32.mrf.mxu0
      %v954 = vadd.f32 0.0, %v953
      %v955 = vpop.f32.mrf.mxu0
      %956 = vmatprep.mubr.f32.mxu0 0.0
      %957 = vmatmul.mubr.f32.gmra.mxu0 %v425
      %v958 = vpop.f32.mrf.mxu0
      %v959 = vadd.f32 0.0, %v958
      %v960 = vpop.f32.mrf.mxu0
      %961 = vmatprep.mubr.f32.mxu0 0.0
      %962 = vmatmul.mubr.f32.gmra.mxu0 %v428
      %v963 = vpop.f32.mrf.mxu0
      %v964 = vadd.f32 0.0, %v963
      %v965 = vpop.f32.mrf.mxu0
      %966 = vmatprep.mubr.f32.mxu0 0.0
      %967 = vmatmul.mubr.f32.gmra.mxu0 %v431
      %v968 = vpop.f32.mrf.mxu0
      %v969 = vadd.f32 0.0, %v968
      %v970 = vpop.f32.mrf.mxu0
      %971 = vmatprep.mubr.f32.mxu0 0.0
      %972 = vmatmul.mubr.f32.gmra.mxu0 %v434
      %v973 = vpop.f32.mrf.mxu0
      %v974 = vadd.f32 0.0, %v973
      %v975 = vpop.f32.mrf.mxu0
      %976 = vmatprep.mubr.f32.mxu0 0.0
      %977 = vmatmul.mubr.f32.gmra.mxu0 %v437
      %v978 = vpop.f32.mrf.mxu0
      %v979 = vadd.f32 0.0, %v978
      %v980 = vpop.f32.mrf.mxu0
      %981 = vmatprep.mubr.f32.mxu0 0.0
      %982 = vmatmul.mubr.f32.gmra.mxu0 %v440
      %v983 = vpop.f32.mrf.mxu0
      %v984 = vadd.f32 0.0, %v983
      %v985 = vpop.f32.mrf.mxu0
      %986 = vmatprep.mubr.f32.mxu0 0.0
      %987 = vmatmul.mubr.f32.gmra.mxu0 %v443
      %v988 = vpop.f32.mrf.mxu0
      %v989 = vadd.f32 0.0, %v988
      %v990 = vpop.f32.mrf.mxu0
      %991 = vmatprep.mubr.f32.mxu0 0.0
      %992 = vmatmul.mubr.f32.gmra.mxu0 %v446
      %v993 = vpop.f32.mrf.mxu0
      %v994 = vadd.f32 0.0, %v993
      %v995 = vpop.f32.mrf.mxu0
      %996 = vmatprep.mubr.f32.mxu0 0.0
      %997 = vmatmul.mubr.f32.gmra.mxu0 %v449
      %v998 = vpop.f32.mrf.mxu0
      %v999 = vadd.f32 0.0, %v998
      %v1000 = vpop.f32.mrf.mxu0
      %1001 = vmatprep.mubr.f32.mxu0 0.0
      %1002 = vmatmul.mubr.f32.gmra.mxu0 %v452
      %v1003 = vpop.f32.mrf.mxu0
      %v1004 = vadd.f32 0.0, %v1003
      %v1005 = vpop.f32.mrf.mxu0
      %1006 = vmatprep.mubr.f32.mxu0 0.0
      %1007 = vmatmul.mubr.f32.gmra.mxu0 %v455
      %v1008 = vpop.f32.mrf.mxu0
      %v1009 = vadd.f32 0.0, %v1008
      %v1010 = vpop.f32.mrf.mxu0
      %1011 = vmatprep.mubr.f32.mxu0 0.0
      %1012 = vmatmul.mubr.f32.gmra.mxu0 %v458
      %v1013 = vpop.f32.mrf.mxu0
      %v1014 = vadd.f32 0.0, %v1013
      %v1015 = vpop.f32.mrf.mxu0
      %1016 = vmatprep.mubr.f32.mxu0 0.0
      %1017 = vmatmul.mubr.f32.gmra.mxu0 %v461
      %v1018 = vpop.f32.mrf.mxu0
      %v1019 = vadd.f32 0.0, %v1018
      %v1020 = vpop.f32.mrf.mxu0
      %1021 = vmatprep.mubr.f32.mxu0 0.0
      %1022 = vmatmul.mubr.f32.gmra.mxu0 %v464
      %v1023 = vpop.f32.mrf.mxu0
      %v1024 = vadd.f32 0.0, %v1023
      %v1025 = vpop.f32.mrf.mxu0
      %1026 = vmatprep.mubr.f32.mxu0 0.0
      %1027 = vmatmul.mubr.f32.gmra.mxu0 %v467
      %v1028 = vpop.f32.mrf.mxu0
      %v1029 = vadd.f32 0.0, %v1028
      %v1030 = vpop.f32.mrf.mxu0
      %1031 = vmatprep.mubr.f32.mxu0 0.0
      %1032 = vmatmul.mubr.f32.gmra.mxu0 %v470
      %v1033 = vpop.f32.mrf.mxu0
      %v1034 = vadd.f32 0.0, %v1033
      %v1035 = vpop.f32.mrf.mxu0
      %1036 = vmatprep.mubr.f32.mxu0 0.0
      %1037 = vmatmul.mubr.f32.gmra.mxu0 %v473
      %v1038 = vpop.f32.mrf.mxu0
      %v1039 = vadd.f32 0.0, %v1038
      %v1040 = vpop.f32.mrf.mxu0
      %1041 = vmatprep.mubr.f32.mxu0 0.0
      %1042 = vmatmul.mubr.f32.gmra.mxu0 %v476
      %v1043 = vpop.f32.mrf.mxu0
      %v1044 = vadd.f32 0.0, %v1043
      %v1045 = vpop.f32.mrf.mxu0
      %1046 = vmatprep.mubr.f32.mxu0 0.0
      %1047 = vmatmul.mubr.f32.gmra.mxu0 %v479
      %v1048 = vpop.f32.mrf.mxu0
      %v1049 = vadd.f32 0.0, %v1048
      %v1050 = vpop.f32.mrf.mxu0
      %1051 = vmatprep.mubr.f32.mxu0 0.0
      %1052 = vmatmul.mubr.f32.gmra.mxu0 %v482
      %v1053 = vpop.f32.mrf.mxu0
      %v1054 = vadd.f32 0.0, %v1053
      %v1055 = vpop.f32.mrf.mxu0
      %1056 = vmatprep.mubr.f32.mxu0 0.0
      %1057 = vmatmul.mubr.f32.gmra.mxu0 %v485
      %v1058 = vpop.f32.mrf.mxu0
      %v1059 = vadd.f32 0.0, %v1058
      %v1060 = vpop.f32.mrf.mxu0
      %1061 = vmatprep.mubr.f32.mxu0 0.0
      %1062 = vmatmul.mubr.f32.gmra.mxu0 %v488
      %v1063 = vpop.f32.mrf.mxu0
      %v1064 = vadd.f32 0.0, %v1063
      %v1065 = vpop.f32.mrf.mxu0
      %1066 = vmatprep.mubr.f32.mxu0 0.0
      %1067 = vmatmul.mubr.f32.gmra.mxu0 %v491
      %v1068 = vpop.f32.mrf.mxu0
      %v1069 = vadd.f32 0.0, %v1068
      %v1070 = vpop.f32.mrf.mxu0
      %1071 = vmatprep.mubr.f32.mxu0 0.0
      %1072 = vmatmul.mubr.f32.gmra.mxu0 %v494
      %v1073 = vpop.f32.mrf.mxu0
      %v1074 = vadd.f32 0.0, %v1073
      %v1075 = vpop.f32.mrf.mxu0
      %1076 = vmatprep.mubr.f32.mxu0 0.0
      %1077 = vmatmul.mubr.f32.gmra.mxu0 %v497
      %v1078 = vpop.f32.mrf.mxu0
      %v1079 = vadd.f32 0.0, %v1078
      %v1080 = vpop.f32.mrf.mxu0
      %1081 = vmatprep.mubr.f32.mxu0 0.0
      %1082 = vmatmul.mubr.f32.gmra.mxu0 %v500
      %v1083 = vpop.f32.mrf.mxu0
      %v1084 = vadd.f32 0.0, %v1083
      %v1085 = vpop.f32.mrf.mxu0
      %1086 = vmatprep.mubr.f32.mxu0 0.0
      %1087 = vmatmul.mubr.f32.gmra.mxu0 %v503
      %v1088 = vpop.f32.mrf.mxu0
      %v1089 = vadd.f32 0.0, %v1088
      %v1090 = vpop.f32.mrf.mxu0
      %1091 = vmatprep.mubr.f32.mxu0 0.0
      %1092 = vmatmul.mubr.f32.gmra.mxu0 %v506
      %v1093 = vpop.f32.mrf.mxu0
      %v1094 = vadd.f32 0.0, %v1093
      %v1095 = vpop.f32.mrf.mxu0
      %1096 = vmatprep.mubr.f32.mxu0 0.0
      %1097 = vmatmul.mubr.f32.gmra.mxu0 %v509
      %v1098 = vpop.f32.mrf.mxu0
      %v1099 = vadd.f32 0.0, %v1098
      %v1100 = vpop.f32.mrf.mxu0
      %1101 = vmatprep.mubr.f32.mxu0 0.0
      %1102 = vmatmul.mubr.f32.gmra.mxu0 %v512
      %v1103 = vpop.f32.mrf.mxu0
      %v1104 = vadd.f32 0.0, %v1103
      %v1105 = vpop.f32.mrf.mxu0
      %1106 = vmatprep.mubr.f32.mxu0 0.0
      %1107 = vmatmul.mubr.f32.gmra.mxu0 %v515
      %v1108 = vpop.f32.mrf.mxu0
      %v1109 = vadd.f32 0.0, %v1108
      %v1110 = vpop.f32.mrf.mxu0
      %1111 = vmatprep.mubr.f32.mxu0 0.0
      %1112 = vmatmul.mubr.f32.gmra.mxu0 %v518
      %v1113 = vpop.f32.mrf.mxu0
      %v1114 = vadd.f32 0.0, %v1113
      %v1115 = vpop.f32.mrf.mxu0
      %1116 = vmatprep.mubr.f32.mxu0 0.0
      %1117 = vmatmul.mubr.f32.gmra.mxu0 %v521
      %v1118 = vpop.f32.mrf.mxu0
      %v1119 = vadd.f32 0.0, %v1118
      %v1120 = vpop.f32.mrf.mxu0
      %1121 = vmatprep.mubr.f32.mxu0 0.0
      %1122 = vmatmul.mubr.f32.gmra.mxu0 %v524
      %v1123 = vpop.f32.mrf.mxu0
      %v1124 = vadd.f32 0.0, %v1123
      %v1125 = vpop.f32.mrf.mxu0
      %1126 = vmatprep.mubr.f32.mxu0 0.0
      %1127 = vmatmul.mubr.f32.gmra.mxu0 %v527
      %v1128 = vpop.f32.mrf.mxu0
      %v1129 = vadd.f32 0.0, %v1128
      %v1130 = vpop.f32.mrf.mxu0
      %1131 = vmatprep.mubr.f32.mxu0 0.0
      %1132 = vmatmul.mubr.f32.gmra.mxu0 %v530
      %v1133 = vpop.f32.mrf.mxu0
      %v1134 = vadd.f32 0.0, %v1133
      %v1135 = vpop.f32.mrf.mxu0
      %1136 = vmatprep.mubr.f32.mxu0 0.0
      %1137 = vmatmul.mubr.f32.gmra.mxu0 %v533
      %v1138 = vpop.f32.mrf.mxu0
      %v1139 = vadd.f32 0.0, %v1138
      %v1140 = vpop.f32.mrf.mxu0
      %1141 = vmatprep.mubr.f32.mxu0 0.0
      %1142 = vmatmul.mubr.f32.gmra.mxu0 %v536
      %v1143 = vpop.f32.mrf.mxu0
      %v1144 = vadd.f32 0.0, %v1143
      %v1145 = vpop.f32.mrf.mxu0
      %1146 = vmatprep.mubr.f32.mxu0 0.0
      %1147 = vmatmul.mubr.f32.gmra.mxu0 %v539
      %v1148 = vpop.f32.mrf.mxu0
      %v1149 = vadd.f32 0.0, %v1148
      %v1150 = vpop.f32.mrf.mxu0
      %1151 = vmatprep.mubr.f32.mxu0 0.0
      %1152 = vmatmul.mubr.f32.gmra.mxu0 %v542
      %v1153 = vpop.f32.mrf.mxu0
      %v1154 = vadd.f32 0.0, %v1153
      %v1155 = vpop.f32.mrf.mxu0
      %1156 = vmatprep.mubr.f32.mxu0 0.0
      %1157 = vmatmul.mubr.f32.gmra.mxu0 %v545
      %v1158 = vpop.f32.mrf.mxu0
      %v1159 = vadd.f32 0.0, %v1158
      %v1160 = vpop.f32.mrf.mxu0
      %1161 = vmatprep.mubr.f32.mxu0 0.0
      %1162 = vmatmul.mubr.f32.gmra.mxu0 %v548
      %v1163 = vpop.f32.mrf.mxu0
      %v1164 = vadd.f32 0.0, %v1163
      %v1165 = vpop.f32.mrf.mxu0
      %1166 = vmatprep.mubr.f32.mxu0 0.0
      %1167 = vmatmul.mubr.f32.gmra.mxu0 %v551
      %v1168 = vpop.f32.mrf.mxu0
      %v1169 = vadd.f32 0.0, %v1168
      %v1170 = vpop.f32.mrf.mxu0
      %1171 = vmatprep.mubr.f32.mxu0 0.0
      %1172 = vmatmul.mubr.f32.gmra.mxu0 %v554
      %v1173 = vpop.f32.mrf.mxu0
      %v1174 = vadd.f32 0.0, %v1173
      %v1175 = vpop.f32.mrf.mxu0
      %1176 = vmatprep.mubr.f32.mxu0 0.0
      %1177 = vmatmul.mubr.f32.gmra.mxu0 %v557
      %v1178 = vpop.f32.mrf.mxu0
      %v1179 = vadd.f32 0.0, %v1178
      %v1180 = vpop.f32.mrf.mxu0
      %1181 = vmatprep.mubr.f32.mxu0 0.0
      %1182 = vmatmul.mubr.f32.gmra.mxu0 %v560
      %v1183 = vpop.f32.mrf.mxu0
      %v1184 = vadd.f32 0.0, %v1183
      %v1185 = vpop.f32.mrf.mxu0
      %1186 = vmatprep.mubr.f32.mxu0 0.0
      %1187 = vmatmul.mubr.f32.gmra.mxu0 %v563
      %v1188 = vpop.f32.mrf.mxu0
      %v1189 = vadd.f32 0.0, %v1188
      %v1190 = vpop.f32.mrf.mxu0
      %1191 = vmatprep.mubr.f32.mxu0 0.0
      %1192 = vmatmul.mubr.f32.gmra.mxu0 %v566
      %v1193 = vpop.f32.mrf.mxu0
      %v1194 = vadd.f32 0.0, %v1193
      %v1195 = vpop.f32.mrf.mxu0
      %1196 = vmatprep.mubr.f32.mxu0 0.0
      %1197 = vmatmul.mubr.f32.gmra.mxu0 %v569
      %v1198 = vpop.f32.mrf.mxu0
      %v1199 = vadd.f32 0.0, %v1198
      %v1200 = vpop.f32.mrf.mxu0
      %1201 = vmatprep.mubr.f32.mxu0 0.0
      %1202 = vmatmul.mubr.f32.gmra.mxu0 %v572
      %v1203 = vpop.f32.mrf.mxu0
      %v1204 = vadd.f32 0.0, %v1203
      %v1205 = vpop.f32.mrf.mxu0
      %1206 = vmatprep.mubr.f32.mxu0 0.0
      %1207 = vmatmul.mubr.f32.gmra.mxu0 %v575
      %v1208 = vpop.f32.mrf.mxu0
      %v1209 = vadd.f32 0.0, %v1208
      %v1210 = vpop.f32.mrf.mxu0
      %1211 = vmatprep.mubr.f32.mxu0 0.0
      %1212 = vmatmul.mubr.f32.gmra.mxu0 %v578
      %v1213 = vpop.f32.mrf.mxu0
      %v1214 = vadd.f32 0.0, %v1213
      %v1215 = vpop.f32.mrf.mxu0
      %1216 = vmatprep.mubr.f32.mxu0 0.0
      %1217 = vmatmul.mubr.f32.gmra.mxu0 %v581
      %v1218 = vpop.f32.mrf.mxu0
      %v1219 = vadd.f32 0.0, %v1218
      %v1220 = vpop.f32.mrf.mxu0
      %1221 = vmatprep.mubr.f32.mxu0 0.0
      %1222 = vmatmul.mubr.f32.gmra.mxu0 %v584
      %v1223 = vpop.f32.mrf.mxu0
      %v1224 = vadd.f32 0.0, %v1223
      %v1225 = vpop.f32.mrf.mxu0
      %1226 = vmatprep.mubr.f32.mxu0 0.0
      %1227 = vmatmul.mubr.f32.gmra.mxu0 %v587
      %v1228 = vpop.f32.mrf.mxu0
      %v1229 = vadd.f32 0.0, %v1228
      %v1230 = vpop.f32.mrf.mxu0
      %1231 = vmatprep.mubr.f32.mxu0 0.0
      %1232 = vmatmul.mubr.f32.gmra.mxu0 %v590
      %v1233 = vpop.f32.mrf.mxu0
      %v1234 = vadd.f32 0.0, %v1233
      %v1235 = vpop.f32.mrf.mxu0
      %1236 = vmatprep.mubr.f32.mxu0 0.0
      %1237 = vmatmul.mubr.f32.gmra.mxu0 %v593
      %v1238 = vpop.f32.mrf.mxu0
      %v1239 = vadd.f32 0.0, %v1238
      %v1240 = vpop.f32.mrf.mxu0
      %1241 = vmatprep.mubr.f32.mxu0 0.0
      %1242 = vmatmul.mubr.f32.gmra.mxu0 %v596
      %v1243 = vpop.f32.mrf.mxu0
      %v1244 = vadd.f32 0.0, %v1243
      %v1245 = vpop.f32.mrf.mxu0
      %1246 = vmatprep.mubr.f32.mxu0 0.0
      %1247 = vmatmul.mubr.f32.gmra.mxu0 %v599
      %v1248 = vpop.f32.mrf.mxu0
      %v1249 = vadd.f32 0.0, %v1248
      %v1250 = vpop.f32.mrf.mxu0
      %1251 = vmatprep.mubr.f32.mxu0 0.0
      %1252 = vmatmul.mubr.f32.gmra.mxu0 %v602
      %v1253 = vpop.f32.mrf.mxu0
      %v1254 = vadd.f32 0.0, %v1253
      %v1255 = vpop.f32.mrf.mxu0
      %1256 = vmatprep.mubr.f32.mxu0 0.0
      %1257 = vmatmul.mubr.f32.gmra.mxu0 %v605
      %v1258 = vpop.f32.mrf.mxu0
      %v1259 = vadd.f32 0.0, %v1258
      %v1260 = vpop.f32.mrf.mxu0
      %1261 = vmatprep.mubr.f32.mxu0 0.0
      %1262 = vmatmul.mubr.f32.gmra.mxu0 %v608
      %v1263 = vpop.f32.mrf.mxu0
      %v1264 = vadd.f32 0.0, %v1263
      %v1265 = vpop.f32.mrf.mxu0
      %1266 = vmatprep.mubr.f32.mxu0 0.0
      %1267 = vmatmul.mubr.f32.gmra.mxu0 %v611
      %v1268 = vpop.f32.mrf.mxu0
      %v1269 = vadd.f32 0.0, %v1268
      %v1270 = vpop.f32.mrf.mxu0
      %1271 = vmatprep.mubr.f32.mxu0 0.0
      %1272 = vmatmul.mubr.f32.gmra.mxu0 %v614
      %v1273 = vpop.f32.mrf.mxu0
      %v1274 = vadd.f32 0.0, %v1273
      %v1275 = vpop.f32.mrf.mxu0
      %1276 = vmatprep.mubr.f32.mxu0 0.0
      %1277 = vmatmul.mubr.f32.gmra.mxu0 %v617
      %v1278 = vpop.f32.mrf.mxu0
      %v1279 = vadd.f32 0.0, %v1278
      %v1280 = vpop.f32.mrf.mxu0
      %1281 = vmatprep.mubr.f32.mxu0 0.0
      %1282 = vmatmul.mubr.f32.gmra.mxu0 %v620
      %v1283 = vpop.f32.mrf.mxu0
      %v1284 = vadd.f32 0.0, %v1283
      %v1285 = vpop.f32.mrf.mxu0
      %1286 = vmatprep.mubr.f32.mxu0 0.0
      %1287 = vmatmul.mubr.f32.gmra.mxu0 %v623
      %v1288 = vpop.f32.mrf.mxu0
      %v1289 = vadd.f32 0.0, %v1288
      %v1290 = vpop.f32.mrf.mxu0
      %1291 = vmatprep.mubr.f32.mxu0 0.0
      %1292 = vmatmul.mubr.f32.gmra.mxu0 %v626
      %v1293 = vpop.f32.mrf.mxu0
      %v1294 = vadd.f32 0.0, %v1293
      %v1295 = vpop.f32.mrf.mxu0
      %1296 = vmatprep.mubr.f32.mxu0 0.0
      %1297 = vmatmul.mubr.f32.gmra.mxu0 %v629
      %v1298 = vpop.f32.mrf.mxu0
      %v1299 = vadd.f32 0.0, %v1298
      %v1300 = vpop.f32.mrf.mxu0
      %1301 = vmatprep.mubr.f32.mxu0 0.0
      %1302 = vmatmul.mubr.f32.gmra.mxu0 %v632
      %v1303 = vpop.f32.mrf.mxu0
      %v1304 = vadd.f32 0.0, %v1303
      %v1305 = vpop.f32.mrf.mxu0
      %1306 = vmatprep.mubr.f32.mxu0 0.0
      %1307 = vmatmul.mubr.f32.gmra.mxu0 %v635
      %v1308 = vpop.f32.mrf.mxu0
      %v1309 = vadd.f32 0.0, %v1308
      %v1310 = vpop.f32.mrf.mxu0
      %1311 = vmatprep.mubr.f32.mxu0 0.0
      %1312 = vmatmul.mubr.f32.gmra.mxu0 %v638
      %v1313 = vpop.f32.mrf.mxu0
      %v1314 = vadd.f32 0.0, %v1313
      %v1315 = vpop.f32.mrf.mxu0
      %1316 = vmatprep.mubr.f32.mxu0 0.0
      %1317 = vmatmul.mubr.f32.gmra.mxu0 %v641
      %v1318 = vpop.f32.mrf.mxu0
      %v1319 = vadd.f32 0.0, %v1318
      %v1320 = vpop.f32.mrf.mxu0
      %1321 = vmatprep.mubr.f32.mxu0 0.0
      %1322 = vmatmul.mubr.f32.gmra.mxu0 %v644
      %v1323 = vpop.f32.mrf.mxu0
      %v1324 = vadd.f32 0.0, %v1323
      %v1325 = vpop.f32.mrf.mxu0
      %1326 = vmatprep.mubr.f32.mxu0 0.0
      %1327 = vmatmul.mubr.f32.gmra.mxu0 %v647
      %v1328 = vpop.f32.mrf.mxu0
      %v1329 = vadd.f32 0.0, %v1328
      %v1330 = vpop.f32.mrf.mxu0
      %1331 = vmatprep.mubr.f32.mxu0 0.0
      %1332 = vmatmul.mubr.f32.gmra.mxu0 %v650
      %v1333 = vpop.f32.mrf.mxu0
      %v1334 = vadd.f32 0.0, %v1333
      %v1335 = vpop.f32.mrf.mxu0
      %1336 = vmatprep.mubr.f32.mxu0 0.0
      %1337 = vmatmul.mubr.f32.gmra.mxu0 %v653
      %v1338 = vpop.f32.mrf.mxu0
      %v1339 = vadd.f32 0.0, %v1338
      %v1340 = vpop.f32.mrf.mxu0
      %1341 = vmatprep.mubr.f32.mxu0 0.0
      %1342 = vmatmul.mubr.f32.gmra.mxu0 %v656
      %v1343 = vpop.f32.mrf.mxu0
      %v1344 = vadd.f32 0.0, %v1343
      %v1345 = vpop.f32.mrf.mxu0
      %1346 = vmatprep.mubr.f32.mxu0 0.0
      %1347 = vmatmul.mubr.f32.gmra.mxu0 %v659
      %v1348 = vpop.f32.mrf.mxu0
      %v1349 = vadd.f32 0.0, %v1348
      %v1350 = vpop.f32.mrf.mxu0
      %1351 = vmatprep.mubr.f32.mxu0 0.0
      %1352 = vmatmul.mubr.f32.gmra.mxu0 %v662
      %v1353 = vpop.f32.mrf.mxu0
      %v1354 = vadd.f32 0.0, %v1353
      %v1355 = vpop.f32.mrf.mxu0
      %1356 = vmatprep.mubr.f32.mxu0 0.0
      %1357 = vmatmul.mubr.f32.gmra.mxu0 %v665
      %v1358 = vpop.f32.mrf.mxu0
      %v1359 = vadd.f32 0.0, %v1358
      %v1360 = vpop.f32.mrf.mxu0
      %1361 = vmatprep.mubr.f32.mxu0 0.0
      %1362 = vmatmul.mubr.f32.gmra.mxu0 %v668
      %v1363 = vpop.f32.mrf.mxu0
      %v1364 = vadd.f32 0.0, %v1363
      %v1365 = vpop.f32.mrf.mxu0
      %1366 = vmatprep.mubr.f32.mxu0 0.0
      %1367 = vmatmul.mubr.f32.gmra.mxu0 %v671
      %v1368 = vpop.f32.mrf.mxu0
      %v1369 = vadd.f32 0.0, %v1368
      %v1370 = vpop.f32.mrf.mxu0
      %1371 = vmatprep.mubr.f32.mxu0 0.0
      %1372 = vmatmul.mubr.f32.gmra.mxu0 %v674
      %v1373 = vpop.f32.mrf.mxu0
      %v1374 = vadd.f32 0.0, %v1373
      %v1375 = vpop.f32.mrf.mxu0
      %1376 = vmatprep.mubr.f32.mxu0 0.0
      %1377 = vmatmul.mubr.f32.gmra.mxu0 %v677
      %v1378 = vpop.f32.mrf.mxu0
      %v1379 = vadd.f32 0.0, %v1378
      %v1380 = vpop.f32.mrf.mxu0
      %1381 = vmatprep.mubr.f32.mxu0 0.0
      %1382 = vmatmul.mubr.f32.gmra.mxu0 %v680
      %v1383 = vpop.f32.mrf.mxu0
      %v1384 = vadd.f32 0.0, %v1383
      %v1385 = vpop.f32.mrf.mxu0
      %1386 = vmatprep.mubr.f32.mxu0 0.0
      %1387 = vmatmul.mubr.f32.gmra.mxu0 %v683
      %v1388 = vpop.f32.mrf.mxu0
      %v1389 = vadd.f32 0.0, %v1388
      %v1390 = vpop.f32.mrf.mxu0
      %1391 = vmatprep.mubr.f32.mxu0 0.0
      %1392 = vmatmul.mubr.f32.gmra.mxu0 %v686
      %v1393 = vpop.f32.mrf.mxu0
      %v1394 = vadd.f32 0.0, %v1393
      %v1395 = vpop.f32.mrf.mxu0
      %1396 = vdwg.mxu0
      %s1397 = scalar_lea.vmem %s165, 1024
      %v1398 = vld [vmem:[%s1397] sm:$0xff]
      %v1399 = vld [vmem:[%s1397 + $0x8] sm:$0xff]
      %v1400 = vld [vmem:[%s1397 + $0x10] sm:$0xff]
      %v1401 = vld [vmem:[%s1397 + $0x18] sm:$0xff]
      %v1402 = vld [vmem:[%s1397 + $0x20] sm:$0xff]
      %v1403 = vld [vmem:[%s1397 + $0x28] sm:$0xff]
      %v1404 = vld [vmem:[%s1397 + $0x30] sm:$0xff]
      %v1405 = vld [vmem:[%s1397 + $0x38] sm:$0xff]
      %v1406 = vld [vmem:[%s1397 + $0x40] sm:$0xff]
      %v1407 = vld [vmem:[%s1397 + $0x48] sm:$0xff]
      %v1408 = vld [vmem:[%s1397 + $0x50] sm:$0xff]
      %v1409 = vld [vmem:[%s1397 + $0x58] sm:$0xff]
      %v1410 = vld [vmem:[%s1397 + $0x60] sm:$0xff]
      %v1411 = vld [vmem:[%s1397 + $0x68] sm:$0xff]
      %v1412 = vld [vmem:[%s1397 + $0x70] sm:$0xff]
      %v1413 = vld [vmem:[%s1397 + $0x78] sm:$0xff]
      %v1414 = vld [vmem:[%s1397 + $0x80] sm:$0xff]
      %v1415 = vld [vmem:[%s1397 + $0x88] sm:$0xff]
      %v1416 = vld [vmem:[%s1397 + $0x90] sm:$0xff]
      %v1417 = vld [vmem:[%s1397 + $0x98] sm:$0xff]
      %v1418 = vld [vmem:[%s1397 + $0xa0] sm:$0xff]
      %v1419 = vld [vmem:[%s1397 + $0xa8] sm:$0xff]
      %v1420 = vld [vmem:[%s1397 + $0xb0] sm:$0xff]
      %v1421 = vld [vmem:[%s1397 + $0xb8] sm:$0xff]
      %v1422 = vld [vmem:[%s1397 + $0xc0] sm:$0xff]
      %v1423 = vld [vmem:[%s1397 + $0xc8] sm:$0xff]
      %v1424 = vld [vmem:[%s1397 + $0xd0] sm:$0xff]
      %v1425 = vld [vmem:[%s1397 + $0xd8] sm:$0xff]
      %v1426 = vld [vmem:[%s1397 + $0xe0] sm:$0xff]
      %v1427 = vld [vmem:[%s1397 + $0xe8] sm:$0xff]
      %v1428 = vld [vmem:[%s1397 + $0xf0] sm:$0xff]
      %v1429 = vld [vmem:[%s1397 + $0xf8] sm:$0xff]
      %v1430 = vld [vmem:[%s1397 + $0x100] sm:$0xff]
      %v1431 = vld [vmem:[%s1397 + $0x108] sm:$0xff]
      %v1432 = vld [vmem:[%s1397 + $0x110] sm:$0xff]
      %v1433 = vld [vmem:[%s1397 + $0x118] sm:$0xff]
      %v1434 = vld [vmem:[%s1397 + $0x120] sm:$0xff]
      %v1435 = vld [vmem:[%s1397 + $0x128] sm:$0xff]
      %v1436 = vld [vmem:[%s1397 + $0x130] sm:$0xff]
      %v1437 = vld [vmem:[%s1397 + $0x138] sm:$0xff]
      %v1438 = vld [vmem:[%s1397 + $0x140] sm:$0xff]
      %v1439 = vld [vmem:[%s1397 + $0x148] sm:$0xff]
      %v1440 = vld [vmem:[%s1397 + $0x150] sm:$0xff]
      %v1441 = vld [vmem:[%s1397 + $0x158] sm:$0xff]
      %v1442 = vld [vmem:[%s1397 + $0x160] sm:$0xff]
      %v1443 = vld [vmem:[%s1397 + $0x168] sm:$0xff]
      %v1444 = vld [vmem:[%s1397 + $0x170] sm:$0xff]
      %v1445 = vld [vmem:[%s1397 + $0x178] sm:$0xff]
      %v1446 = vld [vmem:[%s1397 + $0x180] sm:$0xff]
      %v1447 = vld [vmem:[%s1397 + $0x188] sm:$0xff]
      %v1448 = vld [vmem:[%s1397 + $0x190] sm:$0xff]
      %v1449 = vld [vmem:[%s1397 + $0x198] sm:$0xff]
      %v1450 = vld [vmem:[%s1397 + $0x1a0] sm:$0xff]
      %v1451 = vld [vmem:[%s1397 + $0x1a8] sm:$0xff]
      %v1452 = vld [vmem:[%s1397 + $0x1b0] sm:$0xff]
      %v1453 = vld [vmem:[%s1397 + $0x1b8] sm:$0xff]
      %v1454 = vld [vmem:[%s1397 + $0x1c0] sm:$0xff]
      %v1455 = vld [vmem:[%s1397 + $0x1c8] sm:$0xff]
      %v1456 = vld [vmem:[%s1397 + $0x1d0] sm:$0xff]
      %v1457 = vld [vmem:[%s1397 + $0x1d8] sm:$0xff]
      %v1458 = vld [vmem:[%s1397 + $0x1e0] sm:$0xff]
      %v1459 = vld [vmem:[%s1397 + $0x1e8] sm:$0xff]
      %v1460 = vld [vmem:[%s1397 + $0x1f0] sm:$0xff]
      %v1461 = vld [vmem:[%s1397 + $0x1f8] sm:$0xff]
      %v1462 = vld [vmem:[%s1397 + $0x200] sm:$0xff]
      %v1463 = vld [vmem:[%s1397 + $0x208] sm:$0xff]
      %v1464 = vld [vmem:[%s1397 + $0x210] sm:$0xff]
      %v1465 = vld [vmem:[%s1397 + $0x218] sm:$0xff]
      %v1466 = vld [vmem:[%s1397 + $0x220] sm:$0xff]
      %v1467 = vld [vmem:[%s1397 + $0x228] sm:$0xff]
      %v1468 = vld [vmem:[%s1397 + $0x230] sm:$0xff]
      %v1469 = vld [vmem:[%s1397 + $0x238] sm:$0xff]
      %v1470 = vld [vmem:[%s1397 + $0x240] sm:$0xff]
      %v1471 = vld [vmem:[%s1397 + $0x248] sm:$0xff]
      %v1472 = vld [vmem:[%s1397 + $0x250] sm:$0xff]
      %v1473 = vld [vmem:[%s1397 + $0x258] sm:$0xff]
      %v1474 = vld [vmem:[%s1397 + $0x260] sm:$0xff]
      %v1475 = vld [vmem:[%s1397 + $0x268] sm:$0xff]
      %v1476 = vld [vmem:[%s1397 + $0x270] sm:$0xff]
      %v1477 = vld [vmem:[%s1397 + $0x278] sm:$0xff]
      %v1478 = vld [vmem:[%s1397 + $0x280] sm:$0xff]
      %v1479 = vld [vmem:[%s1397 + $0x288] sm:$0xff]
      %v1480 = vld [vmem:[%s1397 + $0x290] sm:$0xff]
      %v1481 = vld [vmem:[%s1397 + $0x298] sm:$0xff]
      %v1482 = vld [vmem:[%s1397 + $0x2a0] sm:$0xff]
      %v1483 = vld [vmem:[%s1397 + $0x2a8] sm:$0xff]
      %v1484 = vld [vmem:[%s1397 + $0x2b0] sm:$0xff]
      %v1485 = vld [vmem:[%s1397 + $0x2b8] sm:$0xff]
      %v1486 = vld [vmem:[%s1397 + $0x2c0] sm:$0xff]
      %v1487 = vld [vmem:[%s1397 + $0x2c8] sm:$0xff]
      %v1488 = vld [vmem:[%s1397 + $0x2d0] sm:$0xff]
      %v1489 = vld [vmem:[%s1397 + $0x2d8] sm:$0xff]
      %v1490 = vld [vmem:[%s1397 + $0x2e0] sm:$0xff]
      %v1491 = vld [vmem:[%s1397 + $0x2e8] sm:$0xff]
      %v1492 = vld [vmem:[%s1397 + $0x2f0] sm:$0xff]
      %v1493 = vld [vmem:[%s1397 + $0x2f8] sm:$0xff]
      %v1494 = vld [vmem:[%s1397 + $0x300] sm:$0xff]
      %v1495 = vld [vmem:[%s1397 + $0x308] sm:$0xff]
      %v1496 = vld [vmem:[%s1397 + $0x310] sm:$0xff]
      %v1497 = vld [vmem:[%s1397 + $0x318] sm:$0xff]
      %v1498 = vld [vmem:[%s1397 + $0x320] sm:$0xff]
      %v1499 = vld [vmem:[%s1397 + $0x328] sm:$0xff]
      %v1500 = vld [vmem:[%s1397 + $0x330] sm:$0xff]
      %v1501 = vld [vmem:[%s1397 + $0x338] sm:$0xff]
      %v1502 = vld [vmem:[%s1397 + $0x340] sm:$0xff]
      %v1503 = vld [vmem:[%s1397 + $0x348] sm:$0xff]
      %v1504 = vld [vmem:[%s1397 + $0x350] sm:$0xff]
      %v1505 = vld [vmem:[%s1397 + $0x358] sm:$0xff]
      %v1506 = vld [vmem:[%s1397 + $0x360] sm:$0xff]
      %v1507 = vld [vmem:[%s1397 + $0x368] sm:$0xff]
      %v1508 = vld [vmem:[%s1397 + $0x370] sm:$0xff]
      %v1509 = vld [vmem:[%s1397 + $0x378] sm:$0xff]
      %v1510 = vld [vmem:[%s1397 + $0x380] sm:$0xff]
      %v1511 = vld [vmem:[%s1397 + $0x388] sm:$0xff]
      %v1512 = vld [vmem:[%s1397 + $0x390] sm:$0xff]
      %v1513 = vld [vmem:[%s1397 + $0x398] sm:$0xff]
      %v1514 = vld [vmem:[%s1397 + $0x3a0] sm:$0xff]
      %v1515 = vld [vmem:[%s1397 + $0x3a8] sm:$0xff]
      %v1516 = vld [vmem:[%s1397 + $0x3b0] sm:$0xff]
      %v1517 = vld [vmem:[%s1397 + $0x3b8] sm:$0xff]
      %v1518 = vld [vmem:[%s1397 + $0x3c0] sm:$0xff]
      %v1519 = vld [vmem:[%s1397 + $0x3c8] sm:$0xff]
      %v1520 = vld [vmem:[%s1397 + $0x3d0] sm:$0xff]
      %v1521 = vld [vmem:[%s1397 + $0x3d8] sm:$0xff]
      %v1522 = vld [vmem:[%s1397 + $0x3e0] sm:$0xff]
      %v1523 = vld [vmem:[%s1397 + $0x3e8] sm:$0xff]
      %v1524 = vld [vmem:[%s1397 + $0x3f0] sm:$0xff]
      %v1525 = vld [vmem:[%s1397 + $0x3f8] sm:$0xff]
      %v1527 = vsel %vm303, %v1398, 0
      %v1530 = vsel %vm303, %v1399, 0
      %v1533 = vsel %vm303, %v1400, 0
      %v1536 = vsel %vm303, %v1401, 0
      %v1539 = vsel %vm303, %v1402, 0
      %v1542 = vsel %vm303, %v1403, 0
      %v1545 = vsel %vm303, %v1404, 0
      %v1548 = vsel %vm303, %v1405, 0
      %v1551 = vsel %vm303, %v1406, 0
      %v1554 = vsel %vm303, %v1407, 0
      %v1557 = vsel %vm303, %v1408, 0
      %v1560 = vsel %vm303, %v1409, 0
      %v1563 = vsel %vm303, %v1410, 0
      %v1566 = vsel %vm303, %v1411, 0
      %v1569 = vsel %vm303, %v1412, 0
      %v1572 = vsel %vm303, %v1413, 0
      %v1575 = vsel %vm303, %v1414, 0
      %v1578 = vsel %vm303, %v1415, 0
      %v1581 = vsel %vm303, %v1416, 0
      %v1584 = vsel %vm303, %v1417, 0
      %v1587 = vsel %vm303, %v1418, 0
      %v1590 = vsel %vm303, %v1419, 0
      %v1593 = vsel %vm303, %v1420, 0
      %v1596 = vsel %vm303, %v1421, 0
      %v1599 = vsel %vm303, %v1422, 0
      %v1602 = vsel %vm303, %v1423, 0
      %v1605 = vsel %vm303, %v1424, 0
      %v1608 = vsel %vm303, %v1425, 0
      %v1611 = vsel %vm303, %v1426, 0
      %v1614 = vsel %vm303, %v1427, 0
      %v1617 = vsel %vm303, %v1428, 0
      %v1620 = vsel %vm303, %v1429, 0
      %v1623 = vsel %vm303, %v1430, 0
      %v1626 = vsel %vm303, %v1431, 0
      %v1629 = vsel %vm303, %v1432, 0
      %v1632 = vsel %vm303, %v1433, 0
      %v1635 = vsel %vm303, %v1434, 0
      %v1638 = vsel %vm303, %v1435, 0
      %v1641 = vsel %vm303, %v1436, 0
      %v1644 = vsel %vm303, %v1437, 0
      %v1647 = vsel %vm303, %v1438, 0
      %v1650 = vsel %vm303, %v1439, 0
      %v1653 = vsel %vm303, %v1440, 0
      %v1656 = vsel %vm303, %v1441, 0
      %v1659 = vsel %vm303, %v1442, 0
      %v1662 = vsel %vm303, %v1443, 0
      %v1665 = vsel %vm303, %v1444, 0
      %v1668 = vsel %vm303, %v1445, 0
      %v1671 = vsel %vm303, %v1446, 0
      %v1674 = vsel %vm303, %v1447, 0
      %v1677 = vsel %vm303, %v1448, 0
      %v1680 = vsel %vm303, %v1449, 0
      %v1683 = vsel %vm303, %v1450, 0
      %v1686 = vsel %vm303, %v1451, 0
      %v1689 = vsel %vm303, %v1452, 0
      %v1692 = vsel %vm303, %v1453, 0
      %v1695 = vsel %vm303, %v1454, 0
      %v1698 = vsel %vm303, %v1455, 0
      %v1701 = vsel %vm303, %v1456, 0
      %v1704 = vsel %vm303, %v1457, 0
      %v1707 = vsel %vm303, %v1458, 0
      %v1710 = vsel %vm303, %v1459, 0
      %v1713 = vsel %vm303, %v1460, 0
      %v1716 = vsel %vm303, %v1461, 0
      %v1719 = vsel %vm303, %v1462, 0
      %v1722 = vsel %vm303, %v1463, 0
      %v1725 = vsel %vm303, %v1464, 0
      %v1728 = vsel %vm303, %v1465, 0
      %v1731 = vsel %vm303, %v1466, 0
      %v1734 = vsel %vm303, %v1467, 0
      %v1737 = vsel %vm303, %v1468, 0
      %v1740 = vsel %vm303, %v1469, 0
      %v1743 = vsel %vm303, %v1470, 0
      %v1746 = vsel %vm303, %v1471, 0
      %v1749 = vsel %vm303, %v1472, 0
      %v1752 = vsel %vm303, %v1473, 0
      %v1755 = vsel %vm303, %v1474, 0
      %v1758 = vsel %vm303, %v1475, 0
      %v1761 = vsel %vm303, %v1476, 0
      %v1764 = vsel %vm303, %v1477, 0
      %v1767 = vsel %vm303, %v1478, 0
      %v1770 = vsel %vm303, %v1479, 0
      %v1773 = vsel %vm303, %v1480, 0
      %v1776 = vsel %vm303, %v1481, 0
      %v1779 = vsel %vm303, %v1482, 0
      %v1782 = vsel %vm303, %v1483, 0
      %v1785 = vsel %vm303, %v1484, 0
      %v1788 = vsel %vm303, %v1485, 0
      %v1791 = vsel %vm303, %v1486, 0
      %v1794 = vsel %vm303, %v1487, 0
      %v1797 = vsel %vm303, %v1488, 0
      %v1800 = vsel %vm303, %v1489, 0
      %v1803 = vsel %vm303, %v1490, 0
      %v1806 = vsel %vm303, %v1491, 0
      %v1809 = vsel %vm303, %v1492, 0
      %v1812 = vsel %vm303, %v1493, 0
      %v1815 = vsel %vm303, %v1494, 0
      %v1818 = vsel %vm303, %v1495, 0
      %v1821 = vsel %vm303, %v1496, 0
      %v1824 = vsel %vm303, %v1497, 0
      %v1827 = vsel %vm303, %v1498, 0
      %v1830 = vsel %vm303, %v1499, 0
      %v1833 = vsel %vm303, %v1500, 0
      %v1836 = vsel %vm303, %v1501, 0
      %v1839 = vsel %vm303, %v1502, 0
      %v1842 = vsel %vm303, %v1503, 0
      %v1845 = vsel %vm303, %v1504, 0
      %v1848 = vsel %vm303, %v1505, 0
      %v1851 = vsel %vm303, %v1506, 0
      %v1854 = vsel %vm303, %v1507, 0
      %v1857 = vsel %vm303, %v1508, 0
      %v1860 = vsel %vm303, %v1509, 0
      %v1863 = vsel %vm303, %v1510, 0
      %v1866 = vsel %vm303, %v1511, 0
      %v1869 = vsel %vm303, %v1512, 0
      %v1872 = vsel %vm303, %v1513, 0
      %v1875 = vsel %vm303, %v1514, 0
      %v1878 = vsel %vm303, %v1515, 0
      %v1881 = vsel %vm303, %v1516, 0
      %v1884 = vsel %vm303, %v1517, 0
      %v1887 = vsel %vm303, %v1518, 0
      %v1890 = vsel %vm303, %v1519, 0
      %v1893 = vsel %vm303, %v1520, 0
      %v1896 = vsel %vm303, %v1521, 0
      %v1899 = vsel %vm303, %v1522, 0
      %v1902 = vsel %vm303, %v1523, 0
      %v1905 = vsel %vm303, %v1524, 0
      %v1908 = vsel %vm303, %v1525, 0
      %1910 = vmatprep.subr.mxu0 0.0
      %1911 = vmatpush1.msra.mxu0 0.0
      %1912 = vmatprep.subr.mxu0 0.0
      %1913 = vmatpush1.msra.mxu0 0.0
      %1914 = vmatprep.subr.mxu0 0.0
      %1915 = vmatpush1.msra.mxu0 0.0
      %1916 = vmatprep.subr.mxu0 0.0
      %1917 = vmatpush1.msra.mxu0 0.0
      %1918 = vmatprep.subr.mxu0 0.0
      %1919 = vmatpush1.msra.mxu0 0.0
      %1920 = vmatprep.subr.mxu0 0.0
      %1921 = vmatpush1.msra.mxu0 0.0
      %1922 = vmatprep.subr.mxu0 0.0
      %1923 = vmatpush1.msra.mxu0 0.0
      %1924 = vmatprep.subr.mxu0 0.0
      %1925 = vmatpush1.msra.mxu0 0.0
      %1926 = vmatprep.subr.mxu0 0.0
      %1927 = vmatpush1.msra.mxu0 0.0
      %1928 = vmatprep.subr.mxu0 0.0
      %1929 = vmatpush1.msra.mxu0 0.0
      %1930 = vmatprep.subr.mxu0 0.0
      %1931 = vmatpush1.msra.mxu0 0.0
      %1932 = vmatprep.subr.mxu0 0.0
      %1933 = vmatpush1.msra.mxu0 0.0
      %1934 = vmatprep.subr.mxu0 0.0
      %1935 = vmatpush1.msra.mxu0 %v690
      %1936 = vmatprep.subr.mxu0 0.0
      %1937 = vmatpush1.msra.mxu0 %v173
      %1938 = vmatprep.subr.mxu0 0.0
      %1939 = vmatpush1.msra.mxu0 %v172
      %1940 = vmatprep.subr.mxu0 0.0
      %1941 = vmatpush1.msra.mxu0 %v171
      %1942 = vmatprep.subr.mxu0 0.0
      %1943 = vmatpush2.msra.mxu0 0.0
      %1944 = vmatprep.subr.mxu0 0.0
      %1945 = vmatpush2.msra.mxu0 0.0
      %1946 = vmatprep.subr.mxu0 0.0
      %1947 = vmatpush2.msra.mxu0 0.0
      %1948 = vmatprep.subr.mxu0 0.0
      %1949 = vmatpush2.msra.mxu0 0.0
      %1950 = vmatprep.subr.mxu0 0.0
      %1951 = vmatpush2.msra.mxu0 0.0
      %1952 = vmatprep.subr.mxu0 0.0
      %1953 = vmatpush2.msra.mxu0 0.0
      %1954 = vmatprep.subr.mxu0 0.0
      %1955 = vmatpush2.msra.mxu0 0.0
      %1956 = vmatprep.subr.mxu0 0.0
      %1957 = vmatpush2.msra.mxu0 0.0
      %1958 = vmatprep.subr.mxu0 0.0
      %1959 = vmatpush2.msra.mxu0 0.0
      %1960 = vmatprep.subr.mxu0 0.0
      %1961 = vmatpush2.msra.mxu0 0.0
      %1962 = vmatprep.subr.mxu0 0.0
      %1963 = vmatpush2.msra.mxu0 0.0
      %1964 = vmatprep.subr.mxu0 0.0
      %1965 = vmatpush2.msra.mxu0 0.0
      %1966 = vmatprep.subr.mxu0 0.0
      %1967 = vmatpush2.msra.mxu0 0.0
      %1968 = vmatprep.subr.mxu0 0.0
      %1969 = vmatpush2.msra.mxu0 0.0
      %1970 = vmatprep.subr.mxu0 0.0
      %1971 = vmatpush2.msra.mxu0 0.0
      %1972 = vmatprep.subr.mxu0 0.0
      %1973 = vmatpush2.msra.mxu0 0.0
      %1974 = vmatprep.mubr.f32.mxu0 0.0
      %1975 = vmatmul.mubr.f32.gmra.mxu0 %v1527
      %v1976 = vpop.f32.mrf.mxu0
      %v1977 = vadd.f32 0.0, %v1976
      %v1978 = vpop.f32.mrf.mxu0
      %1979 = vmatprep.mubr.f32.mxu0 0.0
      %1980 = vmatmul.mubr.f32.gmra.mxu0 %v1530
      %v1981 = vpop.f32.mrf.mxu0
      %v1982 = vadd.f32 0.0, %v1981
      %v1983 = vpop.f32.mrf.mxu0
      %1984 = vmatprep.mubr.f32.mxu0 0.0
      %1985 = vmatmul.mubr.f32.gmra.mxu0 %v1533
      %v1986 = vpop.f32.mrf.mxu0
      %v1987 = vadd.f32 0.0, %v1986
      %v1988 = vpop.f32.mrf.mxu0
      %1989 = vmatprep.mubr.f32.mxu0 0.0
      %1990 = vmatmul.mubr.f32.gmra.mxu0 %v1536
      %v1991 = vpop.f32.mrf.mxu0
      %v1992 = vadd.f32 0.0, %v1991
      %v1993 = vpop.f32.mrf.mxu0
      %1994 = vmatprep.mubr.f32.mxu0 0.0
      %1995 = vmatmul.mubr.f32.gmra.mxu0 %v1539
      %v1996 = vpop.f32.mrf.mxu0
      %v1997 = vadd.f32 0.0, %v1996
      %v1998 = vpop.f32.mrf.mxu0
      %1999 = vmatprep.mubr.f32.mxu0 0.0
      %2000 = vmatmul.mubr.f32.gmra.mxu0 %v1542
      %v2001 = vpop.f32.mrf.mxu0
      %v2002 = vadd.f32 0.0, %v2001
      %v2003 = vpop.f32.mrf.mxu0
      %2004 = vmatprep.mubr.f32.mxu0 0.0
      %2005 = vmatmul.mubr.f32.gmra.mxu0 %v1545
      %v2006 = vpop.f32.mrf.mxu0
      %v2007 = vadd.f32 0.0, %v2006
      %v2008 = vpop.f32.mrf.mxu0
      %2009 = vmatprep.mubr.f32.mxu0 0.0
      %2010 = vmatmul.mubr.f32.gmra.mxu0 %v1548
      %v2011 = vpop.f32.mrf.mxu0
      %v2012 = vadd.f32 0.0, %v2011
      %v2013 = vpop.f32.mrf.mxu0
      %2014 = vmatprep.mubr.f32.mxu0 0.0
      %2015 = vmatmul.mubr.f32.gmra.mxu0 %v1551
      %v2016 = vpop.f32.mrf.mxu0
      %v2017 = vadd.f32 0.0, %v2016
      %v2018 = vpop.f32.mrf.mxu0
      %2019 = vmatprep.mubr.f32.mxu0 0.0
      %2020 = vmatmul.mubr.f32.gmra.mxu0 %v1554
      %v2021 = vpop.f32.mrf.mxu0
      %v2022 = vadd.f32 0.0, %v2021
      %v2023 = vpop.f32.mrf.mxu0
      %2024 = vmatprep.mubr.f32.mxu0 0.0
      %2025 = vmatmul.mubr.f32.gmra.mxu0 %v1557
      %v2026 = vpop.f32.mrf.mxu0
      %v2027 = vadd.f32 0.0, %v2026
      %v2028 = vpop.f32.mrf.mxu0
      %2029 = vmatprep.mubr.f32.mxu0 0.0
      %2030 = vmatmul.mubr.f32.gmra.mxu0 %v1560
      %v2031 = vpop.f32.mrf.mxu0
      %v2032 = vadd.f32 0.0, %v2031
      %v2033 = vpop.f32.mrf.mxu0
      %2034 = vmatprep.mubr.f32.mxu0 0.0
      %2035 = vmatmul.mubr.f32.gmra.mxu0 %v1563
      %v2036 = vpop.f32.mrf.mxu0
      %v2037 = vadd.f32 0.0, %v2036
      %v2038 = vpop.f32.mrf.mxu0
      %2039 = vmatprep.mubr.f32.mxu0 0.0
      %2040 = vmatmul.mubr.f32.gmra.mxu0 %v1566
      %v2041 = vpop.f32.mrf.mxu0
      %v2042 = vadd.f32 0.0, %v2041
      %v2043 = vpop.f32.mrf.mxu0
      %2044 = vmatprep.mubr.f32.mxu0 0.0
      %2045 = vmatmul.mubr.f32.gmra.mxu0 %v1569
      %v2046 = vpop.f32.mrf.mxu0
      %v2047 = vadd.f32 0.0, %v2046
      %v2048 = vpop.f32.mrf.mxu0
      %2049 = vmatprep.mubr.f32.mxu0 0.0
      %2050 = vmatmul.mubr.f32.gmra.mxu0 %v1572
      %v2051 = vpop.f32.mrf.mxu0
      %v2052 = vadd.f32 0.0, %v2051
      %v2053 = vpop.f32.mrf.mxu0
      %2054 = vmatprep.mubr.f32.mxu0 0.0
      %2055 = vmatmul.mubr.f32.gmra.mxu0 %v1575
      %v2056 = vpop.f32.mrf.mxu0
      %v2057 = vadd.f32 0.0, %v2056
      %v2058 = vpop.f32.mrf.mxu0
      %2059 = vmatprep.mubr.f32.mxu0 0.0
      %2060 = vmatmul.mubr.f32.gmra.mxu0 %v1578
      %v2061 = vpop.f32.mrf.mxu0
      %v2062 = vadd.f32 0.0, %v2061
      %v2063 = vpop.f32.mrf.mxu0
      %2064 = vmatprep.mubr.f32.mxu0 0.0
      %2065 = vmatmul.mubr.f32.gmra.mxu0 %v1581
      %v2066 = vpop.f32.mrf.mxu0
      %v2067 = vadd.f32 0.0, %v2066
      %v2068 = vpop.f32.mrf.mxu0
      %2069 = vmatprep.mubr.f32.mxu0 0.0
      %2070 = vmatmul.mubr.f32.gmra.mxu0 %v1584
      %v2071 = vpop.f32.mrf.mxu0
      %v2072 = vadd.f32 0.0, %v2071
      %v2073 = vpop.f32.mrf.mxu0
      %2074 = vmatprep.mubr.f32.mxu0 0.0
      %2075 = vmatmul.mubr.f32.gmra.mxu0 %v1587
      %v2076 = vpop.f32.mrf.mxu0
      %v2077 = vadd.f32 0.0, %v2076
      %v2078 = vpop.f32.mrf.mxu0
      %2079 = vmatprep.mubr.f32.mxu0 0.0
      %2080 = vmatmul.mubr.f32.gmra.mxu0 %v1590
      %v2081 = vpop.f32.mrf.mxu0
      %v2082 = vadd.f32 0.0, %v2081
      %v2083 = vpop.f32.mrf.mxu0
      %2084 = vmatprep.mubr.f32.mxu0 0.0
      %2085 = vmatmul.mubr.f32.gmra.mxu0 %v1593
      %v2086 = vpop.f32.mrf.mxu0
      %v2087 = vadd.f32 0.0, %v2086
      %v2088 = vpop.f32.mrf.mxu0
      %2089 = vmatprep.mubr.f32.mxu0 0.0
      %2090 = vmatmul.mubr.f32.gmra.mxu0 %v1596
      %v2091 = vpop.f32.mrf.mxu0
      %v2092 = vadd.f32 0.0, %v2091
      %v2093 = vpop.f32.mrf.mxu0
      %2094 = vmatprep.mubr.f32.mxu0 0.0
      %2095 = vmatmul.mubr.f32.gmra.mxu0 %v1599
      %v2096 = vpop.f32.mrf.mxu0
      %v2097 = vadd.f32 0.0, %v2096
      %v2098 = vpop.f32.mrf.mxu0
      %2099 = vmatprep.mubr.f32.mxu0 0.0
      %2100 = vmatmul.mubr.f32.gmra.mxu0 %v1602
      %v2101 = vpop.f32.mrf.mxu0
      %v2102 = vadd.f32 0.0, %v2101
      %v2103 = vpop.f32.mrf.mxu0
      %2104 = vmatprep.mubr.f32.mxu0 0.0
      %2105 = vmatmul.mubr.f32.gmra.mxu0 %v1605
      %v2106 = vpop.f32.mrf.mxu0
      %v2107 = vadd.f32 0.0, %v2106
      %v2108 = vpop.f32.mrf.mxu0
      %2109 = vmatprep.mubr.f32.mxu0 0.0
      %2110 = vmatmul.mubr.f32.gmra.mxu0 %v1608
      %v2111 = vpop.f32.mrf.mxu0
      %v2112 = vadd.f32 0.0, %v2111
      %v2113 = vpop.f32.mrf.mxu0
      %2114 = vmatprep.mubr.f32.mxu0 0.0
      %2115 = vmatmul.mubr.f32.gmra.mxu0 %v1611
      %v2116 = vpop.f32.mrf.mxu0
      %v2117 = vadd.f32 0.0, %v2116
      %v2118 = vpop.f32.mrf.mxu0
      %2119 = vmatprep.mubr.f32.mxu0 0.0
      %2120 = vmatmul.mubr.f32.gmra.mxu0 %v1614
      %v2121 = vpop.f32.mrf.mxu0
      %v2122 = vadd.f32 0.0, %v2121
      %v2123 = vpop.f32.mrf.mxu0
      %2124 = vmatprep.mubr.f32.mxu0 0.0
      %2125 = vmatmul.mubr.f32.gmra.mxu0 %v1617
      %v2126 = vpop.f32.mrf.mxu0
      %v2127 = vadd.f32 0.0, %v2126
      %v2128 = vpop.f32.mrf.mxu0
      %2129 = vmatprep.mubr.f32.mxu0 0.0
      %2130 = vmatmul.mubr.f32.gmra.mxu0 %v1620
      %v2131 = vpop.f32.mrf.mxu0
      %v2132 = vadd.f32 0.0, %v2131
      %v2133 = vpop.f32.mrf.mxu0
      %2134 = vmatprep.mubr.f32.mxu0 0.0
      %2135 = vmatmul.mubr.f32.gmra.mxu0 %v1623
      %v2136 = vpop.f32.mrf.mxu0
      %v2137 = vadd.f32 0.0, %v2136
      %v2138 = vpop.f32.mrf.mxu0
      %2139 = vmatprep.mubr.f32.mxu0 0.0
      %2140 = vmatmul.mubr.f32.gmra.mxu0 %v1626
      %v2141 = vpop.f32.mrf.mxu0
      %v2142 = vadd.f32 0.0, %v2141
      %v2143 = vpop.f32.mrf.mxu0
      %2144 = vmatprep.mubr.f32.mxu0 0.0
      %2145 = vmatmul.mubr.f32.gmra.mxu0 %v1629
      %v2146 = vpop.f32.mrf.mxu0
      %v2147 = vadd.f32 0.0, %v2146
      %v2148 = vpop.f32.mrf.mxu0
      %2149 = vmatprep.mubr.f32.mxu0 0.0
      %2150 = vmatmul.mubr.f32.gmra.mxu0 %v1632
      %v2151 = vpop.f32.mrf.mxu0
      %v2152 = vadd.f32 0.0, %v2151
      %v2153 = vpop.f32.mrf.mxu0
      %2154 = vmatprep.mubr.f32.mxu0 0.0
      %2155 = vmatmul.mubr.f32.gmra.mxu0 %v1635
      %v2156 = vpop.f32.mrf.mxu0
      %v2157 = vadd.f32 0.0, %v2156
      %v2158 = vpop.f32.mrf.mxu0
      %2159 = vmatprep.mubr.f32.mxu0 0.0
      %2160 = vmatmul.mubr.f32.gmra.mxu0 %v1638
      %v2161 = vpop.f32.mrf.mxu0
      %v2162 = vadd.f32 0.0, %v2161
      %v2163 = vpop.f32.mrf.mxu0
      %2164 = vmatprep.mubr.f32.mxu0 0.0
      %2165 = vmatmul.mubr.f32.gmra.mxu0 %v1641
      %v2166 = vpop.f32.mrf.mxu0
      %v2167 = vadd.f32 0.0, %v2166
      %v2168 = vpop.f32.mrf.mxu0
      %2169 = vmatprep.mubr.f32.mxu0 0.0
      %2170 = vmatmul.mubr.f32.gmra.mxu0 %v1644
      %v2171 = vpop.f32.mrf.mxu0
      %v2172 = vadd.f32 0.0, %v2171
      %v2173 = vpop.f32.mrf.mxu0
      %2174 = vmatprep.mubr.f32.mxu0 0.0
      %2175 = vmatmul.mubr.f32.gmra.mxu0 %v1647
      %v2176 = vpop.f32.mrf.mxu0
      %v2177 = vadd.f32 0.0, %v2176
      %v2178 = vpop.f32.mrf.mxu0
      %2179 = vmatprep.mubr.f32.mxu0 0.0
      %2180 = vmatmul.mubr.f32.gmra.mxu0 %v1650
      %v2181 = vpop.f32.mrf.mxu0
      %v2182 = vadd.f32 0.0, %v2181
      %v2183 = vpop.f32.mrf.mxu0
      %2184 = vmatprep.mubr.f32.mxu0 0.0
      %2185 = vmatmul.mubr.f32.gmra.mxu0 %v1653
      %v2186 = vpop.f32.mrf.mxu0
      %v2187 = vadd.f32 0.0, %v2186
      %v2188 = vpop.f32.mrf.mxu0
      %2189 = vmatprep.mubr.f32.mxu0 0.0
      %2190 = vmatmul.mubr.f32.gmra.mxu0 %v1656
      %v2191 = vpop.f32.mrf.mxu0
      %v2192 = vadd.f32 0.0, %v2191
      %v2193 = vpop.f32.mrf.mxu0
      %2194 = vmatprep.mubr.f32.mxu0 0.0
      %2195 = vmatmul.mubr.f32.gmra.mxu0 %v1659
      %v2196 = vpop.f32.mrf.mxu0
      %v2197 = vadd.f32 0.0, %v2196
      %v2198 = vpop.f32.mrf.mxu0
      %2199 = vmatprep.mubr.f32.mxu0 0.0
      %2200 = vmatmul.mubr.f32.gmra.mxu0 %v1662
      %v2201 = vpop.f32.mrf.mxu0
      %v2202 = vadd.f32 0.0, %v2201
      %v2203 = vpop.f32.mrf.mxu0
      %2204 = vmatprep.mubr.f32.mxu0 0.0
      %2205 = vmatmul.mubr.f32.gmra.mxu0 %v1665
      %v2206 = vpop.f32.mrf.mxu0
      %v2207 = vadd.f32 0.0, %v2206
      %v2208 = vpop.f32.mrf.mxu0
      %2209 = vmatprep.mubr.f32.mxu0 0.0
      %2210 = vmatmul.mubr.f32.gmra.mxu0 %v1668
      %v2211 = vpop.f32.mrf.mxu0
      %v2212 = vadd.f32 0.0, %v2211
      %v2213 = vpop.f32.mrf.mxu0
      %2214 = vmatprep.mubr.f32.mxu0 0.0
      %2215 = vmatmul.mubr.f32.gmra.mxu0 %v1671
      %v2216 = vpop.f32.mrf.mxu0
      %v2217 = vadd.f32 0.0, %v2216
      %v2218 = vpop.f32.mrf.mxu0
      %2219 = vmatprep.mubr.f32.mxu0 0.0
      %2220 = vmatmul.mubr.f32.gmra.mxu0 %v1674
      %v2221 = vpop.f32.mrf.mxu0
      %v2222 = vadd.f32 0.0, %v2221
      %v2223 = vpop.f32.mrf.mxu0
      %2224 = vmatprep.mubr.f32.mxu0 0.0
      %2225 = vmatmul.mubr.f32.gmra.mxu0 %v1677
      %v2226 = vpop.f32.mrf.mxu0
      %v2227 = vadd.f32 0.0, %v2226
      %v2228 = vpop.f32.mrf.mxu0
      %2229 = vmatprep.mubr.f32.mxu0 0.0
      %2230 = vmatmul.mubr.f32.gmra.mxu0 %v1680
      %v2231 = vpop.f32.mrf.mxu0
      %v2232 = vadd.f32 0.0, %v2231
      %v2233 = vpop.f32.mrf.mxu0
      %2234 = vmatprep.mubr.f32.mxu0 0.0
      %2235 = vmatmul.mubr.f32.gmra.mxu0 %v1683
      %v2236 = vpop.f32.mrf.mxu0
      %v2237 = vadd.f32 0.0, %v2236
      %v2238 = vpop.f32.mrf.mxu0
      %2239 = vmatprep.mubr.f32.mxu0 0.0
      %2240 = vmatmul.mubr.f32.gmra.mxu0 %v1686
      %v2241 = vpop.f32.mrf.mxu0
      %v2242 = vadd.f32 0.0, %v2241
      %v2243 = vpop.f32.mrf.mxu0
      %2244 = vmatprep.mubr.f32.mxu0 0.0
      %2245 = vmatmul.mubr.f32.gmra.mxu0 %v1689
      %v2246 = vpop.f32.mrf.mxu0
      %v2247 = vadd.f32 0.0, %v2246
      %v2248 = vpop.f32.mrf.mxu0
      %2249 = vmatprep.mubr.f32.mxu0 0.0
      %2250 = vmatmul.mubr.f32.gmra.mxu0 %v1692
      %v2251 = vpop.f32.mrf.mxu0
      %v2252 = vadd.f32 0.0, %v2251
      %v2253 = vpop.f32.mrf.mxu0
      %2254 = vmatprep.mubr.f32.mxu0 0.0
      %2255 = vmatmul.mubr.f32.gmra.mxu0 %v1695
      %v2256 = vpop.f32.mrf.mxu0
      %v2257 = vadd.f32 0.0, %v2256
      %v2258 = vpop.f32.mrf.mxu0
      %2259 = vmatprep.mubr.f32.mxu0 0.0
      %2260 = vmatmul.mubr.f32.gmra.mxu0 %v1698
      %v2261 = vpop.f32.mrf.mxu0
      %v2262 = vadd.f32 0.0, %v2261
      %v2263 = vpop.f32.mrf.mxu0
      %2264 = vmatprep.mubr.f32.mxu0 0.0
      %2265 = vmatmul.mubr.f32.gmra.mxu0 %v1701
      %v2266 = vpop.f32.mrf.mxu0
      %v2267 = vadd.f32 0.0, %v2266
      %v2268 = vpop.f32.mrf.mxu0
      %2269 = vmatprep.mubr.f32.mxu0 0.0
      %2270 = vmatmul.mubr.f32.gmra.mxu0 %v1704
      %v2271 = vpop.f32.mrf.mxu0
      %v2272 = vadd.f32 0.0, %v2271
      %v2273 = vpop.f32.mrf.mxu0
      %2274 = vmatprep.mubr.f32.mxu0 0.0
      %2275 = vmatmul.mubr.f32.gmra.mxu0 %v1707
      %v2276 = vpop.f32.mrf.mxu0
      %v2277 = vadd.f32 0.0, %v2276
      %v2278 = vpop.f32.mrf.mxu0
      %2279 = vmatprep.mubr.f32.mxu0 0.0
      %2280 = vmatmul.mubr.f32.gmra.mxu0 %v1710
      %v2281 = vpop.f32.mrf.mxu0
      %v2282 = vadd.f32 0.0, %v2281
      %v2283 = vpop.f32.mrf.mxu0
      %2284 = vmatprep.mubr.f32.mxu0 0.0
      %2285 = vmatmul.mubr.f32.gmra.mxu0 %v1713
      %v2286 = vpop.f32.mrf.mxu0
      %v2287 = vadd.f32 0.0, %v2286
      %v2288 = vpop.f32.mrf.mxu0
      %2289 = vmatprep.mubr.f32.mxu0 0.0
      %2290 = vmatmul.mubr.f32.gmra.mxu0 %v1716
      %v2291 = vpop.f32.mrf.mxu0
      %v2292 = vadd.f32 0.0, %v2291
      %v2293 = vpop.f32.mrf.mxu0
      %2294 = vmatprep.mubr.f32.mxu0 0.0
      %2295 = vmatmul.mubr.f32.gmra.mxu0 %v1719
      %v2296 = vpop.f32.mrf.mxu0
      %v2297 = vadd.f32 0.0, %v2296
      %v2298 = vpop.f32.mrf.mxu0
      %2299 = vmatprep.mubr.f32.mxu0 0.0
      %2300 = vmatmul.mubr.f32.gmra.mxu0 %v1722
      %v2301 = vpop.f32.mrf.mxu0
      %v2302 = vadd.f32 0.0, %v2301
      %v2303 = vpop.f32.mrf.mxu0
      %2304 = vmatprep.mubr.f32.mxu0 0.0
      %2305 = vmatmul.mubr.f32.gmra.mxu0 %v1725
      %v2306 = vpop.f32.mrf.mxu0
      %v2307 = vadd.f32 0.0, %v2306
      %v2308 = vpop.f32.mrf.mxu0
      %2309 = vmatprep.mubr.f32.mxu0 0.0
      %2310 = vmatmul.mubr.f32.gmra.mxu0 %v1728
      %v2311 = vpop.f32.mrf.mxu0
      %v2312 = vadd.f32 0.0, %v2311
      %v2313 = vpop.f32.mrf.mxu0
      %2314 = vmatprep.mubr.f32.mxu0 0.0
      %2315 = vmatmul.mubr.f32.gmra.mxu0 %v1731
      %v2316 = vpop.f32.mrf.mxu0
      %v2317 = vadd.f32 0.0, %v2316
      %v2318 = vpop.f32.mrf.mxu0
      %2319 = vmatprep.mubr.f32.mxu0 0.0
      %2320 = vmatmul.mubr.f32.gmra.mxu0 %v1734
      %v2321 = vpop.f32.mrf.mxu0
      %v2322 = vadd.f32 0.0, %v2321
      %v2323 = vpop.f32.mrf.mxu0
      %2324 = vmatprep.mubr.f32.mxu0 0.0
      %2325 = vmatmul.mubr.f32.gmra.mxu0 %v1737
      %v2326 = vpop.f32.mrf.mxu0
      %v2327 = vadd.f32 0.0, %v2326
      %v2328 = vpop.f32.mrf.mxu0
      %2329 = vmatprep.mubr.f32.mxu0 0.0
      %2330 = vmatmul.mubr.f32.gmra.mxu0 %v1740
      %v2331 = vpop.f32.mrf.mxu0
      %v2332 = vadd.f32 0.0, %v2331
      %v2333 = vpop.f32.mrf.mxu0
      %2334 = vmatprep.mubr.f32.mxu0 0.0
      %2335 = vmatmul.mubr.f32.gmra.mxu0 %v1743
      %v2336 = vpop.f32.mrf.mxu0
      %v2337 = vadd.f32 0.0, %v2336
      %v2338 = vpop.f32.mrf.mxu0
      %2339 = vmatprep.mubr.f32.mxu0 0.0
      %2340 = vmatmul.mubr.f32.gmra.mxu0 %v1746
      %v2341 = vpop.f32.mrf.mxu0
      %v2342 = vadd.f32 0.0, %v2341
      %v2343 = vpop.f32.mrf.mxu0
      %2344 = vmatprep.mubr.f32.mxu0 0.0
      %2345 = vmatmul.mubr.f32.gmra.mxu0 %v1749
      %v2346 = vpop.f32.mrf.mxu0
      %v2347 = vadd.f32 0.0, %v2346
      %v2348 = vpop.f32.mrf.mxu0
      %2349 = vmatprep.mubr.f32.mxu0 0.0
      %2350 = vmatmul.mubr.f32.gmra.mxu0 %v1752
      %v2351 = vpop.f32.mrf.mxu0
      %v2352 = vadd.f32 0.0, %v2351
      %v2353 = vpop.f32.mrf.mxu0
      %2354 = vmatprep.mubr.f32.mxu0 0.0
      %2355 = vmatmul.mubr.f32.gmra.mxu0 %v1755
      %v2356 = vpop.f32.mrf.mxu0
      %v2357 = vadd.f32 0.0, %v2356
      %v2358 = vpop.f32.mrf.mxu0
      %2359 = vmatprep.mubr.f32.mxu0 0.0
      %2360 = vmatmul.mubr.f32.gmra.mxu0 %v1758
      %v2361 = vpop.f32.mrf.mxu0
      %v2362 = vadd.f32 0.0, %v2361
      %v2363 = vpop.f32.mrf.mxu0
      %2364 = vmatprep.mubr.f32.mxu0 0.0
      %2365 = vmatmul.mubr.f32.gmra.mxu0 %v1761
      %v2366 = vpop.f32.mrf.mxu0
      %v2367 = vadd.f32 0.0, %v2366
      %v2368 = vpop.f32.mrf.mxu0
      %2369 = vmatprep.mubr.f32.mxu0 0.0
      %2370 = vmatmul.mubr.f32.gmra.mxu0 %v1764
      %v2371 = vpop.f32.mrf.mxu0
      %v2372 = vadd.f32 0.0, %v2371
      %v2373 = vpop.f32.mrf.mxu0
      %2374 = vmatprep.mubr.f32.mxu0 0.0
      %2375 = vmatmul.mubr.f32.gmra.mxu0 %v1767
      %v2376 = vpop.f32.mrf.mxu0
      %v2377 = vadd.f32 0.0, %v2376
      %v2378 = vpop.f32.mrf.mxu0
      %2379 = vmatprep.mubr.f32.mxu0 0.0
      %2380 = vmatmul.mubr.f32.gmra.mxu0 %v1770
      %v2381 = vpop.f32.mrf.mxu0
      %v2382 = vadd.f32 0.0, %v2381
      %v2383 = vpop.f32.mrf.mxu0
      %2384 = vmatprep.mubr.f32.mxu0 0.0
      %2385 = vmatmul.mubr.f32.gmra.mxu0 %v1773
      %v2386 = vpop.f32.mrf.mxu0
      %v2387 = vadd.f32 0.0, %v2386
      %v2388 = vpop.f32.mrf.mxu0
      %2389 = vmatprep.mubr.f32.mxu0 0.0
      %2390 = vmatmul.mubr.f32.gmra.mxu0 %v1776
      %v2391 = vpop.f32.mrf.mxu0
      %v2392 = vadd.f32 0.0, %v2391
      %v2393 = vpop.f32.mrf.mxu0
      %2394 = vmatprep.mubr.f32.mxu0 0.0
      %2395 = vmatmul.mubr.f32.gmra.mxu0 %v1779
      %v2396 = vpop.f32.mrf.mxu0
      %v2397 = vadd.f32 0.0, %v2396
      %v2398 = vpop.f32.mrf.mxu0
      %2399 = vmatprep.mubr.f32.mxu0 0.0
      %2400 = vmatmul.mubr.f32.gmra.mxu0 %v1782
      %v2401 = vpop.f32.mrf.mxu0
      %v2402 = vadd.f32 0.0, %v2401
      %v2403 = vpop.f32.mrf.mxu0
      %2404 = vmatprep.mubr.f32.mxu0 0.0
      %2405 = vmatmul.mubr.f32.gmra.mxu0 %v1785
      %v2406 = vpop.f32.mrf.mxu0
      %v2407 = vadd.f32 0.0, %v2406
      %v2408 = vpop.f32.mrf.mxu0
      %2409 = vmatprep.mubr.f32.mxu0 0.0
      %2410 = vmatmul.mubr.f32.gmra.mxu0 %v1788
      %v2411 = vpop.f32.mrf.mxu0
      %v2412 = vadd.f32 0.0, %v2411
      %v2413 = vpop.f32.mrf.mxu0
      %2414 = vmatprep.mubr.f32.mxu0 0.0
      %2415 = vmatmul.mubr.f32.gmra.mxu0 %v1791
      %v2416 = vpop.f32.mrf.mxu0
      %v2417 = vadd.f32 0.0, %v2416
      %v2418 = vpop.f32.mrf.mxu0
      %2419 = vmatprep.mubr.f32.mxu0 0.0
      %2420 = vmatmul.mubr.f32.gmra.mxu0 %v1794
      %v2421 = vpop.f32.mrf.mxu0
      %v2422 = vadd.f32 0.0, %v2421
      %v2423 = vpop.f32.mrf.mxu0
      %2424 = vmatprep.mubr.f32.mxu0 0.0
      %2425 = vmatmul.mubr.f32.gmra.mxu0 %v1797
      %v2426 = vpop.f32.mrf.mxu0
      %v2427 = vadd.f32 0.0, %v2426
      %v2428 = vpop.f32.mrf.mxu0
      %2429 = vmatprep.mubr.f32.mxu0 0.0
      %2430 = vmatmul.mubr.f32.gmra.mxu0 %v1800
      %v2431 = vpop.f32.mrf.mxu0
      %v2432 = vadd.f32 0.0, %v2431
      %v2433 = vpop.f32.mrf.mxu0
      %2434 = vmatprep.mubr.f32.mxu0 0.0
      %2435 = vmatmul.mubr.f32.gmra.mxu0 %v1803
      %v2436 = vpop.f32.mrf.mxu0
      %v2437 = vadd.f32 0.0, %v2436
      %v2438 = vpop.f32.mrf.mxu0
      %2439 = vmatprep.mubr.f32.mxu0 0.0
      %2440 = vmatmul.mubr.f32.gmra.mxu0 %v1806
      %v2441 = vpop.f32.mrf.mxu0
      %v2442 = vadd.f32 0.0, %v2441
      %v2443 = vpop.f32.mrf.mxu0
      %2444 = vmatprep.mubr.f32.mxu0 0.0
      %2445 = vmatmul.mubr.f32.gmra.mxu0 %v1809
      %v2446 = vpop.f32.mrf.mxu0
      %v2447 = vadd.f32 0.0, %v2446
      %v2448 = vpop.f32.mrf.mxu0
      %2449 = vmatprep.mubr.f32.mxu0 0.0
      %2450 = vmatmul.mubr.f32.gmra.mxu0 %v1812
      %v2451 = vpop.f32.mrf.mxu0
      %v2452 = vadd.f32 0.0, %v2451
      %v2453 = vpop.f32.mrf.mxu0
      %2454 = vmatprep.mubr.f32.mxu0 0.0
      %2455 = vmatmul.mubr.f32.gmra.mxu0 %v1815
      %v2456 = vpop.f32.mrf.mxu0
      %v2457 = vadd.f32 0.0, %v2456
      %v2458 = vpop.f32.mrf.mxu0
      %2459 = vmatprep.mubr.f32.mxu0 0.0
      %2460 = vmatmul.mubr.f32.gmra.mxu0 %v1818
      %v2461 = vpop.f32.mrf.mxu0
      %v2462 = vadd.f32 0.0, %v2461
      %v2463 = vpop.f32.mrf.mxu0
      %2464 = vmatprep.mubr.f32.mxu0 0.0
      %2465 = vmatmul.mubr.f32.gmra.mxu0 %v1821
      %v2466 = vpop.f32.mrf.mxu0
      %v2467 = vadd.f32 0.0, %v2466
      %v2468 = vpop.f32.mrf.mxu0
      %2469 = vmatprep.mubr.f32.mxu0 0.0
      %2470 = vmatmul.mubr.f32.gmra.mxu0 %v1824
      %v2471 = vpop.f32.mrf.mxu0
      %v2472 = vadd.f32 0.0, %v2471
      %v2473 = vpop.f32.mrf.mxu0
      %2474 = vmatprep.mubr.f32.mxu0 0.0
      %2475 = vmatmul.mubr.f32.gmra.mxu0 %v1827
      %v2476 = vpop.f32.mrf.mxu0
      %v2477 = vadd.f32 0.0, %v2476
      %v2478 = vpop.f32.mrf.mxu0
      %2479 = vmatprep.mubr.f32.mxu0 0.0
      %2480 = vmatmul.mubr.f32.gmra.mxu0 %v1830
      %v2481 = vpop.f32.mrf.mxu0
      %v2482 = vadd.f32 0.0, %v2481
      %v2483 = vpop.f32.mrf.mxu0
      %2484 = vmatprep.mubr.f32.mxu0 0.0
      %2485 = vmatmul.mubr.f32.gmra.mxu0 %v1833
      %v2486 = vpop.f32.mrf.mxu0
      %v2487 = vadd.f32 0.0, %v2486
      %v2488 = vpop.f32.mrf.mxu0
      %2489 = vmatprep.mubr.f32.mxu0 0.0
      %2490 = vmatmul.mubr.f32.gmra.mxu0 %v1836
      %v2491 = vpop.f32.mrf.mxu0
      %v2492 = vadd.f32 0.0, %v2491
      %v2493 = vpop.f32.mrf.mxu0
      %2494 = vmatprep.mubr.f32.mxu0 0.0
      %2495 = vmatmul.mubr.f32.gmra.mxu0 %v1839
      %v2496 = vpop.f32.mrf.mxu0
      %v2497 = vadd.f32 0.0, %v2496
      %v2498 = vpop.f32.mrf.mxu0
      %2499 = vmatprep.mubr.f32.mxu0 0.0
      %2500 = vmatmul.mubr.f32.gmra.mxu0 %v1842
      %v2501 = vpop.f32.mrf.mxu0
      %v2502 = vadd.f32 0.0, %v2501
      %v2503 = vpop.f32.mrf.mxu0
      %2504 = vmatprep.mubr.f32.mxu0 0.0
      %2505 = vmatmul.mubr.f32.gmra.mxu0 %v1845
      %v2506 = vpop.f32.mrf.mxu0
      %v2507 = vadd.f32 0.0, %v2506
      %v2508 = vpop.f32.mrf.mxu0
      %2509 = vmatprep.mubr.f32.mxu0 0.0
      %2510 = vmatmul.mubr.f32.gmra.mxu0 %v1848
      %v2511 = vpop.f32.mrf.mxu0
      %v2512 = vadd.f32 0.0, %v2511
      %v2513 = vpop.f32.mrf.mxu0
      %2514 = vmatprep.mubr.f32.mxu0 0.0
      %2515 = vmatmul.mubr.f32.gmra.mxu0 %v1851
      %v2516 = vpop.f32.mrf.mxu0
      %v2517 = vadd.f32 0.0, %v2516
      %v2518 = vpop.f32.mrf.mxu0
      %2519 = vmatprep.mubr.f32.mxu0 0.0
      %2520 = vmatmul.mubr.f32.gmra.mxu0 %v1854
      %v2521 = vpop.f32.mrf.mxu0
      %v2522 = vadd.f32 0.0, %v2521
      %v2523 = vpop.f32.mrf.mxu0
      %2524 = vmatprep.mubr.f32.mxu0 0.0
      %2525 = vmatmul.mubr.f32.gmra.mxu0 %v1857
      %v2526 = vpop.f32.mrf.mxu0
      %v2527 = vadd.f32 0.0, %v2526
      %v2528 = vpop.f32.mrf.mxu0
      %2529 = vmatprep.mubr.f32.mxu0 0.0
      %2530 = vmatmul.mubr.f32.gmra.mxu0 %v1860
      %v2531 = vpop.f32.mrf.mxu0
      %v2532 = vadd.f32 0.0, %v2531
      %v2533 = vpop.f32.mrf.mxu0
      %2534 = vmatprep.mubr.f32.mxu0 0.0
      %2535 = vmatmul.mubr.f32.gmra.mxu0 %v1863
      %v2536 = vpop.f32.mrf.mxu0
      %v2537 = vadd.f32 0.0, %v2536
      %v2538 = vpop.f32.mrf.mxu0
      %2539 = vmatprep.mubr.f32.mxu0 0.0
      %2540 = vmatmul.mubr.f32.gmra.mxu0 %v1866
      %v2541 = vpop.f32.mrf.mxu0
      %v2542 = vadd.f32 0.0, %v2541
      %v2543 = vpop.f32.mrf.mxu0
      %2544 = vmatprep.mubr.f32.mxu0 0.0
      %2545 = vmatmul.mubr.f32.gmra.mxu0 %v1869
      %v2546 = vpop.f32.mrf.mxu0
      %v2547 = vadd.f32 0.0, %v2546
      %v2548 = vpop.f32.mrf.mxu0
      %2549 = vmatprep.mubr.f32.mxu0 0.0
      %2550 = vmatmul.mubr.f32.gmra.mxu0 %v1872
      %v2551 = vpop.f32.mrf.mxu0
      %v2552 = vadd.f32 0.0, %v2551
      %v2553 = vpop.f32.mrf.mxu0
      %2554 = vmatprep.mubr.f32.mxu0 0.0
      %2555 = vmatmul.mubr.f32.gmra.mxu0 %v1875
      %v2556 = vpop.f32.mrf.mxu0
      %v2557 = vadd.f32 0.0, %v2556
      %v2558 = vpop.f32.mrf.mxu0
      %2559 = vmatprep.mubr.f32.mxu0 0.0
      %2560 = vmatmul.mubr.f32.gmra.mxu0 %v1878
      %v2561 = vpop.f32.mrf.mxu0
      %v2562 = vadd.f32 0.0, %v2561
      %v2563 = vpop.f32.mrf.mxu0
      %2564 = vmatprep.mubr.f32.mxu0 0.0
      %2565 = vmatmul.mubr.f32.gmra.mxu0 %v1881
      %v2566 = vpop.f32.mrf.mxu0
      %v2567 = vadd.f32 0.0, %v2566
      %v2568 = vpop.f32.mrf.mxu0
      %2569 = vmatprep.mubr.f32.mxu0 0.0
      %2570 = vmatmul.mubr.f32.gmra.mxu0 %v1884
      %v2571 = vpop.f32.mrf.mxu0
      %v2572 = vadd.f32 0.0, %v2571
      %v2573 = vpop.f32.mrf.mxu0
      %2574 = vmatprep.mubr.f32.mxu0 0.0
      %2575 = vmatmul.mubr.f32.gmra.mxu0 %v1887
      %v2576 = vpop.f32.mrf.mxu0
      %v2577 = vadd.f32 0.0, %v2576
      %v2578 = vpop.f32.mrf.mxu0
      %2579 = vmatprep.mubr.f32.mxu0 0.0
      %2580 = vmatmul.mubr.f32.gmra.mxu0 %v1890
      %v2581 = vpop.f32.mrf.mxu0
      %v2582 = vadd.f32 0.0, %v2581
      %v2583 = vpop.f32.mrf.mxu0
      %2584 = vmatprep.mubr.f32.mxu0 0.0
      %2585 = vmatmul.mubr.f32.gmra.mxu0 %v1893
      %v2586 = vpop.f32.mrf.mxu0
      %v2587 = vadd.f32 0.0, %v2586
      %v2588 = vpop.f32.mrf.mxu0
      %2589 = vmatprep.mubr.f32.mxu0 0.0
      %2590 = vmatmul.mubr.f32.gmra.mxu0 %v1896
      %v2591 = vpop.f32.mrf.mxu0
      %v2592 = vadd.f32 0.0, %v2591
      %v2593 = vpop.f32.mrf.mxu0
      %2594 = vmatprep.mubr.f32.mxu0 0.0
      %2595 = vmatmul.mubr.f32.gmra.mxu0 %v1899
      %v2596 = vpop.f32.mrf.mxu0
      %v2597 = vadd.f32 0.0, %v2596
      %v2598 = vpop.f32.mrf.mxu0
      %2599 = vmatprep.mubr.f32.mxu0 0.0
      %2600 = vmatmul.mubr.f32.gmra.mxu0 %v1902
      %v2601 = vpop.f32.mrf.mxu0
      %v2602 = vadd.f32 0.0, %v2601
      %v2603 = vpop.f32.mrf.mxu0
      %2604 = vmatprep.mubr.f32.mxu0 0.0
      %2605 = vmatmul.mubr.f32.gmra.mxu0 %v1905
      %v2606 = vpop.f32.mrf.mxu0
      %v2607 = vadd.f32 0.0, %v2606
      %v2608 = vpop.f32.mrf.mxu0
      %2609 = vmatprep.mubr.f32.mxu0 0.0
      %2610 = vmatmul.mubr.f32.gmra.mxu0 %v1908
      %v2611 = vpop.f32.mrf.mxu0
      %v2612 = vadd.f32 0.0, %v2611
      %v2613 = vpop.f32.mrf.mxu0
      %2614 = vdwg.mxu0
      %v2615 = vmax.f32 %v759, %v1977
      %v2616 = vmax.f32 %v764, %v1982
      %v2617 = vmax.f32 %v769, %v1987
      %v2618 = vmax.f32 %v774, %v1992
      %v2619 = vmax.f32 %v779, %v1997
      %v2620 = vmax.f32 %v784, %v2002
      %v2621 = vmax.f32 %v789, %v2007
      %v2622 = vmax.f32 %v794, %v2012
      %v2623 = vmax.f32 %v799, %v2017
      %v2624 = vmax.f32 %v804, %v2022
      %v2625 = vmax.f32 %v809, %v2027
      %v2626 = vmax.f32 %v814, %v2032
      %v2627 = vmax.f32 %v819, %v2037
      %v2628 = vmax.f32 %v824, %v2042
      %v2629 = vmax.f32 %v829, %v2047
      %v2630 = vmax.f32 %v834, %v2052
      %v2631 = vmax.f32 %v839, %v2057
      %v2632 = vmax.f32 %v844, %v2062
      %v2633 = vmax.f32 %v849, %v2067
      %v2634 = vmax.f32 %v854, %v2072
      %v2635 = vmax.f32 %v859, %v2077
      %v2636 = vmax.f32 %v864, %v2082
      %v2637 = vmax.f32 %v869, %v2087
      %v2638 = vmax.f32 %v874, %v2092
      %v2639 = vmax.f32 %v879, %v2097
      %v2640 = vmax.f32 %v884, %v2102
      %v2641 = vmax.f32 %v889, %v2107
      %v2642 = vmax.f32 %v894, %v2112
      %v2643 = vmax.f32 %v899, %v2117
      %v2644 = vmax.f32 %v904, %v2122
      %v2645 = vmax.f32 %v909, %v2127
      %v2646 = vmax.f32 %v914, %v2132
      %v2647 = vmax.f32 %v919, %v2137
      %v2648 = vmax.f32 %v924, %v2142
      %v2649 = vmax.f32 %v929, %v2147
      %v2650 = vmax.f32 %v934, %v2152
      %v2651 = vmax.f32 %v939, %v2157
      %v2652 = vmax.f32 %v944, %v2162
      %v2653 = vmax.f32 %v949, %v2167
      %v2654 = vmax.f32 %v954, %v2172
      %v2655 = vmax.f32 %v959, %v2177
      %v2656 = vmax.f32 %v964, %v2182
      %v2657 = vmax.f32 %v969, %v2187
      %v2658 = vmax.f32 %v974, %v2192
      %v2659 = vmax.f32 %v979, %v2197
      %v2660 = vmax.f32 %v984, %v2202
      %v2661 = vmax.f32 %v989, %v2207
      %v2662 = vmax.f32 %v994, %v2212
      %v2663 = vmax.f32 %v999, %v2217
      %v2664 = vmax.f32 %v1004, %v2222
      %v2665 = vmax.f32 %v1009, %v2227
      %v2666 = vmax.f32 %v1014, %v2232
      %v2667 = vmax.f32 %v1019, %v2237
      %v2668 = vmax.f32 %v1024, %v2242
      %v2669 = vmax.f32 %v1029, %v2247
      %v2670 = vmax.f32 %v1034, %v2252
      %v2671 = vmax.f32 %v1039, %v2257
      %v2672 = vmax.f32 %v1044, %v2262
      %v2673 = vmax.f32 %v1049, %v2267
      %v2674 = vmax.f32 %v1054, %v2272
      %v2675 = vmax.f32 %v1059, %v2277
      %v2676 = vmax.f32 %v1064, %v2282
      %v2677 = vmax.f32 %v1069, %v2287
      %v2678 = vmax.f32 %v1074, %v2292
      %v2679 = vmax.f32 %v1079, %v2297
      %v2680 = vmax.f32 %v1084, %v2302
      %v2681 = vmax.f32 %v1089, %v2307
      %v2682 = vmax.f32 %v1094, %v2312
      %v2683 = vmax.f32 %v1099, %v2317
      %v2684 = vmax.f32 %v1104, %v2322
      %v2685 = vmax.f32 %v1109, %v2327
      %v2686 = vmax.f32 %v1114, %v2332
      %v2687 = vmax.f32 %v1119, %v2337
      %v2688 = vmax.f32 %v1124, %v2342
      %v2689 = vmax.f32 %v1129, %v2347
      %v2690 = vmax.f32 %v1134, %v2352
      %v2691 = vmax.f32 %v1139, %v2357
      %v2692 = vmax.f32 %v1144, %v2362
      %v2693 = vmax.f32 %v1149, %v2367
      %v2694 = vmax.f32 %v1154, %v2372
      %v2695 = vmax.f32 %v1159, %v2377
      %v2696 = vmax.f32 %v1164, %v2382
      %v2697 = vmax.f32 %v1169, %v2387
      %v2698 = vmax.f32 %v1174, %v2392
      %v2699 = vmax.f32 %v1179, %v2397
      %v2700 = vmax.f32 %v1184, %v2402
      %v2701 = vmax.f32 %v1189, %v2407
      %v2702 = vmax.f32 %v1194, %v2412
      %v2703 = vmax.f32 %v1199, %v2417
      %v2704 = vmax.f32 %v1204, %v2422
      %v2705 = vmax.f32 %v1209, %v2427
      %v2706 = vmax.f32 %v1214, %v2432
      %v2707 = vmax.f32 %v1219, %v2437
      %v2708 = vmax.f32 %v1224, %v2442
      %v2709 = vmax.f32 %v1229, %v2447
      %v2710 = vmax.f32 %v1234, %v2452
      %v2711 = vmax.f32 %v1239, %v2457
      %v2712 = vmax.f32 %v1244, %v2462
      %v2713 = vmax.f32 %v1249, %v2467
      %v2714 = vmax.f32 %v1254, %v2472
      %v2715 = vmax.f32 %v1259, %v2477
      %v2716 = vmax.f32 %v1264, %v2482
      %v2717 = vmax.f32 %v1269, %v2487
      %v2718 = vmax.f32 %v1274, %v2492
      %v2719 = vmax.f32 %v1279, %v2497
      %v2720 = vmax.f32 %v1284, %v2502
      %v2721 = vmax.f32 %v1289, %v2507
      %v2722 = vmax.f32 %v1294, %v2512
      %v2723 = vmax.f32 %v1299, %v2517
      %v2724 = vmax.f32 %v1304, %v2522
      %v2725 = vmax.f32 %v1309, %v2527
      %v2726 = vmax.f32 %v1314, %v2532
      %v2727 = vmax.f32 %v1319, %v2537
      %v2728 = vmax.f32 %v1324, %v2542
      %v2729 = vmax.f32 %v1329, %v2547
      %v2730 = vmax.f32 %v1334, %v2552
      %v2731 = vmax.f32 %v1339, %v2557
      %v2732 = vmax.f32 %v1344, %v2562
      %v2733 = vmax.f32 %v1349, %v2567
      %v2734 = vmax.f32 %v1354, %v2572
      %v2735 = vmax.f32 %v1359, %v2577
      %v2736 = vmax.f32 %v1364, %v2582
      %v2737 = vmax.f32 %v1369, %v2587
      %v2738 = vmax.f32 %v1374, %v2592
      %v2739 = vmax.f32 %v1379, %v2597
      %v2740 = vmax.f32 %v1384, %v2602
      %v2741 = vmax.f32 %v1389, %v2607
      %v2742 = vmax.f32 %v1394, %v2612
      %s2743 = scalar_lea.vmem %s165, 2048
      %v2744 = vld [vmem:[%s2743] sm:$0xff]
      %v2745 = vld [vmem:[%s2743 + $0x8] sm:$0xff]
      %v2746 = vld [vmem:[%s2743 + $0x10] sm:$0xff]
      %v2747 = vld [vmem:[%s2743 + $0x18] sm:$0xff]
      %v2748 = vld [vmem:[%s2743 + $0x20] sm:$0xff]
      %v2749 = vld [vmem:[%s2743 + $0x28] sm:$0xff]
      %v2750 = vld [vmem:[%s2743 + $0x30] sm:$0xff]
      %v2751 = vld [vmem:[%s2743 + $0x38] sm:$0xff]
      %v2752 = vld [vmem:[%s2743 + $0x40] sm:$0xff]
      %v2753 = vld [vmem:[%s2743 + $0x48] sm:$0xff]
      %v2754 = vld [vmem:[%s2743 + $0x50] sm:$0xff]
      %v2755 = vld [vmem:[%s2743 + $0x58] sm:$0xff]
      %v2756 = vld [vmem:[%s2743 + $0x60] sm:$0xff]
      %v2757 = vld [vmem:[%s2743 + $0x68] sm:$0xff]
      %v2758 = vld [vmem:[%s2743 + $0x70] sm:$0xff]
      %v2759 = vld [vmem:[%s2743 + $0x78] sm:$0xff]
      %v2760 = vld [vmem:[%s2743 + $0x80] sm:$0xff]
      %v2761 = vld [vmem:[%s2743 + $0x88] sm:$0xff]
      %v2762 = vld [vmem:[%s2743 + $0x90] sm:$0xff]
      %v2763 = vld [vmem:[%s2743 + $0x98] sm:$0xff]
      %v2764 = vld [vmem:[%s2743 + $0xa0] sm:$0xff]
      %v2765 = vld [vmem:[%s2743 + $0xa8] sm:$0xff]
      %v2766 = vld [vmem:[%s2743 + $0xb0] sm:$0xff]
      %v2767 = vld [vmem:[%s2743 + $0xb8] sm:$0xff]
      %v2768 = vld [vmem:[%s2743 + $0xc0] sm:$0xff]
      %v2769 = vld [vmem:[%s2743 + $0xc8] sm:$0xff]
      %v2770 = vld [vmem:[%s2743 + $0xd0] sm:$0xff]
      %v2771 = vld [vmem:[%s2743 + $0xd8] sm:$0xff]
      %v2772 = vld [vmem:[%s2743 + $0xe0] sm:$0xff]
      %v2773 = vld [vmem:[%s2743 + $0xe8] sm:$0xff]
      %v2774 = vld [vmem:[%s2743 + $0xf0] sm:$0xff]
      %v2775 = vld [vmem:[%s2743 + $0xf8] sm:$0xff]
      %v2776 = vld [vmem:[%s2743 + $0x100] sm:$0xff]
      %v2777 = vld [vmem:[%s2743 + $0x108] sm:$0xff]
      %v2778 = vld [vmem:[%s2743 + $0x110] sm:$0xff]
      %v2779 = vld [vmem:[%s2743 + $0x118] sm:$0xff]
      %v2780 = vld [vmem:[%s2743 + $0x120] sm:$0xff]
      %v2781 = vld [vmem:[%s2743 + $0x128] sm:$0xff]
      %v2782 = vld [vmem:[%s2743 + $0x130] sm:$0xff]
      %v2783 = vld [vmem:[%s2743 + $0x138] sm:$0xff]
      %v2784 = vld [vmem:[%s2743 + $0x140] sm:$0xff]
      %v2785 = vld [vmem:[%s2743 + $0x148] sm:$0xff]
      %v2786 = vld [vmem:[%s2743 + $0x150] sm:$0xff]
      %v2787 = vld [vmem:[%s2743 + $0x158] sm:$0xff]
      %v2788 = vld [vmem:[%s2743 + $0x160] sm:$0xff]
      %v2789 = vld [vmem:[%s2743 + $0x168] sm:$0xff]
      %v2790 = vld [vmem:[%s2743 + $0x170] sm:$0xff]
      %v2791 = vld [vmem:[%s2743 + $0x178] sm:$0xff]
      %v2792 = vld [vmem:[%s2743 + $0x180] sm:$0xff]
      %v2793 = vld [vmem:[%s2743 + $0x188] sm:$0xff]
      %v2794 = vld [vmem:[%s2743 + $0x190] sm:$0xff]
      %v2795 = vld [vmem:[%s2743 + $0x198] sm:$0xff]
      %v2796 = vld [vmem:[%s2743 + $0x1a0] sm:$0xff]
      %v2797 = vld [vmem:[%s2743 + $0x1a8] sm:$0xff]
      %v2798 = vld [vmem:[%s2743 + $0x1b0] sm:$0xff]
      %v2799 = vld [vmem:[%s2743 + $0x1b8] sm:$0xff]
      %v2800 = vld [vmem:[%s2743 + $0x1c0] sm:$0xff]
      %v2801 = vld [vmem:[%s2743 + $0x1c8] sm:$0xff]
      %v2802 = vld [vmem:[%s2743 + $0x1d0] sm:$0xff]
      %v2803 = vld [vmem:[%s2743 + $0x1d8] sm:$0xff]
      %v2804 = vld [vmem:[%s2743 + $0x1e0] sm:$0xff]
      %v2805 = vld [vmem:[%s2743 + $0x1e8] sm:$0xff]
      %v2806 = vld [vmem:[%s2743 + $0x1f0] sm:$0xff]
      %v2807 = vld [vmem:[%s2743 + $0x1f8] sm:$0xff]
      %v2808 = vld [vmem:[%s2743 + $0x200] sm:$0xff]
      %v2809 = vld [vmem:[%s2743 + $0x208] sm:$0xff]
      %v2810 = vld [vmem:[%s2743 + $0x210] sm:$0xff]
      %v2811 = vld [vmem:[%s2743 + $0x218] sm:$0xff]
      %v2812 = vld [vmem:[%s2743 + $0x220] sm:$0xff]
      %v2813 = vld [vmem:[%s2743 + $0x228] sm:$0xff]
      %v2814 = vld [vmem:[%s2743 + $0x230] sm:$0xff]
      %v2815 = vld [vmem:[%s2743 + $0x238] sm:$0xff]
      %v2816 = vld [vmem:[%s2743 + $0x240] sm:$0xff]
      %v2817 = vld [vmem:[%s2743 + $0x248] sm:$0xff]
      %v2818 = vld [vmem:[%s2743 + $0x250] sm:$0xff]
      %v2819 = vld [vmem:[%s2743 + $0x258] sm:$0xff]
      %v2820 = vld [vmem:[%s2743 + $0x260] sm:$0xff]
      %v2821 = vld [vmem:[%s2743 + $0x268] sm:$0xff]
      %v2822 = vld [vmem:[%s2743 + $0x270] sm:$0xff]
      %v2823 = vld [vmem:[%s2743 + $0x278] sm:$0xff]
      %v2824 = vld [vmem:[%s2743 + $0x280] sm:$0xff]
      %v2825 = vld [vmem:[%s2743 + $0x288] sm:$0xff]
      %v2826 = vld [vmem:[%s2743 + $0x290] sm:$0xff]
      %v2827 = vld [vmem:[%s2743 + $0x298] sm:$0xff]
      %v2828 = vld [vmem:[%s2743 + $0x2a0] sm:$0xff]
      %v2829 = vld [vmem:[%s2743 + $0x2a8] sm:$0xff]
      %v2830 = vld [vmem:[%s2743 + $0x2b0] sm:$0xff]
      %v2831 = vld [vmem:[%s2743 + $0x2b8] sm:$0xff]
      %v2832 = vld [vmem:[%s2743 + $0x2c0] sm:$0xff]
      %v2833 = vld [vmem:[%s2743 + $0x2c8] sm:$0xff]
      %v2834 = vld [vmem:[%s2743 + $0x2d0] sm:$0xff]
      %v2835 = vld [vmem:[%s2743 + $0x2d8] sm:$0xff]
      %v2836 = vld [vmem:[%s2743 + $0x2e0] sm:$0xff]
      %v2837 = vld [vmem:[%s2743 + $0x2e8] sm:$0xff]
      %v2838 = vld [vmem:[%s2743 + $0x2f0] sm:$0xff]
      %v2839 = vld [vmem:[%s2743 + $0x2f8] sm:$0xff]
      %v2840 = vld [vmem:[%s2743 + $0x300] sm:$0xff]
      %v2841 = vld [vmem:[%s2743 + $0x308] sm:$0xff]
      %v2842 = vld [vmem:[%s2743 + $0x310] sm:$0xff]
      %v2843 = vld [vmem:[%s2743 + $0x318] sm:$0xff]
      %v2844 = vld [vmem:[%s2743 + $0x320] sm:$0xff]
      %v2845 = vld [vmem:[%s2743 + $0x328] sm:$0xff]
      %v2846 = vld [vmem:[%s2743 + $0x330] sm:$0xff]
      %v2847 = vld [vmem:[%s2743 + $0x338] sm:$0xff]
      %v2848 = vld [vmem:[%s2743 + $0x340] sm:$0xff]
      %v2849 = vld [vmem:[%s2743 + $0x348] sm:$0xff]
      %v2850 = vld [vmem:[%s2743 + $0x350] sm:$0xff]
      %v2851 = vld [vmem:[%s2743 + $0x358] sm:$0xff]
      %v2852 = vld [vmem:[%s2743 + $0x360] sm:$0xff]
      %v2853 = vld [vmem:[%s2743 + $0x368] sm:$0xff]
      %v2854 = vld [vmem:[%s2743 + $0x370] sm:$0xff]
      %v2855 = vld [vmem:[%s2743 + $0x378] sm:$0xff]
      %v2856 = vld [vmem:[%s2743 + $0x380] sm:$0xff]
      %v2857 = vld [vmem:[%s2743 + $0x388] sm:$0xff]
      %v2858 = vld [vmem:[%s2743 + $0x390] sm:$0xff]
      %v2859 = vld [vmem:[%s2743 + $0x398] sm:$0xff]
      %v2860 = vld [vmem:[%s2743 + $0x3a0] sm:$0xff]
      %v2861 = vld [vmem:[%s2743 + $0x3a8] sm:$0xff]
      %v2862 = vld [vmem:[%s2743 + $0x3b0] sm:$0xff]
      %v2863 = vld [vmem:[%s2743 + $0x3b8] sm:$0xff]
      %v2864 = vld [vmem:[%s2743 + $0x3c0] sm:$0xff]
      %v2865 = vld [vmem:[%s2743 + $0x3c8] sm:$0xff]
      %v2866 = vld [vmem:[%s2743 + $0x3d0] sm:$0xff]
      %v2867 = vld [vmem:[%s2743 + $0x3d8] sm:$0xff]
      %v2868 = vld [vmem:[%s2743 + $0x3e0] sm:$0xff]
      %v2869 = vld [vmem:[%s2743 + $0x3e8] sm:$0xff]
      %v2870 = vld [vmem:[%s2743 + $0x3f0] sm:$0xff]
      %v2871 = vld [vmem:[%s2743 + $0x3f8] sm:$0xff]
      %v2873 = vsel %vm303, %v2744, 0
      %v2876 = vsel %vm303, %v2745, 0
      %v2879 = vsel %vm303, %v2746, 0
      %v2882 = vsel %vm303, %v2747, 0
      %v2885 = vsel %vm303, %v2748, 0
      %v2888 = vsel %vm303, %v2749, 0
      %v2891 = vsel %vm303, %v2750, 0
      %v2894 = vsel %vm303, %v2751, 0
      %v2897 = vsel %vm303, %v2752, 0
      %v2900 = vsel %vm303, %v2753, 0
      %v2903 = vsel %vm303, %v2754, 0
      %v2906 = vsel %vm303, %v2755, 0
      %v2909 = vsel %vm303, %v2756, 0
      %v2912 = vsel %vm303, %v2757, 0
      %v2915 = vsel %vm303, %v2758, 0
      %v2918 = vsel %vm303, %v2759, 0
      %v2921 = vsel %vm303, %v2760, 0
      %v2924 = vsel %vm303, %v2761, 0
      %v2927 = vsel %vm303, %v2762, 0
      %v2930 = vsel %vm303, %v2763, 0
      %v2933 = vsel %vm303, %v2764, 0
      %v2936 = vsel %vm303, %v2765, 0
      %v2939 = vsel %vm303, %v2766, 0
      %v2942 = vsel %vm303, %v2767, 0
      %v2945 = vsel %vm303, %v2768, 0
      %v2948 = vsel %vm303, %v2769, 0
      %v2951 = vsel %vm303, %v2770, 0
      %v2954 = vsel %vm303, %v2771, 0
      %v2957 = vsel %vm303, %v2772, 0
      %v2960 = vsel %vm303, %v2773, 0
      %v2963 = vsel %vm303, %v2774, 0
      %v2966 = vsel %vm303, %v2775, 0
      %v2969 = vsel %vm303, %v2776, 0
      %v2972 = vsel %vm303, %v2777, 0
      %v2975 = vsel %vm303, %v2778, 0
      %v2978 = vsel %vm303, %v2779, 0
      %v2981 = vsel %vm303, %v2780, 0
      %v2984 = vsel %vm303, %v2781, 0
      %v2987 = vsel %vm303, %v2782, 0
      %v2990 = vsel %vm303, %v2783, 0
      %v2993 = vsel %vm303, %v2784, 0
      %v2996 = vsel %vm303, %v2785, 0
      %v2999 = vsel %vm303, %v2786, 0
      %v3002 = vsel %vm303, %v2787, 0
      %v3005 = vsel %vm303, %v2788, 0
      %v3008 = vsel %vm303, %v2789, 0
      %v3011 = vsel %vm303, %v2790, 0
      %v3014 = vsel %vm303, %v2791, 0
      %v3017 = vsel %vm303, %v2792, 0
      %v3020 = vsel %vm303, %v2793, 0
      %v3023 = vsel %vm303, %v2794, 0
      %v3026 = vsel %vm303, %v2795, 0
      %v3029 = vsel %vm303, %v2796, 0
      %v3032 = vsel %vm303, %v2797, 0
      %v3035 = vsel %vm303, %v2798, 0
      %v3038 = vsel %vm303, %v2799, 0
      %v3041 = vsel %vm303, %v2800, 0
      %v3044 = vsel %vm303, %v2801, 0
      %v3047 = vsel %vm303, %v2802, 0
      %v3050 = vsel %vm303, %v2803, 0
      %v3053 = vsel %vm303, %v2804, 0
      %v3056 = vsel %vm303, %v2805, 0
      %v3059 = vsel %vm303, %v2806, 0
      %v3062 = vsel %vm303, %v2807, 0
      %v3065 = vsel %vm303, %v2808, 0
      %v3068 = vsel %vm303, %v2809, 0
      %v3071 = vsel %vm303, %v2810, 0
      %v3074 = vsel %vm303, %v2811, 0
      %v3077 = vsel %vm303, %v2812, 0
      %v3080 = vsel %vm303, %v2813, 0
      %v3083 = vsel %vm303, %v2814, 0
      %v3086 = vsel %vm303, %v2815, 0
      %v3089 = vsel %vm303, %v2816, 0
      %v3092 = vsel %vm303, %v2817, 0
      %v3095 = vsel %vm303, %v2818, 0
      %v3098 = vsel %vm303, %v2819, 0
      %v3101 = vsel %vm303, %v2820, 0
      %v3104 = vsel %vm303, %v2821, 0
      %v3107 = vsel %vm303, %v2822, 0
      %v3110 = vsel %vm303, %v2823, 0
      %v3113 = vsel %vm303, %v2824, 0
      %v3116 = vsel %vm303, %v2825, 0
      %v3119 = vsel %vm303, %v2826, 0
      %v3122 = vsel %vm303, %v2827, 0
      %v3125 = vsel %vm303, %v2828, 0
      %v3128 = vsel %vm303, %v2829, 0
      %v3131 = vsel %vm303, %v2830, 0
      %v3134 = vsel %vm303, %v2831, 0
      %v3137 = vsel %vm303, %v2832, 0
      %v3140 = vsel %vm303, %v2833, 0
      %v3143 = vsel %vm303, %v2834, 0
      %v3146 = vsel %vm303, %v2835, 0
      %v3149 = vsel %vm303, %v2836, 0
      %v3152 = vsel %vm303, %v2837, 0
      %v3155 = vsel %vm303, %v2838, 0
      %v3158 = vsel %vm303, %v2839, 0
      %v3161 = vsel %vm303, %v2840, 0
      %v3164 = vsel %vm303, %v2841, 0
      %v3167 = vsel %vm303, %v2842, 0
      %v3170 = vsel %vm303, %v2843, 0
      %v3173 = vsel %vm303, %v2844, 0
      %v3176 = vsel %vm303, %v2845, 0
      %v3179 = vsel %vm303, %v2846, 0
      %v3182 = vsel %vm303, %v2847, 0
      %v3185 = vsel %vm303, %v2848, 0
      %v3188 = vsel %vm303, %v2849, 0
      %v3191 = vsel %vm303, %v2850, 0
      %v3194 = vsel %vm303, %v2851, 0
      %v3197 = vsel %vm303, %v2852, 0
      %v3200 = vsel %vm303, %v2853, 0
      %v3203 = vsel %vm303, %v2854, 0
      %v3206 = vsel %vm303, %v2855, 0
      %v3209 = vsel %vm303, %v2856, 0
      %v3212 = vsel %vm303, %v2857, 0
      %v3215 = vsel %vm303, %v2858, 0
      %v3218 = vsel %vm303, %v2859, 0
      %v3221 = vsel %vm303, %v2860, 0
      %v3224 = vsel %vm303, %v2861, 0
      %v3227 = vsel %vm303, %v2862, 0
      %v3230 = vsel %vm303, %v2863, 0
      %v3233 = vsel %vm303, %v2864, 0
      %v3236 = vsel %vm303, %v2865, 0
      %v3239 = vsel %vm303, %v2866, 0
      %v3242 = vsel %vm303, %v2867, 0
      %v3245 = vsel %vm303, %v2868, 0
      %v3248 = vsel %vm303, %v2869, 0
      %v3251 = vsel %vm303, %v2870, 0
      %v3254 = vsel %vm303, %v2871, 0
      %3256 = vmatprep.subr.mxu0 0.0
      %3257 = vmatpush1.msra.mxu0 0.0
      %3258 = vmatprep.subr.mxu0 0.0
      %3259 = vmatpush1.msra.mxu0 0.0
      %3260 = vmatprep.subr.mxu0 0.0
      %3261 = vmatpush1.msra.mxu0 0.0
      %3262 = vmatprep.subr.mxu0 0.0
      %3263 = vmatpush1.msra.mxu0 0.0
      %3264 = vmatprep.subr.mxu0 0.0
      %3265 = vmatpush1.msra.mxu0 0.0
      %3266 = vmatprep.subr.mxu0 0.0
      %3267 = vmatpush1.msra.mxu0 0.0
      %3268 = vmatprep.subr.mxu0 0.0
      %3269 = vmatpush1.msra.mxu0 0.0
      %3270 = vmatprep.subr.mxu0 0.0
      %3271 = vmatpush1.msra.mxu0 0.0
      %3272 = vmatprep.subr.mxu0 0.0
      %3273 = vmatpush1.msra.mxu0 0.0
      %3274 = vmatprep.subr.mxu0 0.0
      %3275 = vmatpush1.msra.mxu0 0.0
      %3276 = vmatprep.subr.mxu0 0.0
      %3277 = vmatpush1.msra.mxu0 0.0
      %3278 = vmatprep.subr.mxu0 0.0
      %3279 = vmatpush1.msra.mxu0 0.0
      %3280 = vmatprep.subr.mxu0 0.0
      %3281 = vmatpush1.msra.mxu0 %v690
      %3282 = vmatprep.subr.mxu0 0.0
      %3283 = vmatpush1.msra.mxu0 %v173
      %3284 = vmatprep.subr.mxu0 0.0
      %3285 = vmatpush1.msra.mxu0 %v172
      %3286 = vmatprep.subr.mxu0 0.0
      %3287 = vmatpush1.msra.mxu0 %v171
      %3288 = vmatprep.subr.mxu0 0.0
      %3289 = vmatpush2.msra.mxu0 0.0
      %3290 = vmatprep.subr.mxu0 0.0
      %3291 = vmatpush2.msra.mxu0 0.0
      %3292 = vmatprep.subr.mxu0 0.0
      %3293 = vmatpush2.msra.mxu0 0.0
      %3294 = vmatprep.subr.mxu0 0.0
      %3295 = vmatpush2.msra.mxu0 0.0
      %3296 = vmatprep.subr.mxu0 0.0
      %3297 = vmatpush2.msra.mxu0 0.0
      %3298 = vmatprep.subr.mxu0 0.0
      %3299 = vmatpush2.msra.mxu0 0.0
      %3300 = vmatprep.subr.mxu0 0.0
      %3301 = vmatpush2.msra.mxu0 0.0
      %3302 = vmatprep.subr.mxu0 0.0
      %3303 = vmatpush2.msra.mxu0 0.0
      %3304 = vmatprep.subr.mxu0 0.0
      %3305 = vmatpush2.msra.mxu0 0.0
      %3306 = vmatprep.subr.mxu0 0.0
      %3307 = vmatpush2.msra.mxu0 0.0
      %3308 = vmatprep.subr.mxu0 0.0
      %3309 = vmatpush2.msra.mxu0 0.0
      %3310 = vmatprep.subr.mxu0 0.0
      %3311 = vmatpush2.msra.mxu0 0.0
      %3312 = vmatprep.subr.mxu0 0.0
      %3313 = vmatpush2.msra.mxu0 0.0
      %3314 = vmatprep.subr.mxu0 0.0
      %3315 = vmatpush2.msra.mxu0 0.0
      %3316 = vmatprep.subr.mxu0 0.0
      %3317 = vmatpush2.msra.mxu0 0.0
      %3318 = vmatprep.subr.mxu0 0.0
      %3319 = vmatpush2.msra.mxu0 0.0
      %3320 = vmatprep.mubr.f32.mxu0 0.0
      %3321 = vmatmul.mubr.f32.gmra.mxu0 %v2873
      %v3322 = vpop.f32.mrf.mxu0
      %v3323 = vadd.f32 0.0, %v3322
      %v3324 = vpop.f32.mrf.mxu0
      %3325 = vmatprep.mubr.f32.mxu0 0.0
      %3326 = vmatmul.mubr.f32.gmra.mxu0 %v2876
      %v3327 = vpop.f32.mrf.mxu0
      %v3328 = vadd.f32 0.0, %v3327
      %v3329 = vpop.f32.mrf.mxu0
      %3330 = vmatprep.mubr.f32.mxu0 0.0
      %3331 = vmatmul.mubr.f32.gmra.mxu0 %v2879
      %v3332 = vpop.f32.mrf.mxu0
      %v3333 = vadd.f32 0.0, %v3332
      %v3334 = vpop.f32.mrf.mxu0
      %3335 = vmatprep.mubr.f32.mxu0 0.0
      %3336 = vmatmul.mubr.f32.gmra.mxu0 %v2882
      %v3337 = vpop.f32.mrf.mxu0
      %v3338 = vadd.f32 0.0, %v3337
      %v3339 = vpop.f32.mrf.mxu0
      %3340 = vmatprep.mubr.f32.mxu0 0.0
      %3341 = vmatmul.mubr.f32.gmra.mxu0 %v2885
      %v3342 = vpop.f32.mrf.mxu0
      %v3343 = vadd.f32 0.0, %v3342
      %v3344 = vpop.f32.mrf.mxu0
      %3345 = vmatprep.mubr.f32.mxu0 0.0
      %3346 = vmatmul.mubr.f32.gmra.mxu0 %v2888
      %v3347 = vpop.f32.mrf.mxu0
      %v3348 = vadd.f32 0.0, %v3347
      %v3349 = vpop.f32.mrf.mxu0
      %3350 = vmatprep.mubr.f32.mxu0 0.0
      %3351 = vmatmul.mubr.f32.gmra.mxu0 %v2891
      %v3352 = vpop.f32.mrf.mxu0
      %v3353 = vadd.f32 0.0, %v3352
      %v3354 = vpop.f32.mrf.mxu0
      %3355 = vmatprep.mubr.f32.mxu0 0.0
      %3356 = vmatmul.mubr.f32.gmra.mxu0 %v2894
      %v3357 = vpop.f32.mrf.mxu0
      %v3358 = vadd.f32 0.0, %v3357
      %v3359 = vpop.f32.mrf.mxu0
      %3360 = vmatprep.mubr.f32.mxu0 0.0
      %3361 = vmatmul.mubr.f32.gmra.mxu0 %v2897
      %v3362 = vpop.f32.mrf.mxu0
      %v3363 = vadd.f32 0.0, %v3362
      %v3364 = vpop.f32.mrf.mxu0
      %3365 = vmatprep.mubr.f32.mxu0 0.0
      %3366 = vmatmul.mubr.f32.gmra.mxu0 %v2900
      %v3367 = vpop.f32.mrf.mxu0
      %v3368 = vadd.f32 0.0, %v3367
      %v3369 = vpop.f32.mrf.mxu0
      %3370 = vmatprep.mubr.f32.mxu0 0.0
      %3371 = vmatmul.mubr.f32.gmra.mxu0 %v2903
      %v3372 = vpop.f32.mrf.mxu0
      %v3373 = vadd.f32 0.0, %v3372
      %v3374 = vpop.f32.mrf.mxu0
      %3375 = vmatprep.mubr.f32.mxu0 0.0
      %3376 = vmatmul.mubr.f32.gmra.mxu0 %v2906
      %v3377 = vpop.f32.mrf.mxu0
      %v3378 = vadd.f32 0.0, %v3377
      %v3379 = vpop.f32.mrf.mxu0
      %3380 = vmatprep.mubr.f32.mxu0 0.0
      %3381 = vmatmul.mubr.f32.gmra.mxu0 %v2909
      %v3382 = vpop.f32.mrf.mxu0
      %v3383 = vadd.f32 0.0, %v3382
      %v3384 = vpop.f32.mrf.mxu0
      %3385 = vmatprep.mubr.f32.mxu0 0.0
      %3386 = vmatmul.mubr.f32.gmra.mxu0 %v2912
      %v3387 = vpop.f32.mrf.mxu0
      %v3388 = vadd.f32 0.0, %v3387
      %v3389 = vpop.f32.mrf.mxu0
      %3390 = vmatprep.mubr.f32.mxu0 0.0
      %3391 = vmatmul.mubr.f32.gmra.mxu0 %v2915
      %v3392 = vpop.f32.mrf.mxu0
      %v3393 = vadd.f32 0.0, %v3392
      %v3394 = vpop.f32.mrf.mxu0
      %3395 = vmatprep.mubr.f32.mxu0 0.0
      %3396 = vmatmul.mubr.f32.gmra.mxu0 %v2918
      %v3397 = vpop.f32.mrf.mxu0
      %v3398 = vadd.f32 0.0, %v3397
      %v3399 = vpop.f32.mrf.mxu0
      %3400 = vmatprep.mubr.f32.mxu0 0.0
      %3401 = vmatmul.mubr.f32.gmra.mxu0 %v2921
      %v3402 = vpop.f32.mrf.mxu0
      %v3403 = vadd.f32 0.0, %v3402
      %v3404 = vpop.f32.mrf.mxu0
      %3405 = vmatprep.mubr.f32.mxu0 0.0
      %3406 = vmatmul.mubr.f32.gmra.mxu0 %v2924
      %v3407 = vpop.f32.mrf.mxu0
      %v3408 = vadd.f32 0.0, %v3407
      %v3409 = vpop.f32.mrf.mxu0
      %3410 = vmatprep.mubr.f32.mxu0 0.0
      %3411 = vmatmul.mubr.f32.gmra.mxu0 %v2927
      %v3412 = vpop.f32.mrf.mxu0
      %v3413 = vadd.f32 0.0, %v3412
      %v3414 = vpop.f32.mrf.mxu0
      %3415 = vmatprep.mubr.f32.mxu0 0.0
      %3416 = vmatmul.mubr.f32.gmra.mxu0 %v2930
      %v3417 = vpop.f32.mrf.mxu0
      %v3418 = vadd.f32 0.0, %v3417
      %v3419 = vpop.f32.mrf.mxu0
      %3420 = vmatprep.mubr.f32.mxu0 0.0
      %3421 = vmatmul.mubr.f32.gmra.mxu0 %v2933
      %v3422 = vpop.f32.mrf.mxu0
      %v3423 = vadd.f32 0.0, %v3422
      %v3424 = vpop.f32.mrf.mxu0
      %3425 = vmatprep.mubr.f32.mxu0 0.0
      %3426 = vmatmul.mubr.f32.gmra.mxu0 %v2936
      %v3427 = vpop.f32.mrf.mxu0
      %v3428 = vadd.f32 0.0, %v3427
      %v3429 = vpop.f32.mrf.mxu0
      %3430 = vmatprep.mubr.f32.mxu0 0.0
      %3431 = vmatmul.mubr.f32.gmra.mxu0 %v2939
      %v3432 = vpop.f32.mrf.mxu0
      %v3433 = vadd.f32 0.0, %v3432
      %v3434 = vpop.f32.mrf.mxu0
      %3435 = vmatprep.mubr.f32.mxu0 0.0
      %3436 = vmatmul.mubr.f32.gmra.mxu0 %v2942
      %v3437 = vpop.f32.mrf.mxu0
      %v3438 = vadd.f32 0.0, %v3437
      %v3439 = vpop.f32.mrf.mxu0
      %3440 = vmatprep.mubr.f32.mxu0 0.0
      %3441 = vmatmul.mubr.f32.gmra.mxu0 %v2945
      %v3442 = vpop.f32.mrf.mxu0
      %v3443 = vadd.f32 0.0, %v3442
      %v3444 = vpop.f32.mrf.mxu0
      %3445 = vmatprep.mubr.f32.mxu0 0.0
      %3446 = vmatmul.mubr.f32.gmra.mxu0 %v2948
      %v3447 = vpop.f32.mrf.mxu0
      %v3448 = vadd.f32 0.0, %v3447
      %v3449 = vpop.f32.mrf.mxu0
      %3450 = vmatprep.mubr.f32.mxu0 0.0
      %3451 = vmatmul.mubr.f32.gmra.mxu0 %v2951
      %v3452 = vpop.f32.mrf.mxu0
      %v3453 = vadd.f32 0.0, %v3452
      %v3454 = vpop.f32.mrf.mxu0
      %3455 = vmatprep.mubr.f32.mxu0 0.0
      %3456 = vmatmul.mubr.f32.gmra.mxu0 %v2954
      %v3457 = vpop.f32.mrf.mxu0
      %v3458 = vadd.f32 0.0, %v3457
      %v3459 = vpop.f32.mrf.mxu0
      %3460 = vmatprep.mubr.f32.mxu0 0.0
      %3461 = vmatmul.mubr.f32.gmra.mxu0 %v2957
      %v3462 = vpop.f32.mrf.mxu0
      %v3463 = vadd.f32 0.0, %v3462
      %v3464 = vpop.f32.mrf.mxu0
      %3465 = vmatprep.mubr.f32.mxu0 0.0
      %3466 = vmatmul.mubr.f32.gmra.mxu0 %v2960
      %v3467 = vpop.f32.mrf.mxu0
      %v3468 = vadd.f32 0.0, %v3467
      %v3469 = vpop.f32.mrf.mxu0
      %3470 = vmatprep.mubr.f32.mxu0 0.0
      %3471 = vmatmul.mubr.f32.gmra.mxu0 %v2963
      %v3472 = vpop.f32.mrf.mxu0
      %v3473 = vadd.f32 0.0, %v3472
      %v3474 = vpop.f32.mrf.mxu0
      %3475 = vmatprep.mubr.f32.mxu0 0.0
      %3476 = vmatmul.mubr.f32.gmra.mxu0 %v2966
      %v3477 = vpop.f32.mrf.mxu0
      %v3478 = vadd.f32 0.0, %v3477
      %v3479 = vpop.f32.mrf.mxu0
      %3480 = vmatprep.mubr.f32.mxu0 0.0
      %3481 = vmatmul.mubr.f32.gmra.mxu0 %v2969
      %v3482 = vpop.f32.mrf.mxu0
      %v3483 = vadd.f32 0.0, %v3482
      %v3484 = vpop.f32.mrf.mxu0
      %3485 = vmatprep.mubr.f32.mxu0 0.0
      %3486 = vmatmul.mubr.f32.gmra.mxu0 %v2972
      %v3487 = vpop.f32.mrf.mxu0
      %v3488 = vadd.f32 0.0, %v3487
      %v3489 = vpop.f32.mrf.mxu0
      %3490 = vmatprep.mubr.f32.mxu0 0.0
      %3491 = vmatmul.mubr.f32.gmra.mxu0 %v2975
      %v3492 = vpop.f32.mrf.mxu0
      %v3493 = vadd.f32 0.0, %v3492
      %v3494 = vpop.f32.mrf.mxu0
      %3495 = vmatprep.mubr.f32.mxu0 0.0
      %3496 = vmatmul.mubr.f32.gmra.mxu0 %v2978
      %v3497 = vpop.f32.mrf.mxu0
      %v3498 = vadd.f32 0.0, %v3497
      %v3499 = vpop.f32.mrf.mxu0
      %3500 = vmatprep.mubr.f32.mxu0 0.0
      %3501 = vmatmul.mubr.f32.gmra.mxu0 %v2981
      %v3502 = vpop.f32.mrf.mxu0
      %v3503 = vadd.f32 0.0, %v3502
      %v3504 = vpop.f32.mrf.mxu0
      %3505 = vmatprep.mubr.f32.mxu0 0.0
      %3506 = vmatmul.mubr.f32.gmra.mxu0 %v2984
      %v3507 = vpop.f32.mrf.mxu0
      %v3508 = vadd.f32 0.0, %v3507
      %v3509 = vpop.f32.mrf.mxu0
      %3510 = vmatprep.mubr.f32.mxu0 0.0
      %3511 = vmatmul.mubr.f32.gmra.mxu0 %v2987
      %v3512 = vpop.f32.mrf.mxu0
      %v3513 = vadd.f32 0.0, %v3512
      %v3514 = vpop.f32.mrf.mxu0
      %3515 = vmatprep.mubr.f32.mxu0 0.0
      %3516 = vmatmul.mubr.f32.gmra.mxu0 %v2990
      %v3517 = vpop.f32.mrf.mxu0
      %v3518 = vadd.f32 0.0, %v3517
      %v3519 = vpop.f32.mrf.mxu0
      %3520 = vmatprep.mubr.f32.mxu0 0.0
      %3521 = vmatmul.mubr.f32.gmra.mxu0 %v2993
      %v3522 = vpop.f32.mrf.mxu0
      %v3523 = vadd.f32 0.0, %v3522
      %v3524 = vpop.f32.mrf.mxu0
      %3525 = vmatprep.mubr.f32.mxu0 0.0
      %3526 = vmatmul.mubr.f32.gmra.mxu0 %v2996
      %v3527 = vpop.f32.mrf.mxu0
      %v3528 = vadd.f32 0.0, %v3527
      %v3529 = vpop.f32.mrf.mxu0
      %3530 = vmatprep.mubr.f32.mxu0 0.0
      %3531 = vmatmul.mubr.f32.gmra.mxu0 %v2999
      %v3532 = vpop.f32.mrf.mxu0
      %v3533 = vadd.f32 0.0, %v3532
      %v3534 = vpop.f32.mrf.mxu0
      %3535 = vmatprep.mubr.f32.mxu0 0.0
      %3536 = vmatmul.mubr.f32.gmra.mxu0 %v3002
      %v3537 = vpop.f32.mrf.mxu0
      %v3538 = vadd.f32 0.0, %v3537
      %v3539 = vpop.f32.mrf.mxu0
      %3540 = vmatprep.mubr.f32.mxu0 0.0
      %3541 = vmatmul.mubr.f32.gmra.mxu0 %v3005
      %v3542 = vpop.f32.mrf.mxu0
      %v3543 = vadd.f32 0.0, %v3542
      %v3544 = vpop.f32.mrf.mxu0
      %3545 = vmatprep.mubr.f32.mxu0 0.0
      %3546 = vmatmul.mubr.f32.gmra.mxu0 %v3008
      %v3547 = vpop.f32.mrf.mxu0
      %v3548 = vadd.f32 0.0, %v3547
      %v3549 = vpop.f32.mrf.mxu0
      %3550 = vmatprep.mubr.f32.mxu0 0.0
      %3551 = vmatmul.mubr.f32.gmra.mxu0 %v3011
      %v3552 = vpop.f32.mrf.mxu0
      %v3553 = vadd.f32 0.0, %v3552
      %v3554 = vpop.f32.mrf.mxu0
      %3555 = vmatprep.mubr.f32.mxu0 0.0
      %3556 = vmatmul.mubr.f32.gmra.mxu0 %v3014
      %v3557 = vpop.f32.mrf.mxu0
      %v3558 = vadd.f32 0.0, %v3557
      %v3559 = vpop.f32.mrf.mxu0
      %3560 = vmatprep.mubr.f32.mxu0 0.0
      %3561 = vmatmul.mubr.f32.gmra.mxu0 %v3017
      %v3562 = vpop.f32.mrf.mxu0
      %v3563 = vadd.f32 0.0, %v3562
      %v3564 = vpop.f32.mrf.mxu0
      %3565 = vmatprep.mubr.f32.mxu0 0.0
      %3566 = vmatmul.mubr.f32.gmra.mxu0 %v3020
      %v3567 = vpop.f32.mrf.mxu0
      %v3568 = vadd.f32 0.0, %v3567
      %v3569 = vpop.f32.mrf.mxu0
      %3570 = vmatprep.mubr.f32.mxu0 0.0
      %3571 = vmatmul.mubr.f32.gmra.mxu0 %v3023
      %v3572 = vpop.f32.mrf.mxu0
      %v3573 = vadd.f32 0.0, %v3572
      %v3574 = vpop.f32.mrf.mxu0
      %3575 = vmatprep.mubr.f32.mxu0 0.0
      %3576 = vmatmul.mubr.f32.gmra.mxu0 %v3026
      %v3577 = vpop.f32.mrf.mxu0
      %v3578 = vadd.f32 0.0, %v3577
      %v3579 = vpop.f32.mrf.mxu0
      %3580 = vmatprep.mubr.f32.mxu0 0.0
      %3581 = vmatmul.mubr.f32.gmra.mxu0 %v3029
      %v3582 = vpop.f32.mrf.mxu0
      %v3583 = vadd.f32 0.0, %v3582
      %v3584 = vpop.f32.mrf.mxu0
      %3585 = vmatprep.mubr.f32.mxu0 0.0
      %3586 = vmatmul.mubr.f32.gmra.mxu0 %v3032
      %v3587 = vpop.f32.mrf.mxu0
      %v3588 = vadd.f32 0.0, %v3587
      %v3589 = vpop.f32.mrf.mxu0
      %3590 = vmatprep.mubr.f32.mxu0 0.0
      %3591 = vmatmul.mubr.f32.gmra.mxu0 %v3035
      %v3592 = vpop.f32.mrf.mxu0
      %v3593 = vadd.f32 0.0, %v3592
      %v3594 = vpop.f32.mrf.mxu0
      %3595 = vmatprep.mubr.f32.mxu0 0.0
      %3596 = vmatmul.mubr.f32.gmra.mxu0 %v3038
      %v3597 = vpop.f32.mrf.mxu0
      %v3598 = vadd.f32 0.0, %v3597
      %v3599 = vpop.f32.mrf.mxu0
      %3600 = vmatprep.mubr.f32.mxu0 0.0
      %3601 = vmatmul.mubr.f32.gmra.mxu0 %v3041
      %v3602 = vpop.f32.mrf.mxu0
      %v3603 = vadd.f32 0.0, %v3602
      %v3604 = vpop.f32.mrf.mxu0
      %3605 = vmatprep.mubr.f32.mxu0 0.0
      %3606 = vmatmul.mubr.f32.gmra.mxu0 %v3044
      %v3607 = vpop.f32.mrf.mxu0
      %v3608 = vadd.f32 0.0, %v3607
      %v3609 = vpop.f32.mrf.mxu0
      %3610 = vmatprep.mubr.f32.mxu0 0.0
      %3611 = vmatmul.mubr.f32.gmra.mxu0 %v3047
      %v3612 = vpop.f32.mrf.mxu0
      %v3613 = vadd.f32 0.0, %v3612
      %v3614 = vpop.f32.mrf.mxu0
      %3615 = vmatprep.mubr.f32.mxu0 0.0
      %3616 = vmatmul.mubr.f32.gmra.mxu0 %v3050
      %v3617 = vpop.f32.mrf.mxu0
      %v3618 = vadd.f32 0.0, %v3617
      %v3619 = vpop.f32.mrf.mxu0
      %3620 = vmatprep.mubr.f32.mxu0 0.0
      %3621 = vmatmul.mubr.f32.gmra.mxu0 %v3053
      %v3622 = vpop.f32.mrf.mxu0
      %v3623 = vadd.f32 0.0, %v3622
      %v3624 = vpop.f32.mrf.mxu0
      %3625 = vmatprep.mubr.f32.mxu0 0.0
      %3626 = vmatmul.mubr.f32.gmra.mxu0 %v3056
      %v3627 = vpop.f32.mrf.mxu0
      %v3628 = vadd.f32 0.0, %v3627
      %v3629 = vpop.f32.mrf.mxu0
      %3630 = vmatprep.mubr.f32.mxu0 0.0
      %3631 = vmatmul.mubr.f32.gmra.mxu0 %v3059
      %v3632 = vpop.f32.mrf.mxu0
      %v3633 = vadd.f32 0.0, %v3632
      %v3634 = vpop.f32.mrf.mxu0
      %3635 = vmatprep.mubr.f32.mxu0 0.0
      %3636 = vmatmul.mubr.f32.gmra.mxu0 %v3062
      %v3637 = vpop.f32.mrf.mxu0
      %v3638 = vadd.f32 0.0, %v3637
      %v3639 = vpop.f32.mrf.mxu0
      %3640 = vmatprep.mubr.f32.mxu0 0.0
      %3641 = vmatmul.mubr.f32.gmra.mxu0 %v3065
      %v3642 = vpop.f32.mrf.mxu0
      %v3643 = vadd.f32 0.0, %v3642
      %v3644 = vpop.f32.mrf.mxu0
      %3645 = vmatprep.mubr.f32.mxu0 0.0
      %3646 = vmatmul.mubr.f32.gmra.mxu0 %v3068
      %v3647 = vpop.f32.mrf.mxu0
      %v3648 = vadd.f32 0.0, %v3647
      %v3649 = vpop.f32.mrf.mxu0
      %3650 = vmatprep.mubr.f32.mxu0 0.0
      %3651 = vmatmul.mubr.f32.gmra.mxu0 %v3071
      %v3652 = vpop.f32.mrf.mxu0
      %v3653 = vadd.f32 0.0, %v3652
      %v3654 = vpop.f32.mrf.mxu0
      %3655 = vmatprep.mubr.f32.mxu0 0.0
      %3656 = vmatmul.mubr.f32.gmra.mxu0 %v3074
      %v3657 = vpop.f32.mrf.mxu0
      %v3658 = vadd.f32 0.0, %v3657
      %v3659 = vpop.f32.mrf.mxu0
      %3660 = vmatprep.mubr.f32.mxu0 0.0
      %3661 = vmatmul.mubr.f32.gmra.mxu0 %v3077
      %v3662 = vpop.f32.mrf.mxu0
      %v3663 = vadd.f32 0.0, %v3662
      %v3664 = vpop.f32.mrf.mxu0
      %3665 = vmatprep.mubr.f32.mxu0 0.0
      %3666 = vmatmul.mubr.f32.gmra.mxu0 %v3080
      %v3667 = vpop.f32.mrf.mxu0
      %v3668 = vadd.f32 0.0, %v3667
      %v3669 = vpop.f32.mrf.mxu0
      %3670 = vmatprep.mubr.f32.mxu0 0.0
      %3671 = vmatmul.mubr.f32.gmra.mxu0 %v3083
      %v3672 = vpop.f32.mrf.mxu0
      %v3673 = vadd.f32 0.0, %v3672
      %v3674 = vpop.f32.mrf.mxu0
      %3675 = vmatprep.mubr.f32.mxu0 0.0
      %3676 = vmatmul.mubr.f32.gmra.mxu0 %v3086
      %v3677 = vpop.f32.mrf.mxu0
      %v3678 = vadd.f32 0.0, %v3677
      %v3679 = vpop.f32.mrf.mxu0
      %3680 = vmatprep.mubr.f32.mxu0 0.0
      %3681 = vmatmul.mubr.f32.gmra.mxu0 %v3089
      %v3682 = vpop.f32.mrf.mxu0
      %v3683 = vadd.f32 0.0, %v3682
      %v3684 = vpop.f32.mrf.mxu0
      %3685 = vmatprep.mubr.f32.mxu0 0.0
      %3686 = vmatmul.mubr.f32.gmra.mxu0 %v3092
      %v3687 = vpop.f32.mrf.mxu0
      %v3688 = vadd.f32 0.0, %v3687
      %v3689 = vpop.f32.mrf.mxu0
      %3690 = vmatprep.mubr.f32.mxu0 0.0
      %3691 = vmatmul.mubr.f32.gmra.mxu0 %v3095
      %v3692 = vpop.f32.mrf.mxu0
      %v3693 = vadd.f32 0.0, %v3692
      %v3694 = vpop.f32.mrf.mxu0
      %3695 = vmatprep.mubr.f32.mxu0 0.0
      %3696 = vmatmul.mubr.f32.gmra.mxu0 %v3098
      %v3697 = vpop.f32.mrf.mxu0
      %v3698 = vadd.f32 0.0, %v3697
      %v3699 = vpop.f32.mrf.mxu0
      %3700 = vmatprep.mubr.f32.mxu0 0.0
      %3701 = vmatmul.mubr.f32.gmra.mxu0 %v3101
      %v3702 = vpop.f32.mrf.mxu0
      %v3703 = vadd.f32 0.0, %v3702
      %v3704 = vpop.f32.mrf.mxu0
      %3705 = vmatprep.mubr.f32.mxu0 0.0
      %3706 = vmatmul.mubr.f32.gmra.mxu0 %v3104
      %v3707 = vpop.f32.mrf.mxu0
      %v3708 = vadd.f32 0.0, %v3707
      %v3709 = vpop.f32.mrf.mxu0
      %3710 = vmatprep.mubr.f32.mxu0 0.0
      %3711 = vmatmul.mubr.f32.gmra.mxu0 %v3107
      %v3712 = vpop.f32.mrf.mxu0
      %v3713 = vadd.f32 0.0, %v3712
      %v3714 = vpop.f32.mrf.mxu0
      %3715 = vmatprep.mubr.f32.mxu0 0.0
      %3716 = vmatmul.mubr.f32.gmra.mxu0 %v3110
      %v3717 = vpop.f32.mrf.mxu0
      %v3718 = vadd.f32 0.0, %v3717
      %v3719 = vpop.f32.mrf.mxu0
      %3720 = vmatprep.mubr.f32.mxu0 0.0
      %3721 = vmatmul.mubr.f32.gmra.mxu0 %v3113
      %v3722 = vpop.f32.mrf.mxu0
      %v3723 = vadd.f32 0.0, %v3722
      %v3724 = vpop.f32.mrf.mxu0
      %3725 = vmatprep.mubr.f32.mxu0 0.0
      %3726 = vmatmul.mubr.f32.gmra.mxu0 %v3116
      %v3727 = vpop.f32.mrf.mxu0
      %v3728 = vadd.f32 0.0, %v3727
      %v3729 = vpop.f32.mrf.mxu0
      %3730 = vmatprep.mubr.f32.mxu0 0.0
      %3731 = vmatmul.mubr.f32.gmra.mxu0 %v3119
      %v3732 = vpop.f32.mrf.mxu0
      %v3733 = vadd.f32 0.0, %v3732
      %v3734 = vpop.f32.mrf.mxu0
      %3735 = vmatprep.mubr.f32.mxu0 0.0
      %3736 = vmatmul.mubr.f32.gmra.mxu0 %v3122
      %v3737 = vpop.f32.mrf.mxu0
      %v3738 = vadd.f32 0.0, %v3737
      %v3739 = vpop.f32.mrf.mxu0
      %3740 = vmatprep.mubr.f32.mxu0 0.0
      %3741 = vmatmul.mubr.f32.gmra.mxu0 %v3125
      %v3742 = vpop.f32.mrf.mxu0
      %v3743 = vadd.f32 0.0, %v3742
      %v3744 = vpop.f32.mrf.mxu0
      %3745 = vmatprep.mubr.f32.mxu0 0.0
      %3746 = vmatmul.mubr.f32.gmra.mxu0 %v3128
      %v3747 = vpop.f32.mrf.mxu0
      %v3748 = vadd.f32 0.0, %v3747
      %v3749 = vpop.f32.mrf.mxu0
      %3750 = vmatprep.mubr.f32.mxu0 0.0
      %3751 = vmatmul.mubr.f32.gmra.mxu0 %v3131
      %v3752 = vpop.f32.mrf.mxu0
      %v3753 = vadd.f32 0.0, %v3752
      %v3754 = vpop.f32.mrf.mxu0
      %3755 = vmatprep.mubr.f32.mxu0 0.0
      %3756 = vmatmul.mubr.f32.gmra.mxu0 %v3134
      %v3757 = vpop.f32.mrf.mxu0
      %v3758 = vadd.f32 0.0, %v3757
      %v3759 = vpop.f32.mrf.mxu0
      %3760 = vmatprep.mubr.f32.mxu0 0.0
      %3761 = vmatmul.mubr.f32.gmra.mxu0 %v3137
      %v3762 = vpop.f32.mrf.mxu0
      %v3763 = vadd.f32 0.0, %v3762
      %v3764 = vpop.f32.mrf.mxu0
      %3765 = vmatprep.mubr.f32.mxu0 0.0
      %3766 = vmatmul.mubr.f32.gmra.mxu0 %v3140
      %v3767 = vpop.f32.mrf.mxu0
      %v3768 = vadd.f32 0.0, %v3767
      %v3769 = vpop.f32.mrf.mxu0
      %3770 = vmatprep.mubr.f32.mxu0 0.0
      %3771 = vmatmul.mubr.f32.gmra.mxu0 %v3143
      %v3772 = vpop.f32.mrf.mxu0
      %v3773 = vadd.f32 0.0, %v3772
      %v3774 = vpop.f32.mrf.mxu0
      %3775 = vmatprep.mubr.f32.mxu0 0.0
      %3776 = vmatmul.mubr.f32.gmra.mxu0 %v3146
      %v3777 = vpop.f32.mrf.mxu0
      %v3778 = vadd.f32 0.0, %v3777
      %v3779 = vpop.f32.mrf.mxu0
      %3780 = vmatprep.mubr.f32.mxu0 0.0
      %3781 = vmatmul.mubr.f32.gmra.mxu0 %v3149
      %v3782 = vpop.f32.mrf.mxu0
      %v3783 = vadd.f32 0.0, %v3782
      %v3784 = vpop.f32.mrf.mxu0
      %3785 = vmatprep.mubr.f32.mxu0 0.0
      %3786 = vmatmul.mubr.f32.gmra.mxu0 %v3152
      %v3787 = vpop.f32.mrf.mxu0
      %v3788 = vadd.f32 0.0, %v3787
      %v3789 = vpop.f32.mrf.mxu0
      %3790 = vmatprep.mubr.f32.mxu0 0.0
      %3791 = vmatmul.mubr.f32.gmra.mxu0 %v3155
      %v3792 = vpop.f32.mrf.mxu0
      %v3793 = vadd.f32 0.0, %v3792
      %v3794 = vpop.f32.mrf.mxu0
      %3795 = vmatprep.mubr.f32.mxu0 0.0
      %3796 = vmatmul.mubr.f32.gmra.mxu0 %v3158
      %v3797 = vpop.f32.mrf.mxu0
      %v3798 = vadd.f32 0.0, %v3797
      %v3799 = vpop.f32.mrf.mxu0
      %3800 = vmatprep.mubr.f32.mxu0 0.0
      %3801 = vmatmul.mubr.f32.gmra.mxu0 %v3161
      %v3802 = vpop.f32.mrf.mxu0
      %v3803 = vadd.f32 0.0, %v3802
      %v3804 = vpop.f32.mrf.mxu0
      %3805 = vmatprep.mubr.f32.mxu0 0.0
      %3806 = vmatmul.mubr.f32.gmra.mxu0 %v3164
      %v3807 = vpop.f32.mrf.mxu0
      %v3808 = vadd.f32 0.0, %v3807
      %v3809 = vpop.f32.mrf.mxu0
      %3810 = vmatprep.mubr.f32.mxu0 0.0
      %3811 = vmatmul.mubr.f32.gmra.mxu0 %v3167
      %v3812 = vpop.f32.mrf.mxu0
      %v3813 = vadd.f32 0.0, %v3812
      %v3814 = vpop.f32.mrf.mxu0
      %3815 = vmatprep.mubr.f32.mxu0 0.0
      %3816 = vmatmul.mubr.f32.gmra.mxu0 %v3170
      %v3817 = vpop.f32.mrf.mxu0
      %v3818 = vadd.f32 0.0, %v3817
      %v3819 = vpop.f32.mrf.mxu0
      %3820 = vmatprep.mubr.f32.mxu0 0.0
      %3821 = vmatmul.mubr.f32.gmra.mxu0 %v3173
      %v3822 = vpop.f32.mrf.mxu0
      %v3823 = vadd.f32 0.0, %v3822
      %v3824 = vpop.f32.mrf.mxu0
      %3825 = vmatprep.mubr.f32.mxu0 0.0
      %3826 = vmatmul.mubr.f32.gmra.mxu0 %v3176
      %v3827 = vpop.f32.mrf.mxu0
      %v3828 = vadd.f32 0.0, %v3827
      %v3829 = vpop.f32.mrf.mxu0
      %3830 = vmatprep.mubr.f32.mxu0 0.0
      %3831 = vmatmul.mubr.f32.gmra.mxu0 %v3179
      %v3832 = vpop.f32.mrf.mxu0
      %v3833 = vadd.f32 0.0, %v3832
      %v3834 = vpop.f32.mrf.mxu0
      %3835 = vmatprep.mubr.f32.mxu0 0.0
      %3836 = vmatmul.mubr.f32.gmra.mxu0 %v3182
      %v3837 = vpop.f32.mrf.mxu0
      %v3838 = vadd.f32 0.0, %v3837
      %v3839 = vpop.f32.mrf.mxu0
      %3840 = vmatprep.mubr.f32.mxu0 0.0
      %3841 = vmatmul.mubr.f32.gmra.mxu0 %v3185
      %v3842 = vpop.f32.mrf.mxu0
      %v3843 = vadd.f32 0.0, %v3842
      %v3844 = vpop.f32.mrf.mxu0
      %3845 = vmatprep.mubr.f32.mxu0 0.0
      %3846 = vmatmul.mubr.f32.gmra.mxu0 %v3188
      %v3847 = vpop.f32.mrf.mxu0
      %v3848 = vadd.f32 0.0, %v3847
      %v3849 = vpop.f32.mrf.mxu0
      %3850 = vmatprep.mubr.f32.mxu0 0.0
      %3851 = vmatmul.mubr.f32.gmra.mxu0 %v3191
      %v3852 = vpop.f32.mrf.mxu0
      %v3853 = vadd.f32 0.0, %v3852
      %v3854 = vpop.f32.mrf.mxu0
      %3855 = vmatprep.mubr.f32.mxu0 0.0
      %3856 = vmatmul.mubr.f32.gmra.mxu0 %v3194
      %v3857 = vpop.f32.mrf.mxu0
      %v3858 = vadd.f32 0.0, %v3857
      %v3859 = vpop.f32.mrf.mxu0
      %3860 = vmatprep.mubr.f32.mxu0 0.0
      %3861 = vmatmul.mubr.f32.gmra.mxu0 %v3197
      %v3862 = vpop.f32.mrf.mxu0
      %v3863 = vadd.f32 0.0, %v3862
      %v3864 = vpop.f32.mrf.mxu0
      %3865 = vmatprep.mubr.f32.mxu0 0.0
      %3866 = vmatmul.mubr.f32.gmra.mxu0 %v3200
      %v3867 = vpop.f32.mrf.mxu0
      %v3868 = vadd.f32 0.0, %v3867
      %v3869 = vpop.f32.mrf.mxu0
      %3870 = vmatprep.mubr.f32.mxu0 0.0
      %3871 = vmatmul.mubr.f32.gmra.mxu0 %v3203
      %v3872 = vpop.f32.mrf.mxu0
      %v3873 = vadd.f32 0.0, %v3872
      %v3874 = vpop.f32.mrf.mxu0
      %3875 = vmatprep.mubr.f32.mxu0 0.0
      %3876 = vmatmul.mubr.f32.gmra.mxu0 %v3206
      %v3877 = vpop.f32.mrf.mxu0
      %v3878 = vadd.f32 0.0, %v3877
      %v3879 = vpop.f32.mrf.mxu0
      %3880 = vmatprep.mubr.f32.mxu0 0.0
      %3881 = vmatmul.mubr.f32.gmra.mxu0 %v3209
      %v3882 = vpop.f32.mrf.mxu0
      %v3883 = vadd.f32 0.0, %v3882
      %v3884 = vpop.f32.mrf.mxu0
      %3885 = vmatprep.mubr.f32.mxu0 0.0
      %3886 = vmatmul.mubr.f32.gmra.mxu0 %v3212
      %v3887 = vpop.f32.mrf.mxu0
      %v3888 = vadd.f32 0.0, %v3887
      %v3889 = vpop.f32.mrf.mxu0
      %3890 = vmatprep.mubr.f32.mxu0 0.0
      %3891 = vmatmul.mubr.f32.gmra.mxu0 %v3215
      %v3892 = vpop.f32.mrf.mxu0
      %v3893 = vadd.f32 0.0, %v3892
      %v3894 = vpop.f32.mrf.mxu0
      %3895 = vmatprep.mubr.f32.mxu0 0.0
      %3896 = vmatmul.mubr.f32.gmra.mxu0 %v3218
      %v3897 = vpop.f32.mrf.mxu0
      %v3898 = vadd.f32 0.0, %v3897
      %v3899 = vpop.f32.mrf.mxu0
      %3900 = vmatprep.mubr.f32.mxu0 0.0
      %3901 = vmatmul.mubr.f32.gmra.mxu0 %v3221
      %v3902 = vpop.f32.mrf.mxu0
      %v3903 = vadd.f32 0.0, %v3902
      %v3904 = vpop.f32.mrf.mxu0
      %3905 = vmatprep.mubr.f32.mxu0 0.0
      %3906 = vmatmul.mubr.f32.gmra.mxu0 %v3224
      %v3907 = vpop.f32.mrf.mxu0
      %v3908 = vadd.f32 0.0, %v3907
      %v3909 = vpop.f32.mrf.mxu0
      %3910 = vmatprep.mubr.f32.mxu0 0.0
      %3911 = vmatmul.mubr.f32.gmra.mxu0 %v3227
      %v3912 = vpop.f32.mrf.mxu0
      %v3913 = vadd.f32 0.0, %v3912
      %v3914 = vpop.f32.mrf.mxu0
      %3915 = vmatprep.mubr.f32.mxu0 0.0
      %3916 = vmatmul.mubr.f32.gmra.mxu0 %v3230
      %v3917 = vpop.f32.mrf.mxu0
      %v3918 = vadd.f32 0.0, %v3917
      %v3919 = vpop.f32.mrf.mxu0
      %3920 = vmatprep.mubr.f32.mxu0 0.0
      %3921 = vmatmul.mubr.f32.gmra.mxu0 %v3233
      %v3922 = vpop.f32.mrf.mxu0
      %v3923 = vadd.f32 0.0, %v3922
      %v3924 = vpop.f32.mrf.mxu0
      %3925 = vmatprep.mubr.f32.mxu0 0.0
      %3926 = vmatmul.mubr.f32.gmra.mxu0 %v3236
      %v3927 = vpop.f32.mrf.mxu0
      %v3928 = vadd.f32 0.0, %v3927
      %v3929 = vpop.f32.mrf.mxu0
      %3930 = vmatprep.mubr.f32.mxu0 0.0
      %3931 = vmatmul.mubr.f32.gmra.mxu0 %v3239
      %v3932 = vpop.f32.mrf.mxu0
      %v3933 = vadd.f32 0.0, %v3932
      %v3934 = vpop.f32.mrf.mxu0
      %3935 = vmatprep.mubr.f32.mxu0 0.0
      %3936 = vmatmul.mubr.f32.gmra.mxu0 %v3242
      %v3937 = vpop.f32.mrf.mxu0
      %v3938 = vadd.f32 0.0, %v3937
      %v3939 = vpop.f32.mrf.mxu0
      %3940 = vmatprep.mubr.f32.mxu0 0.0
      %3941 = vmatmul.mubr.f32.gmra.mxu0 %v3245
      %v3942 = vpop.f32.mrf.mxu0
      %v3943 = vadd.f32 0.0, %v3942
      %v3944 = vpop.f32.mrf.mxu0
      %3945 = vmatprep.mubr.f32.mxu0 0.0
      %3946 = vmatmul.mubr.f32.gmra.mxu0 %v3248
      %v3947 = vpop.f32.mrf.mxu0
      %v3948 = vadd.f32 0.0, %v3947
      %v3949 = vpop.f32.mrf.mxu0
      %3950 = vmatprep.mubr.f32.mxu0 0.0
      %3951 = vmatmul.mubr.f32.gmra.mxu0 %v3251
      %v3952 = vpop.f32.mrf.mxu0
      %v3953 = vadd.f32 0.0, %v3952
      %v3954 = vpop.f32.mrf.mxu0
      %3955 = vmatprep.mubr.f32.mxu0 0.0
      %3956 = vmatmul.mubr.f32.gmra.mxu0 %v3254
      %v3957 = vpop.f32.mrf.mxu0
      %v3958 = vadd.f32 0.0, %v3957
      %v3959 = vpop.f32.mrf.mxu0
      %3960 = vdwg.mxu0
      %v3961 = vmax.f32 %v2615, %v3323
      %v3962 = vmax.f32 %v2616, %v3328
      %v3963 = vmax.f32 %v2617, %v3333
      %v3964 = vmax.f32 %v2618, %v3338
      %v3965 = vmax.f32 %v2619, %v3343
      %v3966 = vmax.f32 %v2620, %v3348
      %v3967 = vmax.f32 %v2621, %v3353
      %v3968 = vmax.f32 %v2622, %v3358
      %v3969 = vmax.f32 %v2623, %v3363
      %v3970 = vmax.f32 %v2624, %v3368
      %v3971 = vmax.f32 %v2625, %v3373
      %v3972 = vmax.f32 %v2626, %v3378
      %v3973 = vmax.f32 %v2627, %v3383
      %v3974 = vmax.f32 %v2628, %v3388
      %v3975 = vmax.f32 %v2629, %v3393
      %v3976 = vmax.f32 %v2630, %v3398
      %v3977 = vmax.f32 %v2631, %v3403
      %v3978 = vmax.f32 %v2632, %v3408
      %v3979 = vmax.f32 %v2633, %v3413
      %v3980 = vmax.f32 %v2634, %v3418
      %v3981 = vmax.f32 %v2635, %v3423
      %v3982 = vmax.f32 %v2636, %v3428
      %v3983 = vmax.f32 %v2637, %v3433
      %v3984 = vmax.f32 %v2638, %v3438
      %v3985 = vmax.f32 %v2639, %v3443
      %v3986 = vmax.f32 %v2640, %v3448
      %v3987 = vmax.f32 %v2641, %v3453
      %v3988 = vmax.f32 %v2642, %v3458
      %v3989 = vmax.f32 %v2643, %v3463
      %v3990 = vmax.f32 %v2644, %v3468
      %v3991 = vmax.f32 %v2645, %v3473
      %v3992 = vmax.f32 %v2646, %v3478
      %v3993 = vmax.f32 %v2647, %v3483
      %v3994 = vmax.f32 %v2648, %v3488
      %v3995 = vmax.f32 %v2649, %v3493
      %v3996 = vmax.f32 %v2650, %v3498
      %v3997 = vmax.f32 %v2651, %v3503
      %v3998 = vmax.f32 %v2652, %v3508
      %v3999 = vmax.f32 %v2653, %v3513
      %v4000 = vmax.f32 %v2654, %v3518
      %v4001 = vmax.f32 %v2655, %v3523
      %v4002 = vmax.f32 %v2656, %v3528
      %v4003 = vmax.f32 %v2657, %v3533
      %v4004 = vmax.f32 %v2658, %v3538
      %v4005 = vmax.f32 %v2659, %v3543
      %v4006 = vmax.f32 %v2660, %v3548
      %v4007 = vmax.f32 %v2661, %v3553
      %v4008 = vmax.f32 %v2662, %v3558
      %v4009 = vmax.f32 %v2663, %v3563
      %v4010 = vmax.f32 %v2664, %v3568
      %v4011 = vmax.f32 %v2665, %v3573
      %v4012 = vmax.f32 %v2666, %v3578
      %v4013 = vmax.f32 %v2667, %v3583
      %v4014 = vmax.f32 %v2668, %v3588
      %v4015 = vmax.f32 %v2669, %v3593
      %v4016 = vmax.f32 %v2670, %v3598
      %v4017 = vmax.f32 %v2671, %v3603
      %v4018 = vmax.f32 %v2672, %v3608
      %v4019 = vmax.f32 %v2673, %v3613
      %v4020 = vmax.f32 %v2674, %v3618
      %v4021 = vmax.f32 %v2675, %v3623
      %v4022 = vmax.f32 %v2676, %v3628
      %v4023 = vmax.f32 %v2677, %v3633
      %v4024 = vmax.f32 %v2678, %v3638
      %v4025 = vmax.f32 %v2679, %v3643
      %v4026 = vmax.f32 %v2680, %v3648
      %v4027 = vmax.f32 %v2681, %v3653
      %v4028 = vmax.f32 %v2682, %v3658
      %v4029 = vmax.f32 %v2683, %v3663
      %v4030 = vmax.f32 %v2684, %v3668
      %v4031 = vmax.f32 %v2685, %v3673
      %v4032 = vmax.f32 %v2686, %v3678
      %v4033 = vmax.f32 %v2687, %v3683
      %v4034 = vmax.f32 %v2688, %v3688
      %v4035 = vmax.f32 %v2689, %v3693
      %v4036 = vmax.f32 %v2690, %v3698
      %v4037 = vmax.f32 %v2691, %v3703
      %v4038 = vmax.f32 %v2692, %v3708
      %v4039 = vmax.f32 %v2693, %v3713
      %v4040 = vmax.f32 %v2694, %v3718
      %v4041 = vmax.f32 %v2695, %v3723
      %v4042 = vmax.f32 %v2696, %v3728
      %v4043 = vmax.f32 %v2697, %v3733
      %v4044 = vmax.f32 %v2698, %v3738
      %v4045 = vmax.f32 %v2699, %v3743
      %v4046 = vmax.f32 %v2700, %v3748
      %v4047 = vmax.f32 %v2701, %v3753
      %v4048 = vmax.f32 %v2702, %v3758
      %v4049 = vmax.f32 %v2703, %v3763
      %v4050 = vmax.f32 %v2704, %v3768
      %v4051 = vmax.f32 %v2705, %v3773
      %v4052 = vmax.f32 %v2706, %v3778
      %v4053 = vmax.f32 %v2707, %v3783
      %v4054 = vmax.f32 %v2708, %v3788
      %v4055 = vmax.f32 %v2709, %v3793
      %v4056 = vmax.f32 %v2710, %v3798
      %v4057 = vmax.f32 %v2711, %v3803
      %v4058 = vmax.f32 %v2712, %v3808
      %v4059 = vmax.f32 %v2713, %v3813
      %v4060 = vmax.f32 %v2714, %v3818
      %v4061 = vmax.f32 %v2715, %v3823
      %v4062 = vmax.f32 %v2716, %v3828
      %v4063 = vmax.f32 %v2717, %v3833
      %v4064 = vmax.f32 %v2718, %v3838
      %v4065 = vmax.f32 %v2719, %v3843
      %v4066 = vmax.f32 %v2720, %v3848
      %v4067 = vmax.f32 %v2721, %v3853
      %v4068 = vmax.f32 %v2722, %v3858
      %v4069 = vmax.f32 %v2723, %v3863
      %v4070 = vmax.f32 %v2724, %v3868
      %v4071 = vmax.f32 %v2725, %v3873
      %v4072 = vmax.f32 %v2726, %v3878
      %v4073 = vmax.f32 %v2727, %v3883
      %v4074 = vmax.f32 %v2728, %v3888
      %v4075 = vmax.f32 %v2729, %v3893
      %v4076 = vmax.f32 %v2730, %v3898
      %v4077 = vmax.f32 %v2731, %v3903
      %v4078 = vmax.f32 %v2732, %v3908
      %v4079 = vmax.f32 %v2733, %v3913
      %v4080 = vmax.f32 %v2734, %v3918
      %v4081 = vmax.f32 %v2735, %v3923
      %v4082 = vmax.f32 %v2736, %v3928
      %v4083 = vmax.f32 %v2737, %v3933
      %v4084 = vmax.f32 %v2738, %v3938
      %v4085 = vmax.f32 %v2739, %v3943
      %v4086 = vmax.f32 %v2740, %v3948
      %v4087 = vmax.f32 %v2741, %v3953
      %v4088 = vmax.f32 %v2742, %v3958
      %s4089 = scalar_lea.vmem %s165, 3072
      %v4090 = vld [vmem:[%s4089] sm:$0xff]
      %v4091 = vld [vmem:[%s4089 + $0x8] sm:$0xff]
      %v4092 = vld [vmem:[%s4089 + $0x10] sm:$0xff]
      %v4093 = vld [vmem:[%s4089 + $0x18] sm:$0xff]
      %v4094 = vld [vmem:[%s4089 + $0x20] sm:$0xff]
      %v4095 = vld [vmem:[%s4089 + $0x28] sm:$0xff]
      %v4096 = vld [vmem:[%s4089 + $0x30] sm:$0xff]
      %v4097 = vld [vmem:[%s4089 + $0x38] sm:$0xff]
      %v4098 = vld [vmem:[%s4089 + $0x40] sm:$0xff]
      %v4099 = vld [vmem:[%s4089 + $0x48] sm:$0xff]
      %v4100 = vld [vmem:[%s4089 + $0x50] sm:$0xff]
      %v4101 = vld [vmem:[%s4089 + $0x58] sm:$0xff]
      %v4102 = vld [vmem:[%s4089 + $0x60] sm:$0xff]
      %v4103 = vld [vmem:[%s4089 + $0x68] sm:$0xff]
      %v4104 = vld [vmem:[%s4089 + $0x70] sm:$0xff]
      %v4105 = vld [vmem:[%s4089 + $0x78] sm:$0xff]
      %v4106 = vld [vmem:[%s4089 + $0x80] sm:$0xff]
      %v4107 = vld [vmem:[%s4089 + $0x88] sm:$0xff]
      %v4108 = vld [vmem:[%s4089 + $0x90] sm:$0xff]
      %v4109 = vld [vmem:[%s4089 + $0x98] sm:$0xff]
      %v4110 = vld [vmem:[%s4089 + $0xa0] sm:$0xff]
      %v4111 = vld [vmem:[%s4089 + $0xa8] sm:$0xff]
      %v4112 = vld [vmem:[%s4089 + $0xb0] sm:$0xff]
      %v4113 = vld [vmem:[%s4089 + $0xb8] sm:$0xff]
      %v4114 = vld [vmem:[%s4089 + $0xc0] sm:$0xff]
      %v4115 = vld [vmem:[%s4089 + $0xc8] sm:$0xff]
      %v4116 = vld [vmem:[%s4089 + $0xd0] sm:$0xff]
      %v4117 = vld [vmem:[%s4089 + $0xd8] sm:$0xff]
      %v4118 = vld [vmem:[%s4089 + $0xe0] sm:$0xff]
      %v4119 = vld [vmem:[%s4089 + $0xe8] sm:$0xff]
      %v4120 = vld [vmem:[%s4089 + $0xf0] sm:$0xff]
      %v4121 = vld [vmem:[%s4089 + $0xf8] sm:$0xff]
      %v4122 = vld [vmem:[%s4089 + $0x100] sm:$0xff]
      %v4123 = vld [vmem:[%s4089 + $0x108] sm:$0xff]
      %v4124 = vld [vmem:[%s4089 + $0x110] sm:$0xff]
      %v4125 = vld [vmem:[%s4089 + $0x118] sm:$0xff]
      %v4126 = vld [vmem:[%s4089 + $0x120] sm:$0xff]
      %v4127 = vld [vmem:[%s4089 + $0x128] sm:$0xff]
      %v4128 = vld [vmem:[%s4089 + $0x130] sm:$0xff]
      %v4129 = vld [vmem:[%s4089 + $0x138] sm:$0xff]
      %v4130 = vld [vmem:[%s4089 + $0x140] sm:$0xff]
      %v4131 = vld [vmem:[%s4089 + $0x148] sm:$0xff]
      %v4132 = vld [vmem:[%s4089 + $0x150] sm:$0xff]
      %v4133 = vld [vmem:[%s4089 + $0x158] sm:$0xff]
      %v4134 = vld [vmem:[%s4089 + $0x160] sm:$0xff]
      %v4135 = vld [vmem:[%s4089 + $0x168] sm:$0xff]
      %v4136 = vld [vmem:[%s4089 + $0x170] sm:$0xff]
      %v4137 = vld [vmem:[%s4089 + $0x178] sm:$0xff]
      %v4138 = vld [vmem:[%s4089 + $0x180] sm:$0xff]
      %v4139 = vld [vmem:[%s4089 + $0x188] sm:$0xff]
      %v4140 = vld [vmem:[%s4089 + $0x190] sm:$0xff]
      %v4141 = vld [vmem:[%s4089 + $0x198] sm:$0xff]
      %v4142 = vld [vmem:[%s4089 + $0x1a0] sm:$0xff]
      %v4143 = vld [vmem:[%s4089 + $0x1a8] sm:$0xff]
      %v4144 = vld [vmem:[%s4089 + $0x1b0] sm:$0xff]
      %v4145 = vld [vmem:[%s4089 + $0x1b8] sm:$0xff]
      %v4146 = vld [vmem:[%s4089 + $0x1c0] sm:$0xff]
      %v4147 = vld [vmem:[%s4089 + $0x1c8] sm:$0xff]
      %v4148 = vld [vmem:[%s4089 + $0x1d0] sm:$0xff]
      %v4149 = vld [vmem:[%s4089 + $0x1d8] sm:$0xff]
      %v4150 = vld [vmem:[%s4089 + $0x1e0] sm:$0xff]
      %v4151 = vld [vmem:[%s4089 + $0x1e8] sm:$0xff]
      %v4152 = vld [vmem:[%s4089 + $0x1f0] sm:$0xff]
      %v4153 = vld [vmem:[%s4089 + $0x1f8] sm:$0xff]
      %v4154 = vld [vmem:[%s4089 + $0x200] sm:$0xff]
      %v4155 = vld [vmem:[%s4089 + $0x208] sm:$0xff]
      %v4156 = vld [vmem:[%s4089 + $0x210] sm:$0xff]
      %v4157 = vld [vmem:[%s4089 + $0x218] sm:$0xff]
      %v4158 = vld [vmem:[%s4089 + $0x220] sm:$0xff]
      %v4159 = vld [vmem:[%s4089 + $0x228] sm:$0xff]
      %v4160 = vld [vmem:[%s4089 + $0x230] sm:$0xff]
      %v4161 = vld [vmem:[%s4089 + $0x238] sm:$0xff]
      %v4162 = vld [vmem:[%s4089 + $0x240] sm:$0xff]
      %v4163 = vld [vmem:[%s4089 + $0x248] sm:$0xff]
      %v4164 = vld [vmem:[%s4089 + $0x250] sm:$0xff]
      %v4165 = vld [vmem:[%s4089 + $0x258] sm:$0xff]
      %v4166 = vld [vmem:[%s4089 + $0x260] sm:$0xff]
      %v4167 = vld [vmem:[%s4089 + $0x268] sm:$0xff]
      %v4168 = vld [vmem:[%s4089 + $0x270] sm:$0xff]
      %v4169 = vld [vmem:[%s4089 + $0x278] sm:$0xff]
      %v4170 = vld [vmem:[%s4089 + $0x280] sm:$0xff]
      %v4171 = vld [vmem:[%s4089 + $0x288] sm:$0xff]
      %v4172 = vld [vmem:[%s4089 + $0x290] sm:$0xff]
      %v4173 = vld [vmem:[%s4089 + $0x298] sm:$0xff]
      %v4174 = vld [vmem:[%s4089 + $0x2a0] sm:$0xff]
      %v4175 = vld [vmem:[%s4089 + $0x2a8] sm:$0xff]
      %v4176 = vld [vmem:[%s4089 + $0x2b0] sm:$0xff]
      %v4177 = vld [vmem:[%s4089 + $0x2b8] sm:$0xff]
      %v4178 = vld [vmem:[%s4089 + $0x2c0] sm:$0xff]
      %v4179 = vld [vmem:[%s4089 + $0x2c8] sm:$0xff]
      %v4180 = vld [vmem:[%s4089 + $0x2d0] sm:$0xff]
      %v4181 = vld [vmem:[%s4089 + $0x2d8] sm:$0xff]
      %v4182 = vld [vmem:[%s4089 + $0x2e0] sm:$0xff]
      %v4183 = vld [vmem:[%s4089 + $0x2e8] sm:$0xff]
      %v4184 = vld [vmem:[%s4089 + $0x2f0] sm:$0xff]
      %v4185 = vld [vmem:[%s4089 + $0x2f8] sm:$0xff]
      %v4186 = vld [vmem:[%s4089 + $0x300] sm:$0xff]
      %v4187 = vld [vmem:[%s4089 + $0x308] sm:$0xff]
      %v4188 = vld [vmem:[%s4089 + $0x310] sm:$0xff]
      %v4189 = vld [vmem:[%s4089 + $0x318] sm:$0xff]
      %v4190 = vld [vmem:[%s4089 + $0x320] sm:$0xff]
      %v4191 = vld [vmem:[%s4089 + $0x328] sm:$0xff]
      %v4192 = vld [vmem:[%s4089 + $0x330] sm:$0xff]
      %v4193 = vld [vmem:[%s4089 + $0x338] sm:$0xff]
      %v4194 = vld [vmem:[%s4089 + $0x340] sm:$0xff]
      %v4195 = vld [vmem:[%s4089 + $0x348] sm:$0xff]
      %v4196 = vld [vmem:[%s4089 + $0x350] sm:$0xff]
      %v4197 = vld [vmem:[%s4089 + $0x358] sm:$0xff]
      %v4198 = vld [vmem:[%s4089 + $0x360] sm:$0xff]
      %v4199 = vld [vmem:[%s4089 + $0x368] sm:$0xff]
      %v4200 = vld [vmem:[%s4089 + $0x370] sm:$0xff]
      %v4201 = vld [vmem:[%s4089 + $0x378] sm:$0xff]
      %v4202 = vld [vmem:[%s4089 + $0x380] sm:$0xff]
      %v4203 = vld [vmem:[%s4089 + $0x388] sm:$0xff]
      %v4204 = vld [vmem:[%s4089 + $0x390] sm:$0xff]
      %v4205 = vld [vmem:[%s4089 + $0x398] sm:$0xff]
      %v4206 = vld [vmem:[%s4089 + $0x3a0] sm:$0xff]
      %v4207 = vld [vmem:[%s4089 + $0x3a8] sm:$0xff]
      %v4208 = vld [vmem:[%s4089 + $0x3b0] sm:$0xff]
      %v4209 = vld [vmem:[%s4089 + $0x3b8] sm:$0xff]
      %v4210 = vld [vmem:[%s4089 + $0x3c0] sm:$0xff]
      %v4211 = vld [vmem:[%s4089 + $0x3c8] sm:$0xff]
      %v4212 = vld [vmem:[%s4089 + $0x3d0] sm:$0xff]
      %v4213 = vld [vmem:[%s4089 + $0x3d8] sm:$0xff]
      %v4214 = vld [vmem:[%s4089 + $0x3e0] sm:$0xff]
      %v4215 = vld [vmem:[%s4089 + $0x3e8] sm:$0xff]
      %v4216 = vld [vmem:[%s4089 + $0x3f0] sm:$0xff]
      %v4217 = vld [vmem:[%s4089 + $0x3f8] sm:$0xff]
      %v4219 = vsel %vm303, %v4090, 0
      %v4222 = vsel %vm303, %v4091, 0
      %v4225 = vsel %vm303, %v4092, 0
      %v4228 = vsel %vm303, %v4093, 0
      %v4231 = vsel %vm303, %v4094, 0
      %v4234 = vsel %vm303, %v4095, 0
      %v4237 = vsel %vm303, %v4096, 0
      %v4240 = vsel %vm303, %v4097, 0
      %v4243 = vsel %vm303, %v4098, 0
      %v4246 = vsel %vm303, %v4099, 0
      %v4249 = vsel %vm303, %v4100, 0
      %v4252 = vsel %vm303, %v4101, 0
      %v4255 = vsel %vm303, %v4102, 0
      %v4258 = vsel %vm303, %v4103, 0
      %v4261 = vsel %vm303, %v4104, 0
      %v4264 = vsel %vm303, %v4105, 0
      %v4267 = vsel %vm303, %v4106, 0
      %v4270 = vsel %vm303, %v4107, 0
      %v4273 = vsel %vm303, %v4108, 0
      %v4276 = vsel %vm303, %v4109, 0
      %v4279 = vsel %vm303, %v4110, 0
      %v4282 = vsel %vm303, %v4111, 0
      %v4285 = vsel %vm303, %v4112, 0
      %v4288 = vsel %vm303, %v4113, 0
      %v4291 = vsel %vm303, %v4114, 0
      %v4294 = vsel %vm303, %v4115, 0
      %v4297 = vsel %vm303, %v4116, 0
      %v4300 = vsel %vm303, %v4117, 0
      %v4303 = vsel %vm303, %v4118, 0
      %v4306 = vsel %vm303, %v4119, 0
      %v4309 = vsel %vm303, %v4120, 0
      %v4312 = vsel %vm303, %v4121, 0
      %v4315 = vsel %vm303, %v4122, 0
      %v4318 = vsel %vm303, %v4123, 0
      %v4321 = vsel %vm303, %v4124, 0
      %v4324 = vsel %vm303, %v4125, 0
      %v4327 = vsel %vm303, %v4126, 0
      %v4330 = vsel %vm303, %v4127, 0
      %v4333 = vsel %vm303, %v4128, 0
      %v4336 = vsel %vm303, %v4129, 0
      %v4339 = vsel %vm303, %v4130, 0
      %v4342 = vsel %vm303, %v4131, 0
      %v4345 = vsel %vm303, %v4132, 0
      %v4348 = vsel %vm303, %v4133, 0
      %v4351 = vsel %vm303, %v4134, 0
      %v4354 = vsel %vm303, %v4135, 0
      %v4357 = vsel %vm303, %v4136, 0
      %v4360 = vsel %vm303, %v4137, 0
      %v4363 = vsel %vm303, %v4138, 0
      %v4366 = vsel %vm303, %v4139, 0
      %v4369 = vsel %vm303, %v4140, 0
      %v4372 = vsel %vm303, %v4141, 0
      %v4375 = vsel %vm303, %v4142, 0
      %v4378 = vsel %vm303, %v4143, 0
      %v4381 = vsel %vm303, %v4144, 0
      %v4384 = vsel %vm303, %v4145, 0
      %v4387 = vsel %vm303, %v4146, 0
      %v4390 = vsel %vm303, %v4147, 0
      %v4393 = vsel %vm303, %v4148, 0
      %v4396 = vsel %vm303, %v4149, 0
      %v4399 = vsel %vm303, %v4150, 0
      %v4402 = vsel %vm303, %v4151, 0
      %v4405 = vsel %vm303, %v4152, 0
      %v4408 = vsel %vm303, %v4153, 0
      %v4411 = vsel %vm303, %v4154, 0
      %v4414 = vsel %vm303, %v4155, 0
      %v4417 = vsel %vm303, %v4156, 0
      %v4420 = vsel %vm303, %v4157, 0
      %v4423 = vsel %vm303, %v4158, 0
      %v4426 = vsel %vm303, %v4159, 0
      %v4429 = vsel %vm303, %v4160, 0
      %v4432 = vsel %vm303, %v4161, 0
      %v4435 = vsel %vm303, %v4162, 0
      %v4438 = vsel %vm303, %v4163, 0
      %v4441 = vsel %vm303, %v4164, 0
      %v4444 = vsel %vm303, %v4165, 0
      %v4447 = vsel %vm303, %v4166, 0
      %v4450 = vsel %vm303, %v4167, 0
      %v4453 = vsel %vm303, %v4168, 0
      %v4456 = vsel %vm303, %v4169, 0
      %v4459 = vsel %vm303, %v4170, 0
      %v4462 = vsel %vm303, %v4171, 0
      %v4465 = vsel %vm303, %v4172, 0
      %v4468 = vsel %vm303, %v4173, 0
      %v4471 = vsel %vm303, %v4174, 0
      %v4474 = vsel %vm303, %v4175, 0
      %v4477 = vsel %vm303, %v4176, 0
      %v4480 = vsel %vm303, %v4177, 0
      %v4483 = vsel %vm303, %v4178, 0
      %v4486 = vsel %vm303, %v4179, 0
      %v4489 = vsel %vm303, %v4180, 0
      %v4492 = vsel %vm303, %v4181, 0
      %v4495 = vsel %vm303, %v4182, 0
      %v4498 = vsel %vm303, %v4183, 0
      %v4501 = vsel %vm303, %v4184, 0
      %v4504 = vsel %vm303, %v4185, 0
      %v4507 = vsel %vm303, %v4186, 0
      %v4510 = vsel %vm303, %v4187, 0
      %v4513 = vsel %vm303, %v4188, 0
      %v4516 = vsel %vm303, %v4189, 0
      %v4519 = vsel %vm303, %v4190, 0
      %v4522 = vsel %vm303, %v4191, 0
      %v4525 = vsel %vm303, %v4192, 0
      %v4528 = vsel %vm303, %v4193, 0
      %v4531 = vsel %vm303, %v4194, 0
      %v4534 = vsel %vm303, %v4195, 0
      %v4537 = vsel %vm303, %v4196, 0
      %v4540 = vsel %vm303, %v4197, 0
      %v4543 = vsel %vm303, %v4198, 0
      %v4546 = vsel %vm303, %v4199, 0
      %v4549 = vsel %vm303, %v4200, 0
      %v4552 = vsel %vm303, %v4201, 0
      %v4555 = vsel %vm303, %v4202, 0
      %v4558 = vsel %vm303, %v4203, 0
      %v4561 = vsel %vm303, %v4204, 0
      %v4564 = vsel %vm303, %v4205, 0
      %v4567 = vsel %vm303, %v4206, 0
      %v4570 = vsel %vm303, %v4207, 0
      %v4573 = vsel %vm303, %v4208, 0
      %v4576 = vsel %vm303, %v4209, 0
      %v4579 = vsel %vm303, %v4210, 0
      %v4582 = vsel %vm303, %v4211, 0
      %v4585 = vsel %vm303, %v4212, 0
      %v4588 = vsel %vm303, %v4213, 0
      %v4591 = vsel %vm303, %v4214, 0
      %v4594 = vsel %vm303, %v4215, 0
      %v4597 = vsel %vm303, %v4216, 0
      %v4600 = vsel %vm303, %v4217, 0
      %4602 = vmatprep.subr.mxu0 0.0
      %4603 = vmatpush1.msra.mxu0 0.0
      %4604 = vmatprep.subr.mxu0 0.0
      %4605 = vmatpush1.msra.mxu0 0.0
      %4606 = vmatprep.subr.mxu0 0.0
      %4607 = vmatpush1.msra.mxu0 0.0
      %4608 = vmatprep.subr.mxu0 0.0
      %4609 = vmatpush1.msra.mxu0 0.0
      %4610 = vmatprep.subr.mxu0 0.0
      %4611 = vmatpush1.msra.mxu0 0.0
      %4612 = vmatprep.subr.mxu0 0.0
      %4613 = vmatpush1.msra.mxu0 0.0
      %4614 = vmatprep.subr.mxu0 0.0
      %4615 = vmatpush1.msra.mxu0 0.0
      %4616 = vmatprep.subr.mxu0 0.0
      %4617 = vmatpush1.msra.mxu0 0.0
      %4618 = vmatprep.subr.mxu0 0.0
      %4619 = vmatpush1.msra.mxu0 0.0
      %4620 = vmatprep.subr.mxu0 0.0
      %4621 = vmatpush1.msra.mxu0 0.0
      %4622 = vmatprep.subr.mxu0 0.0
      %4623 = vmatpush1.msra.mxu0 0.0
      %4624 = vmatprep.subr.mxu0 0.0
      %4625 = vmatpush1.msra.mxu0 0.0
      %4626 = vmatprep.subr.mxu0 0.0
      %4627 = vmatpush1.msra.mxu0 %v690
      %4628 = vmatprep.subr.mxu0 0.0
      %4629 = vmatpush1.msra.mxu0 %v173
      %4630 = vmatprep.subr.mxu0 0.0
      %4631 = vmatpush1.msra.mxu0 %v172
      %4632 = vmatprep.subr.mxu0 0.0
      %4633 = vmatpush1.msra.mxu0 %v171
      %4634 = vmatprep.subr.mxu0 0.0
      %4635 = vmatpush2.msra.mxu0 0.0
      %4636 = vmatprep.subr.mxu0 0.0
      %4637 = vmatpush2.msra.mxu0 0.0
      %4638 = vmatprep.subr.mxu0 0.0
      %4639 = vmatpush2.msra.mxu0 0.0
      %4640 = vmatprep.subr.mxu0 0.0
      %4641 = vmatpush2.msra.mxu0 0.0
      %4642 = vmatprep.subr.mxu0 0.0
      %4643 = vmatpush2.msra.mxu0 0.0
      %4644 = vmatprep.subr.mxu0 0.0
      %4645 = vmatpush2.msra.mxu0 0.0
      %4646 = vmatprep.subr.mxu0 0.0
      %4647 = vmatpush2.msra.mxu0 0.0
      %4648 = vmatprep.subr.mxu0 0.0
      %4649 = vmatpush2.msra.mxu0 0.0
      %4650 = vmatprep.subr.mxu0 0.0
      %4651 = vmatpush2.msra.mxu0 0.0
      %4652 = vmatprep.subr.mxu0 0.0
      %4653 = vmatpush2.msra.mxu0 0.0
      %4654 = vmatprep.subr.mxu0 0.0
      %4655 = vmatpush2.msra.mxu0 0.0
      %4656 = vmatprep.subr.mxu0 0.0
      %4657 = vmatpush2.msra.mxu0 0.0
      %4658 = vmatprep.subr.mxu0 0.0
      %4659 = vmatpush2.msra.mxu0 0.0
      %4660 = vmatprep.subr.mxu0 0.0
      %4661 = vmatpush2.msra.mxu0 0.0
      %4662 = vmatprep.subr.mxu0 0.0
      %4663 = vmatpush2.msra.mxu0 0.0
      %4664 = vmatprep.subr.mxu0 0.0
      %4665 = vmatpush2.msra.mxu0 0.0
      %4666 = vmatprep.mubr.f32.mxu0 0.0
      %4667 = vmatmul.mubr.f32.gmra.mxu0 %v4219
      %v4668 = vpop.f32.mrf.mxu0
      %v4669 = vadd.f32 0.0, %v4668
      %v4670 = vpop.f32.mrf.mxu0
      %4671 = vmatprep.mubr.f32.mxu0 0.0
      %4672 = vmatmul.mubr.f32.gmra.mxu0 %v4222
      %v4673 = vpop.f32.mrf.mxu0
      %v4674 = vadd.f32 0.0, %v4673
      %v4675 = vpop.f32.mrf.mxu0
      %4676 = vmatprep.mubr.f32.mxu0 0.0
      %4677 = vmatmul.mubr.f32.gmra.mxu0 %v4225
      %v4678 = vpop.f32.mrf.mxu0
      %v4679 = vadd.f32 0.0, %v4678
      %v4680 = vpop.f32.mrf.mxu0
      %4681 = vmatprep.mubr.f32.mxu0 0.0
      %4682 = vmatmul.mubr.f32.gmra.mxu0 %v4228
      %v4683 = vpop.f32.mrf.mxu0
      %v4684 = vadd.f32 0.0, %v4683
      %v4685 = vpop.f32.mrf.mxu0
      %4686 = vmatprep.mubr.f32.mxu0 0.0
      %4687 = vmatmul.mubr.f32.gmra.mxu0 %v4231
      %v4688 = vpop.f32.mrf.mxu0
      %v4689 = vadd.f32 0.0, %v4688
      %v4690 = vpop.f32.mrf.mxu0
      %4691 = vmatprep.mubr.f32.mxu0 0.0
      %4692 = vmatmul.mubr.f32.gmra.mxu0 %v4234
      %v4693 = vpop.f32.mrf.mxu0
      %v4694 = vadd.f32 0.0, %v4693
      %v4695 = vpop.f32.mrf.mxu0
      %4696 = vmatprep.mubr.f32.mxu0 0.0
      %4697 = vmatmul.mubr.f32.gmra.mxu0 %v4237
      %v4698 = vpop.f32.mrf.mxu0
      %v4699 = vadd.f32 0.0, %v4698
      %v4700 = vpop.f32.mrf.mxu0
      %4701 = vmatprep.mubr.f32.mxu0 0.0
      %4702 = vmatmul.mubr.f32.gmra.mxu0 %v4240
      %v4703 = vpop.f32.mrf.mxu0
      %v4704 = vadd.f32 0.0, %v4703
      %v4705 = vpop.f32.mrf.mxu0
      %4706 = vmatprep.mubr.f32.mxu0 0.0
      %4707 = vmatmul.mubr.f32.gmra.mxu0 %v4243
      %v4708 = vpop.f32.mrf.mxu0
      %v4709 = vadd.f32 0.0, %v4708
      %v4710 = vpop.f32.mrf.mxu0
      %4711 = vmatprep.mubr.f32.mxu0 0.0
      %4712 = vmatmul.mubr.f32.gmra.mxu0 %v4246
      %v4713 = vpop.f32.mrf.mxu0
      %v4714 = vadd.f32 0.0, %v4713
      %v4715 = vpop.f32.mrf.mxu0
      %4716 = vmatprep.mubr.f32.mxu0 0.0
      %4717 = vmatmul.mubr.f32.gmra.mxu0 %v4249
      %v4718 = vpop.f32.mrf.mxu0
      %v4719 = vadd.f32 0.0, %v4718
      %v4720 = vpop.f32.mrf.mxu0
      %4721 = vmatprep.mubr.f32.mxu0 0.0
      %4722 = vmatmul.mubr.f32.gmra.mxu0 %v4252
      %v4723 = vpop.f32.mrf.mxu0
      %v4724 = vadd.f32 0.0, %v4723
      %v4725 = vpop.f32.mrf.mxu0
      %4726 = vmatprep.mubr.f32.mxu0 0.0
      %4727 = vmatmul.mubr.f32.gmra.mxu0 %v4255
      %v4728 = vpop.f32.mrf.mxu0
      %v4729 = vadd.f32 0.0, %v4728
      %v4730 = vpop.f32.mrf.mxu0
      %4731 = vmatprep.mubr.f32.mxu0 0.0
      %4732 = vmatmul.mubr.f32.gmra.mxu0 %v4258
      %v4733 = vpop.f32.mrf.mxu0
      %v4734 = vadd.f32 0.0, %v4733
      %v4735 = vpop.f32.mrf.mxu0
      %4736 = vmatprep.mubr.f32.mxu0 0.0
      %4737 = vmatmul.mubr.f32.gmra.mxu0 %v4261
      %v4738 = vpop.f32.mrf.mxu0
      %v4739 = vadd.f32 0.0, %v4738
      %v4740 = vpop.f32.mrf.mxu0
      %4741 = vmatprep.mubr.f32.mxu0 0.0
      %4742 = vmatmul.mubr.f32.gmra.mxu0 %v4264
      %v4743 = vpop.f32.mrf.mxu0
      %v4744 = vadd.f32 0.0, %v4743
      %v4745 = vpop.f32.mrf.mxu0
      %4746 = vmatprep.mubr.f32.mxu0 0.0
      %4747 = vmatmul.mubr.f32.gmra.mxu0 %v4267
      %v4748 = vpop.f32.mrf.mxu0
      %v4749 = vadd.f32 0.0, %v4748
      %v4750 = vpop.f32.mrf.mxu0
      %4751 = vmatprep.mubr.f32.mxu0 0.0
      %4752 = vmatmul.mubr.f32.gmra.mxu0 %v4270
      %v4753 = vpop.f32.mrf.mxu0
      %v4754 = vadd.f32 0.0, %v4753
      %v4755 = vpop.f32.mrf.mxu0
      %4756 = vmatprep.mubr.f32.mxu0 0.0
      %4757 = vmatmul.mubr.f32.gmra.mxu0 %v4273
      %v4758 = vpop.f32.mrf.mxu0
      %v4759 = vadd.f32 0.0, %v4758
      %v4760 = vpop.f32.mrf.mxu0
      %4761 = vmatprep.mubr.f32.mxu0 0.0
      %4762 = vmatmul.mubr.f32.gmra.mxu0 %v4276
      %v4763 = vpop.f32.mrf.mxu0
      %v4764 = vadd.f32 0.0, %v4763
      %v4765 = vpop.f32.mrf.mxu0
      %4766 = vmatprep.mubr.f32.mxu0 0.0
      %4767 = vmatmul.mubr.f32.gmra.mxu0 %v4279
      %v4768 = vpop.f32.mrf.mxu0
      %v4769 = vadd.f32 0.0, %v4768
      %v4770 = vpop.f32.mrf.mxu0
      %4771 = vmatprep.mubr.f32.mxu0 0.0
      %4772 = vmatmul.mubr.f32.gmra.mxu0 %v4282
      %v4773 = vpop.f32.mrf.mxu0
      %v4774 = vadd.f32 0.0, %v4773
      %v4775 = vpop.f32.mrf.mxu0
      %4776 = vmatprep.mubr.f32.mxu0 0.0
      %4777 = vmatmul.mubr.f32.gmra.mxu0 %v4285
      %v4778 = vpop.f32.mrf.mxu0
      %v4779 = vadd.f32 0.0, %v4778
      %v4780 = vpop.f32.mrf.mxu0
      %4781 = vmatprep.mubr.f32.mxu0 0.0
      %4782 = vmatmul.mubr.f32.gmra.mxu0 %v4288
      %v4783 = vpop.f32.mrf.mxu0
      %v4784 = vadd.f32 0.0, %v4783
      %v4785 = vpop.f32.mrf.mxu0
      %4786 = vmatprep.mubr.f32.mxu0 0.0
      %4787 = vmatmul.mubr.f32.gmra.mxu0 %v4291
      %v4788 = vpop.f32.mrf.mxu0
      %v4789 = vadd.f32 0.0, %v4788
      %v4790 = vpop.f32.mrf.mxu0
      %4791 = vmatprep.mubr.f32.mxu0 0.0
      %4792 = vmatmul.mubr.f32.gmra.mxu0 %v4294
      %v4793 = vpop.f32.mrf.mxu0
      %v4794 = vadd.f32 0.0, %v4793
      %v4795 = vpop.f32.mrf.mxu0
      %4796 = vmatprep.mubr.f32.mxu0 0.0
      %4797 = vmatmul.mubr.f32.gmra.mxu0 %v4297
      %v4798 = vpop.f32.mrf.mxu0
      %v4799 = vadd.f32 0.0, %v4798
      %v4800 = vpop.f32.mrf.mxu0
      %4801 = vmatprep.mubr.f32.mxu0 0.0
      %4802 = vmatmul.mubr.f32.gmra.mxu0 %v4300
      %v4803 = vpop.f32.mrf.mxu0
      %v4804 = vadd.f32 0.0, %v4803
      %v4805 = vpop.f32.mrf.mxu0
      %4806 = vmatprep.mubr.f32.mxu0 0.0
      %4807 = vmatmul.mubr.f32.gmra.mxu0 %v4303
      %v4808 = vpop.f32.mrf.mxu0
      %v4809 = vadd.f32 0.0, %v4808
      %v4810 = vpop.f32.mrf.mxu0
      %4811 = vmatprep.mubr.f32.mxu0 0.0
      %4812 = vmatmul.mubr.f32.gmra.mxu0 %v4306
      %v4813 = vpop.f32.mrf.mxu0
      %v4814 = vadd.f32 0.0, %v4813
      %v4815 = vpop.f32.mrf.mxu0
      %4816 = vmatprep.mubr.f32.mxu0 0.0
      %4817 = vmatmul.mubr.f32.gmra.mxu0 %v4309
      %v4818 = vpop.f32.mrf.mxu0
      %v4819 = vadd.f32 0.0, %v4818
      %v4820 = vpop.f32.mrf.mxu0
      %4821 = vmatprep.mubr.f32.mxu0 0.0
      %4822 = vmatmul.mubr.f32.gmra.mxu0 %v4312
      %v4823 = vpop.f32.mrf.mxu0
      %v4824 = vadd.f32 0.0, %v4823
      %v4825 = vpop.f32.mrf.mxu0
      %4826 = vmatprep.mubr.f32.mxu0 0.0
      %4827 = vmatmul.mubr.f32.gmra.mxu0 %v4315
      %v4828 = vpop.f32.mrf.mxu0
      %v4829 = vadd.f32 0.0, %v4828
      %v4830 = vpop.f32.mrf.mxu0
      %4831 = vmatprep.mubr.f32.mxu0 0.0
      %4832 = vmatmul.mubr.f32.gmra.mxu0 %v4318
      %v4833 = vpop.f32.mrf.mxu0
      %v4834 = vadd.f32 0.0, %v4833
      %v4835 = vpop.f32.mrf.mxu0
      %4836 = vmatprep.mubr.f32.mxu0 0.0
      %4837 = vmatmul.mubr.f32.gmra.mxu0 %v4321
      %v4838 = vpop.f32.mrf.mxu0
      %v4839 = vadd.f32 0.0, %v4838
      %v4840 = vpop.f32.mrf.mxu0
      %4841 = vmatprep.mubr.f32.mxu0 0.0
      %4842 = vmatmul.mubr.f32.gmra.mxu0 %v4324
      %v4843 = vpop.f32.mrf.mxu0
      %v4844 = vadd.f32 0.0, %v4843
      %v4845 = vpop.f32.mrf.mxu0
      %4846 = vmatprep.mubr.f32.mxu0 0.0
      %4847 = vmatmul.mubr.f32.gmra.mxu0 %v4327
      %v4848 = vpop.f32.mrf.mxu0
      %v4849 = vadd.f32 0.0, %v4848
      %v4850 = vpop.f32.mrf.mxu0
      %4851 = vmatprep.mubr.f32.mxu0 0.0
      %4852 = vmatmul.mubr.f32.gmra.mxu0 %v4330
      %v4853 = vpop.f32.mrf.mxu0
      %v4854 = vadd.f32 0.0, %v4853
      %v4855 = vpop.f32.mrf.mxu0
      %4856 = vmatprep.mubr.f32.mxu0 0.0
      %4857 = vmatmul.mubr.f32.gmra.mxu0 %v4333
      %v4858 = vpop.f32.mrf.mxu0
      %v4859 = vadd.f32 0.0, %v4858
      %v4860 = vpop.f32.mrf.mxu0
      %4861 = vmatprep.mubr.f32.mxu0 0.0
      %4862 = vmatmul.mubr.f32.gmra.mxu0 %v4336
      %v4863 = vpop.f32.mrf.mxu0
      %v4864 = vadd.f32 0.0, %v4863
      %v4865 = vpop.f32.mrf.mxu0
      %4866 = vmatprep.mubr.f32.mxu0 0.0
      %4867 = vmatmul.mubr.f32.gmra.mxu0 %v4339
      %v4868 = vpop.f32.mrf.mxu0
      %v4869 = vadd.f32 0.0, %v4868
      %v4870 = vpop.f32.mrf.mxu0
      %4871 = vmatprep.mubr.f32.mxu0 0.0
      %4872 = vmatmul.mubr.f32.gmra.mxu0 %v4342
      %v4873 = vpop.f32.mrf.mxu0
      %v4874 = vadd.f32 0.0, %v4873
      %v4875 = vpop.f32.mrf.mxu0
      %4876 = vmatprep.mubr.f32.mxu0 0.0
      %4877 = vmatmul.mubr.f32.gmra.mxu0 %v4345
      %v4878 = vpop.f32.mrf.mxu0
      %v4879 = vadd.f32 0.0, %v4878
      %v4880 = vpop.f32.mrf.mxu0
      %4881 = vmatprep.mubr.f32.mxu0 0.0
      %4882 = vmatmul.mubr.f32.gmra.mxu0 %v4348
      %v4883 = vpop.f32.mrf.mxu0
      %v4884 = vadd.f32 0.0, %v4883
      %v4885 = vpop.f32.mrf.mxu0
      %4886 = vmatprep.mubr.f32.mxu0 0.0
      %4887 = vmatmul.mubr.f32.gmra.mxu0 %v4351
      %v4888 = vpop.f32.mrf.mxu0
      %v4889 = vadd.f32 0.0, %v4888
      %v4890 = vpop.f32.mrf.mxu0
      %4891 = vmatprep.mubr.f32.mxu0 0.0
      %4892 = vmatmul.mubr.f32.gmra.mxu0 %v4354
      %v4893 = vpop.f32.mrf.mxu0
      %v4894 = vadd.f32 0.0, %v4893
      %v4895 = vpop.f32.mrf.mxu0
      %4896 = vmatprep.mubr.f32.mxu0 0.0
      %4897 = vmatmul.mubr.f32.gmra.mxu0 %v4357
      %v4898 = vpop.f32.mrf.mxu0
      %v4899 = vadd.f32 0.0, %v4898
      %v4900 = vpop.f32.mrf.mxu0
      %4901 = vmatprep.mubr.f32.mxu0 0.0
      %4902 = vmatmul.mubr.f32.gmra.mxu0 %v4360
      %v4903 = vpop.f32.mrf.mxu0
      %v4904 = vadd.f32 0.0, %v4903
      %v4905 = vpop.f32.mrf.mxu0
      %4906 = vmatprep.mubr.f32.mxu0 0.0
      %4907 = vmatmul.mubr.f32.gmra.mxu0 %v4363
      %v4908 = vpop.f32.mrf.mxu0
      %v4909 = vadd.f32 0.0, %v4908
      %v4910 = vpop.f32.mrf.mxu0
      %4911 = vmatprep.mubr.f32.mxu0 0.0
      %4912 = vmatmul.mubr.f32.gmra.mxu0 %v4366
      %v4913 = vpop.f32.mrf.mxu0
      %v4914 = vadd.f32 0.0, %v4913
      %v4915 = vpop.f32.mrf.mxu0
      %4916 = vmatprep.mubr.f32.mxu0 0.0
      %4917 = vmatmul.mubr.f32.gmra.mxu0 %v4369
      %v4918 = vpop.f32.mrf.mxu0
      %v4919 = vadd.f32 0.0, %v4918
      %v4920 = vpop.f32.mrf.mxu0
      %4921 = vmatprep.mubr.f32.mxu0 0.0
      %4922 = vmatmul.mubr.f32.gmra.mxu0 %v4372
      %v4923 = vpop.f32.mrf.mxu0
      %v4924 = vadd.f32 0.0, %v4923
      %v4925 = vpop.f32.mrf.mxu0
      %4926 = vmatprep.mubr.f32.mxu0 0.0
      %4927 = vmatmul.mubr.f32.gmra.mxu0 %v4375
      %v4928 = vpop.f32.mrf.mxu0
      %v4929 = vadd.f32 0.0, %v4928
      %v4930 = vpop.f32.mrf.mxu0
      %4931 = vmatprep.mubr.f32.mxu0 0.0
      %4932 = vmatmul.mubr.f32.gmra.mxu0 %v4378
      %v4933 = vpop.f32.mrf.mxu0
      %v4934 = vadd.f32 0.0, %v4933
      %v4935 = vpop.f32.mrf.mxu0
      %4936 = vmatprep.mubr.f32.mxu0 0.0
      %4937 = vmatmul.mubr.f32.gmra.mxu0 %v4381
      %v4938 = vpop.f32.mrf.mxu0
      %v4939 = vadd.f32 0.0, %v4938
      %v4940 = vpop.f32.mrf.mxu0
      %4941 = vmatprep.mubr.f32.mxu0 0.0
      %4942 = vmatmul.mubr.f32.gmra.mxu0 %v4384
      %v4943 = vpop.f32.mrf.mxu0
      %v4944 = vadd.f32 0.0, %v4943
      %v4945 = vpop.f32.mrf.mxu0
      %4946 = vmatprep.mubr.f32.mxu0 0.0
      %4947 = vmatmul.mubr.f32.gmra.mxu0 %v4387
      %v4948 = vpop.f32.mrf.mxu0
      %v4949 = vadd.f32 0.0, %v4948
      %v4950 = vpop.f32.mrf.mxu0
      %4951 = vmatprep.mubr.f32.mxu0 0.0
      %4952 = vmatmul.mubr.f32.gmra.mxu0 %v4390
      %v4953 = vpop.f32.mrf.mxu0
      %v4954 = vadd.f32 0.0, %v4953
      %v4955 = vpop.f32.mrf.mxu0
      %4956 = vmatprep.mubr.f32.mxu0 0.0
      %4957 = vmatmul.mubr.f32.gmra.mxu0 %v4393
      %v4958 = vpop.f32.mrf.mxu0
      %v4959 = vadd.f32 0.0, %v4958
      %v4960 = vpop.f32.mrf.mxu0
      %4961 = vmatprep.mubr.f32.mxu0 0.0
      %4962 = vmatmul.mubr.f32.gmra.mxu0 %v4396
      %v4963 = vpop.f32.mrf.mxu0
      %v4964 = vadd.f32 0.0, %v4963
      %v4965 = vpop.f32.mrf.mxu0
      %4966 = vmatprep.mubr.f32.mxu0 0.0
      %4967 = vmatmul.mubr.f32.gmra.mxu0 %v4399
      %v4968 = vpop.f32.mrf.mxu0
      %v4969 = vadd.f32 0.0, %v4968
      %v4970 = vpop.f32.mrf.mxu0
      %4971 = vmatprep.mubr.f32.mxu0 0.0
      %4972 = vmatmul.mubr.f32.gmra.mxu0 %v4402
      %v4973 = vpop.f32.mrf.mxu0
      %v4974 = vadd.f32 0.0, %v4973
      %v4975 = vpop.f32.mrf.mxu0
      %4976 = vmatprep.mubr.f32.mxu0 0.0
      %4977 = vmatmul.mubr.f32.gmra.mxu0 %v4405
      %v4978 = vpop.f32.mrf.mxu0
      %v4979 = vadd.f32 0.0, %v4978
      %v4980 = vpop.f32.mrf.mxu0
      %4981 = vmatprep.mubr.f32.mxu0 0.0
      %4982 = vmatmul.mubr.f32.gmra.mxu0 %v4408
      %v4983 = vpop.f32.mrf.mxu0
      %v4984 = vadd.f32 0.0, %v4983
      %v4985 = vpop.f32.mrf.mxu0
      %4986 = vmatprep.mubr.f32.mxu0 0.0
      %4987 = vmatmul.mubr.f32.gmra.mxu0 %v4411
      %v4988 = vpop.f32.mrf.mxu0
      %v4989 = vadd.f32 0.0, %v4988
      %v4990 = vpop.f32.mrf.mxu0
      %4991 = vmatprep.mubr.f32.mxu0 0.0
      %4992 = vmatmul.mubr.f32.gmra.mxu0 %v4414
      %v4993 = vpop.f32.mrf.mxu0
      %v4994 = vadd.f32 0.0, %v4993
      %v4995 = vpop.f32.mrf.mxu0
      %4996 = vmatprep.mubr.f32.mxu0 0.0
      %4997 = vmatmul.mubr.f32.gmra.mxu0 %v4417
      %v4998 = vpop.f32.mrf.mxu0
      %v4999 = vadd.f32 0.0, %v4998
      %v5000 = vpop.f32.mrf.mxu0
      %5001 = vmatprep.mubr.f32.mxu0 0.0
      %5002 = vmatmul.mubr.f32.gmra.mxu0 %v4420
      %v5003 = vpop.f32.mrf.mxu0
      %v5004 = vadd.f32 0.0, %v5003
      %v5005 = vpop.f32.mrf.mxu0
      %5006 = vmatprep.mubr.f32.mxu0 0.0
      %5007 = vmatmul.mubr.f32.gmra.mxu0 %v4423
      %v5008 = vpop.f32.mrf.mxu0
      %v5009 = vadd.f32 0.0, %v5008
      %v5010 = vpop.f32.mrf.mxu0
      %5011 = vmatprep.mubr.f32.mxu0 0.0
      %5012 = vmatmul.mubr.f32.gmra.mxu0 %v4426
      %v5013 = vpop.f32.mrf.mxu0
      %v5014 = vadd.f32 0.0, %v5013
      %v5015 = vpop.f32.mrf.mxu0
      %5016 = vmatprep.mubr.f32.mxu0 0.0
      %5017 = vmatmul.mubr.f32.gmra.mxu0 %v4429
      %v5018 = vpop.f32.mrf.mxu0
      %v5019 = vadd.f32 0.0, %v5018
      %v5020 = vpop.f32.mrf.mxu0
      %5021 = vmatprep.mubr.f32.mxu0 0.0
      %5022 = vmatmul.mubr.f32.gmra.mxu0 %v4432
      %v5023 = vpop.f32.mrf.mxu0
      %v5024 = vadd.f32 0.0, %v5023
      %v5025 = vpop.f32.mrf.mxu0
      %5026 = vmatprep.mubr.f32.mxu0 0.0
      %5027 = vmatmul.mubr.f32.gmra.mxu0 %v4435
      %v5028 = vpop.f32.mrf.mxu0
      %v5029 = vadd.f32 0.0, %v5028
      %v5030 = vpop.f32.mrf.mxu0
      %5031 = vmatprep.mubr.f32.mxu0 0.0
      %5032 = vmatmul.mubr.f32.gmra.mxu0 %v4438
      %v5033 = vpop.f32.mrf.mxu0
      %v5034 = vadd.f32 0.0, %v5033
      %v5035 = vpop.f32.mrf.mxu0
      %5036 = vmatprep.mubr.f32.mxu0 0.0
      %5037 = vmatmul.mubr.f32.gmra.mxu0 %v4441
      %v5038 = vpop.f32.mrf.mxu0
      %v5039 = vadd.f32 0.0, %v5038
      %v5040 = vpop.f32.mrf.mxu0
      %5041 = vmatprep.mubr.f32.mxu0 0.0
      %5042 = vmatmul.mubr.f32.gmra.mxu0 %v4444
      %v5043 = vpop.f32.mrf.mxu0
      %v5044 = vadd.f32 0.0, %v5043
      %v5045 = vpop.f32.mrf.mxu0
      %5046 = vmatprep.mubr.f32.mxu0 0.0
      %5047 = vmatmul.mubr.f32.gmra.mxu0 %v4447
      %v5048 = vpop.f32.mrf.mxu0
      %v5049 = vadd.f32 0.0, %v5048
      %v5050 = vpop.f32.mrf.mxu0
      %5051 = vmatprep.mubr.f32.mxu0 0.0
      %5052 = vmatmul.mubr.f32.gmra.mxu0 %v4450
      %v5053 = vpop.f32.mrf.mxu0
      %v5054 = vadd.f32 0.0, %v5053
      %v5055 = vpop.f32.mrf.mxu0
      %5056 = vmatprep.mubr.f32.mxu0 0.0
      %5057 = vmatmul.mubr.f32.gmra.mxu0 %v4453
      %v5058 = vpop.f32.mrf.mxu0
      %v5059 = vadd.f32 0.0, %v5058
      %v5060 = vpop.f32.mrf.mxu0
      %5061 = vmatprep.mubr.f32.mxu0 0.0
      %5062 = vmatmul.mubr.f32.gmra.mxu0 %v4456
      %v5063 = vpop.f32.mrf.mxu0
      %v5064 = vadd.f32 0.0, %v5063
      %v5065 = vpop.f32.mrf.mxu0
      %5066 = vmatprep.mubr.f32.mxu0 0.0
      %5067 = vmatmul.mubr.f32.gmra.mxu0 %v4459
      %v5068 = vpop.f32.mrf.mxu0
      %v5069 = vadd.f32 0.0, %v5068
      %v5070 = vpop.f32.mrf.mxu0
      %5071 = vmatprep.mubr.f32.mxu0 0.0
      %5072 = vmatmul.mubr.f32.gmra.mxu0 %v4462
      %v5073 = vpop.f32.mrf.mxu0
      %v5074 = vadd.f32 0.0, %v5073
      %v5075 = vpop.f32.mrf.mxu0
      %5076 = vmatprep.mubr.f32.mxu0 0.0
      %5077 = vmatmul.mubr.f32.gmra.mxu0 %v4465
      %v5078 = vpop.f32.mrf.mxu0
      %v5079 = vadd.f32 0.0, %v5078
      %v5080 = vpop.f32.mrf.mxu0
      %5081 = vmatprep.mubr.f32.mxu0 0.0
      %5082 = vmatmul.mubr.f32.gmra.mxu0 %v4468
      %v5083 = vpop.f32.mrf.mxu0
      %v5084 = vadd.f32 0.0, %v5083
      %v5085 = vpop.f32.mrf.mxu0
      %5086 = vmatprep.mubr.f32.mxu0 0.0
      %5087 = vmatmul.mubr.f32.gmra.mxu0 %v4471
      %v5088 = vpop.f32.mrf.mxu0
      %v5089 = vadd.f32 0.0, %v5088
      %v5090 = vpop.f32.mrf.mxu0
      %5091 = vmatprep.mubr.f32.mxu0 0.0
      %5092 = vmatmul.mubr.f32.gmra.mxu0 %v4474
      %v5093 = vpop.f32.mrf.mxu0
      %v5094 = vadd.f32 0.0, %v5093
      %v5095 = vpop.f32.mrf.mxu0
      %5096 = vmatprep.mubr.f32.mxu0 0.0
      %5097 = vmatmul.mubr.f32.gmra.mxu0 %v4477
      %v5098 = vpop.f32.mrf.mxu0
      %v5099 = vadd.f32 0.0, %v5098
      %v5100 = vpop.f32.mrf.mxu0
      %5101 = vmatprep.mubr.f32.mxu0 0.0
      %5102 = vmatmul.mubr.f32.gmra.mxu0 %v4480
      %v5103 = vpop.f32.mrf.mxu0
      %v5104 = vadd.f32 0.0, %v5103
      %v5105 = vpop.f32.mrf.mxu0
      %5106 = vmatprep.mubr.f32.mxu0 0.0
      %5107 = vmatmul.mubr.f32.gmra.mxu0 %v4483
      %v5108 = vpop.f32.mrf.mxu0
      %v5109 = vadd.f32 0.0, %v5108
      %v5110 = vpop.f32.mrf.mxu0
      %5111 = vmatprep.mubr.f32.mxu0 0.0
      %5112 = vmatmul.mubr.f32.gmra.mxu0 %v4486
      %v5113 = vpop.f32.mrf.mxu0
      %v5114 = vadd.f32 0.0, %v5113
      %v5115 = vpop.f32.mrf.mxu0
      %5116 = vmatprep.mubr.f32.mxu0 0.0
      %5117 = vmatmul.mubr.f32.gmra.mxu0 %v4489
      %v5118 = vpop.f32.mrf.mxu0
      %v5119 = vadd.f32 0.0, %v5118
      %v5120 = vpop.f32.mrf.mxu0
      %5121 = vmatprep.mubr.f32.mxu0 0.0
      %5122 = vmatmul.mubr.f32.gmra.mxu0 %v4492
      %v5123 = vpop.f32.mrf.mxu0
      %v5124 = vadd.f32 0.0, %v5123
      %v5125 = vpop.f32.mrf.mxu0
      %5126 = vmatprep.mubr.f32.mxu0 0.0
      %5127 = vmatmul.mubr.f32.gmra.mxu0 %v4495
      %v5128 = vpop.f32.mrf.mxu0
      %v5129 = vadd.f32 0.0, %v5128
      %v5130 = vpop.f32.mrf.mxu0
      %5131 = vmatprep.mubr.f32.mxu0 0.0
      %5132 = vmatmul.mubr.f32.gmra.mxu0 %v4498
      %v5133 = vpop.f32.mrf.mxu0
      %v5134 = vadd.f32 0.0, %v5133
      %v5135 = vpop.f32.mrf.mxu0
      %5136 = vmatprep.mubr.f32.mxu0 0.0
      %5137 = vmatmul.mubr.f32.gmra.mxu0 %v4501
      %v5138 = vpop.f32.mrf.mxu0
      %v5139 = vadd.f32 0.0, %v5138
      %v5140 = vpop.f32.mrf.mxu0
      %5141 = vmatprep.mubr.f32.mxu0 0.0
      %5142 = vmatmul.mubr.f32.gmra.mxu0 %v4504
      %v5143 = vpop.f32.mrf.mxu0
      %v5144 = vadd.f32 0.0, %v5143
      %v5145 = vpop.f32.mrf.mxu0
      %5146 = vmatprep.mubr.f32.mxu0 0.0
      %5147 = vmatmul.mubr.f32.gmra.mxu0 %v4507
      %v5148 = vpop.f32.mrf.mxu0
      %v5149 = vadd.f32 0.0, %v5148
      %v5150 = vpop.f32.mrf.mxu0
      %5151 = vmatprep.mubr.f32.mxu0 0.0
      %5152 = vmatmul.mubr.f32.gmra.mxu0 %v4510
      %v5153 = vpop.f32.mrf.mxu0
      %v5154 = vadd.f32 0.0, %v5153
      %v5155 = vpop.f32.mrf.mxu0
      %5156 = vmatprep.mubr.f32.mxu0 0.0
      %5157 = vmatmul.mubr.f32.gmra.mxu0 %v4513
      %v5158 = vpop.f32.mrf.mxu0
      %v5159 = vadd.f32 0.0, %v5158
      %v5160 = vpop.f32.mrf.mxu0
      %5161 = vmatprep.mubr.f32.mxu0 0.0
      %5162 = vmatmul.mubr.f32.gmra.mxu0 %v4516
      %v5163 = vpop.f32.mrf.mxu0
      %v5164 = vadd.f32 0.0, %v5163
      %v5165 = vpop.f32.mrf.mxu0
      %5166 = vmatprep.mubr.f32.mxu0 0.0
      %5167 = vmatmul.mubr.f32.gmra.mxu0 %v4519
      %v5168 = vpop.f32.mrf.mxu0
      %v5169 = vadd.f32 0.0, %v5168
      %v5170 = vpop.f32.mrf.mxu0
      %5171 = vmatprep.mubr.f32.mxu0 0.0
      %5172 = vmatmul.mubr.f32.gmra.mxu0 %v4522
      %v5173 = vpop.f32.mrf.mxu0
      %v5174 = vadd.f32 0.0, %v5173
      %v5175 = vpop.f32.mrf.mxu0
      %5176 = vmatprep.mubr.f32.mxu0 0.0
      %5177 = vmatmul.mubr.f32.gmra.mxu0 %v4525
      %v5178 = vpop.f32.mrf.mxu0
      %v5179 = vadd.f32 0.0, %v5178
      %v5180 = vpop.f32.mrf.mxu0
      %5181 = vmatprep.mubr.f32.mxu0 0.0
      %5182 = vmatmul.mubr.f32.gmra.mxu0 %v4528
      %v5183 = vpop.f32.mrf.mxu0
      %v5184 = vadd.f32 0.0, %v5183
      %v5185 = vpop.f32.mrf.mxu0
      %5186 = vmatprep.mubr.f32.mxu0 0.0
      %5187 = vmatmul.mubr.f32.gmra.mxu0 %v4531
      %v5188 = vpop.f32.mrf.mxu0
      %v5189 = vadd.f32 0.0, %v5188
      %v5190 = vpop.f32.mrf.mxu0
      %5191 = vmatprep.mubr.f32.mxu0 0.0
      %5192 = vmatmul.mubr.f32.gmra.mxu0 %v4534
      %v5193 = vpop.f32.mrf.mxu0
      %v5194 = vadd.f32 0.0, %v5193
      %v5195 = vpop.f32.mrf.mxu0
      %5196 = vmatprep.mubr.f32.mxu0 0.0
      %5197 = vmatmul.mubr.f32.gmra.mxu0 %v4537
      %v5198 = vpop.f32.mrf.mxu0
      %v5199 = vadd.f32 0.0, %v5198
      %v5200 = vpop.f32.mrf.mxu0
      %5201 = vmatprep.mubr.f32.mxu0 0.0
      %5202 = vmatmul.mubr.f32.gmra.mxu0 %v4540
      %v5203 = vpop.f32.mrf.mxu0
      %v5204 = vadd.f32 0.0, %v5203
      %v5205 = vpop.f32.mrf.mxu0
      %5206 = vmatprep.mubr.f32.mxu0 0.0
      %5207 = vmatmul.mubr.f32.gmra.mxu0 %v4543
      %v5208 = vpop.f32.mrf.mxu0
      %v5209 = vadd.f32 0.0, %v5208
      %v5210 = vpop.f32.mrf.mxu0
      %5211 = vmatprep.mubr.f32.mxu0 0.0
      %5212 = vmatmul.mubr.f32.gmra.mxu0 %v4546
      %v5213 = vpop.f32.mrf.mxu0
      %v5214 = vadd.f32 0.0, %v5213
      %v5215 = vpop.f32.mrf.mxu0
      %5216 = vmatprep.mubr.f32.mxu0 0.0
      %5217 = vmatmul.mubr.f32.gmra.mxu0 %v4549
      %v5218 = vpop.f32.mrf.mxu0
      %v5219 = vadd.f32 0.0, %v5218
      %v5220 = vpop.f32.mrf.mxu0
      %5221 = vmatprep.mubr.f32.mxu0 0.0
      %5222 = vmatmul.mubr.f32.gmra.mxu0 %v4552
      %v5223 = vpop.f32.mrf.mxu0
      %v5224 = vadd.f32 0.0, %v5223
      %v5225 = vpop.f32.mrf.mxu0
      %5226 = vmatprep.mubr.f32.mxu0 0.0
      %5227 = vmatmul.mubr.f32.gmra.mxu0 %v4555
      %v5228 = vpop.f32.mrf.mxu0
      %v5229 = vadd.f32 0.0, %v5228
      %v5230 = vpop.f32.mrf.mxu0
      %5231 = vmatprep.mubr.f32.mxu0 0.0
      %5232 = vmatmul.mubr.f32.gmra.mxu0 %v4558
      %v5233 = vpop.f32.mrf.mxu0
      %v5234 = vadd.f32 0.0, %v5233
      %v5235 = vpop.f32.mrf.mxu0
      %5236 = vmatprep.mubr.f32.mxu0 0.0
      %5237 = vmatmul.mubr.f32.gmra.mxu0 %v4561
      %v5238 = vpop.f32.mrf.mxu0
      %v5239 = vadd.f32 0.0, %v5238
      %v5240 = vpop.f32.mrf.mxu0
      %5241 = vmatprep.mubr.f32.mxu0 0.0
      %5242 = vmatmul.mubr.f32.gmra.mxu0 %v4564
      %v5243 = vpop.f32.mrf.mxu0
      %v5244 = vadd.f32 0.0, %v5243
      %v5245 = vpop.f32.mrf.mxu0
      %5246 = vmatprep.mubr.f32.mxu0 0.0
      %5247 = vmatmul.mubr.f32.gmra.mxu0 %v4567
      %v5248 = vpop.f32.mrf.mxu0
      %v5249 = vadd.f32 0.0, %v5248
      %v5250 = vpop.f32.mrf.mxu0
      %5251 = vmatprep.mubr.f32.mxu0 0.0
      %5252 = vmatmul.mubr.f32.gmra.mxu0 %v4570
      %v5253 = vpop.f32.mrf.mxu0
      %v5254 = vadd.f32 0.0, %v5253
      %v5255 = vpop.f32.mrf.mxu0
      %5256 = vmatprep.mubr.f32.mxu0 0.0
      %5257 = vmatmul.mubr.f32.gmra.mxu0 %v4573
      %v5258 = vpop.f32.mrf.mxu0
      %v5259 = vadd.f32 0.0, %v5258
      %v5260 = vpop.f32.mrf.mxu0
      %5261 = vmatprep.mubr.f32.mxu0 0.0
      %5262 = vmatmul.mubr.f32.gmra.mxu0 %v4576
      %v5263 = vpop.f32.mrf.mxu0
      %v5264 = vadd.f32 0.0, %v5263
      %v5265 = vpop.f32.mrf.mxu0
      %5266 = vmatprep.mubr.f32.mxu0 0.0
      %5267 = vmatmul.mubr.f32.gmra.mxu0 %v4579
      %v5268 = vpop.f32.mrf.mxu0
      %v5269 = vadd.f32 0.0, %v5268
      %v5270 = vpop.f32.mrf.mxu0
      %5271 = vmatprep.mubr.f32.mxu0 0.0
      %5272 = vmatmul.mubr.f32.gmra.mxu0 %v4582
      %v5273 = vpop.f32.mrf.mxu0
      %v5274 = vadd.f32 0.0, %v5273
      %v5275 = vpop.f32.mrf.mxu0
      %5276 = vmatprep.mubr.f32.mxu0 0.0
      %5277 = vmatmul.mubr.f32.gmra.mxu0 %v4585
      %v5278 = vpop.f32.mrf.mxu0
      %v5279 = vadd.f32 0.0, %v5278
      %v5280 = vpop.f32.mrf.mxu0
      %5281 = vmatprep.mubr.f32.mxu0 0.0
      %5282 = vmatmul.mubr.f32.gmra.mxu0 %v4588
      %v5283 = vpop.f32.mrf.mxu0
      %v5284 = vadd.f32 0.0, %v5283
      %v5285 = vpop.f32.mrf.mxu0
      %5286 = vmatprep.mubr.f32.mxu0 0.0
      %5287 = vmatmul.mubr.f32.gmra.mxu0 %v4591
      %v5288 = vpop.f32.mrf.mxu0
      %v5289 = vadd.f32 0.0, %v5288
      %v5290 = vpop.f32.mrf.mxu0
      %5291 = vmatprep.mubr.f32.mxu0 0.0
      %5292 = vmatmul.mubr.f32.gmra.mxu0 %v4594
      %v5293 = vpop.f32.mrf.mxu0
      %v5294 = vadd.f32 0.0, %v5293
      %v5295 = vpop.f32.mrf.mxu0
      %5296 = vmatprep.mubr.f32.mxu0 0.0
      %5297 = vmatmul.mubr.f32.gmra.mxu0 %v4597
      %v5298 = vpop.f32.mrf.mxu0
      %v5299 = vadd.f32 0.0, %v5298
      %v5300 = vpop.f32.mrf.mxu0
      %5301 = vmatprep.mubr.f32.mxu0 0.0
      %5302 = vmatmul.mubr.f32.gmra.mxu0 %v4600
      %v5303 = vpop.f32.mrf.mxu0
      %v5304 = vadd.f32 0.0, %v5303
      %v5305 = vpop.f32.mrf.mxu0
      %5306 = vdwg.mxu0
      %v5307 = vmax.f32 %v3961, %v4669
      %v5308 = vmax.f32 %v3962, %v4674
      %v5309 = vmax.f32 %v3963, %v4679
      %v5310 = vmax.f32 %v3964, %v4684
      %v5311 = vmax.f32 %v3965, %v4689
      %v5312 = vmax.f32 %v3966, %v4694
      %v5313 = vmax.f32 %v3967, %v4699
      %v5314 = vmax.f32 %v3968, %v4704
      %v5315 = vmax.f32 %v3969, %v4709
      %v5316 = vmax.f32 %v3970, %v4714
      %v5317 = vmax.f32 %v3971, %v4719
      %v5318 = vmax.f32 %v3972, %v4724
      %v5319 = vmax.f32 %v3973, %v4729
      %v5320 = vmax.f32 %v3974, %v4734
      %v5321 = vmax.f32 %v3975, %v4739
      %v5322 = vmax.f32 %v3976, %v4744
      %v5323 = vmax.f32 %v3977, %v4749
      %v5324 = vmax.f32 %v3978, %v4754
      %v5325 = vmax.f32 %v3979, %v4759
      %v5326 = vmax.f32 %v3980, %v4764
      %v5327 = vmax.f32 %v3981, %v4769
      %v5328 = vmax.f32 %v3982, %v4774
      %v5329 = vmax.f32 %v3983, %v4779
      %v5330 = vmax.f32 %v3984, %v4784
      %v5331 = vmax.f32 %v3985, %v4789
      %v5332 = vmax.f32 %v3986, %v4794
      %v5333 = vmax.f32 %v3987, %v4799
      %v5334 = vmax.f32 %v3988, %v4804
      %v5335 = vmax.f32 %v3989, %v4809
      %v5336 = vmax.f32 %v3990, %v4814
      %v5337 = vmax.f32 %v3991, %v4819
      %v5338 = vmax.f32 %v3992, %v4824
      %v5339 = vmax.f32 %v3993, %v4829
      %v5340 = vmax.f32 %v3994, %v4834
      %v5341 = vmax.f32 %v3995, %v4839
      %v5342 = vmax.f32 %v3996, %v4844
      %v5343 = vmax.f32 %v3997, %v4849
      %v5344 = vmax.f32 %v3998, %v4854
      %v5345 = vmax.f32 %v3999, %v4859
      %v5346 = vmax.f32 %v4000, %v4864
      %v5347 = vmax.f32 %v4001, %v4869
      %v5348 = vmax.f32 %v4002, %v4874
      %v5349 = vmax.f32 %v4003, %v4879
      %v5350 = vmax.f32 %v4004, %v4884
      %v5351 = vmax.f32 %v4005, %v4889
      %v5352 = vmax.f32 %v4006, %v4894
      %v5353 = vmax.f32 %v4007, %v4899
      %v5354 = vmax.f32 %v4008, %v4904
      %v5355 = vmax.f32 %v4009, %v4909
      %v5356 = vmax.f32 %v4010, %v4914
      %v5357 = vmax.f32 %v4011, %v4919
      %v5358 = vmax.f32 %v4012, %v4924
      %v5359 = vmax.f32 %v4013, %v4929
      %v5360 = vmax.f32 %v4014, %v4934
      %v5361 = vmax.f32 %v4015, %v4939
      %v5362 = vmax.f32 %v4016, %v4944
      %v5363 = vmax.f32 %v4017, %v4949
      %v5364 = vmax.f32 %v4018, %v4954
      %v5365 = vmax.f32 %v4019, %v4959
      %v5366 = vmax.f32 %v4020, %v4964
      %v5367 = vmax.f32 %v4021, %v4969
      %v5368 = vmax.f32 %v4022, %v4974
      %v5369 = vmax.f32 %v4023, %v4979
      %v5370 = vmax.f32 %v4024, %v4984
      %v5371 = vmax.f32 %v4025, %v4989
      %v5372 = vmax.f32 %v4026, %v4994
      %v5373 = vmax.f32 %v4027, %v4999
      %v5374 = vmax.f32 %v4028, %v5004
      %v5375 = vmax.f32 %v4029, %v5009
      %v5376 = vmax.f32 %v4030, %v5014
      %v5377 = vmax.f32 %v4031, %v5019
      %v5378 = vmax.f32 %v4032, %v5024
      %v5379 = vmax.f32 %v4033, %v5029
      %v5380 = vmax.f32 %v4034, %v5034
      %v5381 = vmax.f32 %v4035, %v5039
      %v5382 = vmax.f32 %v4036, %v5044
      %v5383 = vmax.f32 %v4037, %v5049
      %v5384 = vmax.f32 %v4038, %v5054
      %v5385 = vmax.f32 %v4039, %v5059
      %v5386 = vmax.f32 %v4040, %v5064
      %v5387 = vmax.f32 %v4041, %v5069
      %v5388 = vmax.f32 %v4042, %v5074
      %v5389 = vmax.f32 %v4043, %v5079
      %v5390 = vmax.f32 %v4044, %v5084
      %v5391 = vmax.f32 %v4045, %v5089
      %v5392 = vmax.f32 %v4046, %v5094
      %v5393 = vmax.f32 %v4047, %v5099
      %v5394 = vmax.f32 %v4048, %v5104
      %v5395 = vmax.f32 %v4049, %v5109
      %v5396 = vmax.f32 %v4050, %v5114
      %v5397 = vmax.f32 %v4051, %v5119
      %v5398 = vmax.f32 %v4052, %v5124
      %v5399 = vmax.f32 %v4053, %v5129
      %v5400 = vmax.f32 %v4054, %v5134
      %v5401 = vmax.f32 %v4055, %v5139
      %v5402 = vmax.f32 %v4056, %v5144
      %v5403 = vmax.f32 %v4057, %v5149
      %v5404 = vmax.f32 %v4058, %v5154
      %v5405 = vmax.f32 %v4059, %v5159
      %v5406 = vmax.f32 %v4060, %v5164
      %v5407 = vmax.f32 %v4061, %v5169
      %v5408 = vmax.f32 %v4062, %v5174
      %v5409 = vmax.f32 %v4063, %v5179
      %v5410 = vmax.f32 %v4064, %v5184
      %v5411 = vmax.f32 %v4065, %v5189
      %v5412 = vmax.f32 %v4066, %v5194
      %v5413 = vmax.f32 %v4067, %v5199
      %v5414 = vmax.f32 %v4068, %v5204
      %v5415 = vmax.f32 %v4069, %v5209
      %v5416 = vmax.f32 %v4070, %v5214
      %v5417 = vmax.f32 %v4071, %v5219
      %v5418 = vmax.f32 %v4072, %v5224
      %v5419 = vmax.f32 %v4073, %v5229
      %v5420 = vmax.f32 %v4074, %v5234
      %v5421 = vmax.f32 %v4075, %v5239
      %v5422 = vmax.f32 %v4076, %v5244
      %v5423 = vmax.f32 %v4077, %v5249
      %v5424 = vmax.f32 %v4078, %v5254
      %v5425 = vmax.f32 %v4079, %v5259
      %v5426 = vmax.f32 %v4080, %v5264
      %v5427 = vmax.f32 %v4081, %v5269
      %v5428 = vmax.f32 %v4082, %v5274
      %v5429 = vmax.f32 %v4083, %v5279
      %v5430 = vmax.f32 %v4084, %v5284
      %v5431 = vmax.f32 %v4085, %v5289
      %v5432 = vmax.f32 %v4086, %v5294
      %v5433 = vmax.f32 %v4087, %v5299
      %v5434 = vmax.f32 %v4088, %v5304
      %v5435 = vld [vmem:[%s2] sm:$0x1]
      %v5437 = vlaneseq
      %v5438 = vshrl.u32 %v5437, 7
      %v5439 = vsub.s32 0, %v5438
      %v5440 = vrot.slane %v5435, %v5439
      %v5442 = vadd.f32 %v5307, %v5440
      %v5443 = vadd.f32 %v5308, %v5440
      %v5444 = vadd.f32 %v5309, %v5440
      %v5445 = vadd.f32 %v5310, %v5440
      %v5446 = vadd.f32 %v5311, %v5440
      %v5447 = vadd.f32 %v5312, %v5440
      %v5448 = vadd.f32 %v5313, %v5440
      %v5449 = vadd.f32 %v5314, %v5440
      %v5450 = vadd.f32 %v5315, %v5440
      %v5451 = vadd.f32 %v5316, %v5440
      %v5452 = vadd.f32 %v5317, %v5440
      %v5453 = vadd.f32 %v5318, %v5440
      %v5454 = vadd.f32 %v5319, %v5440
      %v5455 = vadd.f32 %v5320, %v5440
      %v5456 = vadd.f32 %v5321, %v5440
      %v5457 = vadd.f32 %v5322, %v5440
      %v5458 = vadd.f32 %v5323, %v5440
      %v5459 = vadd.f32 %v5324, %v5440
      %v5460 = vadd.f32 %v5325, %v5440
      %v5461 = vadd.f32 %v5326, %v5440
      %v5462 = vadd.f32 %v5327, %v5440
      %v5463 = vadd.f32 %v5328, %v5440
      %v5464 = vadd.f32 %v5329, %v5440
      %v5465 = vadd.f32 %v5330, %v5440
      %v5466 = vadd.f32 %v5331, %v5440
      %v5467 = vadd.f32 %v5332, %v5440
      %v5468 = vadd.f32 %v5333, %v5440
      %v5469 = vadd.f32 %v5334, %v5440
      %v5470 = vadd.f32 %v5335, %v5440
      %v5471 = vadd.f32 %v5336, %v5440
      %v5472 = vadd.f32 %v5337, %v5440
      %v5473 = vadd.f32 %v5338, %v5440
      %v5474 = vadd.f32 %v5339, %v5440
      %v5475 = vadd.f32 %v5340, %v5440
      %v5476 = vadd.f32 %v5341, %v5440
      %v5477 = vadd.f32 %v5342, %v5440
      %v5478 = vadd.f32 %v5343, %v5440
      %v5479 = vadd.f32 %v5344, %v5440
      %v5480 = vadd.f32 %v5345, %v5440
      %v5481 = vadd.f32 %v5346, %v5440
      %v5482 = vadd.f32 %v5347, %v5440
      %v5483 = vadd.f32 %v5348, %v5440
      %v5484 = vadd.f32 %v5349, %v5440
      %v5485 = vadd.f32 %v5350, %v5440
      %v5486 = vadd.f32 %v5351, %v5440
      %v5487 = vadd.f32 %v5352, %v5440
      %v5488 = vadd.f32 %v5353, %v5440
      %v5489 = vadd.f32 %v5354, %v5440
      %v5490 = vadd.f32 %v5355, %v5440
      %v5491 = vadd.f32 %v5356, %v5440
      %v5492 = vadd.f32 %v5357, %v5440
      %v5493 = vadd.f32 %v5358, %v5440
      %v5494 = vadd.f32 %v5359, %v5440
      %v5495 = vadd.f32 %v5360, %v5440
      %v5496 = vadd.f32 %v5361, %v5440
      %v5497 = vadd.f32 %v5362, %v5440
      %v5498 = vadd.f32 %v5363, %v5440
      %v5499 = vadd.f32 %v5364, %v5440
      %v5500 = vadd.f32 %v5365, %v5440
      %v5501 = vadd.f32 %v5366, %v5440
      %v5502 = vadd.f32 %v5367, %v5440
      %v5503 = vadd.f32 %v5368, %v5440
      %v5504 = vadd.f32 %v5369, %v5440
      %v5505 = vadd.f32 %v5370, %v5440
      %v5506 = vadd.f32 %v5371, %v5440
      %v5507 = vadd.f32 %v5372, %v5440
      %v5508 = vadd.f32 %v5373, %v5440
      %v5509 = vadd.f32 %v5374, %v5440
      %v5510 = vadd.f32 %v5375, %v5440
      %v5511 = vadd.f32 %v5376, %v5440
      %v5512 = vadd.f32 %v5377, %v5440
      %v5513 = vadd.f32 %v5378, %v5440
      %v5514 = vadd.f32 %v5379, %v5440
      %v5515 = vadd.f32 %v5380, %v5440
      %v5516 = vadd.f32 %v5381, %v5440
      %v5517 = vadd.f32 %v5382, %v5440
      %v5518 = vadd.f32 %v5383, %v5440
      %v5519 = vadd.f32 %v5384, %v5440
      %v5520 = vadd.f32 %v5385, %v5440
      %v5521 = vadd.f32 %v5386, %v5440
      %v5522 = vadd.f32 %v5387, %v5440
      %v5523 = vadd.f32 %v5388, %v5440
      %v5524 = vadd.f32 %v5389, %v5440
      %v5525 = vadd.f32 %v5390, %v5440
      %v5526 = vadd.f32 %v5391, %v5440
      %v5527 = vadd.f32 %v5392, %v5440
      %v5528 = vadd.f32 %v5393, %v5440
      %v5529 = vadd.f32 %v5394, %v5440
      %v5530 = vadd.f32 %v5395, %v5440
      %v5531 = vadd.f32 %v5396, %v5440
      %v5532 = vadd.f32 %v5397, %v5440
      %v5533 = vadd.f32 %v5398, %v5440
      %v5534 = vadd.f32 %v5399, %v5440
      %v5535 = vadd.f32 %v5400, %v5440
      %v5536 = vadd.f32 %v5401, %v5440
      %v5537 = vadd.f32 %v5402, %v5440
      %v5538 = vadd.f32 %v5403, %v5440
      %v5539 = vadd.f32 %v5404, %v5440
      %v5540 = vadd.f32 %v5405, %v5440
      %v5541 = vadd.f32 %v5406, %v5440
      %v5542 = vadd.f32 %v5407, %v5440
      %v5543 = vadd.f32 %v5408, %v5440
      %v5544 = vadd.f32 %v5409, %v5440
      %v5545 = vadd.f32 %v5410, %v5440
      %v5546 = vadd.f32 %v5411, %v5440
      %v5547 = vadd.f32 %v5412, %v5440
      %v5548 = vadd.f32 %v5413, %v5440
      %v5549 = vadd.f32 %v5414, %v5440
      %v5550 = vadd.f32 %v5415, %v5440
      %v5551 = vadd.f32 %v5416, %v5440
      %v5552 = vadd.f32 %v5417, %v5440
      %v5553 = vadd.f32 %v5418, %v5440
      %v5554 = vadd.f32 %v5419, %v5440
      %v5555 = vadd.f32 %v5420, %v5440
      %v5556 = vadd.f32 %v5421, %v5440
      %v5557 = vadd.f32 %v5422, %v5440
      %v5558 = vadd.f32 %v5423, %v5440
      %v5559 = vadd.f32 %v5424, %v5440
      %v5560 = vadd.f32 %v5425, %v5440
      %v5561 = vadd.f32 %v5426, %v5440
      %v5562 = vadd.f32 %v5427, %v5440
      %v5563 = vadd.f32 %v5428, %v5440
      %v5564 = vadd.f32 %v5429, %v5440
      %v5565 = vadd.f32 %v5430, %v5440
      %v5566 = vadd.f32 %v5431, %v5440
      %v5567 = vadd.f32 %v5432, %v5440
      %v5568 = vadd.f32 %v5433, %v5440
      %v5569 = vadd.f32 %v5434, %v5440
      %v5570 = vmax.f32 %v5442, 0.0
      %v5571 = vmax.f32 %v5443, 0.0
      %v5572 = vmax.f32 %v5444, 0.0
      %v5573 = vmax.f32 %v5445, 0.0
      %v5574 = vmax.f32 %v5446, 0.0
      %v5575 = vmax.f32 %v5447, 0.0
      %v5576 = vmax.f32 %v5448, 0.0
      %v5577 = vmax.f32 %v5449, 0.0
      %v5578 = vmax.f32 %v5450, 0.0
      %v5579 = vmax.f32 %v5451, 0.0
      %v5580 = vmax.f32 %v5452, 0.0
      %v5581 = vmax.f32 %v5453, 0.0
      %v5582 = vmax.f32 %v5454, 0.0
      %v5583 = vmax.f32 %v5455, 0.0
      %v5584 = vmax.f32 %v5456, 0.0
      %v5585 = vmax.f32 %v5457, 0.0
      %v5586 = vmax.f32 %v5458, 0.0
      %v5587 = vmax.f32 %v5459, 0.0
      %v5588 = vmax.f32 %v5460, 0.0
      %v5589 = vmax.f32 %v5461, 0.0
      %v5590 = vmax.f32 %v5462, 0.0
      %v5591 = vmax.f32 %v5463, 0.0
      %v5592 = vmax.f32 %v5464, 0.0
      %v5593 = vmax.f32 %v5465, 0.0
      %v5594 = vmax.f32 %v5466, 0.0
      %v5595 = vmax.f32 %v5467, 0.0
      %v5596 = vmax.f32 %v5468, 0.0
      %v5597 = vmax.f32 %v5469, 0.0
      %v5598 = vmax.f32 %v5470, 0.0
      %v5599 = vmax.f32 %v5471, 0.0
      %v5600 = vmax.f32 %v5472, 0.0
      %v5601 = vmax.f32 %v5473, 0.0
      %v5602 = vmax.f32 %v5474, 0.0
      %v5603 = vmax.f32 %v5475, 0.0
      %v5604 = vmax.f32 %v5476, 0.0
      %v5605 = vmax.f32 %v5477, 0.0
      %v5606 = vmax.f32 %v5478, 0.0
      %v5607 = vmax.f32 %v5479, 0.0
      %v5608 = vmax.f32 %v5480, 0.0
      %v5609 = vmax.f32 %v5481, 0.0
      %v5610 = vmax.f32 %v5482, 0.0
      %v5611 = vmax.f32 %v5483, 0.0
      %v5612 = vmax.f32 %v5484, 0.0
      %v5613 = vmax.f32 %v5485, 0.0
      %v5614 = vmax.f32 %v5486, 0.0
      %v5615 = vmax.f32 %v5487, 0.0
      %v5616 = vmax.f32 %v5488, 0.0
      %v5617 = vmax.f32 %v5489, 0.0
      %v5618 = vmax.f32 %v5490, 0.0
      %v5619 = vmax.f32 %v5491, 0.0
      %v5620 = vmax.f32 %v5492, 0.0
      %v5621 = vmax.f32 %v5493, 0.0
      %v5622 = vmax.f32 %v5494, 0.0
      %v5623 = vmax.f32 %v5495, 0.0
      %v5624 = vmax.f32 %v5496, 0.0
      %v5625 = vmax.f32 %v5497, 0.0
      %v5626 = vmax.f32 %v5498, 0.0
      %v5627 = vmax.f32 %v5499, 0.0
      %v5628 = vmax.f32 %v5500, 0.0
      %v5629 = vmax.f32 %v5501, 0.0
      %v5630 = vmax.f32 %v5502, 0.0
      %v5631 = vmax.f32 %v5503, 0.0
      %v5632 = vmax.f32 %v5504, 0.0
      %v5633 = vmax.f32 %v5505, 0.0
      %v5634 = vmax.f32 %v5506, 0.0
      %v5635 = vmax.f32 %v5507, 0.0
      %v5636 = vmax.f32 %v5508, 0.0
      %v5637 = vmax.f32 %v5509, 0.0
      %v5638 = vmax.f32 %v5510, 0.0
      %v5639 = vmax.f32 %v5511, 0.0
      %v5640 = vmax.f32 %v5512, 0.0
      %v5641 = vmax.f32 %v5513, 0.0
      %v5642 = vmax.f32 %v5514, 0.0
      %v5643 = vmax.f32 %v5515, 0.0
      %v5644 = vmax.f32 %v5516, 0.0
      %v5645 = vmax.f32 %v5517, 0.0
      %v5646 = vmax.f32 %v5518, 0.0
      %v5647 = vmax.f32 %v5519, 0.0
      %v5648 = vmax.f32 %v5520, 0.0
      %v5649 = vmax.f32 %v5521, 0.0
      %v5650 = vmax.f32 %v5522, 0.0
      %v5651 = vmax.f32 %v5523, 0.0
      %v5652 = vmax.f32 %v5524, 0.0
      %v5653 = vmax.f32 %v5525, 0.0
      %v5654 = vmax.f32 %v5526, 0.0
      %v5655 = vmax.f32 %v5527, 0.0
      %v5656 = vmax.f32 %v5528, 0.0
      %v5657 = vmax.f32 %v5529, 0.0
      %v5658 = vmax.f32 %v5530, 0.0
      %v5659 = vmax.f32 %v5531, 0.0
      %v5660 = vmax.f32 %v5532, 0.0
      %v5661 = vmax.f32 %v5533, 0.0
      %v5662 = vmax.f32 %v5534, 0.0
      %v5663 = vmax.f32 %v5535, 0.0
      %v5664 = vmax.f32 %v5536, 0.0
      %v5665 = vmax.f32 %v5537, 0.0
      %v5666 = vmax.f32 %v5538, 0.0
      %v5667 = vmax.f32 %v5539, 0.0
      %v5668 = vmax.f32 %v5540, 0.0
      %v5669 = vmax.f32 %v5541, 0.0
      %v5670 = vmax.f32 %v5542, 0.0
      %v5671 = vmax.f32 %v5543, 0.0
      %v5672 = vmax.f32 %v5544, 0.0
      %v5673 = vmax.f32 %v5545, 0.0
      %v5674 = vmax.f32 %v5546, 0.0
      %v5675 = vmax.f32 %v5547, 0.0
      %v5676 = vmax.f32 %v5548, 0.0
      %v5677 = vmax.f32 %v5549, 0.0
      %v5678 = vmax.f32 %v5550, 0.0
      %v5679 = vmax.f32 %v5551, 0.0
      %v5680 = vmax.f32 %v5552, 0.0
      %v5681 = vmax.f32 %v5553, 0.0
      %v5682 = vmax.f32 %v5554, 0.0
      %v5683 = vmax.f32 %v5555, 0.0
      %v5684 = vmax.f32 %v5556, 0.0
      %v5685 = vmax.f32 %v5557, 0.0
      %v5686 = vmax.f32 %v5558, 0.0
      %v5687 = vmax.f32 %v5559, 0.0
      %v5688 = vmax.f32 %v5560, 0.0
      %v5689 = vmax.f32 %v5561, 0.0
      %v5690 = vmax.f32 %v5562, 0.0
      %v5691 = vmax.f32 %v5563, 0.0
      %v5692 = vmax.f32 %v5564, 0.0
      %v5693 = vmax.f32 %v5565, 0.0
      %v5694 = vmax.f32 %v5566, 0.0
      %v5695 = vmax.f32 %v5567, 0.0
      %v5696 = vmax.f32 %v5568, 0.0
      %v5697 = vmax.f32 %v5569, 0.0
      %vm5698 = vcmask 261120
      %5699 = vst.msk [vmem:[%s170] sm:$0xff] %vm5698, %v5570
      %5700 = vst.msk [vmem:[%s170 + $0x8] sm:$0xff] %vm5698, %v5571
      %5701 = vst.msk [vmem:[%s170 + $0x10] sm:$0xff] %vm5698, %v5572
      %5702 = vst.msk [vmem:[%s170 + $0x18] sm:$0xff] %vm5698, %v5573
      %5703 = vst.msk [vmem:[%s170 + $0x20] sm:$0xff] %vm5698, %v5574
      %5704 = vst.msk [vmem:[%s170 + $0x28] sm:$0xff] %vm5698, %v5575
      %5705 = vst.msk [vmem:[%s170 + $0x30] sm:$0xff] %vm5698, %v5576
      %5706 = vst.msk [vmem:[%s170 + $0x38] sm:$0xff] %vm5698, %v5577
      %5707 = vst.msk [vmem:[%s170 + $0x40] sm:$0xff] %vm5698, %v5578
      %5708 = vst.msk [vmem:[%s170 + $0x48] sm:$0xff] %vm5698, %v5579
      %5709 = vst.msk [vmem:[%s170 + $0x50] sm:$0xff] %vm5698, %v5580
      %5710 = vst.msk [vmem:[%s170 + $0x58] sm:$0xff] %vm5698, %v5581
      %5711 = vst.msk [vmem:[%s170 + $0x60] sm:$0xff] %vm5698, %v5582
      %5712 = vst.msk [vmem:[%s170 + $0x68] sm:$0xff] %vm5698, %v5583
      %5713 = vst.msk [vmem:[%s170 + $0x70] sm:$0xff] %vm5698, %v5584
      %5714 = vst.msk [vmem:[%s170 + $0x78] sm:$0xff] %vm5698, %v5585
      %5715 = vst.msk [vmem:[%s170 + $0x80] sm:$0xff] %vm5698, %v5586
      %5716 = vst.msk [vmem:[%s170 + $0x88] sm:$0xff] %vm5698, %v5587
      %5717 = vst.msk [vmem:[%s170 + $0x90] sm:$0xff] %vm5698, %v5588
      %5718 = vst.msk [vmem:[%s170 + $0x98] sm:$0xff] %vm5698, %v5589
      %5719 = vst.msk [vmem:[%s170 + $0xa0] sm:$0xff] %vm5698, %v5590
      %5720 = vst.msk [vmem:[%s170 + $0xa8] sm:$0xff] %vm5698, %v5591
      %5721 = vst.msk [vmem:[%s170 + $0xb0] sm:$0xff] %vm5698, %v5592
      %5722 = vst.msk [vmem:[%s170 + $0xb8] sm:$0xff] %vm5698, %v5593
      %5723 = vst.msk [vmem:[%s170 + $0xc0] sm:$0xff] %vm5698, %v5594
      %5724 = vst.msk [vmem:[%s170 + $0xc8] sm:$0xff] %vm5698, %v5595
      %5725 = vst.msk [vmem:[%s170 + $0xd0] sm:$0xff] %vm5698, %v5596
      %5726 = vst.msk [vmem:[%s170 + $0xd8] sm:$0xff] %vm5698, %v5597
      %5727 = vst.msk [vmem:[%s170 + $0xe0] sm:$0xff] %vm5698, %v5598
      %5728 = vst.msk [vmem:[%s170 + $0xe8] sm:$0xff] %vm5698, %v5599
      %5729 = vst.msk [vmem:[%s170 + $0xf0] sm:$0xff] %vm5698, %v5600
      %5730 = vst.msk [vmem:[%s170 + $0xf8] sm:$0xff] %vm5698, %v5601
      %5731 = vst.msk [vmem:[%s170 + $0x100] sm:$0xff] %vm5698, %v5602
      %5732 = vst.msk [vmem:[%s170 + $0x108] sm:$0xff] %vm5698, %v5603
      %5733 = vst.msk [vmem:[%s170 + $0x110] sm:$0xff] %vm5698, %v5604
      %5734 = vst.msk [vmem:[%s170 + $0x118] sm:$0xff] %vm5698, %v5605
      %5735 = vst.msk [vmem:[%s170 + $0x120] sm:$0xff] %vm5698, %v5606
      %5736 = vst.msk [vmem:[%s170 + $0x128] sm:$0xff] %vm5698, %v5607
      %5737 = vst.msk [vmem:[%s170 + $0x130] sm:$0xff] %vm5698, %v5608
      %5738 = vst.msk [vmem:[%s170 + $0x138] sm:$0xff] %vm5698, %v5609
      %5739 = vst.msk [vmem:[%s170 + $0x140] sm:$0xff] %vm5698, %v5610
      %5740 = vst.msk [vmem:[%s170 + $0x148] sm:$0xff] %vm5698, %v5611
      %5741 = vst.msk [vmem:[%s170 + $0x150] sm:$0xff] %vm5698, %v5612
      %5742 = vst.msk [vmem:[%s170 + $0x158] sm:$0xff] %vm5698, %v5613
      %5743 = vst.msk [vmem:[%s170 + $0x160] sm:$0xff] %vm5698, %v5614
      %5744 = vst.msk [vmem:[%s170 + $0x168] sm:$0xff] %vm5698, %v5615
      %5745 = vst.msk [vmem:[%s170 + $0x170] sm:$0xff] %vm5698, %v5616
      %5746 = vst.msk [vmem:[%s170 + $0x178] sm:$0xff] %vm5698, %v5617
      %5747 = vst.msk [vmem:[%s170 + $0x180] sm:$0xff] %vm5698, %v5618
      %5748 = vst.msk [vmem:[%s170 + $0x188] sm:$0xff] %vm5698, %v5619
      %5749 = vst.msk [vmem:[%s170 + $0x190] sm:$0xff] %vm5698, %v5620
      %5750 = vst.msk [vmem:[%s170 + $0x198] sm:$0xff] %vm5698, %v5621
      %5751 = vst.msk [vmem:[%s170 + $0x1a0] sm:$0xff] %vm5698, %v5622
      %5752 = vst.msk [vmem:[%s170 + $0x1a8] sm:$0xff] %vm5698, %v5623
      %5753 = vst.msk [vmem:[%s170 + $0x1b0] sm:$0xff] %vm5698, %v5624
      %5754 = vst.msk [vmem:[%s170 + $0x1b8] sm:$0xff] %vm5698, %v5625
      %5755 = vst.msk [vmem:[%s170 + $0x1c0] sm:$0xff] %vm5698, %v5626
      %5756 = vst.msk [vmem:[%s170 + $0x1c8] sm:$0xff] %vm5698, %v5627
      %5757 = vst.msk [vmem:[%s170 + $0x1d0] sm:$0xff] %vm5698, %v5628
      %5758 = vst.msk [vmem:[%s170 + $0x1d8] sm:$0xff] %vm5698, %v5629
      %5759 = vst.msk [vmem:[%s170 + $0x1e0] sm:$0xff] %vm5698, %v5630
      %5760 = vst.msk [vmem:[%s170 + $0x1e8] sm:$0xff] %vm5698, %v5631
      %5761 = vst.msk [vmem:[%s170 + $0x1f0] sm:$0xff] %vm5698, %v5632
      %5762 = vst.msk [vmem:[%s170 + $0x1f8] sm:$0xff] %vm5698, %v5633
      %5763 = vst.msk [vmem:[%s170 + $0x200] sm:$0xff] %vm5698, %v5634
      %5764 = vst.msk [vmem:[%s170 + $0x208] sm:$0xff] %vm5698, %v5635
      %5765 = vst.msk [vmem:[%s170 + $0x210] sm:$0xff] %vm5698, %v5636
      %5766 = vst.msk [vmem:[%s170 + $0x218] sm:$0xff] %vm5698, %v5637
      %5767 = vst.msk [vmem:[%s170 + $0x220] sm:$0xff] %vm5698, %v5638
      %5768 = vst.msk [vmem:[%s170 + $0x228] sm:$0xff] %vm5698, %v5639
      %5769 = vst.msk [vmem:[%s170 + $0x230] sm:$0xff] %vm5698, %v5640
      %5770 = vst.msk [vmem:[%s170 + $0x238] sm:$0xff] %vm5698, %v5641
      %5771 = vst.msk [vmem:[%s170 + $0x240] sm:$0xff] %vm5698, %v5642
      %5772 = vst.msk [vmem:[%s170 + $0x248] sm:$0xff] %vm5698, %v5643
      %5773 = vst.msk [vmem:[%s170 + $0x250] sm:$0xff] %vm5698, %v5644
      %5774 = vst.msk [vmem:[%s170 + $0x258] sm:$0xff] %vm5698, %v5645
      %5775 = vst.msk [vmem:[%s170 + $0x260] sm:$0xff] %vm5698, %v5646
      %5776 = vst.msk [vmem:[%s170 + $0x268] sm:$0xff] %vm5698, %v5647
      %5777 = vst.msk [vmem:[%s170 + $0x270] sm:$0xff] %vm5698, %v5648
      %5778 = vst.msk [vmem:[%s170 + $0x278] sm:$0xff] %vm5698, %v5649
      %5779 = vst.msk [vmem:[%s170 + $0x280] sm:$0xff] %vm5698, %v5650
      %5780 = vst.msk [vmem:[%s170 + $0x288] sm:$0xff] %vm5698, %v5651
      %5781 = vst.msk [vmem:[%s170 + $0x290] sm:$0xff] %vm5698, %v5652
      %5782 = vst.msk [vmem:[%s170 + $0x298] sm:$0xff] %vm5698, %v5653
      %5783 = vst.msk [vmem:[%s170 + $0x2a0] sm:$0xff] %vm5698, %v5654
      %5784 = vst.msk [vmem:[%s170 + $0x2a8] sm:$0xff] %vm5698, %v5655
      %5785 = vst.msk [vmem:[%s170 + $0x2b0] sm:$0xff] %vm5698, %v5656
      %5786 = vst.msk [vmem:[%s170 + $0x2b8] sm:$0xff] %vm5698, %v5657
      %5787 = vst.msk [vmem:[%s170 + $0x2c0] sm:$0xff] %vm5698, %v5658
      %5788 = vst.msk [vmem:[%s170 + $0x2c8] sm:$0xff] %vm5698, %v5659
      %5789 = vst.msk [vmem:[%s170 + $0x2d0] sm:$0xff] %vm5698, %v5660
      %5790 = vst.msk [vmem:[%s170 + $0x2d8] sm:$0xff] %vm5698, %v5661
      %5791 = vst.msk [vmem:[%s170 + $0x2e0] sm:$0xff] %vm5698, %v5662
      %5792 = vst.msk [vmem:[%s170 + $0x2e8] sm:$0xff] %vm5698, %v5663
      %5793 = vst.msk [vmem:[%s170 + $0x2f0] sm:$0xff] %vm5698, %v5664
      %5794 = vst.msk [vmem:[%s170 + $0x2f8] sm:$0xff] %vm5698, %v5665
      %5795 = vst.msk [vmem:[%s170 + $0x300] sm:$0xff] %vm5698, %v5666
      %5796 = vst.msk [vmem:[%s170 + $0x308] sm:$0xff] %vm5698, %v5667
      %5797 = vst.msk [vmem:[%s170 + $0x310] sm:$0xff] %vm5698, %v5668
      %5798 = vst.msk [vmem:[%s170 + $0x318] sm:$0xff] %vm5698, %v5669
      %5799 = vst.msk [vmem:[%s170 + $0x320] sm:$0xff] %vm5698, %v5670
      %5800 = vst.msk [vmem:[%s170 + $0x328] sm:$0xff] %vm5698, %v5671
      %5801 = vst.msk [vmem:[%s170 + $0x330] sm:$0xff] %vm5698, %v5672
      %5802 = vst.msk [vmem:[%s170 + $0x338] sm:$0xff] %vm5698, %v5673
      %5803 = vst.msk [vmem:[%s170 + $0x340] sm:$0xff] %vm5698, %v5674
      %5804 = vst.msk [vmem:[%s170 + $0x348] sm:$0xff] %vm5698, %v5675
      %5805 = vst.msk [vmem:[%s170 + $0x350] sm:$0xff] %vm5698, %v5676
      %5806 = vst.msk [vmem:[%s170 + $0x358] sm:$0xff] %vm5698, %v5677
      %5807 = vst.msk [vmem:[%s170 + $0x360] sm:$0xff] %vm5698, %v5678
      %5808 = vst.msk [vmem:[%s170 + $0x368] sm:$0xff] %vm5698, %v5679
      %5809 = vst.msk [vmem:[%s170 + $0x370] sm:$0xff] %vm5698, %v5680
      %5810 = vst.msk [vmem:[%s170 + $0x378] sm:$0xff] %vm5698, %v5681
      %5811 = vst.msk [vmem:[%s170 + $0x380] sm:$0xff] %vm5698, %v5682
      %5812 = vst.msk [vmem:[%s170 + $0x388] sm:$0xff] %vm5698, %v5683
      %5813 = vst.msk [vmem:[%s170 + $0x390] sm:$0xff] %vm5698, %v5684
      %5814 = vst.msk [vmem:[%s170 + $0x398] sm:$0xff] %vm5698, %v5685
      %5815 = vst.msk [vmem:[%s170 + $0x3a0] sm:$0xff] %vm5698, %v5686
      %5816 = vst.msk [vmem:[%s170 + $0x3a8] sm:$0xff] %vm5698, %v5687
      %5817 = vst.msk [vmem:[%s170 + $0x3b0] sm:$0xff] %vm5698, %v5688
      %5818 = vst.msk [vmem:[%s170 + $0x3b8] sm:$0xff] %vm5698, %v5689
      %5819 = vst.msk [vmem:[%s170 + $0x3c0] sm:$0xff] %vm5698, %v5690
      %5820 = vst.msk [vmem:[%s170 + $0x3c8] sm:$0xff] %vm5698, %v5691
      %5821 = vst.msk [vmem:[%s170 + $0x3d0] sm:$0xff] %vm5698, %v5692
      %5822 = vst.msk [vmem:[%s170 + $0x3d8] sm:$0xff] %vm5698, %v5693
      %5823 = vst.msk [vmem:[%s170 + $0x3e0] sm:$0xff] %vm5698, %v5694
      %5824 = vst.msk [vmem:[%s170 + $0x3e8] sm:$0xff] %vm5698, %v5695
      %5825 = vst.msk [vmem:[%s170 + $0x3f0] sm:$0xff] %vm5698, %v5696
      %5826 = vst.msk [vmem:[%s170 + $0x3f8] sm:$0xff] %vm5698, %v5697
      %p5827 = scmp.lt.s32.totalorder %s14, 1
      %s5828 = scalar_select %p5827, %s14, 1
      %s5829 = smul.addr %s5828, 128
      %s5830 = smul.addr %s5829, 8
      %s5831 = scalar_lea.vmem %s3, %s5830
      // Predicated region
      $region33: #{_lambda_.3} parent=31 // pred_check
        %p5832 = pneg %p100
      $region34: #{_lambda_.3} parent=31 // pred_check_branch
        %5834 = sbr.rel (%p5832) target = $region36
      $region35: #{_lambda_.3} parent=31 // pred_region
        _
      $region36: #{_lambda_.3} parent=31 // pred_fallthru
        _
    $region32: #{_lambda_.3} parent=5 // pred_fallthru
      _
    %p5835 = scmp.le.s32.totalorder 2, %s9
    // Predicated region
    $region37: #{_lambda_.3} parent=5 // pred_check
      %p5836 = pneg %p5835
    $region38: #{_lambda_.3} parent=5 // pred_check_branch
      %5838 = sbr.rel (%p5836) target = $region40
    $region39: #{_lambda_.3} parent=5 // pred_region
      %s5839 = ssub.s32 %s9, 2
      // Predicated region
      $region41: #{_lambda_.3} parent=39 // pred_check
        %p5840 = pneg %p106
      $region42: #{_lambda_.3} parent=39 // pred_check_branch
        %5842 = sbr.rel (%p5840) target = $region44
      $region43: #{_lambda_.3} parent=39 // pred_region
        %p5843 = scmp.lt.s32.totalorder %s15, 1
        %s5844 = scalar_select %p5843, %s15, 1
        %s5845 = smul.addr %s5844, 128
        %s5846 = smul.addr %s5845, 8
        %s5847 = scalar_lea.vmem %s3, %s5846
      $region44: #{_lambda_.3} parent=39 // pred_fallthru
        _
    $region40: #{_lambda_.3} parent=5 // pred_fallthru
      _
  $region6: #{_lambda_.3} parent=0 // loop_footer
    %s13 = sadd.s32 1, %s9
  $region7: #{_lambda_.3} parent=0 // loop_footer_branch
    %8 = sbr.rel target = $region3
  $region8: #{_lambda_.3} parent=0 // loop_exit
    _

// kernel: _lambda_.4
$region0: #{_lambda_.4}
  #allocation0 [shape = 'u32[]', space=smem, size = 0x4, offset = 0x4, fixed_abs, tag = 'smem constant byte address 0x4 - core index']
  #allocation1 [shape = 'u32[144,128]{1,0:T(1,128)}', space=vmem, size = 0x12000, scoped, tag = 'internal scratch']
  %s0 = inlined_call_operand.vmem [shape: f32[2,4,256,288], index: 0, kind: input, shape index: {}]
  %s1 = inlined_call_operand.vmem [shape: f32[288,64], index: 1, kind: input, shape index: {}]
  %s2 = inlined_call_operand.vmem [shape: f32[1,64], index: 2, kind: input, shape index: {}]
  %s3 = inlined_call_operand.vmem [shape: f32[2,256,64], index: 3, kind: output, shape index: {}]
  %s4 = sld [smem:[#allocation0]]
  $region45: #{_lambda_.4} parent=0
    _
  %s6 = ssub.s32 1, %s4
  %s7 = scalar_select 0, %s6, %s4
  loop: start=0, step=1, limit=4
  $region2: #{_lambda_.4} parent=0 // loop_pre_header
    _
  $region3: #{_lambda_.4} parent=0 // loop_header
    %s9 = sphi 0, %s13
    %p10 = scmp.ge.s32.totalorder %s9, 4
    %s19 = sphi 0, %s21
    %s22 = sphi 0, %s19
    %s23 = sphi 0, %s22
    %s39 = sphi 0, %s23
    %s43 = sphi 0, %s43
    %s45 = sphi 0, %s43
    %s46 = sphi 0, %s45
    %s60 = sphi 0, %s46
    %s64 = sphi 0, %s64
    %s66 = sphi 0, %s64
    %s67 = sphi 0, %s66
    %s81 = sphi 0, %s67
    %s87 = sphi 0, %s89
    %s90 = sphi 0, %s87
    %s91 = sphi 0, %s90
    %s107 = sphi 0, %s91
  $region4: #{_lambda_.4} parent=0 // loop_header_branch
    %12 = sbr.rel (%p10) target = $region8
  $region5: #{_lambda_.4} parent=0 // loop_body
    %s14 = ssub.s32 %s9, 1
    %s15 = ssub.s32 %s9, 2
    %s16 = sadd.s32 %s9, 1
    %s17 = ssub.s32 %s9, %s16
    %p18 = scmp.eq.s32.totalorder %s17, 0
    %s20 = sadd.s32 %s19, 1
    %s21 = scalar_select %p18, %s19, %s20
    %p24 = pneg %p18
    %p25 = scmp.eq.s32.totalorder %s9, 1
    %p26 = por %p24, %p25
    %p27 = scmp.ne.s32.totalorder %s19, %s22
    %p28 = scmp.eq.s32.totalorder %s9, 0
    %p29 = por %p27, %p28
    %p30 = scmp.ne.s32.totalorder %s19, %s22
    %p31 = scmp.eq.s32.totalorder %s14, 1
    %p32 = por %p30, %p31
    %p33 = scmp.ne.s32.totalorder %s22, %s23
    %p34 = scmp.eq.s32.totalorder %s14, 0
    %p35 = por %p33, %p34
    %p36 = scmp.ne.s32.totalorder %s22, %s23
    %p37 = scmp.eq.s32.totalorder %s15, 1
    %p38 = por %p36, %p37
    %p40 = scmp.ne.s32.totalorder %s23, %s39
    %p41 = scmp.eq.s32.totalorder %s15, 0
    %p42 = por %p40, %p41
    %s44 = sadd.s32 %s43, 1
    %p47 = scmp.eq.s32.totalorder %s9, 1
    %p48 = scmp.ne.s32.totalorder %s43, %s45
    %p49 = scmp.eq.s32.totalorder %s9, 0
    %p50 = por %p48, %p49
    %p51 = scmp.ne.s32.totalorder %s43, %s45
    %p52 = scmp.eq.s32.totalorder %s14, 1
    %p53 = por %p51, %p52
    %p54 = scmp.ne.s32.totalorder %s45, %s46
    %p55 = scmp.eq.s32.totalorder %s14, 0
    %p56 = por %p54, %p55
    %p57 = scmp.ne.s32.totalorder %s45, %s46
    %p58 = scmp.eq.s32.totalorder %s15, 1
    %p59 = por %p57, %p58
    %p61 = scmp.ne.s32.totalorder %s46, %s60
    %p62 = scmp.eq.s32.totalorder %s15, 0
    %p63 = por %p61, %p62
    %s65 = sadd.s32 %s64, 1
    %p68 = scmp.eq.s32.totalorder %s9, 1
    %p69 = scmp.ne.s32.totalorder %s64, %s66
    %p70 = scmp.eq.s32.totalorder %s9, 0
    %p71 = por %p69, %p70
    %p72 = scmp.ne.s32.totalorder %s64, %s66
    %p73 = scmp.eq.s32.totalorder %s14, 1
    %p74 = por %p72, %p73
    %p75 = scmp.ne.s32.totalorder %s66, %s67
    %p76 = scmp.eq.s32.totalorder %s14, 0
    %p77 = por %p75, %p76
    %p78 = scmp.ne.s32.totalorder %s66, %s67
    %p79 = scmp.eq.s32.totalorder %s15, 1
    %p80 = por %p78, %p79
    %p82 = scmp.ne.s32.totalorder %s67, %s81
    %p83 = scmp.eq.s32.totalorder %s15, 0
    %p84 = por %p82, %p83
    %s85 = ssub.s32 %s9, %s16
    %p86 = scmp.eq.s32.totalorder %s85, 0
    %s88 = sadd.s32 %s87, 1
    %s89 = scalar_select %p86, %s87, %s88
    %p92 = pneg %p86
    %p93 = scmp.eq.s32.totalorder %s9, 1
    %p94 = por %p92, %p93
    %p95 = scmp.ne.s32.totalorder %s87, %s90
    %p96 = scmp.eq.s32.totalorder %s9, 0
    %p97 = por %p95, %p96
    %p98 = scmp.ne.s32.totalorder %s87, %s90
    %p99 = scmp.eq.s32.totalorder %s14, 1
    %p100 = por %p98, %p99
    %p101 = scmp.ne.s32.totalorder %s90, %s91
    %p102 = scmp.eq.s32.totalorder %s14, 0
    %p103 = por %p101, %p102
    %p104 = scmp.ne.s32.totalorder %s90, %s91
    %p105 = scmp.eq.s32.totalorder %s15, 1
    %p106 = por %p104, %p105
    %p108 = scmp.ne.s32.totalorder %s91, %s107
    %p109 = scmp.eq.s32.totalorder %s15, 0
    %p110 = por %p108, %p109
    %p111 = scmp.le.s32.totalorder 1, %s9
    %p112 = scmp.lt.s32.totalorder %s9, 3
    %p113 = pnand %p111, %p112
    %p114 = pneg %p113
    // Predicated region
    $region9: #{_lambda_.4} parent=5 // pred_check
      _
    $region10: #{_lambda_.4} parent=5 // pred_check_branch
      %116 = sbr.rel (%p113) target = $region12
    $region11: #{_lambda_.4} parent=5 // pred_region
      %s117 = ssub.s32 %s9, 1
      // Predicated region
      $region13: #{_lambda_.4} parent=11 // pred_check
        %p118 = pneg %p56
      $region14: #{_lambda_.4} parent=11 // pred_check_branch
        %120 = sbr.rel (%p118) target = $region16
      $region15: #{_lambda_.4} parent=11 // pred_region
        _
      $region16: #{_lambda_.4} parent=11 // pred_fallthru
        _
      // Predicated region
      $region17: #{_lambda_.4} parent=11 // pred_check
        %p121 = pneg %p77
      $region18: #{_lambda_.4} parent=11 // pred_check_branch
        %123 = sbr.rel (%p121) target = $region20
      $region19: #{_lambda_.4} parent=11 // pred_region
        _
      $region20: #{_lambda_.4} parent=11 // pred_fallthru
        _
    $region12: #{_lambda_.4} parent=5 // pred_fallthru
      _
    %p124 = scmp.lt.s32.totalorder %s9, 2
    // Predicated region
    $region21: #{_lambda_.4} parent=5 // pred_check
      %p125 = pneg %p124
    $region22: #{_lambda_.4} parent=5 // pred_check_branch
      %127 = sbr.rel (%p125) target = $region24
    $region23: #{_lambda_.4} parent=5 // pred_region
      // Predicated region
      $region25: #{_lambda_.4} parent=23 // pred_check
        %p128 = pneg %p29
      $region26: #{_lambda_.4} parent=23 // pred_check_branch
        %130 = sbr.rel (%p128) target = $region28
      $region27: #{_lambda_.4} parent=23 // pred_region
        %p131 = scmp.lt.s32.totalorder %s9, 1
        %s132 = scalar_select %p131, %s9, 1
        %s133 = smul.addr %s132, 384
        %s134 = smul.addr %s133, 8
        %s135 = scalar_lea.vmem %s0, %s134
      $region28: #{_lambda_.4} parent=23 // pred_fallthru
        _
    $region24: #{_lambda_.4} parent=5 // pred_fallthru
      _
    %p136 = scmp.le.s32.totalorder 1, %s9
    %p137 = scmp.lt.s32.totalorder %s9, 3
    %p138 = pnand %p136, %p137
    %p139 = pneg %p138
    // Predicated region
    $region29: #{_lambda_.4} parent=5 // pred_check
      _
    $region30: #{_lambda_.4} parent=5 // pred_check_branch
      %141 = sbr.rel (%p138) target = $region32
    $region31: #{_lambda_.4} parent=5 // pred_region
      %s142 = ssub.s32 %s9, 1
      %p143 = scmp.lt.s32.totalorder %s14, 1
      %s144 = scalar_select %p143, %s14, 1
      %s145 = smul.addr %s144, 384
      %s146 = smul.addr %s145, 8
      %s147 = scalar_lea.vmem %s0, %s146
      %p148 = pneg %p35
      %p149 = pneg %p32
      %p150 = pneg %p56
      %p151 = pneg %p53
      %p152 = pneg %p77
      %p153 = pneg %p74
      %p154 = pneg %p103
      %p155 = pneg %p100
      %p156 = scmp.lt.s32.totalorder %s14, 1
      %s157 = scalar_select %p156, %s14, 1
      %s158 = smul.addr %s157, 32
      %s159 = smul.addr %s158, 8
      %s160 = scalar_lea.vmem %s3, %s159
      %p161 = scmp.lt.s32.totalorder %s14, 1
      %s162 = scalar_select %p161, %s14, 1
      %s163 = smul.addr %s162, 384
      %s164 = smul.addr %s163, 8
      %s165 = scalar_lea.vmem %s0, %s164
      %p166 = scmp.lt.s32.totalorder %s14, 1
      %s167 = scalar_select %p166, %s14, 1
      %s168 = smul.addr %s167, 32
      %s169 = smul.addr %s168, 8
      %s170 = scalar_lea.vmem %s3, %s169
      %v171 = vld [vmem:[%s1] sm:$0xff]
      %v172 = vld [vmem:[%s1 + $0x8] sm:$0xff]
      %v173 = vld [vmem:[%s1 + $0x10] sm:$0xff]
      %v174 = vld [vmem:[%s1 + $0x18] sm:$0xff]
      %v175 = vld [vmem:[%s1 + $0x20] sm:$0xff]
      %v176 = vld [vmem:[%s1 + $0x28] sm:$0xff]
      %v177 = vld [vmem:[%s1 + $0x30] sm:$0xff]
      %v178 = vld [vmem:[%s1 + $0x38] sm:$0xff]
      %v179 = vld [vmem:[%s1 + $0x40] sm:$0xff]
      %v180 = vld [vmem:[%s1 + $0x48] sm:$0xff]
      %v181 = vld [vmem:[%s1 + $0x50] sm:$0xff]
      %v182 = vld [vmem:[%s1 + $0x58] sm:$0xff]
      %v183 = vld [vmem:[%s1 + $0x60] sm:$0xff]
      %v184 = vld [vmem:[%s1 + $0x68] sm:$0xff]
      %v185 = vld [vmem:[%s1 + $0x70] sm:$0xff]
      %v186 = vld [vmem:[%s1 + $0x78] sm:$0xff]
      %v187 = vld [vmem:[%s1 + $0x80] sm:$0xff]
      %v188 = vld [vmem:[%s1 + $0x88] sm:$0xff]
      %v189 = vld [vmem:[%s1 + $0x90] sm:$0xff]
      %v190 = vld [vmem:[%s1 + $0x98] sm:$0xff]
      %v191 = vld [vmem:[%s1 + $0xa0] sm:$0xff]
      %v192 = vld [vmem:[%s1 + $0xa8] sm:$0xff]
      %v193 = vld [vmem:[%s1 + $0xb0] sm:$0xff]
      %v194 = vld [vmem:[%s1 + $0xb8] sm:$0xff]
      %v195 = vld [vmem:[%s1 + $0xc0] sm:$0xff]
      %v196 = vld [vmem:[%s1 + $0xc8] sm:$0xff]
      %v197 = vld [vmem:[%s1 + $0xd0] sm:$0xff]
      %v198 = vld [vmem:[%s1 + $0xd8] sm:$0xff]
      %v199 = vld [vmem:[%s1 + $0xe0] sm:$0xff]
      %v200 = vld [vmem:[%s1 + $0xe8] sm:$0xff]
      %v201 = vld [vmem:[%s1 + $0xf0] sm:$0xff]
      %v202 = vld [vmem:[%s1 + $0xf8] sm:$0xff]
      %v203 = vld [vmem:[%s1 + $0x100] sm:$0xff]
      %v204 = vld [vmem:[%s1 + $0x108] sm:$0xff]
      %v205 = vld [vmem:[%s1 + $0x110] sm:$0xff]
      %v206 = vld [vmem:[%s1 + $0x118] sm:$0xff]
      %v207 = vld [vmem:[%s165] sm:$0xff]
      %v208 = vld [vmem:[%s165 + $0x8] sm:$0xff]
      %v209 = vld [vmem:[%s165 + $0x10] sm:$0xff]
      %v210 = vld [vmem:[%s165 + $0x18] sm:$0xff]
      %v211 = vld [vmem:[%s165 + $0x20] sm:$0xff]
      %v212 = vld [vmem:[%s165 + $0x28] sm:$0xff]
      %v213 = vld [vmem:[%s165 + $0x30] sm:$0xff]
      %v214 = vld [vmem:[%s165 + $0x38] sm:$0xff]
      %v215 = vld [vmem:[%s165 + $0x40] sm:$0xff]
      %v216 = vld [vmem:[%s165 + $0x48] sm:$0xff]
      %v217 = vld [vmem:[%s165 + $0x50] sm:$0xff]
      %v218 = vld [vmem:[%s165 + $0x58] sm:$0xff]
      %v219 = vld [vmem:[%s165 + $0x60] sm:$0xff]
      %v220 = vld [vmem:[%s165 + $0x68] sm:$0xff]
      %v221 = vld [vmem:[%s165 + $0x70] sm:$0xff]
      %v222 = vld [vmem:[%s165 + $0x78] sm:$0xff]
      %v223 = vld [vmem:[%s165 + $0x80] sm:$0xff]
      %v224 = vld [vmem:[%s165 + $0x88] sm:$0xff]
      %v225 = vld [vmem:[%s165 + $0x90] sm:$0xff]
      %v226 = vld [vmem:[%s165 + $0x98] sm:$0xff]
      %v227 = vld [vmem:[%s165 + $0xa0] sm:$0xff]
      %v228 = vld [vmem:[%s165 + $0xa8] sm:$0xff]
      %v229 = vld [vmem:[%s165 + $0xb0] sm:$0xff]
      %v230 = vld [vmem:[%s165 + $0xb8] sm:$0xff]
      %v231 = vld [vmem:[%s165 + $0xc0] sm:$0xff]
      %v232 = vld [vmem:[%s165 + $0xc8] sm:$0xff]
      %v233 = vld [vmem:[%s165 + $0xd0] sm:$0xff]
      %v234 = vld [vmem:[%s165 + $0xd8] sm:$0xff]
      %v235 = vld [vmem:[%s165 + $0xe0] sm:$0xff]
      %v236 = vld [vmem:[%s165 + $0xe8] sm:$0xff]
      %v237 = vld [vmem:[%s165 + $0xf0] sm:$0xff]
      %v238 = vld [vmem:[%s165 + $0xf8] sm:$0xff]
      %v239 = vld [vmem:[%s165 + $0x100] sm:$0xff]
      %v240 = vld [vmem:[%s165 + $0x108] sm:$0xff]
      %v241 = vld [vmem:[%s165 + $0x110] sm:$0xff]
      %v242 = vld [vmem:[%s165 + $0x118] sm:$0xff]
      %v243 = vld [vmem:[%s165 + $0x120] sm:$0xff]
      %v244 = vld [vmem:[%s165 + $0x128] sm:$0xff]
      %v245 = vld [vmem:[%s165 + $0x130] sm:$0xff]
      %v246 = vld [vmem:[%s165 + $0x138] sm:$0xff]
      %v247 = vld [vmem:[%s165 + $0x140] sm:$0xff]
      %v248 = vld [vmem:[%s165 + $0x148] sm:$0xff]
      %v249 = vld [vmem:[%s165 + $0x150] sm:$0xff]
      %v250 = vld [vmem:[%s165 + $0x158] sm:$0xff]
      %v251 = vld [vmem:[%s165 + $0x160] sm:$0xff]
      %v252 = vld [vmem:[%s165 + $0x168] sm:$0xff]
      %v253 = vld [vmem:[%s165 + $0x170] sm:$0xff]
      %v254 = vld [vmem:[%s165 + $0x178] sm:$0xff]
      %v255 = vld [vmem:[%s165 + $0x180] sm:$0xff]
      %v256 = vld [vmem:[%s165 + $0x188] sm:$0xff]
      %v257 = vld [vmem:[%s165 + $0x190] sm:$0xff]
      %v258 = vld [vmem:[%s165 + $0x198] sm:$0xff]
      %v259 = vld [vmem:[%s165 + $0x1a0] sm:$0xff]
      %v260 = vld [vmem:[%s165 + $0x1a8] sm:$0xff]
      %v261 = vld [vmem:[%s165 + $0x1b0] sm:$0xff]
      %v262 = vld [vmem:[%s165 + $0x1b8] sm:$0xff]
      %v263 = vld [vmem:[%s165 + $0x1c0] sm:$0xff]
      %v264 = vld [vmem:[%s165 + $0x1c8] sm:$0xff]
      %v265 = vld [vmem:[%s165 + $0x1d0] sm:$0xff]
      %v266 = vld [vmem:[%s165 + $0x1d8] sm:$0xff]
      %v267 = vld [vmem:[%s165 + $0x1e0] sm:$0xff]
      %v268 = vld [vmem:[%s165 + $0x1e8] sm:$0xff]
      %v269 = vld [vmem:[%s165 + $0x1f0] sm:$0xff]
      %v270 = vld [vmem:[%s165 + $0x1f8] sm:$0xff]
      %v271 = vld [vmem:[%s165 + $0x200] sm:$0xff]
      %v272 = vld [vmem:[%s165 + $0x208] sm:$0xff]
      %v273 = vld [vmem:[%s165 + $0x210] sm:$0xff]
      %v274 = vld [vmem:[%s165 + $0x218] sm:$0xff]
      %v275 = vld [vmem:[%s165 + $0x220] sm:$0xff]
      %v276 = vld [vmem:[%s165 + $0x228] sm:$0xff]
      %v277 = vld [vmem:[%s165 + $0x230] sm:$0xff]
      %v278 = vld [vmem:[%s165 + $0x238] sm:$0xff]
      %v279 = vld [vmem:[%s165 + $0x240] sm:$0xff]
      %v280 = vld [vmem:[%s165 + $0x248] sm:$0xff]
      %v281 = vld [vmem:[%s165 + $0x250] sm:$0xff]
      %v282 = vld [vmem:[%s165 + $0x258] sm:$0xff]
      %v283 = vld [vmem:[%s165 + $0x260] sm:$0xff]
      %v284 = vld [vmem:[%s165 + $0x268] sm:$0xff]
      %v285 = vld [vmem:[%s165 + $0x270] sm:$0xff]
      %v286 = vld [vmem:[%s165 + $0x278] sm:$0xff]
      %v287 = vld [vmem:[%s165 + $0x280] sm:$0xff]
      %v288 = vld [vmem:[%s165 + $0x288] sm:$0xff]
      %v289 = vld [vmem:[%s165 + $0x290] sm:$0xff]
      %v290 = vld [vmem:[%s165 + $0x298] sm:$0xff]
      %v291 = vld [vmem:[%s165 + $0x2a0] sm:$0xff]
      %v292 = vld [vmem:[%s165 + $0x2a8] sm:$0xff]
      %v293 = vld [vmem:[%s165 + $0x2b0] sm:$0xff]
      %v294 = vld [vmem:[%s165 + $0x2b8] sm:$0xff]
      %v295 = vld [vmem:[%s165 + $0x2c0] sm:$0xff]
      %v296 = vld [vmem:[%s165 + $0x2c8] sm:$0xff]
      %v297 = vld [vmem:[%s165 + $0x2d0] sm:$0xff]
      %v298 = vld [vmem:[%s165 + $0x2d8] sm:$0xff]
      %v299 = vld [vmem:[%s165 + $0x2e0] sm:$0xff]
      %v300 = vld [vmem:[%s165 + $0x2e8] sm:$0xff]
      %v301 = vld [vmem:[%s165 + $0x2f0] sm:$0xff]
      %v302 = vld [vmem:[%s165 + $0x2f8] sm:$0xff]
      %vm303 = vcmask 261120
      %v305 = vsel %vm303, %v209, 0
      %v308 = vsel %vm303, %v212, 0
      %v311 = vsel %vm303, %v215, 0
      %v314 = vsel %vm303, %v218, 0
      %v317 = vsel %vm303, %v221, 0
      %v320 = vsel %vm303, %v224, 0
      %v323 = vsel %vm303, %v227, 0
      %v326 = vsel %vm303, %v230, 0
      %v329 = vsel %vm303, %v233, 0
      %v332 = vsel %vm303, %v236, 0
      %v335 = vsel %vm303, %v239, 0
      %v338 = vsel %vm303, %v242, 0
      %v341 = vsel %vm303, %v245, 0
      %v344 = vsel %vm303, %v248, 0
      %v347 = vsel %vm303, %v251, 0
      %v350 = vsel %vm303, %v254, 0
      %v353 = vsel %vm303, %v257, 0
      %v356 = vsel %vm303, %v260, 0
      %v359 = vsel %vm303, %v263, 0
      %v362 = vsel %vm303, %v266, 0
      %v365 = vsel %vm303, %v269, 0
      %v368 = vsel %vm303, %v272, 0
      %v371 = vsel %vm303, %v275, 0
      %v374 = vsel %vm303, %v278, 0
      %v377 = vsel %vm303, %v281, 0
      %v380 = vsel %vm303, %v284, 0
      %v383 = vsel %vm303, %v287, 0
      %v386 = vsel %vm303, %v290, 0
      %v389 = vsel %vm303, %v293, 0
      %v392 = vsel %vm303, %v296, 0
      %v395 = vsel %vm303, %v299, 0
      %v398 = vsel %vm303, %v302, 0
      %400 = vmatprep.subr.mxu0 0.0
      %401 = vmatpush1.msra.mxu0 %v186
      %402 = vmatprep.subr.mxu0 0.0
      %403 = vmatpush1.msra.mxu0 %v185
      %404 = vmatprep.subr.mxu0 0.0
      %405 = vmatpush1.msra.mxu0 %v184
      %406 = vmatprep.subr.mxu0 0.0
      %407 = vmatpush1.msra.mxu0 %v183
      %408 = vmatprep.subr.mxu0 0.0
      %409 = vmatpush1.msra.mxu0 %v182
      %410 = vmatprep.subr.mxu0 0.0
      %411 = vmatpush1.msra.mxu0 %v181
      %412 = vmatprep.subr.mxu0 0.0
      %413 = vmatpush1.msra.mxu0 %v180
      %414 = vmatprep.subr.mxu0 0.0
      %415 = vmatpush1.msra.mxu0 %v179
      %416 = vmatprep.subr.mxu0 0.0
      %417 = vmatpush1.msra.mxu0 %v178
      %418 = vmatprep.subr.mxu0 0.0
      %419 = vmatpush1.msra.mxu0 %v177
      %420 = vmatprep.subr.mxu0 0.0
      %421 = vmatpush1.msra.mxu0 %v176
      %422 = vmatprep.subr.mxu0 0.0
      %423 = vmatpush1.msra.mxu0 %v175
      %424 = vmatprep.subr.mxu0 0.0
      %425 = vmatpush1.msra.mxu0 %v174
      %426 = vmatprep.subr.mxu0 0.0
      %427 = vmatpush1.msra.mxu0 %v173
      %428 = vmatprep.subr.mxu0 0.0
      %429 = vmatpush1.msra.mxu0 %v172
      %430 = vmatprep.subr.mxu0 0.0
      %431 = vmatpush1.msra.mxu0 %v171
      %432 = vmatprep.subr.mxu0 0.0
      %433 = vmatpush2.msra.mxu0 %v202
      %434 = vmatprep.subr.mxu0 0.0
      %435 = vmatpush2.msra.mxu0 %v201
      %436 = vmatprep.subr.mxu0 0.0
      %437 = vmatpush2.msra.mxu0 %v200
      %438 = vmatprep.subr.mxu0 0.0
      %439 = vmatpush2.msra.mxu0 %v199
      %440 = vmatprep.subr.mxu0 0.0
      %441 = vmatpush2.msra.mxu0 %v198
      %442 = vmatprep.subr.mxu0 0.0
      %443 = vmatpush2.msra.mxu0 %v197
      %444 = vmatprep.subr.mxu0 0.0
      %445 = vmatpush2.msra.mxu0 %v196
      %446 = vmatprep.subr.mxu0 0.0
      %447 = vmatpush2.msra.mxu0 %v195
      %448 = vmatprep.subr.mxu0 0.0
      %449 = vmatpush2.msra.mxu0 %v194
      %450 = vmatprep.subr.mxu0 0.0
      %451 = vmatpush2.msra.mxu0 %v193
      %452 = vmatprep.subr.mxu0 0.0
      %453 = vmatpush2.msra.mxu0 %v192
      %454 = vmatprep.subr.mxu0 0.0
      %455 = vmatpush2.msra.mxu0 %v191
      %456 = vmatprep.subr.mxu0 0.0
      %457 = vmatpush2.msra.mxu0 %v190
      %458 = vmatprep.subr.mxu0 0.0
      %459 = vmatpush2.msra.mxu0 %v189
      %460 = vmatprep.subr.mxu0 0.0
      %461 = vmatpush2.msra.mxu0 %v188
      %462 = vmatprep.subr.mxu0 0.0
      %463 = vmatpush2.msra.mxu0 %v187
      %464 = vmatprep.mubr.f32.mxu0 %v208
      %465 = vmatmul.mubr.f32.gmra.mxu0 %v207
      %v466 = vpop.f32.mrf.mxu0
      %v467 = vadd.f32 0.0, %v466
      %v468 = vpop.f32.mrf.mxu0
      %469 = vmatprep.mubr.f32.mxu0 %v211
      %470 = vmatmul.mubr.f32.gmra.mxu0 %v210
      %v471 = vpop.f32.mrf.mxu0
      %v472 = vadd.f32 0.0, %v471
      %v473 = vpop.f32.mrf.mxu0
      %474 = vmatprep.mubr.f32.mxu0 %v214
      %475 = vmatmul.mubr.f32.gmra.mxu0 %v213
      %v476 = vpop.f32.mrf.mxu0
      %v477 = vadd.f32 0.0, %v476
      %v478 = vpop.f32.mrf.mxu0
      %479 = vmatprep.mubr.f32.mxu0 %v217
      %480 = vmatmul.mubr.f32.gmra.mxu0 %v216
      %v481 = vpop.f32.mrf.mxu0
      %v482 = vadd.f32 0.0, %v481
      %v483 = vpop.f32.mrf.mxu0
      %484 = vmatprep.mubr.f32.mxu0 %v220
      %485 = vmatmul.mubr.f32.gmra.mxu0 %v219
      %v486 = vpop.f32.mrf.mxu0
      %v487 = vadd.f32 0.0, %v486
      %v488 = vpop.f32.mrf.mxu0
      %489 = vmatprep.mubr.f32.mxu0 %v223
      %490 = vmatmul.mubr.f32.gmra.mxu0 %v222
      %v491 = vpop.f32.mrf.mxu0
      %v492 = vadd.f32 0.0, %v491
      %v493 = vpop.f32.mrf.mxu0
      %494 = vmatprep.mubr.f32.mxu0 %v226
      %495 = vmatmul.mubr.f32.gmra.mxu0 %v225
      %v496 = vpop.f32.mrf.mxu0
      %v497 = vadd.f32 0.0, %v496
      %v498 = vpop.f32.mrf.mxu0
      %499 = vmatprep.mubr.f32.mxu0 %v229
      %500 = vmatmul.mubr.f32.gmra.mxu0 %v228
      %v501 = vpop.f32.mrf.mxu0
      %v502 = vadd.f32 0.0, %v501
      %v503 = vpop.f32.mrf.mxu0
      %504 = vmatprep.mubr.f32.mxu0 %v232
      %505 = vmatmul.mubr.f32.gmra.mxu0 %v231
      %v506 = vpop.f32.mrf.mxu0
      %v507 = vadd.f32 0.0, %v506
      %v508 = vpop.f32.mrf.mxu0
      %509 = vmatprep.mubr.f32.mxu0 %v235
      %510 = vmatmul.mubr.f32.gmra.mxu0 %v234
      %v511 = vpop.f32.mrf.mxu0
      %v512 = vadd.f32 0.0, %v511
      %v513 = vpop.f32.mrf.mxu0
      %514 = vmatprep.mubr.f32.mxu0 %v238
      %515 = vmatmul.mubr.f32.gmra.mxu0 %v237
      %v516 = vpop.f32.mrf.mxu0
      %v517 = vadd.f32 0.0, %v516
      %v518 = vpop.f32.mrf.mxu0
      %519 = vmatprep.mubr.f32.mxu0 %v241
      %520 = vmatmul.mubr.f32.gmra.mxu0 %v240
      %v521 = vpop.f32.mrf.mxu0
      %v522 = vadd.f32 0.0, %v521
      %v523 = vpop.f32.mrf.mxu0
      %524 = vmatprep.mubr.f32.mxu0 %v244
      %525 = vmatmul.mubr.f32.gmra.mxu0 %v243
      %v526 = vpop.f32.mrf.mxu0
      %v527 = vadd.f32 0.0, %v526
      %v528 = vpop.f32.mrf.mxu0
      %529 = vmatprep.mubr.f32.mxu0 %v247
      %530 = vmatmul.mubr.f32.gmra.mxu0 %v246
      %v531 = vpop.f32.mrf.mxu0
      %v532 = vadd.f32 0.0, %v531
      %v533 = vpop.f32.mrf.mxu0
      %534 = vmatprep.mubr.f32.mxu0 %v250
      %535 = vmatmul.mubr.f32.gmra.mxu0 %v249
      %v536 = vpop.f32.mrf.mxu0
      %v537 = vadd.f32 0.0, %v536
      %v538 = vpop.f32.mrf.mxu0
      %539 = vmatprep.mubr.f32.mxu0 %v253
      %540 = vmatmul.mubr.f32.gmra.mxu0 %v252
      %v541 = vpop.f32.mrf.mxu0
      %v542 = vadd.f32 0.0, %v541
      %v543 = vpop.f32.mrf.mxu0
      %544 = vmatprep.mubr.f32.mxu0 %v256
      %545 = vmatmul.mubr.f32.gmra.mxu0 %v255
      %v546 = vpop.f32.mrf.mxu0
      %v547 = vadd.f32 0.0, %v546
      %v548 = vpop.f32.mrf.mxu0
      %549 = vmatprep.mubr.f32.mxu0 %v259
      %550 = vmatmul.mubr.f32.gmra.mxu0 %v258
      %v551 = vpop.f32.mrf.mxu0
      %v552 = vadd.f32 0.0, %v551
      %v553 = vpop.f32.mrf.mxu0
      %554 = vmatprep.mubr.f32.mxu0 %v262
      %555 = vmatmul.mubr.f32.gmra.mxu0 %v261
      %v556 = vpop.f32.mrf.mxu0
      %v557 = vadd.f32 0.0, %v556
      %v558 = vpop.f32.mrf.mxu0
      %559 = vmatprep.mubr.f32.mxu0 %v265
      %560 = vmatmul.mubr.f32.gmra.mxu0 %v264
      %v561 = vpop.f32.mrf.mxu0
      %v562 = vadd.f32 0.0, %v561
      %v563 = vpop.f32.mrf.mxu0
      %564 = vmatprep.mubr.f32.mxu0 %v268
      %565 = vmatmul.mubr.f32.gmra.mxu0 %v267
      %v566 = vpop.f32.mrf.mxu0
      %v567 = vadd.f32 0.0, %v566
      %v568 = vpop.f32.mrf.mxu0
      %569 = vmatprep.mubr.f32.mxu0 %v271
      %570 = vmatmul.mubr.f32.gmra.mxu0 %v270
      %v571 = vpop.f32.mrf.mxu0
      %v572 = vadd.f32 0.0, %v571
      %v573 = vpop.f32.mrf.mxu0
      %574 = vmatprep.mubr.f32.mxu0 %v274
      %575 = vmatmul.mubr.f32.gmra.mxu0 %v273
      %v576 = vpop.f32.mrf.mxu0
      %v577 = vadd.f32 0.0, %v576
      %v578 = vpop.f32.mrf.mxu0
      %579 = vmatprep.mubr.f32.mxu0 %v277
      %580 = vmatmul.mubr.f32.gmra.mxu0 %v276
      %v581 = vpop.f32.mrf.mxu0
      %v582 = vadd.f32 0.0, %v581
      %v583 = vpop.f32.mrf.mxu0
      %584 = vmatprep.mubr.f32.mxu0 %v280
      %585 = vmatmul.mubr.f32.gmra.mxu0 %v279
      %v586 = vpop.f32.mrf.mxu0
      %v587 = vadd.f32 0.0, %v586
      %v588 = vpop.f32.mrf.mxu0
      %589 = vmatprep.mubr.f32.mxu0 %v283
      %590 = vmatmul.mubr.f32.gmra.mxu0 %v282
      %v591 = vpop.f32.mrf.mxu0
      %v592 = vadd.f32 0.0, %v591
      %v593 = vpop.f32.mrf.mxu0
      %594 = vmatprep.mubr.f32.mxu0 %v286
      %595 = vmatmul.mubr.f32.gmra.mxu0 %v285
      %v596 = vpop.f32.mrf.mxu0
      %v597 = vadd.f32 0.0, %v596
      %v598 = vpop.f32.mrf.mxu0
      %599 = vmatprep.mubr.f32.mxu0 %v289
      %600 = vmatmul.mubr.f32.gmra.mxu0 %v288
      %v601 = vpop.f32.mrf.mxu0
      %v602 = vadd.f32 0.0, %v601
      %v603 = vpop.f32.mrf.mxu0
      %604 = vmatprep.mubr.f32.mxu0 %v292
      %605 = vmatmul.mubr.f32.gmra.mxu0 %v291
      %v606 = vpop.f32.mrf.mxu0
      %v607 = vadd.f32 0.0, %v606
      %v608 = vpop.f32.mrf.mxu0
      %609 = vmatprep.mubr.f32.mxu0 %v295
      %610 = vmatmul.mubr.f32.gmra.mxu0 %v294
      %v611 = vpop.f32.mrf.mxu0
      %v612 = vadd.f32 0.0, %v611
      %v613 = vpop.f32.mrf.mxu0
      %614 = vmatprep.mubr.f32.mxu0 %v298
      %615 = vmatmul.mubr.f32.gmra.mxu0 %v297
      %v616 = vpop.f32.mrf.mxu0
      %v617 = vadd.f32 0.0, %v616
      %v618 = vpop.f32.mrf.mxu0
      %619 = vmatprep.mubr.f32.mxu0 %v301
      %620 = vmatmul.mubr.f32.gmra.mxu0 %v300
      %v621 = vpop.f32.mrf.mxu0
      %v622 = vadd.f32 0.0, %v621
      %v623 = vpop.f32.mrf.mxu0
      %624 = vdwg.mxu0
      %625 = vmatprep.subr.mxu0 0.0
      %626 = vmatpush1.msra.mxu0 0.0
      %627 = vmatprep.subr.mxu0 0.0
      %628 = vmatpush1.msra.mxu0 0.0
      %629 = vmatprep.subr.mxu0 0.0
      %630 = vmatpush1.msra.mxu0 0.0
      %631 = vmatprep.subr.mxu0 0.0
      %632 = vmatpush1.msra.mxu0 0.0
      %633 = vmatprep.subr.mxu0 0.0
      %634 = vmatpush1.msra.mxu0 0.0
      %635 = vmatprep.subr.mxu0 0.0
      %636 = vmatpush1.msra.mxu0 0.0
      %637 = vmatprep.subr.mxu0 0.0
      %638 = vmatpush1.msra.mxu0 0.0
      %639 = vmatprep.subr.mxu0 0.0
      %640 = vmatpush1.msra.mxu0 0.0
      %641 = vmatprep.subr.mxu0 0.0
      %642 = vmatpush1.msra.mxu0 0.0
      %643 = vmatprep.subr.mxu0 0.0
      %644 = vmatpush1.msra.mxu0 0.0
      %645 = vmatprep.subr.mxu0 0.0
      %646 = vmatpush1.msra.mxu0 0.0
      %647 = vmatprep.subr.mxu0 0.0
      %648 = vmatpush1.msra.mxu0 0.0
      %649 = vmatprep.subr.mxu0 0.0
      %650 = vmatpush1.msra.mxu0 %v206
      %651 = vmatprep.subr.mxu0 0.0
      %652 = vmatpush1.msra.mxu0 %v205
      %653 = vmatprep.subr.mxu0 0.0
      %654 = vmatpush1.msra.mxu0 %v204
      %655 = vmatprep.subr.mxu0 0.0
      %656 = vmatpush1.msra.mxu0 %v203
      %657 = vmatprep.subr.mxu0 0.0
      %658 = vmatpush2.msra.mxu0 0.0
      %659 = vmatprep.subr.mxu0 0.0
      %660 = vmatpush2.msra.mxu0 0.0
      %661 = vmatprep.subr.mxu0 0.0
      %662 = vmatpush2.msra.mxu0 0.0
      %663 = vmatprep.subr.mxu0 0.0
      %664 = vmatpush2.msra.mxu0 0.0
      %665 = vmatprep.subr.mxu0 0.0
      %666 = vmatpush2.msra.mxu0 0.0
      %667 = vmatprep.subr.mxu0 0.0
      %668 = vmatpush2.msra.mxu0 0.0
      %669 = vmatprep.subr.mxu0 0.0
      %670 = vmatpush2.msra.mxu0 0.0
      %671 = vmatprep.subr.mxu0 0.0
      %672 = vmatpush2.msra.mxu0 0.0
      %673 = vmatprep.subr.mxu0 0.0
      %674 = vmatpush2.msra.mxu0 0.0
      %675 = vmatprep.subr.mxu0 0.0
      %676 = vmatpush2.msra.mxu0 0.0
      %677 = vmatprep.subr.mxu0 0.0
      %678 = vmatpush2.msra.mxu0 0.0
      %679 = vmatprep.subr.mxu0 0.0
      %680 = vmatpush2.msra.mxu0 0.0
      %681 = vmatprep.subr.mxu0 0.0
      %682 = vmatpush2.msra.mxu0 0.0
      %683 = vmatprep.subr.mxu0 0.0
      %684 = vmatpush2.msra.mxu0 0.0
      %685 = vmatprep.subr.mxu0 0.0
      %686 = vmatpush2.msra.mxu0 0.0
      %687 = vmatprep.subr.mxu0 0.0
      %688 = vmatpush2.msra.mxu0 0.0
      %689 = vmatprep.mubr.f32.mxu0 0.0
      %690 = vmatmul.mubr.f32.gmra.mxu0 %v305
      %v691 = vpop.f32.mrf.mxu0
      %v692 = vadd.f32 %v467, %v691
      %v693 = vpop.f32.mrf.mxu0
      %694 = vmatprep.mubr.f32.mxu0 0.0
      %695 = vmatmul.mubr.f32.gmra.mxu0 %v308
      %v696 = vpop.f32.mrf.mxu0
      %v697 = vadd.f32 %v472, %v696
      %v698 = vpop.f32.mrf.mxu0
      %699 = vmatprep.mubr.f32.mxu0 0.0
      %700 = vmatmul.mubr.f32.gmra.mxu0 %v311
      %v701 = vpop.f32.mrf.mxu0
      %v702 = vadd.f32 %v477, %v701
      %v703 = vpop.f32.mrf.mxu0
      %704 = vmatprep.mubr.f32.mxu0 0.0
      %705 = vmatmul.mubr.f32.gmra.mxu0 %v314
      %v706 = vpop.f32.mrf.mxu0
      %v707 = vadd.f32 %v482, %v706
      %v708 = vpop.f32.mrf.mxu0
      %709 = vmatprep.mubr.f32.mxu0 0.0
      %710 = vmatmul.mubr.f32.gmra.mxu0 %v317
      %v711 = vpop.f32.mrf.mxu0
      %v712 = vadd.f32 %v487, %v711
      %v713 = vpop.f32.mrf.mxu0
      %714 = vmatprep.mubr.f32.mxu0 0.0
      %715 = vmatmul.mubr.f32.gmra.mxu0 %v320
      %v716 = vpop.f32.mrf.mxu0
      %v717 = vadd.f32 %v492, %v716
      %v718 = vpop.f32.mrf.mxu0
      %719 = vmatprep.mubr.f32.mxu0 0.0
      %720 = vmatmul.mubr.f32.gmra.mxu0 %v323
      %v721 = vpop.f32.mrf.mxu0
      %v722 = vadd.f32 %v497, %v721
      %v723 = vpop.f32.mrf.mxu0
      %724 = vmatprep.mubr.f32.mxu0 0.0
      %725 = vmatmul.mubr.f32.gmra.mxu0 %v326
      %v726 = vpop.f32.mrf.mxu0
      %v727 = vadd.f32 %v502, %v726
      %v728 = vpop.f32.mrf.mxu0
      %729 = vmatprep.mubr.f32.mxu0 0.0
      %730 = vmatmul.mubr.f32.gmra.mxu0 %v329
      %v731 = vpop.f32.mrf.mxu0
      %v732 = vadd.f32 %v507, %v731
      %v733 = vpop.f32.mrf.mxu0
      %734 = vmatprep.mubr.f32.mxu0 0.0
      %735 = vmatmul.mubr.f32.gmra.mxu0 %v332
      %v736 = vpop.f32.mrf.mxu0
      %v737 = vadd.f32 %v512, %v736
      %v738 = vpop.f32.mrf.mxu0
      %739 = vmatprep.mubr.f32.mxu0 0.0
      %740 = vmatmul.mubr.f32.gmra.mxu0 %v335
      %v741 = vpop.f32.mrf.mxu0
      %v742 = vadd.f32 %v517, %v741
      %v743 = vpop.f32.mrf.mxu0
      %744 = vmatprep.mubr.f32.mxu0 0.0
      %745 = vmatmul.mubr.f32.gmra.mxu0 %v338
      %v746 = vpop.f32.mrf.mxu0
      %v747 = vadd.f32 %v522, %v746
      %v748 = vpop.f32.mrf.mxu0
      %749 = vmatprep.mubr.f32.mxu0 0.0
      %750 = vmatmul.mubr.f32.gmra.mxu0 %v341
      %v751 = vpop.f32.mrf.mxu0
      %v752 = vadd.f32 %v527, %v751
      %v753 = vpop.f32.mrf.mxu0
      %754 = vmatprep.mubr.f32.mxu0 0.0
      %755 = vmatmul.mubr.f32.gmra.mxu0 %v344
      %v756 = vpop.f32.mrf.mxu0
      %v757 = vadd.f32 %v532, %v756
      %v758 = vpop.f32.mrf.mxu0
      %759 = vmatprep.mubr.f32.mxu0 0.0
      %760 = vmatmul.mubr.f32.gmra.mxu0 %v347
      %v761 = vpop.f32.mrf.mxu0
      %v762 = vadd.f32 %v537, %v761
      %v763 = vpop.f32.mrf.mxu0
      %764 = vmatprep.mubr.f32.mxu0 0.0
      %765 = vmatmul.mubr.f32.gmra.mxu0 %v350
      %v766 = vpop.f32.mrf.mxu0
      %v767 = vadd.f32 %v542, %v766
      %v768 = vpop.f32.mrf.mxu0
      %769 = vmatprep.mubr.f32.mxu0 0.0
      %770 = vmatmul.mubr.f32.gmra.mxu0 %v353
      %v771 = vpop.f32.mrf.mxu0
      %v772 = vadd.f32 %v547, %v771
      %v773 = vpop.f32.mrf.mxu0
      %774 = vmatprep.mubr.f32.mxu0 0.0
      %775 = vmatmul.mubr.f32.gmra.mxu0 %v356
      %v776 = vpop.f32.mrf.mxu0
      %v777 = vadd.f32 %v552, %v776
      %v778 = vpop.f32.mrf.mxu0
      %779 = vmatprep.mubr.f32.mxu0 0.0
      %780 = vmatmul.mubr.f32.gmra.mxu0 %v359
      %v781 = vpop.f32.mrf.mxu0
      %v782 = vadd.f32 %v557, %v781
      %v783 = vpop.f32.mrf.mxu0
      %784 = vmatprep.mubr.f32.mxu0 0.0
      %785 = vmatmul.mubr.f32.gmra.mxu0 %v362
      %v786 = vpop.f32.mrf.mxu0
      %v787 = vadd.f32 %v562, %v786
      %v788 = vpop.f32.mrf.mxu0
      %789 = vmatprep.mubr.f32.mxu0 0.0
      %790 = vmatmul.mubr.f32.gmra.mxu0 %v365
      %v791 = vpop.f32.mrf.mxu0
      %v792 = vadd.f32 %v567, %v791
      %v793 = vpop.f32.mrf.mxu0
      %794 = vmatprep.mubr.f32.mxu0 0.0
      %795 = vmatmul.mubr.f32.gmra.mxu0 %v368
      %v796 = vpop.f32.mrf.mxu0
      %v797 = vadd.f32 %v572, %v796
      %v798 = vpop.f32.mrf.mxu0
      %799 = vmatprep.mubr.f32.mxu0 0.0
      %800 = vmatmul.mubr.f32.gmra.mxu0 %v371
      %v801 = vpop.f32.mrf.mxu0
      %v802 = vadd.f32 %v577, %v801
      %v803 = vpop.f32.mrf.mxu0
      %804 = vmatprep.mubr.f32.mxu0 0.0
      %805 = vmatmul.mubr.f32.gmra.mxu0 %v374
      %v806 = vpop.f32.mrf.mxu0
      %v807 = vadd.f32 %v582, %v806
      %v808 = vpop.f32.mrf.mxu0
      %809 = vmatprep.mubr.f32.mxu0 0.0
      %810 = vmatmul.mubr.f32.gmra.mxu0 %v377
      %v811 = vpop.f32.mrf.mxu0
      %v812 = vadd.f32 %v587, %v811
      %v813 = vpop.f32.mrf.mxu0
      %814 = vmatprep.mubr.f32.mxu0 0.0
      %815 = vmatmul.mubr.f32.gmra.mxu0 %v380
      %v816 = vpop.f32.mrf.mxu0
      %v817 = vadd.f32 %v592, %v816
      %v818 = vpop.f32.mrf.mxu0
      %819 = vmatprep.mubr.f32.mxu0 0.0
      %820 = vmatmul.mubr.f32.gmra.mxu0 %v383
      %v821 = vpop.f32.mrf.mxu0
      %v822 = vadd.f32 %v597, %v821
      %v823 = vpop.f32.mrf.mxu0
      %824 = vmatprep.mubr.f32.mxu0 0.0
      %825 = vmatmul.mubr.f32.gmra.mxu0 %v386
      %v826 = vpop.f32.mrf.mxu0
      %v827 = vadd.f32 %v602, %v826
      %v828 = vpop.f32.mrf.mxu0
      %829 = vmatprep.mubr.f32.mxu0 0.0
      %830 = vmatmul.mubr.f32.gmra.mxu0 %v389
      %v831 = vpop.f32.mrf.mxu0
      %v832 = vadd.f32 %v607, %v831
      %v833 = vpop.f32.mrf.mxu0
      %834 = vmatprep.mubr.f32.mxu0 0.0
      %835 = vmatmul.mubr.f32.gmra.mxu0 %v392
      %v836 = vpop.f32.mrf.mxu0
      %v837 = vadd.f32 %v612, %v836
      %v838 = vpop.f32.mrf.mxu0
      %839 = vmatprep.mubr.f32.mxu0 0.0
      %840 = vmatmul.mubr.f32.gmra.mxu0 %v395
      %v841 = vpop.f32.mrf.mxu0
      %v842 = vadd.f32 %v617, %v841
      %v843 = vpop.f32.mrf.mxu0
      %844 = vmatprep.mubr.f32.mxu0 0.0
      %845 = vmatmul.mubr.f32.gmra.mxu0 %v398
      %v846 = vpop.f32.mrf.mxu0
      %v847 = vadd.f32 %v622, %v846
      %v848 = vpop.f32.mrf.mxu0
      %849 = vdwg.mxu0
      %s850 = scalar_lea.vmem %s165, 768
      %v851 = vld [vmem:[%s850] sm:$0xff]
      %v852 = vld [vmem:[%s850 + $0x8] sm:$0xff]
      %v853 = vld [vmem:[%s850 + $0x10] sm:$0xff]
      %v854 = vld [vmem:[%s850 + $0x18] sm:$0xff]
      %v855 = vld [vmem:[%s850 + $0x20] sm:$0xff]
      %v856 = vld [vmem:[%s850 + $0x28] sm:$0xff]
      %v857 = vld [vmem:[%s850 + $0x30] sm:$0xff]
      %v858 = vld [vmem:[%s850 + $0x38] sm:$0xff]
      %v859 = vld [vmem:[%s850 + $0x40] sm:$0xff]
      %v860 = vld [vmem:[%s850 + $0x48] sm:$0xff]
      %v861 = vld [vmem:[%s850 + $0x50] sm:$0xff]
      %v862 = vld [vmem:[%s850 + $0x58] sm:$0xff]
      %v863 = vld [vmem:[%s850 + $0x60] sm:$0xff]
      %v864 = vld [vmem:[%s850 + $0x68] sm:$0xff]
      %v865 = vld [vmem:[%s850 + $0x70] sm:$0xff]
      %v866 = vld [vmem:[%s850 + $0x78] sm:$0xff]
      %v867 = vld [vmem:[%s850 + $0x80] sm:$0xff]
      %v868 = vld [vmem:[%s850 + $0x88] sm:$0xff]
      %v869 = vld [vmem:[%s850 + $0x90] sm:$0xff]
      %v870 = vld [vmem:[%s850 + $0x98] sm:$0xff]
      %v871 = vld [vmem:[%s850 + $0xa0] sm:$0xff]
      %v872 = vld [vmem:[%s850 + $0xa8] sm:$0xff]
      %v873 = vld [vmem:[%s850 + $0xb0] sm:$0xff]
      %v874 = vld [vmem:[%s850 + $0xb8] sm:$0xff]
      %v875 = vld [vmem:[%s850 + $0xc0] sm:$0xff]
      %v876 = vld [vmem:[%s850 + $0xc8] sm:$0xff]
      %v877 = vld [vmem:[%s850 + $0xd0] sm:$0xff]
      %v878 = vld [vmem:[%s850 + $0xd8] sm:$0xff]
      %v879 = vld [vmem:[%s850 + $0xe0] sm:$0xff]
      %v880 = vld [vmem:[%s850 + $0xe8] sm:$0xff]
      %v881 = vld [vmem:[%s850 + $0xf0] sm:$0xff]
      %v882 = vld [vmem:[%s850 + $0xf8] sm:$0xff]
      %v883 = vld [vmem:[%s850 + $0x100] sm:$0xff]
      %v884 = vld [vmem:[%s850 + $0x108] sm:$0xff]
      %v885 = vld [vmem:[%s850 + $0x110] sm:$0xff]
      %v886 = vld [vmem:[%s850 + $0x118] sm:$0xff]
      %v887 = vld [vmem:[%s850 + $0x120] sm:$0xff]
      %v888 = vld [vmem:[%s850 + $0x128] sm:$0xff]
      %v889 = vld [vmem:[%s850 + $0x130] sm:$0xff]
      %v890 = vld [vmem:[%s850 + $0x138] sm:$0xff]
      %v891 = vld [vmem:[%s850 + $0x140] sm:$0xff]
      %v892 = vld [vmem:[%s850 + $0x148] sm:$0xff]
      %v893 = vld [vmem:[%s850 + $0x150] sm:$0xff]
      %v894 = vld [vmem:[%s850 + $0x158] sm:$0xff]
      %v895 = vld [vmem:[%s850 + $0x160] sm:$0xff]
      %v896 = vld [vmem:[%s850 + $0x168] sm:$0xff]
      %v897 = vld [vmem:[%s850 + $0x170] sm:$0xff]
      %v898 = vld [vmem:[%s850 + $0x178] sm:$0xff]
      %v899 = vld [vmem:[%s850 + $0x180] sm:$0xff]
      %v900 = vld [vmem:[%s850 + $0x188] sm:$0xff]
      %v901 = vld [vmem:[%s850 + $0x190] sm:$0xff]
      %v902 = vld [vmem:[%s850 + $0x198] sm:$0xff]
      %v903 = vld [vmem:[%s850 + $0x1a0] sm:$0xff]
      %v904 = vld [vmem:[%s850 + $0x1a8] sm:$0xff]
      %v905 = vld [vmem:[%s850 + $0x1b0] sm:$0xff]
      %v906 = vld [vmem:[%s850 + $0x1b8] sm:$0xff]
      %v907 = vld [vmem:[%s850 + $0x1c0] sm:$0xff]
      %v908 = vld [vmem:[%s850 + $0x1c8] sm:$0xff]
      %v909 = vld [vmem:[%s850 + $0x1d0] sm:$0xff]
      %v910 = vld [vmem:[%s850 + $0x1d8] sm:$0xff]
      %v911 = vld [vmem:[%s850 + $0x1e0] sm:$0xff]
      %v912 = vld [vmem:[%s850 + $0x1e8] sm:$0xff]
      %v913 = vld [vmem:[%s850 + $0x1f0] sm:$0xff]
      %v914 = vld [vmem:[%s850 + $0x1f8] sm:$0xff]
      %v915 = vld [vmem:[%s850 + $0x200] sm:$0xff]
      %v916 = vld [vmem:[%s850 + $0x208] sm:$0xff]
      %v917 = vld [vmem:[%s850 + $0x210] sm:$0xff]
      %v918 = vld [vmem:[%s850 + $0x218] sm:$0xff]
      %v919 = vld [vmem:[%s850 + $0x220] sm:$0xff]
      %v920 = vld [vmem:[%s850 + $0x228] sm:$0xff]
      %v921 = vld [vmem:[%s850 + $0x230] sm:$0xff]
      %v922 = vld [vmem:[%s850 + $0x238] sm:$0xff]
      %v923 = vld [vmem:[%s850 + $0x240] sm:$0xff]
      %v924 = vld [vmem:[%s850 + $0x248] sm:$0xff]
      %v925 = vld [vmem:[%s850 + $0x250] sm:$0xff]
      %v926 = vld [vmem:[%s850 + $0x258] sm:$0xff]
      %v927 = vld [vmem:[%s850 + $0x260] sm:$0xff]
      %v928 = vld [vmem:[%s850 + $0x268] sm:$0xff]
      %v929 = vld [vmem:[%s850 + $0x270] sm:$0xff]
      %v930 = vld [vmem:[%s850 + $0x278] sm:$0xff]
      %v931 = vld [vmem:[%s850 + $0x280] sm:$0xff]
      %v932 = vld [vmem:[%s850 + $0x288] sm:$0xff]
      %v933 = vld [vmem:[%s850 + $0x290] sm:$0xff]
      %v934 = vld [vmem:[%s850 + $0x298] sm:$0xff]
      %v935 = vld [vmem:[%s850 + $0x2a0] sm:$0xff]
      %v936 = vld [vmem:[%s850 + $0x2a8] sm:$0xff]
      %v937 = vld [vmem:[%s850 + $0x2b0] sm:$0xff]
      %v938 = vld [vmem:[%s850 + $0x2b8] sm:$0xff]
      %v939 = vld [vmem:[%s850 + $0x2c0] sm:$0xff]
      %v940 = vld [vmem:[%s850 + $0x2c8] sm:$0xff]
      %v941 = vld [vmem:[%s850 + $0x2d0] sm:$0xff]
      %v942 = vld [vmem:[%s850 + $0x2d8] sm:$0xff]
      %v943 = vld [vmem:[%s850 + $0x2e0] sm:$0xff]
      %v944 = vld [vmem:[%s850 + $0x2e8] sm:$0xff]
      %v945 = vld [vmem:[%s850 + $0x2f0] sm:$0xff]
      %v946 = vld [vmem:[%s850 + $0x2f8] sm:$0xff]
      %v948 = vsel %vm303, %v853, 0
      %v951 = vsel %vm303, %v856, 0
      %v954 = vsel %vm303, %v859, 0
      %v957 = vsel %vm303, %v862, 0
      %v960 = vsel %vm303, %v865, 0
      %v963 = vsel %vm303, %v868, 0
      %v966 = vsel %vm303, %v871, 0
      %v969 = vsel %vm303, %v874, 0
      %v972 = vsel %vm303, %v877, 0
      %v975 = vsel %vm303, %v880, 0
      %v978 = vsel %vm303, %v883, 0
      %v981 = vsel %vm303, %v886, 0
      %v984 = vsel %vm303, %v889, 0
      %v987 = vsel %vm303, %v892, 0
      %v990 = vsel %vm303, %v895, 0
      %v993 = vsel %vm303, %v898, 0
      %v996 = vsel %vm303, %v901, 0
      %v999 = vsel %vm303, %v904, 0
      %v1002 = vsel %vm303, %v907, 0
      %v1005 = vsel %vm303, %v910, 0
      %v1008 = vsel %vm303, %v913, 0
      %v1011 = vsel %vm303, %v916, 0
      %v1014 = vsel %vm303, %v919, 0
      %v1017 = vsel %vm303, %v922, 0
      %v1020 = vsel %vm303, %v925, 0
      %v1023 = vsel %vm303, %v928, 0
      %v1026 = vsel %vm303, %v931, 0
      %v1029 = vsel %vm303, %v934, 0
      %v1032 = vsel %vm303, %v937, 0
      %v1035 = vsel %vm303, %v940, 0
      %v1038 = vsel %vm303, %v943, 0
      %v1041 = vsel %vm303, %v946, 0
      %1043 = vmatprep.subr.mxu0 0.0
      %1044 = vmatpush1.msra.mxu0 %v186
      %1045 = vmatprep.subr.mxu0 0.0
      %1046 = vmatpush1.msra.mxu0 %v185
      %1047 = vmatprep.subr.mxu0 0.0
      %1048 = vmatpush1.msra.mxu0 %v184
      %1049 = vmatprep.subr.mxu0 0.0
      %1050 = vmatpush1.msra.mxu0 %v183
      %1051 = vmatprep.subr.mxu0 0.0
      %1052 = vmatpush1.msra.mxu0 %v182
      %1053 = vmatprep.subr.mxu0 0.0
      %1054 = vmatpush1.msra.mxu0 %v181
      %1055 = vmatprep.subr.mxu0 0.0
      %1056 = vmatpush1.msra.mxu0 %v180
      %1057 = vmatprep.subr.mxu0 0.0
      %1058 = vmatpush1.msra.mxu0 %v179
      %1059 = vmatprep.subr.mxu0 0.0
      %1060 = vmatpush1.msra.mxu0 %v178
      %1061 = vmatprep.subr.mxu0 0.0
      %1062 = vmatpush1.msra.mxu0 %v177
      %1063 = vmatprep.subr.mxu0 0.0
      %1064 = vmatpush1.msra.mxu0 %v176
      %1065 = vmatprep.subr.mxu0 0.0
      %1066 = vmatpush1.msra.mxu0 %v175
      %1067 = vmatprep.subr.mxu0 0.0
      %1068 = vmatpush1.msra.mxu0 %v174
      %1069 = vmatprep.subr.mxu0 0.0
      %1070 = vmatpush1.msra.mxu0 %v173
      %1071 = vmatprep.subr.mxu0 0.0
      %1072 = vmatpush1.msra.mxu0 %v172
      %1073 = vmatprep.subr.mxu0 0.0
      %1074 = vmatpush1.msra.mxu0 %v171
      %1075 = vmatprep.subr.mxu0 0.0
      %1076 = vmatpush2.msra.mxu0 %v202
      %1077 = vmatprep.subr.mxu0 0.0
      %1078 = vmatpush2.msra.mxu0 %v201
      %1079 = vmatprep.subr.mxu0 0.0
      %1080 = vmatpush2.msra.mxu0 %v200
      %1081 = vmatprep.subr.mxu0 0.0
      %1082 = vmatpush2.msra.mxu0 %v199
      %1083 = vmatprep.subr.mxu0 0.0
      %1084 = vmatpush2.msra.mxu0 %v198
      %1085 = vmatprep.subr.mxu0 0.0
      %1086 = vmatpush2.msra.mxu0 %v197
      %1087 = vmatprep.subr.mxu0 0.0
      %1088 = vmatpush2.msra.mxu0 %v196
      %1089 = vmatprep.subr.mxu0 0.0
      %1090 = vmatpush2.msra.mxu0 %v195
      %1091 = vmatprep.subr.mxu0 0.0
      %1092 = vmatpush2.msra.mxu0 %v194
      %1093 = vmatprep.subr.mxu0 0.0
      %1094 = vmatpush2.msra.mxu0 %v193
      %1095 = vmatprep.subr.mxu0 0.0
      %1096 = vmatpush2.msra.mxu0 %v192
      %1097 = vmatprep.subr.mxu0 0.0
      %1098 = vmatpush2.msra.mxu0 %v191
      %1099 = vmatprep.subr.mxu0 0.0
      %1100 = vmatpush2.msra.mxu0 %v190
      %1101 = vmatprep.subr.mxu0 0.0
      %1102 = vmatpush2.msra.mxu0 %v189
      %1103 = vmatprep.subr.mxu0 0.0
      %1104 = vmatpush2.msra.mxu0 %v188
      %1105 = vmatprep.subr.mxu0 0.0
      %1106 = vmatpush2.msra.mxu0 %v187
      %1107 = vmatprep.mubr.f32.mxu0 %v852
      %1108 = vmatmul.mubr.f32.gmra.mxu0 %v851
      %v1109 = vpop.f32.mrf.mxu0
      %v1110 = vadd.f32 0.0, %v1109
      %v1111 = vpop.f32.mrf.mxu0
      %1112 = vmatprep.mubr.f32.mxu0 %v855
      %1113 = vmatmul.mubr.f32.gmra.mxu0 %v854
      %v1114 = vpop.f32.mrf.mxu0
      %v1115 = vadd.f32 0.0, %v1114
      %v1116 = vpop.f32.mrf.mxu0
      %1117 = vmatprep.mubr.f32.mxu0 %v858
      %1118 = vmatmul.mubr.f32.gmra.mxu0 %v857
      %v1119 = vpop.f32.mrf.mxu0
      %v1120 = vadd.f32 0.0, %v1119
      %v1121 = vpop.f32.mrf.mxu0
      %1122 = vmatprep.mubr.f32.mxu0 %v861
      %1123 = vmatmul.mubr.f32.gmra.mxu0 %v860
      %v1124 = vpop.f32.mrf.mxu0
      %v1125 = vadd.f32 0.0, %v1124
      %v1126 = vpop.f32.mrf.mxu0
      %1127 = vmatprep.mubr.f32.mxu0 %v864
      %1128 = vmatmul.mubr.f32.gmra.mxu0 %v863
      %v1129 = vpop.f32.mrf.mxu0
      %v1130 = vadd.f32 0.0, %v1129
      %v1131 = vpop.f32.mrf.mxu0
      %1132 = vmatprep.mubr.f32.mxu0 %v867
      %1133 = vmatmul.mubr.f32.gmra.mxu0 %v866
      %v1134 = vpop.f32.mrf.mxu0
      %v1135 = vadd.f32 0.0, %v1134
      %v1136 = vpop.f32.mrf.mxu0
      %1137 = vmatprep.mubr.f32.mxu0 %v870
      %1138 = vmatmul.mubr.f32.gmra.mxu0 %v869
      %v1139 = vpop.f32.mrf.mxu0
      %v1140 = vadd.f32 0.0, %v1139
      %v1141 = vpop.f32.mrf.mxu0
      %1142 = vmatprep.mubr.f32.mxu0 %v873
      %1143 = vmatmul.mubr.f32.gmra.mxu0 %v872
      %v1144 = vpop.f32.mrf.mxu0
      %v1145 = vadd.f32 0.0, %v1144
      %v1146 = vpop.f32.mrf.mxu0
      %1147 = vmatprep.mubr.f32.mxu0 %v876
      %1148 = vmatmul.mubr.f32.gmra.mxu0 %v875
      %v1149 = vpop.f32.mrf.mxu0
      %v1150 = vadd.f32 0.0, %v1149
      %v1151 = vpop.f32.mrf.mxu0
      %1152 = vmatprep.mubr.f32.mxu0 %v879
      %1153 = vmatmul.mubr.f32.gmra.mxu0 %v878
      %v1154 = vpop.f32.mrf.mxu0
      %v1155 = vadd.f32 0.0, %v1154
      %v1156 = vpop.f32.mrf.mxu0
      %1157 = vmatprep.mubr.f32.mxu0 %v882
      %1158 = vmatmul.mubr.f32.gmra.mxu0 %v881
      %v1159 = vpop.f32.mrf.mxu0
      %v1160 = vadd.f32 0.0, %v1159
      %v1161 = vpop.f32.mrf.mxu0
      %1162 = vmatprep.mubr.f32.mxu0 %v885
      %1163 = vmatmul.mubr.f32.gmra.mxu0 %v884
      %v1164 = vpop.f32.mrf.mxu0
      %v1165 = vadd.f32 0.0, %v1164
      %v1166 = vpop.f32.mrf.mxu0
      %1167 = vmatprep.mubr.f32.mxu0 %v888
      %1168 = vmatmul.mubr.f32.gmra.mxu0 %v887
      %v1169 = vpop.f32.mrf.mxu0
      %v1170 = vadd.f32 0.0, %v1169
      %v1171 = vpop.f32.mrf.mxu0
      %1172 = vmatprep.mubr.f32.mxu0 %v891
      %1173 = vmatmul.mubr.f32.gmra.mxu0 %v890
      %v1174 = vpop.f32.mrf.mxu0
      %v1175 = vadd.f32 0.0, %v1174
      %v1176 = vpop.f32.mrf.mxu0
      %1177 = vmatprep.mubr.f32.mxu0 %v894
      %1178 = vmatmul.mubr.f32.gmra.mxu0 %v893
      %v1179 = vpop.f32.mrf.mxu0
      %v1180 = vadd.f32 0.0, %v1179
      %v1181 = vpop.f32.mrf.mxu0
      %1182 = vmatprep.mubr.f32.mxu0 %v897
      %1183 = vmatmul.mubr.f32.gmra.mxu0 %v896
      %v1184 = vpop.f32.mrf.mxu0
      %v1185 = vadd.f32 0.0, %v1184
      %v1186 = vpop.f32.mrf.mxu0
      %1187 = vmatprep.mubr.f32.mxu0 %v900
      %1188 = vmatmul.mubr.f32.gmra.mxu0 %v899
      %v1189 = vpop.f32.mrf.mxu0
      %v1190 = vadd.f32 0.0, %v1189
      %v1191 = vpop.f32.mrf.mxu0
      %1192 = vmatprep.mubr.f32.mxu0 %v903
      %1193 = vmatmul.mubr.f32.gmra.mxu0 %v902
      %v1194 = vpop.f32.mrf.mxu0
      %v1195 = vadd.f32 0.0, %v1194
      %v1196 = vpop.f32.mrf.mxu0
      %1197 = vmatprep.mubr.f32.mxu0 %v906
      %1198 = vmatmul.mubr.f32.gmra.mxu0 %v905
      %v1199 = vpop.f32.mrf.mxu0
      %v1200 = vadd.f32 0.0, %v1199
      %v1201 = vpop.f32.mrf.mxu0
      %1202 = vmatprep.mubr.f32.mxu0 %v909
      %1203 = vmatmul.mubr.f32.gmra.mxu0 %v908
      %v1204 = vpop.f32.mrf.mxu0
      %v1205 = vadd.f32 0.0, %v1204
      %v1206 = vpop.f32.mrf.mxu0
      %1207 = vmatprep.mubr.f32.mxu0 %v912
      %1208 = vmatmul.mubr.f32.gmra.mxu0 %v911
      %v1209 = vpop.f32.mrf.mxu0
      %v1210 = vadd.f32 0.0, %v1209
      %v1211 = vpop.f32.mrf.mxu0
      %1212 = vmatprep.mubr.f32.mxu0 %v915
      %1213 = vmatmul.mubr.f32.gmra.mxu0 %v914
      %v1214 = vpop.f32.mrf.mxu0
      %v1215 = vadd.f32 0.0, %v1214
      %v1216 = vpop.f32.mrf.mxu0
      %1217 = vmatprep.mubr.f32.mxu0 %v918
      %1218 = vmatmul.mubr.f32.gmra.mxu0 %v917
      %v1219 = vpop.f32.mrf.mxu0
      %v1220 = vadd.f32 0.0, %v1219
      %v1221 = vpop.f32.mrf.mxu0
      %1222 = vmatprep.mubr.f32.mxu0 %v921
      %1223 = vmatmul.mubr.f32.gmra.mxu0 %v920
      %v1224 = vpop.f32.mrf.mxu0
      %v1225 = vadd.f32 0.0, %v1224
      %v1226 = vpop.f32.mrf.mxu0
      %1227 = vmatprep.mubr.f32.mxu0 %v924
      %1228 = vmatmul.mubr.f32.gmra.mxu0 %v923
      %v1229 = vpop.f32.mrf.mxu0
      %v1230 = vadd.f32 0.0, %v1229
      %v1231 = vpop.f32.mrf.mxu0
      %1232 = vmatprep.mubr.f32.mxu0 %v927
      %1233 = vmatmul.mubr.f32.gmra.mxu0 %v926
      %v1234 = vpop.f32.mrf.mxu0
      %v1235 = vadd.f32 0.0, %v1234
      %v1236 = vpop.f32.mrf.mxu0
      %1237 = vmatprep.mubr.f32.mxu0 %v930
      %1238 = vmatmul.mubr.f32.gmra.mxu0 %v929
      %v1239 = vpop.f32.mrf.mxu0
      %v1240 = vadd.f32 0.0, %v1239
      %v1241 = vpop.f32.mrf.mxu0
      %1242 = vmatprep.mubr.f32.mxu0 %v933
      %1243 = vmatmul.mubr.f32.gmra.mxu0 %v932
      %v1244 = vpop.f32.mrf.mxu0
      %v1245 = vadd.f32 0.0, %v1244
      %v1246 = vpop.f32.mrf.mxu0
      %1247 = vmatprep.mubr.f32.mxu0 %v936
      %1248 = vmatmul.mubr.f32.gmra.mxu0 %v935
      %v1249 = vpop.f32.mrf.mxu0
      %v1250 = vadd.f32 0.0, %v1249
      %v1251 = vpop.f32.mrf.mxu0
      %1252 = vmatprep.mubr.f32.mxu0 %v939
      %1253 = vmatmul.mubr.f32.gmra.mxu0 %v938
      %v1254 = vpop.f32.mrf.mxu0
      %v1255 = vadd.f32 0.0, %v1254
      %v1256 = vpop.f32.mrf.mxu0
      %1257 = vmatprep.mubr.f32.mxu0 %v942
      %1258 = vmatmul.mubr.f32.gmra.mxu0 %v941
      %v1259 = vpop.f32.mrf.mxu0
      %v1260 = vadd.f32 0.0, %v1259
      %v1261 = vpop.f32.mrf.mxu0
      %1262 = vmatprep.mubr.f32.mxu0 %v945
      %1263 = vmatmul.mubr.f32.gmra.mxu0 %v944
      %v1264 = vpop.f32.mrf.mxu0
      %v1265 = vadd.f32 0.0, %v1264
      %v1266 = vpop.f32.mrf.mxu0
      %1267 = vdwg.mxu0
      %1268 = vmatprep.subr.mxu0 0.0
      %1269 = vmatpush1.msra.mxu0 0.0
      %1270 = vmatprep.subr.mxu0 0.0
      %1271 = vmatpush1.msra.mxu0 0.0
      %1272 = vmatprep.subr.mxu0 0.0
      %1273 = vmatpush1.msra.mxu0 0.0
      %1274 = vmatprep.subr.mxu0 0.0
      %1275 = vmatpush1.msra.mxu0 0.0
      %1276 = vmatprep.subr.mxu0 0.0
      %1277 = vmatpush1.msra.mxu0 0.0
      %1278 = vmatprep.subr.mxu0 0.0
      %1279 = vmatpush1.msra.mxu0 0.0
      %1280 = vmatprep.subr.mxu0 0.0
      %1281 = vmatpush1.msra.mxu0 0.0
      %1282 = vmatprep.subr.mxu0 0.0
      %1283 = vmatpush1.msra.mxu0 0.0
      %1284 = vmatprep.subr.mxu0 0.0
      %1285 = vmatpush1.msra.mxu0 0.0
      %1286 = vmatprep.subr.mxu0 0.0
      %1287 = vmatpush1.msra.mxu0 0.0
      %1288 = vmatprep.subr.mxu0 0.0
      %1289 = vmatpush1.msra.mxu0 0.0
      %1290 = vmatprep.subr.mxu0 0.0
      %1291 = vmatpush1.msra.mxu0 0.0
      %1292 = vmatprep.subr.mxu0 0.0
      %1293 = vmatpush1.msra.mxu0 %v206
      %1294 = vmatprep.subr.mxu0 0.0
      %1295 = vmatpush1.msra.mxu0 %v205
      %1296 = vmatprep.subr.mxu0 0.0
      %1297 = vmatpush1.msra.mxu0 %v204
      %1298 = vmatprep.subr.mxu0 0.0
      %1299 = vmatpush1.msra.mxu0 %v203
      %1300 = vmatprep.subr.mxu0 0.0
      %1301 = vmatpush2.msra.mxu0 0.0
      %1302 = vmatprep.subr.mxu0 0.0
      %1303 = vmatpush2.msra.mxu0 0.0
      %1304 = vmatprep.subr.mxu0 0.0
      %1305 = vmatpush2.msra.mxu0 0.0
      %1306 = vmatprep.subr.mxu0 0.0
      %1307 = vmatpush2.msra.mxu0 0.0
      %1308 = vmatprep.subr.mxu0 0.0
      %1309 = vmatpush2.msra.mxu0 0.0
      %1310 = vmatprep.subr.mxu0 0.0
      %1311 = vmatpush2.msra.mxu0 0.0
      %1312 = vmatprep.subr.mxu0 0.0
      %1313 = vmatpush2.msra.mxu0 0.0
      %1314 = vmatprep.subr.mxu0 0.0
      %1315 = vmatpush2.msra.mxu0 0.0
      %1316 = vmatprep.subr.mxu0 0.0
      %1317 = vmatpush2.msra.mxu0 0.0
      %1318 = vmatprep.subr.mxu0 0.0
      %1319 = vmatpush2.msra.mxu0 0.0
      %1320 = vmatprep.subr.mxu0 0.0
      %1321 = vmatpush2.msra.mxu0 0.0
      %1322 = vmatprep.subr.mxu0 0.0
      %1323 = vmatpush2.msra.mxu0 0.0
      %1324 = vmatprep.subr.mxu0 0.0
      %1325 = vmatpush2.msra.mxu0 0.0
      %1326 = vmatprep.subr.mxu0 0.0
      %1327 = vmatpush2.msra.mxu0 0.0
      %1328 = vmatprep.subr.mxu0 0.0
      %1329 = vmatpush2.msra.mxu0 0.0
      %1330 = vmatprep.subr.mxu0 0.0
      %1331 = vmatpush2.msra.mxu0 0.0
      %1332 = vmatprep.mubr.f32.mxu0 0.0
      %1333 = vmatmul.mubr.f32.gmra.mxu0 %v948
      %v1334 = vpop.f32.mrf.mxu0
      %v1335 = vadd.f32 %v1110, %v1334
      %v1336 = vpop.f32.mrf.mxu0
      %1337 = vmatprep.mubr.f32.mxu0 0.0
      %1338 = vmatmul.mubr.f32.gmra.mxu0 %v951
      %v1339 = vpop.f32.mrf.mxu0
      %v1340 = vadd.f32 %v1115, %v1339
      %v1341 = vpop.f32.mrf.mxu0
      %1342 = vmatprep.mubr.f32.mxu0 0.0
      %1343 = vmatmul.mubr.f32.gmra.mxu0 %v954
      %v1344 = vpop.f32.mrf.mxu0
      %v1345 = vadd.f32 %v1120, %v1344
      %v1346 = vpop.f32.mrf.mxu0
      %1347 = vmatprep.mubr.f32.mxu0 0.0
      %1348 = vmatmul.mubr.f32.gmra.mxu0 %v957
      %v1349 = vpop.f32.mrf.mxu0
      %v1350 = vadd.f32 %v1125, %v1349
      %v1351 = vpop.f32.mrf.mxu0
      %1352 = vmatprep.mubr.f32.mxu0 0.0
      %1353 = vmatmul.mubr.f32.gmra.mxu0 %v960
      %v1354 = vpop.f32.mrf.mxu0
      %v1355 = vadd.f32 %v1130, %v1354
      %v1356 = vpop.f32.mrf.mxu0
      %1357 = vmatprep.mubr.f32.mxu0 0.0
      %1358 = vmatmul.mubr.f32.gmra.mxu0 %v963
      %v1359 = vpop.f32.mrf.mxu0
      %v1360 = vadd.f32 %v1135, %v1359
      %v1361 = vpop.f32.mrf.mxu0
      %1362 = vmatprep.mubr.f32.mxu0 0.0
      %1363 = vmatmul.mubr.f32.gmra.mxu0 %v966
      %v1364 = vpop.f32.mrf.mxu0
      %v1365 = vadd.f32 %v1140, %v1364
      %v1366 = vpop.f32.mrf.mxu0
      %1367 = vmatprep.mubr.f32.mxu0 0.0
      %1368 = vmatmul.mubr.f32.gmra.mxu0 %v969
      %v1369 = vpop.f32.mrf.mxu0
      %v1370 = vadd.f32 %v1145, %v1369
      %v1371 = vpop.f32.mrf.mxu0
      %1372 = vmatprep.mubr.f32.mxu0 0.0
      %1373 = vmatmul.mubr.f32.gmra.mxu0 %v972
      %v1374 = vpop.f32.mrf.mxu0
      %v1375 = vadd.f32 %v1150, %v1374
      %v1376 = vpop.f32.mrf.mxu0
      %1377 = vmatprep.mubr.f32.mxu0 0.0
      %1378 = vmatmul.mubr.f32.gmra.mxu0 %v975
      %v1379 = vpop.f32.mrf.mxu0
      %v1380 = vadd.f32 %v1155, %v1379
      %v1381 = vpop.f32.mrf.mxu0
      %1382 = vmatprep.mubr.f32.mxu0 0.0
      %1383 = vmatmul.mubr.f32.gmra.mxu0 %v978
      %v1384 = vpop.f32.mrf.mxu0
      %v1385 = vadd.f32 %v1160, %v1384
      %v1386 = vpop.f32.mrf.mxu0
      %1387 = vmatprep.mubr.f32.mxu0 0.0
      %1388 = vmatmul.mubr.f32.gmra.mxu0 %v981
      %v1389 = vpop.f32.mrf.mxu0
      %v1390 = vadd.f32 %v1165, %v1389
      %v1391 = vpop.f32.mrf.mxu0
      %1392 = vmatprep.mubr.f32.mxu0 0.0
      %1393 = vmatmul.mubr.f32.gmra.mxu0 %v984
      %v1394 = vpop.f32.mrf.mxu0
      %v1395 = vadd.f32 %v1170, %v1394
      %v1396 = vpop.f32.mrf.mxu0
      %1397 = vmatprep.mubr.f32.mxu0 0.0
      %1398 = vmatmul.mubr.f32.gmra.mxu0 %v987
      %v1399 = vpop.f32.mrf.mxu0
      %v1400 = vadd.f32 %v1175, %v1399
      %v1401 = vpop.f32.mrf.mxu0
      %1402 = vmatprep.mubr.f32.mxu0 0.0
      %1403 = vmatmul.mubr.f32.gmra.mxu0 %v990
      %v1404 = vpop.f32.mrf.mxu0
      %v1405 = vadd.f32 %v1180, %v1404
      %v1406 = vpop.f32.mrf.mxu0
      %1407 = vmatprep.mubr.f32.mxu0 0.0
      %1408 = vmatmul.mubr.f32.gmra.mxu0 %v993
      %v1409 = vpop.f32.mrf.mxu0
      %v1410 = vadd.f32 %v1185, %v1409
      %v1411 = vpop.f32.mrf.mxu0
      %1412 = vmatprep.mubr.f32.mxu0 0.0
      %1413 = vmatmul.mubr.f32.gmra.mxu0 %v996
      %v1414 = vpop.f32.mrf.mxu0
      %v1415 = vadd.f32 %v1190, %v1414
      %v1416 = vpop.f32.mrf.mxu0
      %1417 = vmatprep.mubr.f32.mxu0 0.0
      %1418 = vmatmul.mubr.f32.gmra.mxu0 %v999
      %v1419 = vpop.f32.mrf.mxu0
      %v1420 = vadd.f32 %v1195, %v1419
      %v1421 = vpop.f32.mrf.mxu0
      %1422 = vmatprep.mubr.f32.mxu0 0.0
      %1423 = vmatmul.mubr.f32.gmra.mxu0 %v1002
      %v1424 = vpop.f32.mrf.mxu0
      %v1425 = vadd.f32 %v1200, %v1424
      %v1426 = vpop.f32.mrf.mxu0
      %1427 = vmatprep.mubr.f32.mxu0 0.0
      %1428 = vmatmul.mubr.f32.gmra.mxu0 %v1005
      %v1429 = vpop.f32.mrf.mxu0
      %v1430 = vadd.f32 %v1205, %v1429
      %v1431 = vpop.f32.mrf.mxu0
      %1432 = vmatprep.mubr.f32.mxu0 0.0
      %1433 = vmatmul.mubr.f32.gmra.mxu0 %v1008
      %v1434 = vpop.f32.mrf.mxu0
      %v1435 = vadd.f32 %v1210, %v1434
      %v1436 = vpop.f32.mrf.mxu0
      %1437 = vmatprep.mubr.f32.mxu0 0.0
      %1438 = vmatmul.mubr.f32.gmra.mxu0 %v1011
      %v1439 = vpop.f32.mrf.mxu0
      %v1440 = vadd.f32 %v1215, %v1439
      %v1441 = vpop.f32.mrf.mxu0
      %1442 = vmatprep.mubr.f32.mxu0 0.0
      %1443 = vmatmul.mubr.f32.gmra.mxu0 %v1014
      %v1444 = vpop.f32.mrf.mxu0
      %v1445 = vadd.f32 %v1220, %v1444
      %v1446 = vpop.f32.mrf.mxu0
      %1447 = vmatprep.mubr.f32.mxu0 0.0
      %1448 = vmatmul.mubr.f32.gmra.mxu0 %v1017
      %v1449 = vpop.f32.mrf.mxu0
      %v1450 = vadd.f32 %v1225, %v1449
      %v1451 = vpop.f32.mrf.mxu0
      %1452 = vmatprep.mubr.f32.mxu0 0.0
      %1453 = vmatmul.mubr.f32.gmra.mxu0 %v1020
      %v1454 = vpop.f32.mrf.mxu0
      %v1455 = vadd.f32 %v1230, %v1454
      %v1456 = vpop.f32.mrf.mxu0
      %1457 = vmatprep.mubr.f32.mxu0 0.0
      %1458 = vmatmul.mubr.f32.gmra.mxu0 %v1023
      %v1459 = vpop.f32.mrf.mxu0
      %v1460 = vadd.f32 %v1235, %v1459
      %v1461 = vpop.f32.mrf.mxu0
      %1462 = vmatprep.mubr.f32.mxu0 0.0
      %1463 = vmatmul.mubr.f32.gmra.mxu0 %v1026
      %v1464 = vpop.f32.mrf.mxu0
      %v1465 = vadd.f32 %v1240, %v1464
      %v1466 = vpop.f32.mrf.mxu0
      %1467 = vmatprep.mubr.f32.mxu0 0.0
      %1468 = vmatmul.mubr.f32.gmra.mxu0 %v1029
      %v1469 = vpop.f32.mrf.mxu0
      %v1470 = vadd.f32 %v1245, %v1469
      %v1471 = vpop.f32.mrf.mxu0
      %1472 = vmatprep.mubr.f32.mxu0 0.0
      %1473 = vmatmul.mubr.f32.gmra.mxu0 %v1032
      %v1474 = vpop.f32.mrf.mxu0
      %v1475 = vadd.f32 %v1250, %v1474
      %v1476 = vpop.f32.mrf.mxu0
      %1477 = vmatprep.mubr.f32.mxu0 0.0
      %1478 = vmatmul.mubr.f32.gmra.mxu0 %v1035
      %v1479 = vpop.f32.mrf.mxu0
      %v1480 = vadd.f32 %v1255, %v1479
      %v1481 = vpop.f32.mrf.mxu0
      %1482 = vmatprep.mubr.f32.mxu0 0.0
      %1483 = vmatmul.mubr.f32.gmra.mxu0 %v1038
      %v1484 = vpop.f32.mrf.mxu0
      %v1485 = vadd.f32 %v1260, %v1484
      %v1486 = vpop.f32.mrf.mxu0
      %1487 = vmatprep.mubr.f32.mxu0 0.0
      %1488 = vmatmul.mubr.f32.gmra.mxu0 %v1041
      %v1489 = vpop.f32.mrf.mxu0
      %v1490 = vadd.f32 %v1265, %v1489
      %v1491 = vpop.f32.mrf.mxu0
      %1492 = vdwg.mxu0
      %v1493 = vmax.f32 %v692, %v1335
      %v1494 = vmax.f32 %v697, %v1340
      %v1495 = vmax.f32 %v702, %v1345
      %v1496 = vmax.f32 %v707, %v1350
      %v1497 = vmax.f32 %v712, %v1355
      %v1498 = vmax.f32 %v717, %v1360
      %v1499 = vmax.f32 %v722, %v1365
      %v1500 = vmax.f32 %v727, %v1370
      %v1501 = vmax.f32 %v732, %v1375
      %v1502 = vmax.f32 %v737, %v1380
      %v1503 = vmax.f32 %v742, %v1385
      %v1504 = vmax.f32 %v747, %v1390
      %v1505 = vmax.f32 %v752, %v1395
      %v1506 = vmax.f32 %v757, %v1400
      %v1507 = vmax.f32 %v762, %v1405
      %v1508 = vmax.f32 %v767, %v1410
      %v1509 = vmax.f32 %v772, %v1415
      %v1510 = vmax.f32 %v777, %v1420
      %v1511 = vmax.f32 %v782, %v1425
      %v1512 = vmax.f32 %v787, %v1430
      %v1513 = vmax.f32 %v792, %v1435
      %v1514 = vmax.f32 %v797, %v1440
      %v1515 = vmax.f32 %v802, %v1445
      %v1516 = vmax.f32 %v807, %v1450
      %v1517 = vmax.f32 %v812, %v1455
      %v1518 = vmax.f32 %v817, %v1460
      %v1519 = vmax.f32 %v822, %v1465
      %v1520 = vmax.f32 %v827, %v1470
      %v1521 = vmax.f32 %v832, %v1475
      %v1522 = vmax.f32 %v837, %v1480
      %v1523 = vmax.f32 %v842, %v1485
      %v1524 = vmax.f32 %v847, %v1490
      %s1525 = scalar_lea.vmem %s165, 1536
      %v1526 = vld [vmem:[%s1525] sm:$0xff]
      %v1527 = vld [vmem:[%s1525 + $0x8] sm:$0xff]
      %v1528 = vld [vmem:[%s1525 + $0x10] sm:$0xff]
      %v1529 = vld [vmem:[%s1525 + $0x18] sm:$0xff]
      %v1530 = vld [vmem:[%s1525 + $0x20] sm:$0xff]
      %v1531 = vld [vmem:[%s1525 + $0x28] sm:$0xff]
      %v1532 = vld [vmem:[%s1525 + $0x30] sm:$0xff]
      %v1533 = vld [vmem:[%s1525 + $0x38] sm:$0xff]
      %v1534 = vld [vmem:[%s1525 + $0x40] sm:$0xff]
      %v1535 = vld [vmem:[%s1525 + $0x48] sm:$0xff]
      %v1536 = vld [vmem:[%s1525 + $0x50] sm:$0xff]
      %v1537 = vld [vmem:[%s1525 + $0x58] sm:$0xff]
      %v1538 = vld [vmem:[%s1525 + $0x60] sm:$0xff]
      %v1539 = vld [vmem:[%s1525 + $0x68] sm:$0xff]
      %v1540 = vld [vmem:[%s1525 + $0x70] sm:$0xff]
      %v1541 = vld [vmem:[%s1525 + $0x78] sm:$0xff]
      %v1542 = vld [vmem:[%s1525 + $0x80] sm:$0xff]
      %v1543 = vld [vmem:[%s1525 + $0x88] sm:$0xff]
      %v1544 = vld [vmem:[%s1525 + $0x90] sm:$0xff]
      %v1545 = vld [vmem:[%s1525 + $0x98] sm:$0xff]
      %v1546 = vld [vmem:[%s1525 + $0xa0] sm:$0xff]
      %v1547 = vld [vmem:[%s1525 + $0xa8] sm:$0xff]
      %v1548 = vld [vmem:[%s1525 + $0xb0] sm:$0xff]
      %v1549 = vld [vmem:[%s1525 + $0xb8] sm:$0xff]
      %v1550 = vld [vmem:[%s1525 + $0xc0] sm:$0xff]
      %v1551 = vld [vmem:[%s1525 + $0xc8] sm:$0xff]
      %v1552 = vld [vmem:[%s1525 + $0xd0] sm:$0xff]
      %v1553 = vld [vmem:[%s1525 + $0xd8] sm:$0xff]
      %v1554 = vld [vmem:[%s1525 + $0xe0] sm:$0xff]
      %v1555 = vld [vmem:[%s1525 + $0xe8] sm:$0xff]
      %v1556 = vld [vmem:[%s1525 + $0xf0] sm:$0xff]
      %v1557 = vld [vmem:[%s1525 + $0xf8] sm:$0xff]
      %v1558 = vld [vmem:[%s1525 + $0x100] sm:$0xff]
      %v1559 = vld [vmem:[%s1525 + $0x108] sm:$0xff]
      %v1560 = vld [vmem:[%s1525 + $0x110] sm:$0xff]
      %v1561 = vld [vmem:[%s1525 + $0x118] sm:$0xff]
      %v1562 = vld [vmem:[%s1525 + $0x120] sm:$0xff]
      %v1563 = vld [vmem:[%s1525 + $0x128] sm:$0xff]
      %v1564 = vld [vmem:[%s1525 + $0x130] sm:$0xff]
      %v1565 = vld [vmem:[%s1525 + $0x138] sm:$0xff]
      %v1566 = vld [vmem:[%s1525 + $0x140] sm:$0xff]
      %v1567 = vld [vmem:[%s1525 + $0x148] sm:$0xff]
      %v1568 = vld [vmem:[%s1525 + $0x150] sm:$0xff]
      %v1569 = vld [vmem:[%s1525 + $0x158] sm:$0xff]
      %v1570 = vld [vmem:[%s1525 + $0x160] sm:$0xff]
      %v1571 = vld [vmem:[%s1525 + $0x168] sm:$0xff]
      %v1572 = vld [vmem:[%s1525 + $0x170] sm:$0xff]
      %v1573 = vld [vmem:[%s1525 + $0x178] sm:$0xff]
      %v1574 = vld [vmem:[%s1525 + $0x180] sm:$0xff]
      %v1575 = vld [vmem:[%s1525 + $0x188] sm:$0xff]
      %v1576 = vld [vmem:[%s1525 + $0x190] sm:$0xff]
      %v1577 = vld [vmem:[%s1525 + $0x198] sm:$0xff]
      %v1578 = vld [vmem:[%s1525 + $0x1a0] sm:$0xff]
      %v1579 = vld [vmem:[%s1525 + $0x1a8] sm:$0xff]
      %v1580 = vld [vmem:[%s1525 + $0x1b0] sm:$0xff]
      %v1581 = vld [vmem:[%s1525 + $0x1b8] sm:$0xff]
      %v1582 = vld [vmem:[%s1525 + $0x1c0] sm:$0xff]
      %v1583 = vld [vmem:[%s1525 + $0x1c8] sm:$0xff]
      %v1584 = vld [vmem:[%s1525 + $0x1d0] sm:$0xff]
      %v1585 = vld [vmem:[%s1525 + $0x1d8] sm:$0xff]
      %v1586 = vld [vmem:[%s1525 + $0x1e0] sm:$0xff]
      %v1587 = vld [vmem:[%s1525 + $0x1e8] sm:$0xff]
      %v1588 = vld [vmem:[%s1525 + $0x1f0] sm:$0xff]
      %v1589 = vld [vmem:[%s1525 + $0x1f8] sm:$0xff]
      %v1590 = vld [vmem:[%s1525 + $0x200] sm:$0xff]
      %v1591 = vld [vmem:[%s1525 + $0x208] sm:$0xff]
      %v1592 = vld [vmem:[%s1525 + $0x210] sm:$0xff]
      %v1593 = vld [vmem:[%s1525 + $0x218] sm:$0xff]
      %v1594 = vld [vmem:[%s1525 + $0x220] sm:$0xff]
      %v1595 = vld [vmem:[%s1525 + $0x228] sm:$0xff]
      %v1596 = vld [vmem:[%s1525 + $0x230] sm:$0xff]
      %v1597 = vld [vmem:[%s1525 + $0x238] sm:$0xff]
      %v1598 = vld [vmem:[%s1525 + $0x240] sm:$0xff]
      %v1599 = vld [vmem:[%s1525 + $0x248] sm:$0xff]
      %v1600 = vld [vmem:[%s1525 + $0x250] sm:$0xff]
      %v1601 = vld [vmem:[%s1525 + $0x258] sm:$0xff]
      %v1602 = vld [vmem:[%s1525 + $0x260] sm:$0xff]
      %v1603 = vld [vmem:[%s1525 + $0x268] sm:$0xff]
      %v1604 = vld [vmem:[%s1525 + $0x270] sm:$0xff]
      %v1605 = vld [vmem:[%s1525 + $0x278] sm:$0xff]
      %v1606 = vld [vmem:[%s1525 + $0x280] sm:$0xff]
      %v1607 = vld [vmem:[%s1525 + $0x288] sm:$0xff]
      %v1608 = vld [vmem:[%s1525 + $0x290] sm:$0xff]
      %v1609 = vld [vmem:[%s1525 + $0x298] sm:$0xff]
      %v1610 = vld [vmem:[%s1525 + $0x2a0] sm:$0xff]
      %v1611 = vld [vmem:[%s1525 + $0x2a8] sm:$0xff]
      %v1612 = vld [vmem:[%s1525 + $0x2b0] sm:$0xff]
      %v1613 = vld [vmem:[%s1525 + $0x2b8] sm:$0xff]
      %v1614 = vld [vmem:[%s1525 + $0x2c0] sm:$0xff]
      %v1615 = vld [vmem:[%s1525 + $0x2c8] sm:$0xff]
      %v1616 = vld [vmem:[%s1525 + $0x2d0] sm:$0xff]
      %v1617 = vld [vmem:[%s1525 + $0x2d8] sm:$0xff]
      %v1618 = vld [vmem:[%s1525 + $0x2e0] sm:$0xff]
      %v1619 = vld [vmem:[%s1525 + $0x2e8] sm:$0xff]
      %v1620 = vld [vmem:[%s1525 + $0x2f0] sm:$0xff]
      %v1621 = vld [vmem:[%s1525 + $0x2f8] sm:$0xff]
      %v1623 = vsel %vm303, %v1528, 0
      %v1626 = vsel %vm303, %v1531, 0
      %v1629 = vsel %vm303, %v1534, 0
      %v1632 = vsel %vm303, %v1537, 0
      %v1635 = vsel %vm303, %v1540, 0
      %v1638 = vsel %vm303, %v1543, 0
      %v1641 = vsel %vm303, %v1546, 0
      %v1644 = vsel %vm303, %v1549, 0
      %v1647 = vsel %vm303, %v1552, 0
      %v1650 = vsel %vm303, %v1555, 0
      %v1653 = vsel %vm303, %v1558, 0
      %v1656 = vsel %vm303, %v1561, 0
      %v1659 = vsel %vm303, %v1564, 0
      %v1662 = vsel %vm303, %v1567, 0
      %v1665 = vsel %vm303, %v1570, 0
      %v1668 = vsel %vm303, %v1573, 0
      %v1671 = vsel %vm303, %v1576, 0
      %v1674 = vsel %vm303, %v1579, 0
      %v1677 = vsel %vm303, %v1582, 0
      %v1680 = vsel %vm303, %v1585, 0
      %v1683 = vsel %vm303, %v1588, 0
      %v1686 = vsel %vm303, %v1591, 0
      %v1689 = vsel %vm303, %v1594, 0
      %v1692 = vsel %vm303, %v1597, 0
      %v1695 = vsel %vm303, %v1600, 0
      %v1698 = vsel %vm303, %v1603, 0
      %v1701 = vsel %vm303, %v1606, 0
      %v1704 = vsel %vm303, %v1609, 0
      %v1707 = vsel %vm303, %v1612, 0
      %v1710 = vsel %vm303, %v1615, 0
      %v1713 = vsel %vm303, %v1618, 0
      %v1716 = vsel %vm303, %v1621, 0
      %1718 = vmatprep.subr.mxu0 0.0
      %1719 = vmatpush1.msra.mxu0 %v186
      %1720 = vmatprep.subr.mxu0 0.0
      %1721 = vmatpush1.msra.mxu0 %v185
      %1722 = vmatprep.subr.mxu0 0.0
      %1723 = vmatpush1.msra.mxu0 %v184
      %1724 = vmatprep.subr.mxu0 0.0
      %1725 = vmatpush1.msra.mxu0 %v183
      %1726 = vmatprep.subr.mxu0 0.0
      %1727 = vmatpush1.msra.mxu0 %v182
      %1728 = vmatprep.subr.mxu0 0.0
      %1729 = vmatpush1.msra.mxu0 %v181
      %1730 = vmatprep.subr.mxu0 0.0
      %1731 = vmatpush1.msra.mxu0 %v180
      %1732 = vmatprep.subr.mxu0 0.0
      %1733 = vmatpush1.msra.mxu0 %v179
      %1734 = vmatprep.subr.mxu0 0.0
      %1735 = vmatpush1.msra.mxu0 %v178
      %1736 = vmatprep.subr.mxu0 0.0
      %1737 = vmatpush1.msra.mxu0 %v177
      %1738 = vmatprep.subr.mxu0 0.0
      %1739 = vmatpush1.msra.mxu0 %v176
      %1740 = vmatprep.subr.mxu0 0.0
      %1741 = vmatpush1.msra.mxu0 %v175
      %1742 = vmatprep.subr.mxu0 0.0
      %1743 = vmatpush1.msra.mxu0 %v174
      %1744 = vmatprep.subr.mxu0 0.0
      %1745 = vmatpush1.msra.mxu0 %v173
      %1746 = vmatprep.subr.mxu0 0.0
      %1747 = vmatpush1.msra.mxu0 %v172
      %1748 = vmatprep.subr.mxu0 0.0
      %1749 = vmatpush1.msra.mxu0 %v171
      %1750 = vmatprep.subr.mxu0 0.0
      %1751 = vmatpush2.msra.mxu0 %v202
      %1752 = vmatprep.subr.mxu0 0.0
      %1753 = vmatpush2.msra.mxu0 %v201
      %1754 = vmatprep.subr.mxu0 0.0
      %1755 = vmatpush2.msra.mxu0 %v200
      %1756 = vmatprep.subr.mxu0 0.0
      %1757 = vmatpush2.msra.mxu0 %v199
      %1758 = vmatprep.subr.mxu0 0.0
      %1759 = vmatpush2.msra.mxu0 %v198
      %1760 = vmatprep.subr.mxu0 0.0
      %1761 = vmatpush2.msra.mxu0 %v197
      %1762 = vmatprep.subr.mxu0 0.0
      %1763 = vmatpush2.msra.mxu0 %v196
      %1764 = vmatprep.subr.mxu0 0.0
      %1765 = vmatpush2.msra.mxu0 %v195
      %1766 = vmatprep.subr.mxu0 0.0
      %1767 = vmatpush2.msra.mxu0 %v194
      %1768 = vmatprep.subr.mxu0 0.0
      %1769 = vmatpush2.msra.mxu0 %v193
      %1770 = vmatprep.subr.mxu0 0.0
      %1771 = vmatpush2.msra.mxu0 %v192
      %1772 = vmatprep.subr.mxu0 0.0
      %1773 = vmatpush2.msra.mxu0 %v191
      %1774 = vmatprep.subr.mxu0 0.0
      %1775 = vmatpush2.msra.mxu0 %v190
      %1776 = vmatprep.subr.mxu0 0.0
      %1777 = vmatpush2.msra.mxu0 %v189
      %1778 = vmatprep.subr.mxu0 0.0
      %1779 = vmatpush2.msra.mxu0 %v188
      %1780 = vmatprep.subr.mxu0 0.0
      %1781 = vmatpush2.msra.mxu0 %v187
      %1782 = vmatprep.mubr.f32.mxu0 %v1527
      %1783 = vmatmul.mubr.f32.gmra.mxu0 %v1526
      %v1784 = vpop.f32.mrf.mxu0
      %v1785 = vadd.f32 0.0, %v1784
      %v1786 = vpop.f32.mrf.mxu0
      %1787 = vmatprep.mubr.f32.mxu0 %v1530
      %1788 = vmatmul.mubr.f32.gmra.mxu0 %v1529
      %v1789 = vpop.f32.mrf.mxu0
      %v1790 = vadd.f32 0.0, %v1789
      %v1791 = vpop.f32.mrf.mxu0
      %1792 = vmatprep.mubr.f32.mxu0 %v1533
      %1793 = vmatmul.mubr.f32.gmra.mxu0 %v1532
      %v1794 = vpop.f32.mrf.mxu0
      %v1795 = vadd.f32 0.0, %v1794
      %v1796 = vpop.f32.mrf.mxu0
      %1797 = vmatprep.mubr.f32.mxu0 %v1536
      %1798 = vmatmul.mubr.f32.gmra.mxu0 %v1535
      %v1799 = vpop.f32.mrf.mxu0
      %v1800 = vadd.f32 0.0, %v1799
      %v1801 = vpop.f32.mrf.mxu0
      %1802 = vmatprep.mubr.f32.mxu0 %v1539
      %1803 = vmatmul.mubr.f32.gmra.mxu0 %v1538
      %v1804 = vpop.f32.mrf.mxu0
      %v1805 = vadd.f32 0.0, %v1804
      %v1806 = vpop.f32.mrf.mxu0
      %1807 = vmatprep.mubr.f32.mxu0 %v1542
      %1808 = vmatmul.mubr.f32.gmra.mxu0 %v1541
      %v1809 = vpop.f32.mrf.mxu0
      %v1810 = vadd.f32 0.0, %v1809
      %v1811 = vpop.f32.mrf.mxu0
      %1812 = vmatprep.mubr.f32.mxu0 %v1545
      %1813 = vmatmul.mubr.f32.gmra.mxu0 %v1544
      %v1814 = vpop.f32.mrf.mxu0
      %v1815 = vadd.f32 0.0, %v1814
      %v1816 = vpop.f32.mrf.mxu0
      %1817 = vmatprep.mubr.f32.mxu0 %v1548
      %1818 = vmatmul.mubr.f32.gmra.mxu0 %v1547
      %v1819 = vpop.f32.mrf.mxu0
      %v1820 = vadd.f32 0.0, %v1819
      %v1821 = vpop.f32.mrf.mxu0
      %1822 = vmatprep.mubr.f32.mxu0 %v1551
      %1823 = vmatmul.mubr.f32.gmra.mxu0 %v1550
      %v1824 = vpop.f32.mrf.mxu0
      %v1825 = vadd.f32 0.0, %v1824
      %v1826 = vpop.f32.mrf.mxu0
      %1827 = vmatprep.mubr.f32.mxu0 %v1554
      %1828 = vmatmul.mubr.f32.gmra.mxu0 %v1553
      %v1829 = vpop.f32.mrf.mxu0
      %v1830 = vadd.f32 0.0, %v1829
      %v1831 = vpop.f32.mrf.mxu0
      %1832 = vmatprep.mubr.f32.mxu0 %v1557
      %1833 = vmatmul.mubr.f32.gmra.mxu0 %v1556
      %v1834 = vpop.f32.mrf.mxu0
      %v1835 = vadd.f32 0.0, %v1834
      %v1836 = vpop.f32.mrf.mxu0
      %1837 = vmatprep.mubr.f32.mxu0 %v1560
      %1838 = vmatmul.mubr.f32.gmra.mxu0 %v1559
      %v1839 = vpop.f32.mrf.mxu0
      %v1840 = vadd.f32 0.0, %v1839
      %v1841 = vpop.f32.mrf.mxu0
      %1842 = vmatprep.mubr.f32.mxu0 %v1563
      %1843 = vmatmul.mubr.f32.gmra.mxu0 %v1562
      %v1844 = vpop.f32.mrf.mxu0
      %v1845 = vadd.f32 0.0, %v1844
      %v1846 = vpop.f32.mrf.mxu0
      %1847 = vmatprep.mubr.f32.mxu0 %v1566
      %1848 = vmatmul.mubr.f32.gmra.mxu0 %v1565
      %v1849 = vpop.f32.mrf.mxu0
      %v1850 = vadd.f32 0.0, %v1849
      %v1851 = vpop.f32.mrf.mxu0
      %1852 = vmatprep.mubr.f32.mxu0 %v1569
      %1853 = vmatmul.mubr.f32.gmra.mxu0 %v1568
      %v1854 = vpop.f32.mrf.mxu0
      %v1855 = vadd.f32 0.0, %v1854
      %v1856 = vpop.f32.mrf.mxu0
      %1857 = vmatprep.mubr.f32.mxu0 %v1572
      %1858 = vmatmul.mubr.f32.gmra.mxu0 %v1571
      %v1859 = vpop.f32.mrf.mxu0
      %v1860 = vadd.f32 0.0, %v1859
      %v1861 = vpop.f32.mrf.mxu0
      %1862 = vmatprep.mubr.f32.mxu0 %v1575
      %1863 = vmatmul.mubr.f32.gmra.mxu0 %v1574
      %v1864 = vpop.f32.mrf.mxu0
      %v1865 = vadd.f32 0.0, %v1864
      %v1866 = vpop.f32.mrf.mxu0
      %1867 = vmatprep.mubr.f32.mxu0 %v1578
      %1868 = vmatmul.mubr.f32.gmra.mxu0 %v1577
      %v1869 = vpop.f32.mrf.mxu0
      %v1870 = vadd.f32 0.0, %v1869
      %v1871 = vpop.f32.mrf.mxu0
      %1872 = vmatprep.mubr.f32.mxu0 %v1581
      %1873 = vmatmul.mubr.f32.gmra.mxu0 %v1580
      %v1874 = vpop.f32.mrf.mxu0
      %v1875 = vadd.f32 0.0, %v1874
      %v1876 = vpop.f32.mrf.mxu0
      %1877 = vmatprep.mubr.f32.mxu0 %v1584
      %1878 = vmatmul.mubr.f32.gmra.mxu0 %v1583
      %v1879 = vpop.f32.mrf.mxu0
      %v1880 = vadd.f32 0.0, %v1879
      %v1881 = vpop.f32.mrf.mxu0
      %1882 = vmatprep.mubr.f32.mxu0 %v1587
      %1883 = vmatmul.mubr.f32.gmra.mxu0 %v1586
      %v1884 = vpop.f32.mrf.mxu0
      %v1885 = vadd.f32 0.0, %v1884
      %v1886 = vpop.f32.mrf.mxu0
      %1887 = vmatprep.mubr.f32.mxu0 %v1590
      %1888 = vmatmul.mubr.f32.gmra.mxu0 %v1589
      %v1889 = vpop.f32.mrf.mxu0
      %v1890 = vadd.f32 0.0, %v1889
      %v1891 = vpop.f32.mrf.mxu0
      %1892 = vmatprep.mubr.f32.mxu0 %v1593
      %1893 = vmatmul.mubr.f32.gmra.mxu0 %v1592
      %v1894 = vpop.f32.mrf.mxu0
      %v1895 = vadd.f32 0.0, %v1894
      %v1896 = vpop.f32.mrf.mxu0
      %1897 = vmatprep.mubr.f32.mxu0 %v1596
      %1898 = vmatmul.mubr.f32.gmra.mxu0 %v1595
      %v1899 = vpop.f32.mrf.mxu0
      %v1900 = vadd.f32 0.0, %v1899
      %v1901 = vpop.f32.mrf.mxu0
      %1902 = vmatprep.mubr.f32.mxu0 %v1599
      %1903 = vmatmul.mubr.f32.gmra.mxu0 %v1598
      %v1904 = vpop.f32.mrf.mxu0
      %v1905 = vadd.f32 0.0, %v1904
      %v1906 = vpop.f32.mrf.mxu0
      %1907 = vmatprep.mubr.f32.mxu0 %v1602
      %1908 = vmatmul.mubr.f32.gmra.mxu0 %v1601
      %v1909 = vpop.f32.mrf.mxu0
      %v1910 = vadd.f32 0.0, %v1909
      %v1911 = vpop.f32.mrf.mxu0
      %1912 = vmatprep.mubr.f32.mxu0 %v1605
      %1913 = vmatmul.mubr.f32.gmra.mxu0 %v1604
      %v1914 = vpop.f32.mrf.mxu0
      %v1915 = vadd.f32 0.0, %v1914
      %v1916 = vpop.f32.mrf.mxu0
      %1917 = vmatprep.mubr.f32.mxu0 %v1608
      %1918 = vmatmul.mubr.f32.gmra.mxu0 %v1607
      %v1919 = vpop.f32.mrf.mxu0
      %v1920 = vadd.f32 0.0, %v1919
      %v1921 = vpop.f32.mrf.mxu0
      %1922 = vmatprep.mubr.f32.mxu0 %v1611
      %1923 = vmatmul.mubr.f32.gmra.mxu0 %v1610
      %v1924 = vpop.f32.mrf.mxu0
      %v1925 = vadd.f32 0.0, %v1924
      %v1926 = vpop.f32.mrf.mxu0
      %1927 = vmatprep.mubr.f32.mxu0 %v1614
      %1928 = vmatmul.mubr.f32.gmra.mxu0 %v1613
      %v1929 = vpop.f32.mrf.mxu0
      %v1930 = vadd.f32 0.0, %v1929
      %v1931 = vpop.f32.mrf.mxu0
      %1932 = vmatprep.mubr.f32.mxu0 %v1617
      %1933 = vmatmul.mubr.f32.gmra.mxu0 %v1616
      %v1934 = vpop.f32.mrf.mxu0
      %v1935 = vadd.f32 0.0, %v1934
      %v1936 = vpop.f32.mrf.mxu0
      %1937 = vmatprep.mubr.f32.mxu0 %v1620
      %1938 = vmatmul.mubr.f32.gmra.mxu0 %v1619
      %v1939 = vpop.f32.mrf.mxu0
      %v1940 = vadd.f32 0.0, %v1939
      %v1941 = vpop.f32.mrf.mxu0
      %1942 = vdwg.mxu0
      %1943 = vmatprep.subr.mxu0 0.0
      %1944 = vmatpush1.msra.mxu0 0.0
      %1945 = vmatprep.subr.mxu0 0.0
      %1946 = vmatpush1.msra.mxu0 0.0
      %1947 = vmatprep.subr.mxu0 0.0
      %1948 = vmatpush1.msra.mxu0 0.0
      %1949 = vmatprep.subr.mxu0 0.0
      %1950 = vmatpush1.msra.mxu0 0.0
      %1951 = vmatprep.subr.mxu0 0.0
      %1952 = vmatpush1.msra.mxu0 0.0
      %1953 = vmatprep.subr.mxu0 0.0
      %1954 = vmatpush1.msra.mxu0 0.0
      %1955 = vmatprep.subr.mxu0 0.0
      %1956 = vmatpush1.msra.mxu0 0.0
      %1957 = vmatprep.subr.mxu0 0.0
      %1958 = vmatpush1.msra.mxu0 0.0
      %1959 = vmatprep.subr.mxu0 0.0
      %1960 = vmatpush1.msra.mxu0 0.0
      %1961 = vmatprep.subr.mxu0 0.0
      %1962 = vmatpush1.msra.mxu0 0.0
      %1963 = vmatprep.subr.mxu0 0.0
      %1964 = vmatpush1.msra.mxu0 0.0
      %1965 = vmatprep.subr.mxu0 0.0
      %1966 = vmatpush1.msra.mxu0 0.0
      %1967 = vmatprep.subr.mxu0 0.0
      %1968 = vmatpush1.msra.mxu0 %v206
      %1969 = vmatprep.subr.mxu0 0.0
      %1970 = vmatpush1.msra.mxu0 %v205
      %1971 = vmatprep.subr.mxu0 0.0
      %1972 = vmatpush1.msra.mxu0 %v204
      %1973 = vmatprep.subr.mxu0 0.0
      %1974 = vmatpush1.msra.mxu0 %v203
      %1975 = vmatprep.subr.mxu0 0.0
      %1976 = vmatpush2.msra.mxu0 0.0
      %1977 = vmatprep.subr.mxu0 0.0
      %1978 = vmatpush2.msra.mxu0 0.0
      %1979 = vmatprep.subr.mxu0 0.0
      %1980 = vmatpush2.msra.mxu0 0.0
      %1981 = vmatprep.subr.mxu0 0.0
      %1982 = vmatpush2.msra.mxu0 0.0
      %1983 = vmatprep.subr.mxu0 0.0
      %1984 = vmatpush2.msra.mxu0 0.0
      %1985 = vmatprep.subr.mxu0 0.0
      %1986 = vmatpush2.msra.mxu0 0.0
      %1987 = vmatprep.subr.mxu0 0.0
      %1988 = vmatpush2.msra.mxu0 0.0
      %1989 = vmatprep.subr.mxu0 0.0
      %1990 = vmatpush2.msra.mxu0 0.0
      %1991 = vmatprep.subr.mxu0 0.0
      %1992 = vmatpush2.msra.mxu0 0.0
      %1993 = vmatprep.subr.mxu0 0.0
      %1994 = vmatpush2.msra.mxu0 0.0
      %1995 = vmatprep.subr.mxu0 0.0
      %1996 = vmatpush2.msra.mxu0 0.0
      %1997 = vmatprep.subr.mxu0 0.0
      %1998 = vmatpush2.msra.mxu0 0.0
      %1999 = vmatprep.subr.mxu0 0.0
      %2000 = vmatpush2.msra.mxu0 0.0
      %2001 = vmatprep.subr.mxu0 0.0
      %2002 = vmatpush2.msra.mxu0 0.0
      %2003 = vmatprep.subr.mxu0 0.0
      %2004 = vmatpush2.msra.mxu0 0.0
      %2005 = vmatprep.subr.mxu0 0.0
      %2006 = vmatpush2.msra.mxu0 0.0
      %2007 = vmatprep.mubr.f32.mxu0 0.0
      %2008 = vmatmul.mubr.f32.gmra.mxu0 %v1623
      %v2009 = vpop.f32.mrf.mxu0
      %v2010 = vadd.f32 %v1785, %v2009
      %v2011 = vpop.f32.mrf.mxu0
      %2012 = vmatprep.mubr.f32.mxu0 0.0
      %2013 = vmatmul.mubr.f32.gmra.mxu0 %v1626
      %v2014 = vpop.f32.mrf.mxu0
      %v2015 = vadd.f32 %v1790, %v2014
      %v2016 = vpop.f32.mrf.mxu0
      %2017 = vmatprep.mubr.f32.mxu0 0.0
      %2018 = vmatmul.mubr.f32.gmra.mxu0 %v1629
      %v2019 = vpop.f32.mrf.mxu0
      %v2020 = vadd.f32 %v1795, %v2019
      %v2021 = vpop.f32.mrf.mxu0
      %2022 = vmatprep.mubr.f32.mxu0 0.0
      %2023 = vmatmul.mubr.f32.gmra.mxu0 %v1632
      %v2024 = vpop.f32.mrf.mxu0
      %v2025 = vadd.f32 %v1800, %v2024
      %v2026 = vpop.f32.mrf.mxu0
      %2027 = vmatprep.mubr.f32.mxu0 0.0
      %2028 = vmatmul.mubr.f32.gmra.mxu0 %v1635
      %v2029 = vpop.f32.mrf.mxu0
      %v2030 = vadd.f32 %v1805, %v2029
      %v2031 = vpop.f32.mrf.mxu0
      %2032 = vmatprep.mubr.f32.mxu0 0.0
      %2033 = vmatmul.mubr.f32.gmra.mxu0 %v1638
      %v2034 = vpop.f32.mrf.mxu0
      %v2035 = vadd.f32 %v1810, %v2034
      %v2036 = vpop.f32.mrf.mxu0
      %2037 = vmatprep.mubr.f32.mxu0 0.0
      %2038 = vmatmul.mubr.f32.gmra.mxu0 %v1641
      %v2039 = vpop.f32.mrf.mxu0
      %v2040 = vadd.f32 %v1815, %v2039
      %v2041 = vpop.f32.mrf.mxu0
      %2042 = vmatprep.mubr.f32.mxu0 0.0
      %2043 = vmatmul.mubr.f32.gmra.mxu0 %v1644
      %v2044 = vpop.f32.mrf.mxu0
      %v2045 = vadd.f32 %v1820, %v2044
      %v2046 = vpop.f32.mrf.mxu0
      %2047 = vmatprep.mubr.f32.mxu0 0.0
      %2048 = vmatmul.mubr.f32.gmra.mxu0 %v1647
      %v2049 = vpop.f32.mrf.mxu0
      %v2050 = vadd.f32 %v1825, %v2049
      %v2051 = vpop.f32.mrf.mxu0
      %2052 = vmatprep.mubr.f32.mxu0 0.0
      %2053 = vmatmul.mubr.f32.gmra.mxu0 %v1650
      %v2054 = vpop.f32.mrf.mxu0
      %v2055 = vadd.f32 %v1830, %v2054
      %v2056 = vpop.f32.mrf.mxu0
      %2057 = vmatprep.mubr.f32.mxu0 0.0
      %2058 = vmatmul.mubr.f32.gmra.mxu0 %v1653
      %v2059 = vpop.f32.mrf.mxu0
      %v2060 = vadd.f32 %v1835, %v2059
      %v2061 = vpop.f32.mrf.mxu0
      %2062 = vmatprep.mubr.f32.mxu0 0.0
      %2063 = vmatmul.mubr.f32.gmra.mxu0 %v1656
      %v2064 = vpop.f32.mrf.mxu0
      %v2065 = vadd.f32 %v1840, %v2064
      %v2066 = vpop.f32.mrf.mxu0
      %2067 = vmatprep.mubr.f32.mxu0 0.0
      %2068 = vmatmul.mubr.f32.gmra.mxu0 %v1659
      %v2069 = vpop.f32.mrf.mxu0
      %v2070 = vadd.f32 %v1845, %v2069
      %v2071 = vpop.f32.mrf.mxu0
      %2072 = vmatprep.mubr.f32.mxu0 0.0
      %2073 = vmatmul.mubr.f32.gmra.mxu0 %v1662
      %v2074 = vpop.f32.mrf.mxu0
      %v2075 = vadd.f32 %v1850, %v2074
      %v2076 = vpop.f32.mrf.mxu0
      %2077 = vmatprep.mubr.f32.mxu0 0.0
      %2078 = vmatmul.mubr.f32.gmra.mxu0 %v1665
      %v2079 = vpop.f32.mrf.mxu0
      %v2080 = vadd.f32 %v1855, %v2079
      %v2081 = vpop.f32.mrf.mxu0
      %2082 = vmatprep.mubr.f32.mxu0 0.0
      %2083 = vmatmul.mubr.f32.gmra.mxu0 %v1668
      %v2084 = vpop.f32.mrf.mxu0
      %v2085 = vadd.f32 %v1860, %v2084
      %v2086 = vpop.f32.mrf.mxu0
      %2087 = vmatprep.mubr.f32.mxu0 0.0
      %2088 = vmatmul.mubr.f32.gmra.mxu0 %v1671
      %v2089 = vpop.f32.mrf.mxu0
      %v2090 = vadd.f32 %v1865, %v2089
      %v2091 = vpop.f32.mrf.mxu0
      %2092 = vmatprep.mubr.f32.mxu0 0.0
      %2093 = vmatmul.mubr.f32.gmra.mxu0 %v1674
      %v2094 = vpop.f32.mrf.mxu0
      %v2095 = vadd.f32 %v1870, %v2094
      %v2096 = vpop.f32.mrf.mxu0
      %2097 = vmatprep.mubr.f32.mxu0 0.0
      %2098 = vmatmul.mubr.f32.gmra.mxu0 %v1677
      %v2099 = vpop.f32.mrf.mxu0
      %v2100 = vadd.f32 %v1875, %v2099
      %v2101 = vpop.f32.mrf.mxu0
      %2102 = vmatprep.mubr.f32.mxu0 0.0
      %2103 = vmatmul.mubr.f32.gmra.mxu0 %v1680
      %v2104 = vpop.f32.mrf.mxu0
      %v2105 = vadd.f32 %v1880, %v2104
      %v2106 = vpop.f32.mrf.mxu0
      %2107 = vmatprep.mubr.f32.mxu0 0.0
      %2108 = vmatmul.mubr.f32.gmra.mxu0 %v1683
      %v2109 = vpop.f32.mrf.mxu0
      %v2110 = vadd.f32 %v1885, %v2109
      %v2111 = vpop.f32.mrf.mxu0
      %2112 = vmatprep.mubr.f32.mxu0 0.0
      %2113 = vmatmul.mubr.f32.gmra.mxu0 %v1686
      %v2114 = vpop.f32.mrf.mxu0
      %v2115 = vadd.f32 %v1890, %v2114
      %v2116 = vpop.f32.mrf.mxu0
      %2117 = vmatprep.mubr.f32.mxu0 0.0
      %2118 = vmatmul.mubr.f32.gmra.mxu0 %v1689
      %v2119 = vpop.f32.mrf.mxu0
      %v2120 = vadd.f32 %v1895, %v2119
      %v2121 = vpop.f32.mrf.mxu0
      %2122 = vmatprep.mubr.f32.mxu0 0.0
      %2123 = vmatmul.mubr.f32.gmra.mxu0 %v1692
      %v2124 = vpop.f32.mrf.mxu0
      %v2125 = vadd.f32 %v1900, %v2124
      %v2126 = vpop.f32.mrf.mxu0
      %2127 = vmatprep.mubr.f32.mxu0 0.0
      %2128 = vmatmul.mubr.f32.gmra.mxu0 %v1695
      %v2129 = vpop.f32.mrf.mxu0
      %v2130 = vadd.f32 %v1905, %v2129
      %v2131 = vpop.f32.mrf.mxu0
      %2132 = vmatprep.mubr.f32.mxu0 0.0
      %2133 = vmatmul.mubr.f32.gmra.mxu0 %v1698
      %v2134 = vpop.f32.mrf.mxu0
      %v2135 = vadd.f32 %v1910, %v2134
      %v2136 = vpop.f32.mrf.mxu0
      %2137 = vmatprep.mubr.f32.mxu0 0.0
      %2138 = vmatmul.mubr.f32.gmra.mxu0 %v1701
      %v2139 = vpop.f32.mrf.mxu0
      %v2140 = vadd.f32 %v1915, %v2139
      %v2141 = vpop.f32.mrf.mxu0
      %2142 = vmatprep.mubr.f32.mxu0 0.0
      %2143 = vmatmul.mubr.f32.gmra.mxu0 %v1704
      %v2144 = vpop.f32.mrf.mxu0
      %v2145 = vadd.f32 %v1920, %v2144
      %v2146 = vpop.f32.mrf.mxu0
      %2147 = vmatprep.mubr.f32.mxu0 0.0
      %2148 = vmatmul.mubr.f32.gmra.mxu0 %v1707
      %v2149 = vpop.f32.mrf.mxu0
      %v2150 = vadd.f32 %v1925, %v2149
      %v2151 = vpop.f32.mrf.mxu0
      %2152 = vmatprep.mubr.f32.mxu0 0.0
      %2153 = vmatmul.mubr.f32.gmra.mxu0 %v1710
      %v2154 = vpop.f32.mrf.mxu0
      %v2155 = vadd.f32 %v1930, %v2154
      %v2156 = vpop.f32.mrf.mxu0
      %2157 = vmatprep.mubr.f32.mxu0 0.0
      %2158 = vmatmul.mubr.f32.gmra.mxu0 %v1713
      %v2159 = vpop.f32.mrf.mxu0
      %v2160 = vadd.f32 %v1935, %v2159
      %v2161 = vpop.f32.mrf.mxu0
      %2162 = vmatprep.mubr.f32.mxu0 0.0
      %2163 = vmatmul.mubr.f32.gmra.mxu0 %v1716
      %v2164 = vpop.f32.mrf.mxu0
      %v2165 = vadd.f32 %v1940, %v2164
      %v2166 = vpop.f32.mrf.mxu0
      %2167 = vdwg.mxu0
      %v2168 = vmax.f32 %v1493, %v2010
      %v2169 = vmax.f32 %v1494, %v2015
      %v2170 = vmax.f32 %v1495, %v2020
      %v2171 = vmax.f32 %v1496, %v2025
      %v2172 = vmax.f32 %v1497, %v2030
      %v2173 = vmax.f32 %v1498, %v2035
      %v2174 = vmax.f32 %v1499, %v2040
      %v2175 = vmax.f32 %v1500, %v2045
      %v2176 = vmax.f32 %v1501, %v2050
      %v2177 = vmax.f32 %v1502, %v2055
      %v2178 = vmax.f32 %v1503, %v2060
      %v2179 = vmax.f32 %v1504, %v2065
      %v2180 = vmax.f32 %v1505, %v2070
      %v2181 = vmax.f32 %v1506, %v2075
      %v2182 = vmax.f32 %v1507, %v2080
      %v2183 = vmax.f32 %v1508, %v2085
      %v2184 = vmax.f32 %v1509, %v2090
      %v2185 = vmax.f32 %v1510, %v2095
      %v2186 = vmax.f32 %v1511, %v2100
      %v2187 = vmax.f32 %v1512, %v2105
      %v2188 = vmax.f32 %v1513, %v2110
      %v2189 = vmax.f32 %v1514, %v2115
      %v2190 = vmax.f32 %v1515, %v2120
      %v2191 = vmax.f32 %v1516, %v2125
      %v2192 = vmax.f32 %v1517, %v2130
      %v2193 = vmax.f32 %v1518, %v2135
      %v2194 = vmax.f32 %v1519, %v2140
      %v2195 = vmax.f32 %v1520, %v2145
      %v2196 = vmax.f32 %v1521, %v2150
      %v2197 = vmax.f32 %v1522, %v2155
      %v2198 = vmax.f32 %v1523, %v2160
      %v2199 = vmax.f32 %v1524, %v2165
      %s2200 = scalar_lea.vmem %s165, 2304
      %v2201 = vld [vmem:[%s2200] sm:$0xff]
      %v2202 = vld [vmem:[%s2200 + $0x8] sm:$0xff]
      %v2203 = vld [vmem:[%s2200 + $0x10] sm:$0xff]
      %v2204 = vld [vmem:[%s2200 + $0x18] sm:$0xff]
      %v2205 = vld [vmem:[%s2200 + $0x20] sm:$0xff]
      %v2206 = vld [vmem:[%s2200 + $0x28] sm:$0xff]
      %v2207 = vld [vmem:[%s2200 + $0x30] sm:$0xff]
      %v2208 = vld [vmem:[%s2200 + $0x38] sm:$0xff]
      %v2209 = vld [vmem:[%s2200 + $0x40] sm:$0xff]
      %v2210 = vld [vmem:[%s2200 + $0x48] sm:$0xff]
      %v2211 = vld [vmem:[%s2200 + $0x50] sm:$0xff]
      %v2212 = vld [vmem:[%s2200 + $0x58] sm:$0xff]
      %v2213 = vld [vmem:[%s2200 + $0x60] sm:$0xff]
      %v2214 = vld [vmem:[%s2200 + $0x68] sm:$0xff]
      %v2215 = vld [vmem:[%s2200 + $0x70] sm:$0xff]
      %v2216 = vld [vmem:[%s2200 + $0x78] sm:$0xff]
      %v2217 = vld [vmem:[%s2200 + $0x80] sm:$0xff]
      %v2218 = vld [vmem:[%s2200 + $0x88] sm:$0xff]
      %v2219 = vld [vmem:[%s2200 + $0x90] sm:$0xff]
      %v2220 = vld [vmem:[%s2200 + $0x98] sm:$0xff]
      %v2221 = vld [vmem:[%s2200 + $0xa0] sm:$0xff]
      %v2222 = vld [vmem:[%s2200 + $0xa8] sm:$0xff]
      %v2223 = vld [vmem:[%s2200 + $0xb0] sm:$0xff]
      %v2224 = vld [vmem:[%s2200 + $0xb8] sm:$0xff]
      %v2225 = vld [vmem:[%s2200 + $0xc0] sm:$0xff]
      %v2226 = vld [vmem:[%s2200 + $0xc8] sm:$0xff]
      %v2227 = vld [vmem:[%s2200 + $0xd0] sm:$0xff]
      %v2228 = vld [vmem:[%s2200 + $0xd8] sm:$0xff]
      %v2229 = vld [vmem:[%s2200 + $0xe0] sm:$0xff]
      %v2230 = vld [vmem:[%s2200 + $0xe8] sm:$0xff]
      %v2231 = vld [vmem:[%s2200 + $0xf0] sm:$0xff]
      %v2232 = vld [vmem:[%s2200 + $0xf8] sm:$0xff]
      %v2233 = vld [vmem:[%s2200 + $0x100] sm:$0xff]
      %v2234 = vld [vmem:[%s2200 + $0x108] sm:$0xff]
      %v2235 = vld [vmem:[%s2200 + $0x110] sm:$0xff]
      %v2236 = vld [vmem:[%s2200 + $0x118] sm:$0xff]
      %v2237 = vld [vmem:[%s2200 + $0x120] sm:$0xff]
      %v2238 = vld [vmem:[%s2200 + $0x128] sm:$0xff]
      %v2239 = vld [vmem:[%s2200 + $0x130] sm:$0xff]
      %v2240 = vld [vmem:[%s2200 + $0x138] sm:$0xff]
      %v2241 = vld [vmem:[%s2200 + $0x140] sm:$0xff]
      %v2242 = vld [vmem:[%s2200 + $0x148] sm:$0xff]
      %v2243 = vld [vmem:[%s2200 + $0x150] sm:$0xff]
      %v2244 = vld [vmem:[%s2200 + $0x158] sm:$0xff]
      %v2245 = vld [vmem:[%s2200 + $0x160] sm:$0xff]
      %v2246 = vld [vmem:[%s2200 + $0x168] sm:$0xff]
      %v2247 = vld [vmem:[%s2200 + $0x170] sm:$0xff]
      %v2248 = vld [vmem:[%s2200 + $0x178] sm:$0xff]
      %v2249 = vld [vmem:[%s2200 + $0x180] sm:$0xff]
      %v2250 = vld [vmem:[%s2200 + $0x188] sm:$0xff]
      %v2251 = vld [vmem:[%s2200 + $0x190] sm:$0xff]
      %v2252 = vld [vmem:[%s2200 + $0x198] sm:$0xff]
      %v2253 = vld [vmem:[%s2200 + $0x1a0] sm:$0xff]
      %v2254 = vld [vmem:[%s2200 + $0x1a8] sm:$0xff]
      %v2255 = vld [vmem:[%s2200 + $0x1b0] sm:$0xff]
      %v2256 = vld [vmem:[%s2200 + $0x1b8] sm:$0xff]
      %v2257 = vld [vmem:[%s2200 + $0x1c0] sm:$0xff]
      %v2258 = vld [vmem:[%s2200 + $0x1c8] sm:$0xff]
      %v2259 = vld [vmem:[%s2200 + $0x1d0] sm:$0xff]
      %v2260 = vld [vmem:[%s2200 + $0x1d8] sm:$0xff]
      %v2261 = vld [vmem:[%s2200 + $0x1e0] sm:$0xff]
      %v2262 = vld [vmem:[%s2200 + $0x1e8] sm:$0xff]
      %v2263 = vld [vmem:[%s2200 + $0x1f0] sm:$0xff]
      %v2264 = vld [vmem:[%s2200 + $0x1f8] sm:$0xff]
      %v2265 = vld [vmem:[%s2200 + $0x200] sm:$0xff]
      %v2266 = vld [vmem:[%s2200 + $0x208] sm:$0xff]
      %v2267 = vld [vmem:[%s2200 + $0x210] sm:$0xff]
      %v2268 = vld [vmem:[%s2200 + $0x218] sm:$0xff]
      %v2269 = vld [vmem:[%s2200 + $0x220] sm:$0xff]
      %v2270 = vld [vmem:[%s2200 + $0x228] sm:$0xff]
      %v2271 = vld [vmem:[%s2200 + $0x230] sm:$0xff]
      %v2272 = vld [vmem:[%s2200 + $0x238] sm:$0xff]
      %v2273 = vld [vmem:[%s2200 + $0x240] sm:$0xff]
      %v2274 = vld [vmem:[%s2200 + $0x248] sm:$0xff]
      %v2275 = vld [vmem:[%s2200 + $0x250] sm:$0xff]
      %v2276 = vld [vmem:[%s2200 + $0x258] sm:$0xff]
      %v2277 = vld [vmem:[%s2200 + $0x260] sm:$0xff]
      %v2278 = vld [vmem:[%s2200 + $0x268] sm:$0xff]
      %v2279 = vld [vmem:[%s2200 + $0x270] sm:$0xff]
      %v2280 = vld [vmem:[%s2200 + $0x278] sm:$0xff]
      %v2281 = vld [vmem:[%s2200 + $0x280] sm:$0xff]
      %v2282 = vld [vmem:[%s2200 + $0x288] sm:$0xff]
      %v2283 = vld [vmem:[%s2200 + $0x290] sm:$0xff]
      %v2284 = vld [vmem:[%s2200 + $0x298] sm:$0xff]
      %v2285 = vld [vmem:[%s2200 + $0x2a0] sm:$0xff]
      %v2286 = vld [vmem:[%s2200 + $0x2a8] sm:$0xff]
      %v2287 = vld [vmem:[%s2200 + $0x2b0] sm:$0xff]
      %v2288 = vld [vmem:[%s2200 + $0x2b8] sm:$0xff]
      %v2289 = vld [vmem:[%s2200 + $0x2c0] sm:$0xff]
      %v2290 = vld [vmem:[%s2200 + $0x2c8] sm:$0xff]
      %v2291 = vld [vmem:[%s2200 + $0x2d0] sm:$0xff]
      %v2292 = vld [vmem:[%s2200 + $0x2d8] sm:$0xff]
      %v2293 = vld [vmem:[%s2200 + $0x2e0] sm:$0xff]
      %v2294 = vld [vmem:[%s2200 + $0x2e8] sm:$0xff]
      %v2295 = vld [vmem:[%s2200 + $0x2f0] sm:$0xff]
      %v2296 = vld [vmem:[%s2200 + $0x2f8] sm:$0xff]
      %v2298 = vsel %vm303, %v2203, 0
      %v2301 = vsel %vm303, %v2206, 0
      %v2304 = vsel %vm303, %v2209, 0
      %v2307 = vsel %vm303, %v2212, 0
      %v2310 = vsel %vm303, %v2215, 0
      %v2313 = vsel %vm303, %v2218, 0
      %v2316 = vsel %vm303, %v2221, 0
      %v2319 = vsel %vm303, %v2224, 0
      %v2322 = vsel %vm303, %v2227, 0
      %v2325 = vsel %vm303, %v2230, 0
      %v2328 = vsel %vm303, %v2233, 0
      %v2331 = vsel %vm303, %v2236, 0
      %v2334 = vsel %vm303, %v2239, 0
      %v2337 = vsel %vm303, %v2242, 0
      %v2340 = vsel %vm303, %v2245, 0
      %v2343 = vsel %vm303, %v2248, 0
      %v2346 = vsel %vm303, %v2251, 0
      %v2349 = vsel %vm303, %v2254, 0
      %v2352 = vsel %vm303, %v2257, 0
      %v2355 = vsel %vm303, %v2260, 0
      %v2358 = vsel %vm303, %v2263, 0
      %v2361 = vsel %vm303, %v2266, 0
      %v2364 = vsel %vm303, %v2269, 0
      %v2367 = vsel %vm303, %v2272, 0
      %v2370 = vsel %vm303, %v2275, 0
      %v2373 = vsel %vm303, %v2278, 0
      %v2376 = vsel %vm303, %v2281, 0
      %v2379 = vsel %vm303, %v2284, 0
      %v2382 = vsel %vm303, %v2287, 0
      %v2385 = vsel %vm303, %v2290, 0
      %v2388 = vsel %vm303, %v2293, 0
      %v2391 = vsel %vm303, %v2296, 0
      %2393 = vmatprep.subr.mxu0 0.0
      %2394 = vmatpush1.msra.mxu0 %v186
      %2395 = vmatprep.subr.mxu0 0.0
      %2396 = vmatpush1.msra.mxu0 %v185
      %2397 = vmatprep.subr.mxu0 0.0
      %2398 = vmatpush1.msra.mxu0 %v184
      %2399 = vmatprep.subr.mxu0 0.0
      %2400 = vmatpush1.msra.mxu0 %v183
      %2401 = vmatprep.subr.mxu0 0.0
      %2402 = vmatpush1.msra.mxu0 %v182
      %2403 = vmatprep.subr.mxu0 0.0
      %2404 = vmatpush1.msra.mxu0 %v181
      %2405 = vmatprep.subr.mxu0 0.0
      %2406 = vmatpush1.msra.mxu0 %v180
      %2407 = vmatprep.subr.mxu0 0.0
      %2408 = vmatpush1.msra.mxu0 %v179
      %2409 = vmatprep.subr.mxu0 0.0
      %2410 = vmatpush1.msra.mxu0 %v178
      %2411 = vmatprep.subr.mxu0 0.0
      %2412 = vmatpush1.msra.mxu0 %v177
      %2413 = vmatprep.subr.mxu0 0.0
      %2414 = vmatpush1.msra.mxu0 %v176
      %2415 = vmatprep.subr.mxu0 0.0
      %2416 = vmatpush1.msra.mxu0 %v175
      %2417 = vmatprep.subr.mxu0 0.0
      %2418 = vmatpush1.msra.mxu0 %v174
      %2419 = vmatprep.subr.mxu0 0.0
      %2420 = vmatpush1.msra.mxu0 %v173
      %2421 = vmatprep.subr.mxu0 0.0
      %2422 = vmatpush1.msra.mxu0 %v172
      %2423 = vmatprep.subr.mxu0 0.0
      %2424 = vmatpush1.msra.mxu0 %v171
      %2425 = vmatprep.subr.mxu0 0.0
      %2426 = vmatpush2.msra.mxu0 %v202
      %2427 = vmatprep.subr.mxu0 0.0
      %2428 = vmatpush2.msra.mxu0 %v201
      %2429 = vmatprep.subr.mxu0 0.0
      %2430 = vmatpush2.msra.mxu0 %v200
      %2431 = vmatprep.subr.mxu0 0.0
      %2432 = vmatpush2.msra.mxu0 %v199
      %2433 = vmatprep.subr.mxu0 0.0
      %2434 = vmatpush2.msra.mxu0 %v198
      %2435 = vmatprep.subr.mxu0 0.0
      %2436 = vmatpush2.msra.mxu0 %v197
      %2437 = vmatprep.subr.mxu0 0.0
      %2438 = vmatpush2.msra.mxu0 %v196
      %2439 = vmatprep.subr.mxu0 0.0
      %2440 = vmatpush2.msra.mxu0 %v195
      %2441 = vmatprep.subr.mxu0 0.0
      %2442 = vmatpush2.msra.mxu0 %v194
      %2443 = vmatprep.subr.mxu0 0.0
      %2444 = vmatpush2.msra.mxu0 %v193
      %2445 = vmatprep.subr.mxu0 0.0
      %2446 = vmatpush2.msra.mxu0 %v192
      %2447 = vmatprep.subr.mxu0 0.0
      %2448 = vmatpush2.msra.mxu0 %v191
      %2449 = vmatprep.subr.mxu0 0.0
      %2450 = vmatpush2.msra.mxu0 %v190
      %2451 = vmatprep.subr.mxu0 0.0
      %2452 = vmatpush2.msra.mxu0 %v189
      %2453 = vmatprep.subr.mxu0 0.0
      %2454 = vmatpush2.msra.mxu0 %v188
      %2455 = vmatprep.subr.mxu0 0.0
      %2456 = vmatpush2.msra.mxu0 %v187
      %2457 = vmatprep.mubr.f32.mxu0 %v2202
      %2458 = vmatmul.mubr.f32.gmra.mxu0 %v2201
      %v2459 = vpop.f32.mrf.mxu0
      %v2460 = vadd.f32 0.0, %v2459
      %v2461 = vpop.f32.mrf.mxu0
      %2462 = vmatprep.mubr.f32.mxu0 %v2205
      %2463 = vmatmul.mubr.f32.gmra.mxu0 %v2204
      %v2464 = vpop.f32.mrf.mxu0
      %v2465 = vadd.f32 0.0, %v2464
      %v2466 = vpop.f32.mrf.mxu0
      %2467 = vmatprep.mubr.f32.mxu0 %v2208
      %2468 = vmatmul.mubr.f32.gmra.mxu0 %v2207
      %v2469 = vpop.f32.mrf.mxu0
      %v2470 = vadd.f32 0.0, %v2469
      %v2471 = vpop.f32.mrf.mxu0
      %2472 = vmatprep.mubr.f32.mxu0 %v2211
      %2473 = vmatmul.mubr.f32.gmra.mxu0 %v2210
      %v2474 = vpop.f32.mrf.mxu0
      %v2475 = vadd.f32 0.0, %v2474
      %v2476 = vpop.f32.mrf.mxu0
      %2477 = vmatprep.mubr.f32.mxu0 %v2214
      %2478 = vmatmul.mubr.f32.gmra.mxu0 %v2213
      %v2479 = vpop.f32.mrf.mxu0
      %v2480 = vadd.f32 0.0, %v2479
      %v2481 = vpop.f32.mrf.mxu0
      %2482 = vmatprep.mubr.f32.mxu0 %v2217
      %2483 = vmatmul.mubr.f32.gmra.mxu0 %v2216
      %v2484 = vpop.f32.mrf.mxu0
      %v2485 = vadd.f32 0.0, %v2484
      %v2486 = vpop.f32.mrf.mxu0
      %2487 = vmatprep.mubr.f32.mxu0 %v2220
      %2488 = vmatmul.mubr.f32.gmra.mxu0 %v2219
      %v2489 = vpop.f32.mrf.mxu0
      %v2490 = vadd.f32 0.0, %v2489
      %v2491 = vpop.f32.mrf.mxu0
      %2492 = vmatprep.mubr.f32.mxu0 %v2223
      %2493 = vmatmul.mubr.f32.gmra.mxu0 %v2222
      %v2494 = vpop.f32.mrf.mxu0
      %v2495 = vadd.f32 0.0, %v2494
      %v2496 = vpop.f32.mrf.mxu0
      %2497 = vmatprep.mubr.f32.mxu0 %v2226
      %2498 = vmatmul.mubr.f32.gmra.mxu0 %v2225
      %v2499 = vpop.f32.mrf.mxu0
      %v2500 = vadd.f32 0.0, %v2499
      %v2501 = vpop.f32.mrf.mxu0
      %2502 = vmatprep.mubr.f32.mxu0 %v2229
      %2503 = vmatmul.mubr.f32.gmra.mxu0 %v2228
      %v2504 = vpop.f32.mrf.mxu0
      %v2505 = vadd.f32 0.0, %v2504
      %v2506 = vpop.f32.mrf.mxu0
      %2507 = vmatprep.mubr.f32.mxu0 %v2232
      %2508 = vmatmul.mubr.f32.gmra.mxu0 %v2231
      %v2509 = vpop.f32.mrf.mxu0
      %v2510 = vadd.f32 0.0, %v2509
      %v2511 = vpop.f32.mrf.mxu0
      %2512 = vmatprep.mubr.f32.mxu0 %v2235
      %2513 = vmatmul.mubr.f32.gmra.mxu0 %v2234
      %v2514 = vpop.f32.mrf.mxu0
      %v2515 = vadd.f32 0.0, %v2514
      %v2516 = vpop.f32.mrf.mxu0
      %2517 = vmatprep.mubr.f32.mxu0 %v2238
      %2518 = vmatmul.mubr.f32.gmra.mxu0 %v2237
      %v2519 = vpop.f32.mrf.mxu0
      %v2520 = vadd.f32 0.0, %v2519
      %v2521 = vpop.f32.mrf.mxu0
      %2522 = vmatprep.mubr.f32.mxu0 %v2241
      %2523 = vmatmul.mubr.f32.gmra.mxu0 %v2240
      %v2524 = vpop.f32.mrf.mxu0
      %v2525 = vadd.f32 0.0, %v2524
      %v2526 = vpop.f32.mrf.mxu0
      %2527 = vmatprep.mubr.f32.mxu0 %v2244
      %2528 = vmatmul.mubr.f32.gmra.mxu0 %v2243
      %v2529 = vpop.f32.mrf.mxu0
      %v2530 = vadd.f32 0.0, %v2529
      %v2531 = vpop.f32.mrf.mxu0
      %2532 = vmatprep.mubr.f32.mxu0 %v2247
      %2533 = vmatmul.mubr.f32.gmra.mxu0 %v2246
      %v2534 = vpop.f32.mrf.mxu0
      %v2535 = vadd.f32 0.0, %v2534
      %v2536 = vpop.f32.mrf.mxu0
      %2537 = vmatprep.mubr.f32.mxu0 %v2250
      %2538 = vmatmul.mubr.f32.gmra.mxu0 %v2249
      %v2539 = vpop.f32.mrf.mxu0
      %v2540 = vadd.f32 0.0, %v2539
      %v2541 = vpop.f32.mrf.mxu0
      %2542 = vmatprep.mubr.f32.mxu0 %v2253
      %2543 = vmatmul.mubr.f32.gmra.mxu0 %v2252
      %v2544 = vpop.f32.mrf.mxu0
      %v2545 = vadd.f32 0.0, %v2544
      %v2546 = vpop.f32.mrf.mxu0
      %2547 = vmatprep.mubr.f32.mxu0 %v2256
      %2548 = vmatmul.mubr.f32.gmra.mxu0 %v2255
      %v2549 = vpop.f32.mrf.mxu0
      %v2550 = vadd.f32 0.0, %v2549
      %v2551 = vpop.f32.mrf.mxu0
      %2552 = vmatprep.mubr.f32.mxu0 %v2259
      %2553 = vmatmul.mubr.f32.gmra.mxu0 %v2258
      %v2554 = vpop.f32.mrf.mxu0
      %v2555 = vadd.f32 0.0, %v2554
      %v2556 = vpop.f32.mrf.mxu0
      %2557 = vmatprep.mubr.f32.mxu0 %v2262
      %2558 = vmatmul.mubr.f32.gmra.mxu0 %v2261
      %v2559 = vpop.f32.mrf.mxu0
      %v2560 = vadd.f32 0.0, %v2559
      %v2561 = vpop.f32.mrf.mxu0
      %2562 = vmatprep.mubr.f32.mxu0 %v2265
      %2563 = vmatmul.mubr.f32.gmra.mxu0 %v2264
      %v2564 = vpop.f32.mrf.mxu0
      %v2565 = vadd.f32 0.0, %v2564
      %v2566 = vpop.f32.mrf.mxu0
      %2567 = vmatprep.mubr.f32.mxu0 %v2268
      %2568 = vmatmul.mubr.f32.gmra.mxu0 %v2267
      %v2569 = vpop.f32.mrf.mxu0
      %v2570 = vadd.f32 0.0, %v2569
      %v2571 = vpop.f32.mrf.mxu0
      %2572 = vmatprep.mubr.f32.mxu0 %v2271
      %2573 = vmatmul.mubr.f32.gmra.mxu0 %v2270
      %v2574 = vpop.f32.mrf.mxu0
      %v2575 = vadd.f32 0.0, %v2574
      %v2576 = vpop.f32.mrf.mxu0
      %2577 = vmatprep.mubr.f32.mxu0 %v2274
      %2578 = vmatmul.mubr.f32.gmra.mxu0 %v2273
      %v2579 = vpop.f32.mrf.mxu0
      %v2580 = vadd.f32 0.0, %v2579
      %v2581 = vpop.f32.mrf.mxu0
      %2582 = vmatprep.mubr.f32.mxu0 %v2277
      %2583 = vmatmul.mubr.f32.gmra.mxu0 %v2276
      %v2584 = vpop.f32.mrf.mxu0
      %v2585 = vadd.f32 0.0, %v2584
      %v2586 = vpop.f32.mrf.mxu0
      %2587 = vmatprep.mubr.f32.mxu0 %v2280
      %2588 = vmatmul.mubr.f32.gmra.mxu0 %v2279
      %v2589 = vpop.f32.mrf.mxu0
      %v2590 = vadd.f32 0.0, %v2589
      %v2591 = vpop.f32.mrf.mxu0
      %2592 = vmatprep.mubr.f32.mxu0 %v2283
      %2593 = vmatmul.mubr.f32.gmra.mxu0 %v2282
      %v2594 = vpop.f32.mrf.mxu0
      %v2595 = vadd.f32 0.0, %v2594
      %v2596 = vpop.f32.mrf.mxu0
      %2597 = vmatprep.mubr.f32.mxu0 %v2286
      %2598 = vmatmul.mubr.f32.gmra.mxu0 %v2285
      %v2599 = vpop.f32.mrf.mxu0
      %v2600 = vadd.f32 0.0, %v2599
      %v2601 = vpop.f32.mrf.mxu0
      %2602 = vmatprep.mubr.f32.mxu0 %v2289
      %2603 = vmatmul.mubr.f32.gmra.mxu0 %v2288
      %v2604 = vpop.f32.mrf.mxu0
      %v2605 = vadd.f32 0.0, %v2604
      %v2606 = vpop.f32.mrf.mxu0
      %2607 = vmatprep.mubr.f32.mxu0 %v2292
      %2608 = vmatmul.mubr.f32.gmra.mxu0 %v2291
      %v2609 = vpop.f32.mrf.mxu0
      %v2610 = vadd.f32 0.0, %v2609
      %v2611 = vpop.f32.mrf.mxu0
      %2612 = vmatprep.mubr.f32.mxu0 %v2295
      %2613 = vmatmul.mubr.f32.gmra.mxu0 %v2294
      %v2614 = vpop.f32.mrf.mxu0
      %v2615 = vadd.f32 0.0, %v2614
      %v2616 = vpop.f32.mrf.mxu0
      %2617 = vdwg.mxu0
      %2618 = vmatprep.subr.mxu0 0.0
      %2619 = vmatpush1.msra.mxu0 0.0
      %2620 = vmatprep.subr.mxu0 0.0
      %2621 = vmatpush1.msra.mxu0 0.0
      %2622 = vmatprep.subr.mxu0 0.0
      %2623 = vmatpush1.msra.mxu0 0.0
      %2624 = vmatprep.subr.mxu0 0.0
      %2625 = vmatpush1.msra.mxu0 0.0
      %2626 = vmatprep.subr.mxu0 0.0
      %2627 = vmatpush1.msra.mxu0 0.0
      %2628 = vmatprep.subr.mxu0 0.0
      %2629 = vmatpush1.msra.mxu0 0.0
      %2630 = vmatprep.subr.mxu0 0.0
      %2631 = vmatpush1.msra.mxu0 0.0
      %2632 = vmatprep.subr.mxu0 0.0
      %2633 = vmatpush1.msra.mxu0 0.0
      %2634 = vmatprep.subr.mxu0 0.0
      %2635 = vmatpush1.msra.mxu0 0.0
      %2636 = vmatprep.subr.mxu0 0.0
      %2637 = vmatpush1.msra.mxu0 0.0
      %2638 = vmatprep.subr.mxu0 0.0
      %2639 = vmatpush1.msra.mxu0 0.0
      %2640 = vmatprep.subr.mxu0 0.0
      %2641 = vmatpush1.msra.mxu0 0.0
      %2642 = vmatprep.subr.mxu0 0.0
      %2643 = vmatpush1.msra.mxu0 %v206
      %2644 = vmatprep.subr.mxu0 0.0
      %2645 = vmatpush1.msra.mxu0 %v205
      %2646 = vmatprep.subr.mxu0 0.0
      %2647 = vmatpush1.msra.mxu0 %v204
      %2648 = vmatprep.subr.mxu0 0.0
      %2649 = vmatpush1.msra.mxu0 %v203
      %2650 = vmatprep.subr.mxu0 0.0
      %2651 = vmatpush2.msra.mxu0 0.0
      %2652 = vmatprep.subr.mxu0 0.0
      %2653 = vmatpush2.msra.mxu0 0.0
      %2654 = vmatprep.subr.mxu0 0.0
      %2655 = vmatpush2.msra.mxu0 0.0
      %2656 = vmatprep.subr.mxu0 0.0
      %2657 = vmatpush2.msra.mxu0 0.0
      %2658 = vmatprep.subr.mxu0 0.0
      %2659 = vmatpush2.msra.mxu0 0.0
      %2660 = vmatprep.subr.mxu0 0.0
      %2661 = vmatpush2.msra.mxu0 0.0
      %2662 = vmatprep.subr.mxu0 0.0
      %2663 = vmatpush2.msra.mxu0 0.0
      %2664 = vmatprep.subr.mxu0 0.0
      %2665 = vmatpush2.msra.mxu0 0.0
      %2666 = vmatprep.subr.mxu0 0.0
      %2667 = vmatpush2.msra.mxu0 0.0
      %2668 = vmatprep.subr.mxu0 0.0
      %2669 = vmatpush2.msra.mxu0 0.0
      %2670 = vmatprep.subr.mxu0 0.0
      %2671 = vmatpush2.msra.mxu0 0.0
      %2672 = vmatprep.subr.mxu0 0.0
      %2673 = vmatpush2.msra.mxu0 0.0
      %2674 = vmatprep.subr.mxu0 0.0
      %2675 = vmatpush2.msra.mxu0 0.0
      %2676 = vmatprep.subr.mxu0 0.0
      %2677 = vmatpush2.msra.mxu0 0.0
      %2678 = vmatprep.subr.mxu0 0.0
      %2679 = vmatpush2.msra.mxu0 0.0
      %2680 = vmatprep.subr.mxu0 0.0
      %2681 = vmatpush2.msra.mxu0 0.0
      %2682 = vmatprep.mubr.f32.mxu0 0.0
      %2683 = vmatmul.mubr.f32.gmra.mxu0 %v2298
      %v2684 = vpop.f32.mrf.mxu0
      %v2685 = vadd.f32 %v2460, %v2684
      %v2686 = vpop.f32.mrf.mxu0
      %2687 = vmatprep.mubr.f32.mxu0 0.0
      %2688 = vmatmul.mubr.f32.gmra.mxu0 %v2301
      %v2689 = vpop.f32.mrf.mxu0
      %v2690 = vadd.f32 %v2465, %v2689
      %v2691 = vpop.f32.mrf.mxu0
      %2692 = vmatprep.mubr.f32.mxu0 0.0
      %2693 = vmatmul.mubr.f32.gmra.mxu0 %v2304
      %v2694 = vpop.f32.mrf.mxu0
      %v2695 = vadd.f32 %v2470, %v2694
      %v2696 = vpop.f32.mrf.mxu0
      %2697 = vmatprep.mubr.f32.mxu0 0.0
      %2698 = vmatmul.mubr.f32.gmra.mxu0 %v2307
      %v2699 = vpop.f32.mrf.mxu0
      %v2700 = vadd.f32 %v2475, %v2699
      %v2701 = vpop.f32.mrf.mxu0
      %2702 = vmatprep.mubr.f32.mxu0 0.0
      %2703 = vmatmul.mubr.f32.gmra.mxu0 %v2310
      %v2704 = vpop.f32.mrf.mxu0
      %v2705 = vadd.f32 %v2480, %v2704
      %v2706 = vpop.f32.mrf.mxu0
      %2707 = vmatprep.mubr.f32.mxu0 0.0
      %2708 = vmatmul.mubr.f32.gmra.mxu0 %v2313
      %v2709 = vpop.f32.mrf.mxu0
      %v2710 = vadd.f32 %v2485, %v2709
      %v2711 = vpop.f32.mrf.mxu0
      %2712 = vmatprep.mubr.f32.mxu0 0.0
      %2713 = vmatmul.mubr.f32.gmra.mxu0 %v2316
      %v2714 = vpop.f32.mrf.mxu0
      %v2715 = vadd.f32 %v2490, %v2714
      %v2716 = vpop.f32.mrf.mxu0
      %2717 = vmatprep.mubr.f32.mxu0 0.0
      %2718 = vmatmul.mubr.f32.gmra.mxu0 %v2319
      %v2719 = vpop.f32.mrf.mxu0
      %v2720 = vadd.f32 %v2495, %v2719
      %v2721 = vpop.f32.mrf.mxu0
      %2722 = vmatprep.mubr.f32.mxu0 0.0
      %2723 = vmatmul.mubr.f32.gmra.mxu0 %v2322
      %v2724 = vpop.f32.mrf.mxu0
      %v2725 = vadd.f32 %v2500, %v2724
      %v2726 = vpop.f32.mrf.mxu0
      %2727 = vmatprep.mubr.f32.mxu0 0.0
      %2728 = vmatmul.mubr.f32.gmra.mxu0 %v2325
      %v2729 = vpop.f32.mrf.mxu0
      %v2730 = vadd.f32 %v2505, %v2729
      %v2731 = vpop.f32.mrf.mxu0
      %2732 = vmatprep.mubr.f32.mxu0 0.0
      %2733 = vmatmul.mubr.f32.gmra.mxu0 %v2328
      %v2734 = vpop.f32.mrf.mxu0
      %v2735 = vadd.f32 %v2510, %v2734
      %v2736 = vpop.f32.mrf.mxu0
      %2737 = vmatprep.mubr.f32.mxu0 0.0
      %2738 = vmatmul.mubr.f32.gmra.mxu0 %v2331
      %v2739 = vpop.f32.mrf.mxu0
      %v2740 = vadd.f32 %v2515, %v2739
      %v2741 = vpop.f32.mrf.mxu0
      %2742 = vmatprep.mubr.f32.mxu0 0.0
      %2743 = vmatmul.mubr.f32.gmra.mxu0 %v2334
      %v2744 = vpop.f32.mrf.mxu0
      %v2745 = vadd.f32 %v2520, %v2744
      %v2746 = vpop.f32.mrf.mxu0
      %2747 = vmatprep.mubr.f32.mxu0 0.0
      %2748 = vmatmul.mubr.f32.gmra.mxu0 %v2337
      %v2749 = vpop.f32.mrf.mxu0
      %v2750 = vadd.f32 %v2525, %v2749
      %v2751 = vpop.f32.mrf.mxu0
      %2752 = vmatprep.mubr.f32.mxu0 0.0
      %2753 = vmatmul.mubr.f32.gmra.mxu0 %v2340
      %v2754 = vpop.f32.mrf.mxu0
      %v2755 = vadd.f32 %v2530, %v2754
      %v2756 = vpop.f32.mrf.mxu0
      %2757 = vmatprep.mubr.f32.mxu0 0.0
      %2758 = vmatmul.mubr.f32.gmra.mxu0 %v2343
      %v2759 = vpop.f32.mrf.mxu0
      %v2760 = vadd.f32 %v2535, %v2759
      %v2761 = vpop.f32.mrf.mxu0
      %2762 = vmatprep.mubr.f32.mxu0 0.0
      %2763 = vmatmul.mubr.f32.gmra.mxu0 %v2346
      %v2764 = vpop.f32.mrf.mxu0
      %v2765 = vadd.f32 %v2540, %v2764
      %v2766 = vpop.f32.mrf.mxu0
      %2767 = vmatprep.mubr.f32.mxu0 0.0
      %2768 = vmatmul.mubr.f32.gmra.mxu0 %v2349
      %v2769 = vpop.f32.mrf.mxu0
      %v2770 = vadd.f32 %v2545, %v2769
      %v2771 = vpop.f32.mrf.mxu0
      %2772 = vmatprep.mubr.f32.mxu0 0.0
      %2773 = vmatmul.mubr.f32.gmra.mxu0 %v2352
      %v2774 = vpop.f32.mrf.mxu0
      %v2775 = vadd.f32 %v2550, %v2774
      %v2776 = vpop.f32.mrf.mxu0
      %2777 = vmatprep.mubr.f32.mxu0 0.0
      %2778 = vmatmul.mubr.f32.gmra.mxu0 %v2355
      %v2779 = vpop.f32.mrf.mxu0
      %v2780 = vadd.f32 %v2555, %v2779
      %v2781 = vpop.f32.mrf.mxu0
      %2782 = vmatprep.mubr.f32.mxu0 0.0
      %2783 = vmatmul.mubr.f32.gmra.mxu0 %v2358
      %v2784 = vpop.f32.mrf.mxu0
      %v2785 = vadd.f32 %v2560, %v2784
      %v2786 = vpop.f32.mrf.mxu0
      %2787 = vmatprep.mubr.f32.mxu0 0.0
      %2788 = vmatmul.mubr.f32.gmra.mxu0 %v2361
      %v2789 = vpop.f32.mrf.mxu0
      %v2790 = vadd.f32 %v2565, %v2789
      %v2791 = vpop.f32.mrf.mxu0
      %2792 = vmatprep.mubr.f32.mxu0 0.0
      %2793 = vmatmul.mubr.f32.gmra.mxu0 %v2364
      %v2794 = vpop.f32.mrf.mxu0
      %v2795 = vadd.f32 %v2570, %v2794
      %v2796 = vpop.f32.mrf.mxu0
      %2797 = vmatprep.mubr.f32.mxu0 0.0
      %2798 = vmatmul.mubr.f32.gmra.mxu0 %v2367
      %v2799 = vpop.f32.mrf.mxu0
      %v2800 = vadd.f32 %v2575, %v2799
      %v2801 = vpop.f32.mrf.mxu0
      %2802 = vmatprep.mubr.f32.mxu0 0.0
      %2803 = vmatmul.mubr.f32.gmra.mxu0 %v2370
      %v2804 = vpop.f32.mrf.mxu0
      %v2805 = vadd.f32 %v2580, %v2804
      %v2806 = vpop.f32.mrf.mxu0
      %2807 = vmatprep.mubr.f32.mxu0 0.0
      %2808 = vmatmul.mubr.f32.gmra.mxu0 %v2373
      %v2809 = vpop.f32.mrf.mxu0
      %v2810 = vadd.f32 %v2585, %v2809
      %v2811 = vpop.f32.mrf.mxu0
      %2812 = vmatprep.mubr.f32.mxu0 0.0
      %2813 = vmatmul.mubr.f32.gmra.mxu0 %v2376
      %v2814 = vpop.f32.mrf.mxu0
      %v2815 = vadd.f32 %v2590, %v2814
      %v2816 = vpop.f32.mrf.mxu0
      %2817 = vmatprep.mubr.f32.mxu0 0.0
      %2818 = vmatmul.mubr.f32.gmra.mxu0 %v2379
      %v2819 = vpop.f32.mrf.mxu0
      %v2820 = vadd.f32 %v2595, %v2819
      %v2821 = vpop.f32.mrf.mxu0
      %2822 = vmatprep.mubr.f32.mxu0 0.0
      %2823 = vmatmul.mubr.f32.gmra.mxu0 %v2382
      %v2824 = vpop.f32.mrf.mxu0
      %v2825 = vadd.f32 %v2600, %v2824
      %v2826 = vpop.f32.mrf.mxu0
      %2827 = vmatprep.mubr.f32.mxu0 0.0
      %2828 = vmatmul.mubr.f32.gmra.mxu0 %v2385
      %v2829 = vpop.f32.mrf.mxu0
      %v2830 = vadd.f32 %v2605, %v2829
      %v2831 = vpop.f32.mrf.mxu0
      %2832 = vmatprep.mubr.f32.mxu0 0.0
      %2833 = vmatmul.mubr.f32.gmra.mxu0 %v2388
      %v2834 = vpop.f32.mrf.mxu0
      %v2835 = vadd.f32 %v2610, %v2834
      %v2836 = vpop.f32.mrf.mxu0
      %2837 = vmatprep.mubr.f32.mxu0 0.0
      %2838 = vmatmul.mubr.f32.gmra.mxu0 %v2391
      %v2839 = vpop.f32.mrf.mxu0
      %v2840 = vadd.f32 %v2615, %v2839
      %v2841 = vpop.f32.mrf.mxu0
      %2842 = vdwg.mxu0
      %v2843 = vmax.f32 %v2168, %v2685
      %v2844 = vmax.f32 %v2169, %v2690
      %v2845 = vmax.f32 %v2170, %v2695
      %v2846 = vmax.f32 %v2171, %v2700
      %v2847 = vmax.f32 %v2172, %v2705
      %v2848 = vmax.f32 %v2173, %v2710
      %v2849 = vmax.f32 %v2174, %v2715
      %v2850 = vmax.f32 %v2175, %v2720
      %v2851 = vmax.f32 %v2176, %v2725
      %v2852 = vmax.f32 %v2177, %v2730
      %v2853 = vmax.f32 %v2178, %v2735
      %v2854 = vmax.f32 %v2179, %v2740
      %v2855 = vmax.f32 %v2180, %v2745
      %v2856 = vmax.f32 %v2181, %v2750
      %v2857 = vmax.f32 %v2182, %v2755
      %v2858 = vmax.f32 %v2183, %v2760
      %v2859 = vmax.f32 %v2184, %v2765
      %v2860 = vmax.f32 %v2185, %v2770
      %v2861 = vmax.f32 %v2186, %v2775
      %v2862 = vmax.f32 %v2187, %v2780
      %v2863 = vmax.f32 %v2188, %v2785
      %v2864 = vmax.f32 %v2189, %v2790
      %v2865 = vmax.f32 %v2190, %v2795
      %v2866 = vmax.f32 %v2191, %v2800
      %v2867 = vmax.f32 %v2192, %v2805
      %v2868 = vmax.f32 %v2193, %v2810
      %v2869 = vmax.f32 %v2194, %v2815
      %v2870 = vmax.f32 %v2195, %v2820
      %v2871 = vmax.f32 %v2196, %v2825
      %v2872 = vmax.f32 %v2197, %v2830
      %v2873 = vmax.f32 %v2198, %v2835
      %v2874 = vmax.f32 %v2199, %v2840
      %v2875 = vld [vmem:[%s2] sm:$0x1]
      %v2877 = vlaneseq
      %v2878 = vshrl.u32 %v2877, 7
      %v2879 = vsub.s32 0, %v2878
      %v2880 = vrot.slane %v2875, %v2879
      %v2882 = vadd.f32 %v2843, %v2880
      %v2883 = vadd.f32 %v2844, %v2880
      %v2884 = vadd.f32 %v2845, %v2880
      %v2885 = vadd.f32 %v2846, %v2880
      %v2886 = vadd.f32 %v2847, %v2880
      %v2887 = vadd.f32 %v2848, %v2880
      %v2888 = vadd.f32 %v2849, %v2880
      %v2889 = vadd.f32 %v2850, %v2880
      %v2890 = vadd.f32 %v2851, %v2880
      %v2891 = vadd.f32 %v2852, %v2880
      %v2892 = vadd.f32 %v2853, %v2880
      %v2893 = vadd.f32 %v2854, %v2880
      %v2894 = vadd.f32 %v2855, %v2880
      %v2895 = vadd.f32 %v2856, %v2880
      %v2896 = vadd.f32 %v2857, %v2880
      %v2897 = vadd.f32 %v2858, %v2880
      %v2898 = vadd.f32 %v2859, %v2880
      %v2899 = vadd.f32 %v2860, %v2880
      %v2900 = vadd.f32 %v2861, %v2880
      %v2901 = vadd.f32 %v2862, %v2880
      %v2902 = vadd.f32 %v2863, %v2880
      %v2903 = vadd.f32 %v2864, %v2880
      %v2904 = vadd.f32 %v2865, %v2880
      %v2905 = vadd.f32 %v2866, %v2880
      %v2906 = vadd.f32 %v2867, %v2880
      %v2907 = vadd.f32 %v2868, %v2880
      %v2908 = vadd.f32 %v2869, %v2880
      %v2909 = vadd.f32 %v2870, %v2880
      %v2910 = vadd.f32 %v2871, %v2880
      %v2911 = vadd.f32 %v2872, %v2880
      %v2912 = vadd.f32 %v2873, %v2880
      %v2913 = vadd.f32 %v2874, %v2880
      %v2914 = vmax.f32 %v2882, 0.0
      %v2915 = vmax.f32 %v2883, 0.0
      %v2916 = vmax.f32 %v2884, 0.0
      %v2917 = vmax.f32 %v2885, 0.0
      %v2918 = vmax.f32 %v2886, 0.0
      %v2919 = vmax.f32 %v2887, 0.0
      %v2920 = vmax.f32 %v2888, 0.0
      %v2921 = vmax.f32 %v2889, 0.0
      %v2922 = vmax.f32 %v2890, 0.0
      %v2923 = vmax.f32 %v2891, 0.0
      %v2924 = vmax.f32 %v2892, 0.0
      %v2925 = vmax.f32 %v2893, 0.0
      %v2926 = vmax.f32 %v2894, 0.0
      %v2927 = vmax.f32 %v2895, 0.0
      %v2928 = vmax.f32 %v2896, 0.0
      %v2929 = vmax.f32 %v2897, 0.0
      %v2930 = vmax.f32 %v2898, 0.0
      %v2931 = vmax.f32 %v2899, 0.0
      %v2932 = vmax.f32 %v2900, 0.0
      %v2933 = vmax.f32 %v2901, 0.0
      %v2934 = vmax.f32 %v2902, 0.0
      %v2935 = vmax.f32 %v2903, 0.0
      %v2936 = vmax.f32 %v2904, 0.0
      %v2937 = vmax.f32 %v2905, 0.0
      %v2938 = vmax.f32 %v2906, 0.0
      %v2939 = vmax.f32 %v2907, 0.0
      %v2940 = vmax.f32 %v2908, 0.0
      %v2941 = vmax.f32 %v2909, 0.0
      %v2942 = vmax.f32 %v2910, 0.0
      %v2943 = vmax.f32 %v2911, 0.0
      %v2944 = vmax.f32 %v2912, 0.0
      %v2945 = vmax.f32 %v2913, 0.0
      %vm2946 = vcmask 523264
      %2947 = vst.msk [vmem:[%s170] sm:$0xff] %vm2946, %v2914
      %2948 = vst.msk [vmem:[%s170 + $0x8] sm:$0xff] %vm2946, %v2915
      %2949 = vst.msk [vmem:[%s170 + $0x10] sm:$0xff] %vm2946, %v2916
      %2950 = vst.msk [vmem:[%s170 + $0x18] sm:$0xff] %vm2946, %v2917
      %2951 = vst.msk [vmem:[%s170 + $0x20] sm:$0xff] %vm2946, %v2918
      %2952 = vst.msk [vmem:[%s170 + $0x28] sm:$0xff] %vm2946, %v2919
      %2953 = vst.msk [vmem:[%s170 + $0x30] sm:$0xff] %vm2946, %v2920
      %2954 = vst.msk [vmem:[%s170 + $0x38] sm:$0xff] %vm2946, %v2921
      %2955 = vst.msk [vmem:[%s170 + $0x40] sm:$0xff] %vm2946, %v2922
      %2956 = vst.msk [vmem:[%s170 + $0x48] sm:$0xff] %vm2946, %v2923
      %2957 = vst.msk [vmem:[%s170 + $0x50] sm:$0xff] %vm2946, %v2924
      %2958 = vst.msk [vmem:[%s170 + $0x58] sm:$0xff] %vm2946, %v2925
      %2959 = vst.msk [vmem:[%s170 + $0x60] sm:$0xff] %vm2946, %v2926
      %2960 = vst.msk [vmem:[%s170 + $0x68] sm:$0xff] %vm2946, %v2927
      %2961 = vst.msk [vmem:[%s170 + $0x70] sm:$0xff] %vm2946, %v2928
      %2962 = vst.msk [vmem:[%s170 + $0x78] sm:$0xff] %vm2946, %v2929
      %2963 = vst.msk [vmem:[%s170 + $0x80] sm:$0xff] %vm2946, %v2930
      %2964 = vst.msk [vmem:[%s170 + $0x88] sm:$0xff] %vm2946, %v2931
      %2965 = vst.msk [vmem:[%s170 + $0x90] sm:$0xff] %vm2946, %v2932
      %2966 = vst.msk [vmem:[%s170 + $0x98] sm:$0xff] %vm2946, %v2933
      %2967 = vst.msk [vmem:[%s170 + $0xa0] sm:$0xff] %vm2946, %v2934
      %2968 = vst.msk [vmem:[%s170 + $0xa8] sm:$0xff] %vm2946, %v2935
      %2969 = vst.msk [vmem:[%s170 + $0xb0] sm:$0xff] %vm2946, %v2936
      %2970 = vst.msk [vmem:[%s170 + $0xb8] sm:$0xff] %vm2946, %v2937
      %2971 = vst.msk [vmem:[%s170 + $0xc0] sm:$0xff] %vm2946, %v2938
      %2972 = vst.msk [vmem:[%s170 + $0xc8] sm:$0xff] %vm2946, %v2939
      %2973 = vst.msk [vmem:[%s170 + $0xd0] sm:$0xff] %vm2946, %v2940
      %2974 = vst.msk [vmem:[%s170 + $0xd8] sm:$0xff] %vm2946, %v2941
      %2975 = vst.msk [vmem:[%s170 + $0xe0] sm:$0xff] %vm2946, %v2942
      %2976 = vst.msk [vmem:[%s170 + $0xe8] sm:$0xff] %vm2946, %v2943
      %2977 = vst.msk [vmem:[%s170 + $0xf0] sm:$0xff] %vm2946, %v2944
      %2978 = vst.msk [vmem:[%s170 + $0xf8] sm:$0xff] %vm2946, %v2945
      %p2979 = scmp.lt.s32.totalorder %s14, 1
      %s2980 = scalar_select %p2979, %s14, 1
      %s2981 = smul.addr %s2980, 32
      %s2982 = smul.addr %s2981, 8
      %s2983 = scalar_lea.vmem %s3, %s2982
      // Predicated region
      $region33: #{_lambda_.4} parent=31 // pred_check
        %p2984 = pneg %p100
      $region34: #{_lambda_.4} parent=31 // pred_check_branch
        %2986 = sbr.rel (%p2984) target = $region36
      $region35: #{_lambda_.4} parent=31 // pred_region
        _
      $region36: #{_lambda_.4} parent=31 // pred_fallthru
        _
    $region32: #{_lambda_.4} parent=5 // pred_fallthru
      _
    %p2987 = scmp.le.s32.totalorder 2, %s9
    // Predicated region
    $region37: #{_lambda_.4} parent=5 // pred_check
      %p2988 = pneg %p2987
    $region38: #{_lambda_.4} parent=5 // pred_check_branch
      %2990 = sbr.rel (%p2988) target = $region40
    $region39: #{_lambda_.4} parent=5 // pred_region
      %s2991 = ssub.s32 %s9, 2
      // Predicated region
      $region41: #{_lambda_.4} parent=39 // pred_check
        %p2992 = pneg %p106
      $region42: #{_lambda_.4} parent=39 // pred_check_branch
        %2994 = sbr.rel (%p2992) target = $region44
      $region43: #{_lambda_.4} parent=39 // pred_region
        %p2995 = scmp.lt.s32.totalorder %s15, 1
        %s2996 = scalar_select %p2995, %s15, 1
        %s2997 = smul.addr %s2996, 32
        %s2998 = smul.addr %s2997, 8
        %s2999 = scalar_lea.vmem %s3, %s2998
      $region44: #{_lambda_.4} parent=39 // pred_fallthru
        _
    $region40: #{_lambda_.4} parent=5 // pred_fallthru
      _
  $region6: #{_lambda_.4} parent=0 // loop_footer
    %s13 = sadd.s32 1, %s9
  $region7: #{_lambda_.4} parent=0 // loop_footer_branch
    %8 = sbr.rel target = $region3
  $region8: #{_lambda_.4} parent=0 // loop_exit
    _

// kernel: _lambda_.5
$region0: #{_lambda_.5}
  #allocation0 [shape = 'u32[]', space=smem, size = 0x4, offset = 0x4, fixed_abs, tag = 'smem constant byte address 0x4 - core index']
  #allocation1 [shape = 'u32[144,128]{1,0:T(1,128)}', space=vmem, size = 0x12000, scoped, tag = 'internal scratch']
  #allocation2 [shape = 'f32[2,128]{1,0:T(2,128)}', space=vmem, size = 0x400, scoped, tag = 'scratch operand']
  #allocation3 [shape = 'f32[1,1]{1,0:T(1,128)S(1)}', space=vmem, size = 0x200, scoped, tag = 'scoped memory for _lambda_.5']
  %s0 = inlined_call_operand.vmem [shape: f32[2,16384], index: 0, kind: input, shape index: {}]
  %s1 = inlined_call_operand.vmem [shape: f32[16384,128], index: 1, kind: input, shape index: {}]
  %s2 = inlined_call_operand.vmem [shape: f32[1,128], index: 2, kind: input, shape index: {}]
  %s3 = inlined_call_operand.vmem [shape: f32[128,1], index: 3, kind: input, shape index: {}]
  %s4 = inlined_call_operand.<no memory space> [shape: f32[1,1], index: 4, kind: input, shape index: {}]
  %s5 = inlined_call_operand.vmem [shape: f32[2,1], index: 5, kind: output, shape index: {}]
  %s6 = sld [smem:[#allocation0]]
  $region61: #{_lambda_.5} parent=0
    _
  %s8 = ssub.s32 1, %s6
  %s9 = scalar_select 0, %s8, %s6
  %v10 = vstv %s4
  %11 = vst [vmem:[#allocation3] sm:$0x1] %v10
  loop: start=0, step=1, limit=10
  $region2: #{_lambda_.5} parent=0 // loop_pre_header
    _
  $region3: #{_lambda_.5} parent=0 // loop_header
    %s13 = sphi 0, %s17
    %p14 = scmp.ge.s32.totalorder %s13, 10
    %s23 = sphi 0, %s25
    %s26 = sphi 0, %s23
    %s27 = sphi 0, %s26
    %s43 = sphi 0, %s27
    %s49 = sphi 0, %s51
    %s52 = sphi 0, %s49
    %s53 = sphi 0, %s52
    %s69 = sphi 0, %s53
    %s73 = sphi 0, %s73
    %s75 = sphi 0, %s73
    %s76 = sphi 0, %s75
    %s90 = sphi 0, %s76
    %s94 = sphi 0, %s94
    %s96 = sphi 0, %s94
    %s97 = sphi 0, %s96
    %s111 = sphi 0, %s97
    %s115 = sphi 0, %s115
    %s117 = sphi 0, %s115
    %s118 = sphi 0, %s117
    %s132 = sphi 0, %s118
    %s136 = sphi 0, %s136
    %s138 = sphi 0, %s136
    %s139 = sphi 0, %s138
    %s153 = sphi 0, %s139
  $region4: #{_lambda_.5} parent=0 // loop_header_branch
    %16 = sbr.rel (%p14) target = $region8
  $region5: #{_lambda_.5} parent=0 // loop_body
    %s18 = ssub.s32 %s13, 1
    %s19 = ssub.s32 %s13, 2
    %s20 = sadd.s32 %s13, 1
    %s21 = ssub.s32 %s13, %s20
    %p22 = scmp.eq.s32.totalorder %s21, 0
    %s24 = sadd.s32 %s23, 1
    %s25 = scalar_select %p22, %s23, %s24
    %p28 = pneg %p22
    %p29 = scmp.eq.s32.totalorder %s13, 7
    %p30 = por %p28, %p29
    %p31 = scmp.ne.s32.totalorder %s23, %s26
    %p32 = scmp.eq.s32.totalorder %s13, 0
    %p33 = por %p31, %p32
    %p34 = scmp.ne.s32.totalorder %s23, %s26
    %p35 = scmp.eq.s32.totalorder %s18, 7
    %p36 = por %p34, %p35
    %p37 = scmp.ne.s32.totalorder %s26, %s27
    %p38 = scmp.eq.s32.totalorder %s18, 0
    %p39 = por %p37, %p38
    %p40 = scmp.ne.s32.totalorder %s26, %s27
    %p41 = scmp.eq.s32.totalorder %s19, 7
    %p42 = por %p40, %p41
    %p44 = scmp.ne.s32.totalorder %s27, %s43
    %p45 = scmp.eq.s32.totalorder %s19, 0
    %p46 = por %p44, %p45
    %s47 = ssub.s32 %s13, %s20
    %p48 = scmp.eq.s32.totalorder %s47, 0
    %s50 = sadd.s32 %s49, 1
    %s51 = scalar_select %p48, %s49, %s50
    %p54 = pneg %p48
    %p55 = scmp.eq.s32.totalorder %s13, 7
    %p56 = por %p54, %p55
    %p57 = scmp.ne.s32.totalorder %s49, %s52
    %p58 = scmp.eq.s32.totalorder %s13, 0
    %p59 = por %p57, %p58
    %p60 = scmp.ne.s32.totalorder %s49, %s52
    %p61 = scmp.eq.s32.totalorder %s18, 7
    %p62 = por %p60, %p61
    %p63 = scmp.ne.s32.totalorder %s52, %s53
    %p64 = scmp.eq.s32.totalorder %s18, 0
    %p65 = por %p63, %p64
    %p66 = scmp.ne.s32.totalorder %s52, %s53
    %p67 = scmp.eq.s32.totalorder %s19, 7
    %p68 = por %p66, %p67
    %p70 = scmp.ne.s32.totalorder %s53, %s69
    %p71 = scmp.eq.s32.totalorder %s19, 0
    %p72 = por %p70, %p71
    %s74 = sadd.s32 %s73, 1
    %p77 = scmp.eq.s32.totalorder %s13, 7
    %p78 = scmp.ne.s32.totalorder %s73, %s75
    %p79 = scmp.eq.s32.totalorder %s13, 0
    %p80 = por %p78, %p79
    %p81 = scmp.ne.s32.totalorder %s73, %s75
    %p82 = scmp.eq.s32.totalorder %s18, 7
    %p83 = por %p81, %p82
    %p84 = scmp.ne.s32.totalorder %s75, %s76
    %p85 = scmp.eq.s32.totalorder %s18, 0
    %p86 = por %p84, %p85
    %p87 = scmp.ne.s32.totalorder %s75, %s76
    %p88 = scmp.eq.s32.totalorder %s19, 7
    %p89 = por %p87, %p88
    %p91 = scmp.ne.s32.totalorder %s76, %s90
    %p92 = scmp.eq.s32.totalorder %s19, 0
    %p93 = por %p91, %p92
    %s95 = sadd.s32 %s94, 1
    %p98 = scmp.eq.s32.totalorder %s13, 7
    %p99 = scmp.ne.s32.totalorder %s94, %s96
    %p100 = scmp.eq.s32.totalorder %s13, 0
    %p101 = por %p99, %p100
    %p102 = scmp.ne.s32.totalorder %s94, %s96
    %p103 = scmp.eq.s32.totalorder %s18, 7
    %p104 = por %p102, %p103
    %p105 = scmp.ne.s32.totalorder %s96, %s97
    %p106 = scmp.eq.s32.totalorder %s18, 0
    %p107 = por %p105, %p106
    %p108 = scmp.ne.s32.totalorder %s96, %s97
    %p109 = scmp.eq.s32.totalorder %s19, 7
    %p110 = por %p108, %p109
    %p112 = scmp.ne.s32.totalorder %s97, %s111
    %p113 = scmp.eq.s32.totalorder %s19, 0
    %p114 = por %p112, %p113
    %s116 = sadd.s32 %s115, 1
    %p119 = scmp.eq.s32.totalorder %s13, 7
    %p120 = scmp.ne.s32.totalorder %s115, %s117
    %p121 = scmp.eq.s32.totalorder %s13, 0
    %p122 = por %p120, %p121
    %p123 = scmp.ne.s32.totalorder %s115, %s117
    %p124 = scmp.eq.s32.totalorder %s18, 7
    %p125 = por %p123, %p124
    %p126 = scmp.ne.s32.totalorder %s117, %s118
    %p127 = scmp.eq.s32.totalorder %s18, 0
    %p128 = por %p126, %p127
    %p129 = scmp.ne.s32.totalorder %s117, %s118
    %p130 = scmp.eq.s32.totalorder %s19, 7
    %p131 = por %p129, %p130
    %p133 = scmp.ne.s32.totalorder %s118, %s132
    %p134 = scmp.eq.s32.totalorder %s19, 0
    %p135 = por %p133, %p134
    %s137 = sadd.s32 %s136, 1
    %p140 = scmp.eq.s32.totalorder %s13, 7
    %p141 = scmp.ne.s32.totalorder %s136, %s138
    %p142 = scmp.eq.s32.totalorder %s13, 0
    %p143 = por %p141, %p142
    %p144 = scmp.ne.s32.totalorder %s136, %s138
    %p145 = scmp.eq.s32.totalorder %s18, 7
    %p146 = por %p144, %p145
    %p147 = scmp.ne.s32.totalorder %s138, %s139
    %p148 = scmp.eq.s32.totalorder %s18, 0
    %p149 = por %p147, %p148
    %p150 = scmp.ne.s32.totalorder %s138, %s139
    %p151 = scmp.eq.s32.totalorder %s19, 7
    %p152 = por %p150, %p151
    %p154 = scmp.ne.s32.totalorder %s139, %s153
    %p155 = scmp.eq.s32.totalorder %s19, 0
    %p156 = por %p154, %p155
    %p157 = scmp.le.s32.totalorder 1, %s13
    %p158 = scmp.lt.s32.totalorder %s13, 9
    %p159 = pnand %p157, %p158
    %p160 = pneg %p159
    // Predicated region
    $region9: #{_lambda_.5} parent=5 // pred_check
      _
    $region10: #{_lambda_.5} parent=5 // pred_check_branch
      %162 = sbr.rel (%p159) target = $region12
    $region11: #{_lambda_.5} parent=5 // pred_region
      %s163 = ssub.s32 %s13, 1
      // Predicated region
      $region13: #{_lambda_.5} parent=11 // pred_check
        %p164 = pneg %p86
      $region14: #{_lambda_.5} parent=11 // pred_check_branch
        %166 = sbr.rel (%p164) target = $region16
      $region15: #{_lambda_.5} parent=11 // pred_region
        _
      $region16: #{_lambda_.5} parent=11 // pred_fallthru
        _
      // Predicated region
      $region17: #{_lambda_.5} parent=11 // pred_check
        %p167 = pneg %p107
      $region18: #{_lambda_.5} parent=11 // pred_check_branch
        %169 = sbr.rel (%p167) target = $region20
      $region19: #{_lambda_.5} parent=11 // pred_region
        _
      $region20: #{_lambda_.5} parent=11 // pred_fallthru
        _
      // Predicated region
      $region21: #{_lambda_.5} parent=11 // pred_check
        %p170 = pneg %p128
      $region22: #{_lambda_.5} parent=11 // pred_check_branch
        %172 = sbr.rel (%p170) target = $region24
      $region23: #{_lambda_.5} parent=11 // pred_region
        _
      $region24: #{_lambda_.5} parent=11 // pred_fallthru
        _
    $region12: #{_lambda_.5} parent=5 // pred_fallthru
      _
    %p173 = scmp.lt.s32.totalorder %s13, 8
    // Predicated region
    $region25: #{_lambda_.5} parent=5 // pred_check
      %p174 = pneg %p173
    $region26: #{_lambda_.5} parent=5 // pred_check_branch
      %176 = sbr.rel (%p174) target = $region28
    $region27: #{_lambda_.5} parent=5 // pred_region
      // Predicated region
      $region29: #{_lambda_.5} parent=27 // pred_check
        %p177 = pneg %p33
      $region30: #{_lambda_.5} parent=27 // pred_check_branch
        %179 = sbr.rel (%p177) target = $region32
      $region31: #{_lambda_.5} parent=27 // pred_region
        %s180 = smul.u32 16, %s13
        %p181 = scmp.lt.s32.totalorder %s180, 127
        %s182 = scalar_select %p181, %s180, 127
        %s183 = smul.addr %s182, 2
        %s184 = scalar_lea.vmem %s0, %s183
        %s185 = smul.u32 16, %s13
      $region32: #{_lambda_.5} parent=27 // pred_fallthru
        _
      // Predicated region
      $region33: #{_lambda_.5} parent=27 // pred_check
        %p186 = pneg %p59
      $region34: #{_lambda_.5} parent=27 // pred_check_branch
        %188 = sbr.rel (%p186) target = $region36
      $region35: #{_lambda_.5} parent=27 // pred_region
        %s189 = smul.u32 256, %s13
        %p190 = scmp.lt.s32.totalorder %s189, 2047
        %s191 = scalar_select %p190, %s189, 2047
        %s192 = smul.addr %s191, 8
        %s193 = scalar_lea.vmem %s1, %s192
        %s194 = smul.u32 256, %s13
      $region36: #{_lambda_.5} parent=27 // pred_fallthru
        _
    $region28: #{_lambda_.5} parent=5 // pred_fallthru
      _
    %p195 = scmp.le.s32.totalorder 1, %s13
    %p196 = scmp.lt.s32.totalorder %s13, 9
    %p197 = pnand %p195, %p196
    %p198 = pneg %p197
    // Predicated region
    $region37: #{_lambda_.5} parent=5 // pred_check
      _
    $region38: #{_lambda_.5} parent=5 // pred_check_branch
      %200 = sbr.rel (%p197) target = $region40
    $region39: #{_lambda_.5} parent=5 // pred_region
      %s201 = ssub.s32 %s13, 1
      %s202 = smul.u32 16, %s18
      %p203 = scmp.lt.s32.totalorder %s202, 127
      %s204 = scalar_select %p203, %s202, 127
      %s205 = smul.addr %s204, 2
      %s206 = scalar_lea.vmem %s0, %s205
      %p207 = pneg %p39
      %p208 = pneg %p36
      %s209 = smul.u32 256, %s18
      %p210 = scmp.lt.s32.totalorder %s209, 2047
      %s211 = scalar_select %p210, %s209, 2047
      %s212 = smul.addr %s211, 8
      %s213 = scalar_lea.vmem %s1, %s212
      %p214 = pneg %p65
      %p215 = pneg %p62
      %p216 = pneg %p86
      %p217 = pneg %p83
      %p218 = pneg %p107
      %p219 = pneg %p104
      %p220 = pneg %p128
      %p221 = pneg %p125
      %p222 = pneg %p149
      %p223 = pneg %p146
      %s224 = smul.u32 16, %s18
      %p225 = scmp.lt.s32.totalorder %s224, 127
      %s226 = scalar_select %p225, %s224, 127
      %s227 = smul.addr %s226, 2
      %s228 = scalar_lea.vmem %s0, %s227
      %s229 = smul.u32 16, %s18
      %s230 = smul.u32 256, %s18
      %p231 = scmp.lt.s32.totalorder %s230, 2047
      %s232 = scalar_select %p231, %s230, 2047
      %s233 = smul.addr %s232, 8
      %s234 = scalar_lea.vmem %s1, %s233
      %s235 = smul.u32 256, %s18
      %p236 = scmp.eq.s32.totalorder %s18, 0
      // Predicated region
      $region41: #{_lambda_.5} parent=39 // pred_check
        %p237 = pneg %p236
      $region42: #{_lambda_.5} parent=39 // pred_check_branch
        %239 = sbr.rel (%p237) target = $region44
      $region43: #{_lambda_.5} parent=39 // pred_region
        %240 = vst [vmem:[#allocation2] sm:$0x3] 0.0
      $region44: #{_lambda_.5} parent=39 // pred_fallthru
        _
      %v241 = vld [vmem:[#allocation2] sm:$0x3]
      %v242 = vld [vmem:[%s228] sm:$0xff]
      %v243 = vld [vmem:[%s228 + $0x8] sm:$0xff]
      %v244 = vld [vmem:[%s228 + $0x10] sm:$0xff]
      %v245 = vld [vmem:[%s228 + $0x18] sm:$0xff]
      %v246 = vld [vmem:[%s234] sm:$0xff]
      %v247 = vld [vmem:[%s234 + $0x8] sm:$0xff]
      %v248 = vld [vmem:[%s234 + $0x10] sm:$0xff]
      %v249 = vld [vmem:[%s234 + $0x18] sm:$0xff]
      %v250 = vld [vmem:[%s234 + $0x20] sm:$0xff]
      %v251 = vld [vmem:[%s234 + $0x28] sm:$0xff]
      %v252 = vld [vmem:[%s234 + $0x30] sm:$0xff]
      %v253 = vld [vmem:[%s234 + $0x38] sm:$0xff]
      %v254 = vld [vmem:[%s234 + $0x40] sm:$0xff]
      %v255 = vld [vmem:[%s234 + $0x48] sm:$0xff]
      %v256 = vld [vmem:[%s234 + $0x50] sm:$0xff]
      %v257 = vld [vmem:[%s234 + $0x58] sm:$0xff]
      %v258 = vld [vmem:[%s234 + $0x60] sm:$0xff]
      %v259 = vld [vmem:[%s234 + $0x68] sm:$0xff]
      %v260 = vld [vmem:[%s234 + $0x70] sm:$0xff]
      %v261 = vld [vmem:[%s234 + $0x78] sm:$0xff]
      %v262 = vld [vmem:[%s234 + $0x80] sm:$0xff]
      %v263 = vld [vmem:[%s234 + $0x88] sm:$0xff]
      %v264 = vld [vmem:[%s234 + $0x90] sm:$0xff]
      %v265 = vld [vmem:[%s234 + $0x98] sm:$0xff]
      %v266 = vld [vmem:[%s234 + $0xa0] sm:$0xff]
      %v267 = vld [vmem:[%s234 + $0xa8] sm:$0xff]
      %v268 = vld [vmem:[%s234 + $0xb0] sm:$0xff]
      %v269 = vld [vmem:[%s234 + $0xb8] sm:$0xff]
      %v270 = vld [vmem:[%s234 + $0xc0] sm:$0xff]
      %v271 = vld [vmem:[%s234 + $0xc8] sm:$0xff]
      %v272 = vld [vmem:[%s234 + $0xd0] sm:$0xff]
      %v273 = vld [vmem:[%s234 + $0xd8] sm:$0xff]
      %v274 = vld [vmem:[%s234 + $0xe0] sm:$0xff]
      %v275 = vld [vmem:[%s234 + $0xe8] sm:$0xff]
      %v276 = vld [vmem:[%s234 + $0xf0] sm:$0xff]
      %v277 = vld [vmem:[%s234 + $0xf8] sm:$0xff]
      %v278 = vld [vmem:[%s234 + $0x100] sm:$0xff]
      %v279 = vld [vmem:[%s234 + $0x108] sm:$0xff]
      %v280 = vld [vmem:[%s234 + $0x110] sm:$0xff]
      %v281 = vld [vmem:[%s234 + $0x118] sm:$0xff]
      %v282 = vld [vmem:[%s234 + $0x120] sm:$0xff]
      %v283 = vld [vmem:[%s234 + $0x128] sm:$0xff]
      %v284 = vld [vmem:[%s234 + $0x130] sm:$0xff]
      %v285 = vld [vmem:[%s234 + $0x138] sm:$0xff]
      %v286 = vld [vmem:[%s234 + $0x140] sm:$0xff]
      %v287 = vld [vmem:[%s234 + $0x148] sm:$0xff]
      %v288 = vld [vmem:[%s234 + $0x150] sm:$0xff]
      %v289 = vld [vmem:[%s234 + $0x158] sm:$0xff]
      %v290 = vld [vmem:[%s234 + $0x160] sm:$0xff]
      %v291 = vld [vmem:[%s234 + $0x168] sm:$0xff]
      %v292 = vld [vmem:[%s234 + $0x170] sm:$0xff]
      %v293 = vld [vmem:[%s234 + $0x178] sm:$0xff]
      %v294 = vld [vmem:[%s234 + $0x180] sm:$0xff]
      %v295 = vld [vmem:[%s234 + $0x188] sm:$0xff]
      %v296 = vld [vmem:[%s234 + $0x190] sm:$0xff]
      %v297 = vld [vmem:[%s234 + $0x198] sm:$0xff]
      %v298 = vld [vmem:[%s234 + $0x1a0] sm:$0xff]
      %v299 = vld [vmem:[%s234 + $0x1a8] sm:$0xff]
      %v300 = vld [vmem:[%s234 + $0x1b0] sm:$0xff]
      %v301 = vld [vmem:[%s234 + $0x1b8] sm:$0xff]
      %v302 = vld [vmem:[%s234 + $0x1c0] sm:$0xff]
      %v303 = vld [vmem:[%s234 + $0x1c8] sm:$0xff]
      %v304 = vld [vmem:[%s234 + $0x1d0] sm:$0xff]
      %v305 = vld [vmem:[%s234 + $0x1d8] sm:$0xff]
      %v306 = vld [vmem:[%s234 + $0x1e0] sm:$0xff]
      %v307 = vld [vmem:[%s234 + $0x1e8] sm:$0xff]
      %v308 = vld [vmem:[%s234 + $0x1f0] sm:$0xff]
      %v309 = vld [vmem:[%s234 + $0x1f8] sm:$0xff]
      %v310 = vld [vmem:[%s234 + $0x200] sm:$0xff]
      %v311 = vld [vmem:[%s234 + $0x208] sm:$0xff]
      %v312 = vld [vmem:[%s234 + $0x210] sm:$0xff]
      %v313 = vld [vmem:[%s234 + $0x218] sm:$0xff]
      %v314 = vld [vmem:[%s234 + $0x220] sm:$0xff]
      %v315 = vld [vmem:[%s234 + $0x228] sm:$0xff]
      %v316 = vld [vmem:[%s234 + $0x230] sm:$0xff]
      %v317 = vld [vmem:[%s234 + $0x238] sm:$0xff]
      %v318 = vld [vmem:[%s234 + $0x240] sm:$0xff]
      %v319 = vld [vmem:[%s234 + $0x248] sm:$0xff]
      %v320 = vld [vmem:[%s234 + $0x250] sm:$0xff]
      %v321 = vld [vmem:[%s234 + $0x258] sm:$0xff]
      %v322 = vld [vmem:[%s234 + $0x260] sm:$0xff]
      %v323 = vld [vmem:[%s234 + $0x268] sm:$0xff]
      %v324 = vld [vmem:[%s234 + $0x270] sm:$0xff]
      %v325 = vld [vmem:[%s234 + $0x278] sm:$0xff]
      %v326 = vld [vmem:[%s234 + $0x280] sm:$0xff]
      %v327 = vld [vmem:[%s234 + $0x288] sm:$0xff]
      %v328 = vld [vmem:[%s234 + $0x290] sm:$0xff]
      %v329 = vld [vmem:[%s234 + $0x298] sm:$0xff]
      %v330 = vld [vmem:[%s234 + $0x2a0] sm:$0xff]
      %v331 = vld [vmem:[%s234 + $0x2a8] sm:$0xff]
      %v332 = vld [vmem:[%s234 + $0x2b0] sm:$0xff]
      %v333 = vld [vmem:[%s234 + $0x2b8] sm:$0xff]
      %v334 = vld [vmem:[%s234 + $0x2c0] sm:$0xff]
      %v335 = vld [vmem:[%s234 + $0x2c8] sm:$0xff]
      %v336 = vld [vmem:[%s234 + $0x2d0] sm:$0xff]
      %v337 = vld [vmem:[%s234 + $0x2d8] sm:$0xff]
      %v338 = vld [vmem:[%s234 + $0x2e0] sm:$0xff]
      %v339 = vld [vmem:[%s234 + $0x2e8] sm:$0xff]
      %v340 = vld [vmem:[%s234 + $0x2f0] sm:$0xff]
      %v341 = vld [vmem:[%s234 + $0x2f8] sm:$0xff]
      %v342 = vld [vmem:[%s234 + $0x300] sm:$0xff]
      %v343 = vld [vmem:[%s234 + $0x308] sm:$0xff]
      %v344 = vld [vmem:[%s234 + $0x310] sm:$0xff]
      %v345 = vld [vmem:[%s234 + $0x318] sm:$0xff]
      %v346 = vld [vmem:[%s234 + $0x320] sm:$0xff]
      %v347 = vld [vmem:[%s234 + $0x328] sm:$0xff]
      %v348 = vld [vmem:[%s234 + $0x330] sm:$0xff]
      %v349 = vld [vmem:[%s234 + $0x338] sm:$0xff]
      %v350 = vld [vmem:[%s234 + $0x340] sm:$0xff]
      %v351 = vld [vmem:[%s234 + $0x348] sm:$0xff]
      %v352 = vld [vmem:[%s234 + $0x350] sm:$0xff]
      %v353 = vld [vmem:[%s234 + $0x358] sm:$0xff]
      %v354 = vld [vmem:[%s234 + $0x360] sm:$0xff]
      %v355 = vld [vmem:[%s234 + $0x368] sm:$0xff]
      %v356 = vld [vmem:[%s234 + $0x370] sm:$0xff]
      %v357 = vld [vmem:[%s234 + $0x378] sm:$0xff]
      %v358 = vld [vmem:[%s234 + $0x380] sm:$0xff]
      %v359 = vld [vmem:[%s234 + $0x388] sm:$0xff]
      %v360 = vld [vmem:[%s234 + $0x390] sm:$0xff]
      %v361 = vld [vmem:[%s234 + $0x398] sm:$0xff]
      %v362 = vld [vmem:[%s234 + $0x3a0] sm:$0xff]
      %v363 = vld [vmem:[%s234 + $0x3a8] sm:$0xff]
      %v364 = vld [vmem:[%s234 + $0x3b0] sm:$0xff]
      %v365 = vld [vmem:[%s234 + $0x3b8] sm:$0xff]
      %v366 = vld [vmem:[%s234 + $0x3c0] sm:$0xff]
      %v367 = vld [vmem:[%s234 + $0x3c8] sm:$0xff]
      %v368 = vld [vmem:[%s234 + $0x3d0] sm:$0xff]
      %v369 = vld [vmem:[%s234 + $0x3d8] sm:$0xff]
      %v370 = vld [vmem:[%s234 + $0x3e0] sm:$0xff]
      %v371 = vld [vmem:[%s234 + $0x3e8] sm:$0xff]
      %v372 = vld [vmem:[%s234 + $0x3f0] sm:$0xff]
      %v373 = vld [vmem:[%s234 + $0x3f8] sm:$0xff]
      %v374 = vld [vmem:[%s234 + $0x400] sm:$0xff]
      %v375 = vld [vmem:[%s234 + $0x408] sm:$0xff]
      %v376 = vld [vmem:[%s234 + $0x410] sm:$0xff]
      %v377 = vld [vmem:[%s234 + $0x418] sm:$0xff]
      %v378 = vld [vmem:[%s234 + $0x420] sm:$0xff]
      %v379 = vld [vmem:[%s234 + $0x428] sm:$0xff]
      %v380 = vld [vmem:[%s234 + $0x430] sm:$0xff]
      %v381 = vld [vmem:[%s234 + $0x438] sm:$0xff]
      %v382 = vld [vmem:[%s234 + $0x440] sm:$0xff]
      %v383 = vld [vmem:[%s234 + $0x448] sm:$0xff]
      %v384 = vld [vmem:[%s234 + $0x450] sm:$0xff]
      %v385 = vld [vmem:[%s234 + $0x458] sm:$0xff]
      %v386 = vld [vmem:[%s234 + $0x460] sm:$0xff]
      %v387 = vld [vmem:[%s234 + $0x468] sm:$0xff]
      %v388 = vld [vmem:[%s234 + $0x470] sm:$0xff]
      %v389 = vld [vmem:[%s234 + $0x478] sm:$0xff]
      %v390 = vld [vmem:[%s234 + $0x480] sm:$0xff]
      %v391 = vld [vmem:[%s234 + $0x488] sm:$0xff]
      %v392 = vld [vmem:[%s234 + $0x490] sm:$0xff]
      %v393 = vld [vmem:[%s234 + $0x498] sm:$0xff]
      %v394 = vld [vmem:[%s234 + $0x4a0] sm:$0xff]
      %v395 = vld [vmem:[%s234 + $0x4a8] sm:$0xff]
      %v396 = vld [vmem:[%s234 + $0x4b0] sm:$0xff]
      %v397 = vld [vmem:[%s234 + $0x4b8] sm:$0xff]
      %v398 = vld [vmem:[%s234 + $0x4c0] sm:$0xff]
      %v399 = vld [vmem:[%s234 + $0x4c8] sm:$0xff]
      %v400 = vld [vmem:[%s234 + $0x4d0] sm:$0xff]
      %v401 = vld [vmem:[%s234 + $0x4d8] sm:$0xff]
      %v402 = vld [vmem:[%s234 + $0x4e0] sm:$0xff]
      %v403 = vld [vmem:[%s234 + $0x4e8] sm:$0xff]
      %v404 = vld [vmem:[%s234 + $0x4f0] sm:$0xff]
      %v405 = vld [vmem:[%s234 + $0x4f8] sm:$0xff]
      %v406 = vld [vmem:[%s234 + $0x500] sm:$0xff]
      %v407 = vld [vmem:[%s234 + $0x508] sm:$0xff]
      %v408 = vld [vmem:[%s234 + $0x510] sm:$0xff]
      %v409 = vld [vmem:[%s234 + $0x518] sm:$0xff]
      %v410 = vld [vmem:[%s234 + $0x520] sm:$0xff]
      %v411 = vld [vmem:[%s234 + $0x528] sm:$0xff]
      %v412 = vld [vmem:[%s234 + $0x530] sm:$0xff]
      %v413 = vld [vmem:[%s234 + $0x538] sm:$0xff]
      %v414 = vld [vmem:[%s234 + $0x540] sm:$0xff]
      %v415 = vld [vmem:[%s234 + $0x548] sm:$0xff]
      %v416 = vld [vmem:[%s234 + $0x550] sm:$0xff]
      %v417 = vld [vmem:[%s234 + $0x558] sm:$0xff]
      %v418 = vld [vmem:[%s234 + $0x560] sm:$0xff]
      %v419 = vld [vmem:[%s234 + $0x568] sm:$0xff]
      %v420 = vld [vmem:[%s234 + $0x570] sm:$0xff]
      %v421 = vld [vmem:[%s234 + $0x578] sm:$0xff]
      %v422 = vld [vmem:[%s234 + $0x580] sm:$0xff]
      %v423 = vld [vmem:[%s234 + $0x588] sm:$0xff]
      %v424 = vld [vmem:[%s234 + $0x590] sm:$0xff]
      %v425 = vld [vmem:[%s234 + $0x598] sm:$0xff]
      %v426 = vld [vmem:[%s234 + $0x5a0] sm:$0xff]
      %v427 = vld [vmem:[%s234 + $0x5a8] sm:$0xff]
      %v428 = vld [vmem:[%s234 + $0x5b0] sm:$0xff]
      %v429 = vld [vmem:[%s234 + $0x5b8] sm:$0xff]
      %v430 = vld [vmem:[%s234 + $0x5c0] sm:$0xff]
      %v431 = vld [vmem:[%s234 + $0x5c8] sm:$0xff]
      %v432 = vld [vmem:[%s234 + $0x5d0] sm:$0xff]
      %v433 = vld [vmem:[%s234 + $0x5d8] sm:$0xff]
      %v434 = vld [vmem:[%s234 + $0x5e0] sm:$0xff]
      %v435 = vld [vmem:[%s234 + $0x5e8] sm:$0xff]
      %v436 = vld [vmem:[%s234 + $0x5f0] sm:$0xff]
      %v437 = vld [vmem:[%s234 + $0x5f8] sm:$0xff]
      %v438 = vld [vmem:[%s234 + $0x600] sm:$0xff]
      %v439 = vld [vmem:[%s234 + $0x608] sm:$0xff]
      %v440 = vld [vmem:[%s234 + $0x610] sm:$0xff]
      %v441 = vld [vmem:[%s234 + $0x618] sm:$0xff]
      %v442 = vld [vmem:[%s234 + $0x620] sm:$0xff]
      %v443 = vld [vmem:[%s234 + $0x628] sm:$0xff]
      %v444 = vld [vmem:[%s234 + $0x630] sm:$0xff]
      %v445 = vld [vmem:[%s234 + $0x638] sm:$0xff]
      %v446 = vld [vmem:[%s234 + $0x640] sm:$0xff]
      %v447 = vld [vmem:[%s234 + $0x648] sm:$0xff]
      %v448 = vld [vmem:[%s234 + $0x650] sm:$0xff]
      %v449 = vld [vmem:[%s234 + $0x658] sm:$0xff]
      %v450 = vld [vmem:[%s234 + $0x660] sm:$0xff]
      %v451 = vld [vmem:[%s234 + $0x668] sm:$0xff]
      %v452 = vld [vmem:[%s234 + $0x670] sm:$0xff]
      %v453 = vld [vmem:[%s234 + $0x678] sm:$0xff]
      %v454 = vld [vmem:[%s234 + $0x680] sm:$0xff]
      %v455 = vld [vmem:[%s234 + $0x688] sm:$0xff]
      %v456 = vld [vmem:[%s234 + $0x690] sm:$0xff]
      %v457 = vld [vmem:[%s234 + $0x698] sm:$0xff]
      %v458 = vld [vmem:[%s234 + $0x6a0] sm:$0xff]
      %v459 = vld [vmem:[%s234 + $0x6a8] sm:$0xff]
      %v460 = vld [vmem:[%s234 + $0x6b0] sm:$0xff]
      %v461 = vld [vmem:[%s234 + $0x6b8] sm:$0xff]
      %v462 = vld [vmem:[%s234 + $0x6c0] sm:$0xff]
      %v463 = vld [vmem:[%s234 + $0x6c8] sm:$0xff]
      %v464 = vld [vmem:[%s234 + $0x6d0] sm:$0xff]
      %v465 = vld [vmem:[%s234 + $0x6d8] sm:$0xff]
      %v466 = vld [vmem:[%s234 + $0x6e0] sm:$0xff]
      %v467 = vld [vmem:[%s234 + $0x6e8] sm:$0xff]
      %v468 = vld [vmem:[%s234 + $0x6f0] sm:$0xff]
      %v469 = vld [vmem:[%s234 + $0x6f8] sm:$0xff]
      %v470 = vld [vmem:[%s234 + $0x700] sm:$0xff]
      %v471 = vld [vmem:[%s234 + $0x708] sm:$0xff]
      %v472 = vld [vmem:[%s234 + $0x710] sm:$0xff]
      %v473 = vld [vmem:[%s234 + $0x718] sm:$0xff]
      %v474 = vld [vmem:[%s234 + $0x720] sm:$0xff]
      %v475 = vld [vmem:[%s234 + $0x728] sm:$0xff]
      %v476 = vld [vmem:[%s234 + $0x730] sm:$0xff]
      %v477 = vld [vmem:[%s234 + $0x738] sm:$0xff]
      %v478 = vld [vmem:[%s234 + $0x740] sm:$0xff]
      %v479 = vld [vmem:[%s234 + $0x748] sm:$0xff]
      %v480 = vld [vmem:[%s234 + $0x750] sm:$0xff]
      %v481 = vld [vmem:[%s234 + $0x758] sm:$0xff]
      %v482 = vld [vmem:[%s234 + $0x760] sm:$0xff]
      %v483 = vld [vmem:[%s234 + $0x768] sm:$0xff]
      %v484 = vld [vmem:[%s234 + $0x770] sm:$0xff]
      %v485 = vld [vmem:[%s234 + $0x778] sm:$0xff]
      %v486 = vld [vmem:[%s234 + $0x780] sm:$0xff]
      %v487 = vld [vmem:[%s234 + $0x788] sm:$0xff]
      %v488 = vld [vmem:[%s234 + $0x790] sm:$0xff]
      %v489 = vld [vmem:[%s234 + $0x798] sm:$0xff]
      %v490 = vld [vmem:[%s234 + $0x7a0] sm:$0xff]
      %v491 = vld [vmem:[%s234 + $0x7a8] sm:$0xff]
      %v492 = vld [vmem:[%s234 + $0x7b0] sm:$0xff]
      %v493 = vld [vmem:[%s234 + $0x7b8] sm:$0xff]
      %v494 = vld [vmem:[%s234 + $0x7c0] sm:$0xff]
      %v495 = vld [vmem:[%s234 + $0x7c8] sm:$0xff]
      %v496 = vld [vmem:[%s234 + $0x7d0] sm:$0xff]
      %v497 = vld [vmem:[%s234 + $0x7d8] sm:$0xff]
      %v498 = vld [vmem:[%s234 + $0x7e0] sm:$0xff]
      %v499 = vld [vmem:[%s234 + $0x7e8] sm:$0xff]
      %v500 = vld [vmem:[%s234 + $0x7f0] sm:$0xff]
      %v501 = vld [vmem:[%s234 + $0x7f8] sm:$0xff]
      %v506 = vcombine.high %v242, %v242
      %v508 = vunpack.c.l.s4 1983009808
      %v509 = vunpack.c.0.s8 %v508
      %v510 = vlaneseq
      %v511 = vshrl.u32 %v510, 7
      %v512 = vsub.s32 %v509, %v511
      %v513 = vrot.slane %v242, %v512
      %v515 = vunpack.c.l.s4 1983009808
      %v516 = vunpack.c.0.s8 %v515
      %v517 = vlaneseq
      %v518 = vshrl.u32 %v517, 7
      %v519 = vsub.s32 %v516, %v518
      %v520 = vrot.slane %v506, %v519
      %v521 = vcombine.high %v513, %v513
      %v522 = vcombine.high %v520, %v520
      %v523 = vcombine.high %v243, %v243
      %v525 = vunpack.c.l.s4 1983009808
      %v526 = vunpack.c.0.s8 %v525
      %v527 = vlaneseq
      %v528 = vshrl.u32 %v527, 7
      %v529 = vsub.s32 %v526, %v528
      %v530 = vrot.slane %v243, %v529
      %v532 = vunpack.c.l.s4 1983009808
      %v533 = vunpack.c.0.s8 %v532
      %v534 = vlaneseq
      %v535 = vshrl.u32 %v534, 7
      %v536 = vsub.s32 %v533, %v535
      %v537 = vrot.slane %v523, %v536
      %v538 = vcombine.high %v530, %v530
      %v539 = vcombine.high %v537, %v537
      %v540 = vcombine.high %v244, %v244
      %v542 = vunpack.c.l.s4 1983009808
      %v543 = vunpack.c.0.s8 %v542
      %v544 = vlaneseq
      %v545 = vshrl.u32 %v544, 7
      %v546 = vsub.s32 %v543, %v545
      %v547 = vrot.slane %v244, %v546
      %v549 = vunpack.c.l.s4 1983009808
      %v550 = vunpack.c.0.s8 %v549
      %v551 = vlaneseq
      %v552 = vshrl.u32 %v551, 7
      %v553 = vsub.s32 %v550, %v552
      %v554 = vrot.slane %v540, %v553
      %v555 = vcombine.high %v547, %v547
      %v556 = vcombine.high %v554, %v554
      %v557 = vcombine.high %v245, %v245
      %v559 = vunpack.c.l.s4 1983009808
      %v560 = vunpack.c.0.s8 %v559
      %v561 = vlaneseq
      %v562 = vshrl.u32 %v561, 7
      %v563 = vsub.s32 %v560, %v562
      %v564 = vrot.slane %v245, %v563
      %v566 = vunpack.c.l.s4 1983009808
      %v567 = vunpack.c.0.s8 %v566
      %v568 = vlaneseq
      %v569 = vshrl.u32 %v568, 7
      %v570 = vsub.s32 %v567, %v569
      %v571 = vrot.slane %v557, %v570
      %v572 = vcombine.high %v564, %v564
      %v573 = vcombine.high %v571, %v571
      %590 = vmatprep.subr.mxu0 0.0
      %591 = vmatpush1.msra.mxu0 %v261
      %592 = vmatprep.subr.mxu0 0.0
      %593 = vmatpush1.msra.mxu0 %v260
      %594 = vmatprep.subr.mxu0 0.0
      %595 = vmatpush1.msra.mxu0 %v259
      %596 = vmatprep.subr.mxu0 0.0
      %597 = vmatpush1.msra.mxu0 %v258
      %598 = vmatprep.subr.mxu0 0.0
      %599 = vmatpush1.msra.mxu0 %v257
      %600 = vmatprep.subr.mxu0 0.0
      %601 = vmatpush1.msra.mxu0 %v256
      %602 = vmatprep.subr.mxu0 0.0
      %603 = vmatpush1.msra.mxu0 %v255
      %604 = vmatprep.subr.mxu0 0.0
      %605 = vmatpush1.msra.mxu0 %v254
      %606 = vmatprep.subr.mxu0 0.0
      %607 = vmatpush1.msra.mxu0 %v253
      %608 = vmatprep.subr.mxu0 0.0
      %609 = vmatpush1.msra.mxu0 %v252
      %610 = vmatprep.subr.mxu0 0.0
      %611 = vmatpush1.msra.mxu0 %v251
      %612 = vmatprep.subr.mxu0 0.0
      %613 = vmatpush1.msra.mxu0 %v250
      %614 = vmatprep.subr.mxu0 0.0
      %615 = vmatpush1.msra.mxu0 %v249
      %616 = vmatprep.subr.mxu0 0.0
      %617 = vmatpush1.msra.mxu0 %v248
      %618 = vmatprep.subr.mxu0 0.0
      %619 = vmatpush1.msra.mxu0 %v247
      %620 = vmatprep.subr.mxu0 0.0
      %621 = vmatpush1.msra.mxu0 %v246
      %622 = vmatprep.subr.mxu0 0.0
      %623 = vmatpush2.msra.mxu0 %v277
      %624 = vmatprep.subr.mxu0 0.0
      %625 = vmatpush2.msra.mxu0 %v276
      %626 = vmatprep.subr.mxu0 0.0
      %627 = vmatpush2.msra.mxu0 %v275
      %628 = vmatprep.subr.mxu0 0.0
      %629 = vmatpush2.msra.mxu0 %v274
      %630 = vmatprep.subr.mxu0 0.0
      %631 = vmatpush2.msra.mxu0 %v273
      %632 = vmatprep.subr.mxu0 0.0
      %633 = vmatpush2.msra.mxu0 %v272
      %634 = vmatprep.subr.mxu0 0.0
      %635 = vmatpush2.msra.mxu0 %v271
      %636 = vmatprep.subr.mxu0 0.0
      %637 = vmatpush2.msra.mxu0 %v270
      %638 = vmatprep.subr.mxu0 0.0
      %639 = vmatpush2.msra.mxu0 %v269
      %640 = vmatprep.subr.mxu0 0.0
      %641 = vmatpush2.msra.mxu0 %v268
      %642 = vmatprep.subr.mxu0 0.0
      %643 = vmatpush2.msra.mxu0 %v267
      %644 = vmatprep.subr.mxu0 0.0
      %645 = vmatpush2.msra.mxu0 %v266
      %646 = vmatprep.subr.mxu0 0.0
      %647 = vmatpush2.msra.mxu0 %v265
      %648 = vmatprep.subr.mxu0 0.0
      %649 = vmatpush2.msra.mxu0 %v264
      %650 = vmatprep.subr.mxu0 0.0
      %651 = vmatpush2.msra.mxu0 %v263
      %652 = vmatprep.subr.mxu0 0.0
      %653 = vmatpush2.msra.mxu0 %v262
      %654 = vmatprep.mubr.f32.mxu0 %v521
      %655 = vmatmul.mubr.f32.gmra.mxu0 %v513
      %v656 = vpop.f32.mrf.mxu0
      %v657 = vadd.f32 0.0, %v656
      %v658 = vpop.f32.mrf.mxu0
      %659 = vdwg.mxu0
      %660 = vmatprep.subr.mxu0 0.0
      %661 = vmatpush1.msra.mxu0 %v293
      %662 = vmatprep.subr.mxu0 0.0
      %663 = vmatpush1.msra.mxu0 %v292
      %664 = vmatprep.subr.mxu0 0.0
      %665 = vmatpush1.msra.mxu0 %v291
      %666 = vmatprep.subr.mxu0 0.0
      %667 = vmatpush1.msra.mxu0 %v290
      %668 = vmatprep.subr.mxu0 0.0
      %669 = vmatpush1.msra.mxu0 %v289
      %670 = vmatprep.subr.mxu0 0.0
      %671 = vmatpush1.msra.mxu0 %v288
      %672 = vmatprep.subr.mxu0 0.0
      %673 = vmatpush1.msra.mxu0 %v287
      %674 = vmatprep.subr.mxu0 0.0
      %675 = vmatpush1.msra.mxu0 %v286
      %676 = vmatprep.subr.mxu0 0.0
      %677 = vmatpush1.msra.mxu0 %v285
      %678 = vmatprep.subr.mxu0 0.0
      %679 = vmatpush1.msra.mxu0 %v284
      %680 = vmatprep.subr.mxu0 0.0
      %681 = vmatpush1.msra.mxu0 %v283
      %682 = vmatprep.subr.mxu0 0.0
      %683 = vmatpush1.msra.mxu0 %v282
      %684 = vmatprep.subr.mxu0 0.0
      %685 = vmatpush1.msra.mxu0 %v281
      %686 = vmatprep.subr.mxu0 0.0
      %687 = vmatpush1.msra.mxu0 %v280
      %688 = vmatprep.subr.mxu0 0.0
      %689 = vmatpush1.msra.mxu0 %v279
      %690 = vmatprep.subr.mxu0 0.0
      %691 = vmatpush1.msra.mxu0 %v278
      %692 = vmatprep.subr.mxu0 0.0
      %693 = vmatpush2.msra.mxu0 %v309
      %694 = vmatprep.subr.mxu0 0.0
      %695 = vmatpush2.msra.mxu0 %v308
      %696 = vmatprep.subr.mxu0 0.0
      %697 = vmatpush2.msra.mxu0 %v307
      %698 = vmatprep.subr.mxu0 0.0
      %699 = vmatpush2.msra.mxu0 %v306
      %700 = vmatprep.subr.mxu0 0.0
      %701 = vmatpush2.msra.mxu0 %v305
      %702 = vmatprep.subr.mxu0 0.0
      %703 = vmatpush2.msra.mxu0 %v304
      %704 = vmatprep.subr.mxu0 0.0
      %705 = vmatpush2.msra.mxu0 %v303
      %706 = vmatprep.subr.mxu0 0.0
      %707 = vmatpush2.msra.mxu0 %v302
      %708 = vmatprep.subr.mxu0 0.0
      %709 = vmatpush2.msra.mxu0 %v301
      %710 = vmatprep.subr.mxu0 0.0
      %711 = vmatpush2.msra.mxu0 %v300
      %712 = vmatprep.subr.mxu0 0.0
      %713 = vmatpush2.msra.mxu0 %v299
      %714 = vmatprep.subr.mxu0 0.0
      %715 = vmatpush2.msra.mxu0 %v298
      %716 = vmatprep.subr.mxu0 0.0
      %717 = vmatpush2.msra.mxu0 %v297
      %718 = vmatprep.subr.mxu0 0.0
      %719 = vmatpush2.msra.mxu0 %v296
      %720 = vmatprep.subr.mxu0 0.0
      %721 = vmatpush2.msra.mxu0 %v295
      %722 = vmatprep.subr.mxu0 0.0
      %723 = vmatpush2.msra.mxu0 %v294
      %724 = vmatprep.mubr.f32.mxu0 %v522
      %725 = vmatmul.mubr.f32.gmra.mxu0 %v520
      %v726 = vpop.f32.mrf.mxu0
      %v727 = vadd.f32 %v657, %v726
      %v728 = vpop.f32.mrf.mxu0
      %729 = vdwg.mxu0
      %730 = vmatprep.subr.mxu0 0.0
      %731 = vmatpush1.msra.mxu0 %v325
      %732 = vmatprep.subr.mxu0 0.0
      %733 = vmatpush1.msra.mxu0 %v324
      %734 = vmatprep.subr.mxu0 0.0
      %735 = vmatpush1.msra.mxu0 %v323
      %736 = vmatprep.subr.mxu0 0.0
      %737 = vmatpush1.msra.mxu0 %v322
      %738 = vmatprep.subr.mxu0 0.0
      %739 = vmatpush1.msra.mxu0 %v321
      %740 = vmatprep.subr.mxu0 0.0
      %741 = vmatpush1.msra.mxu0 %v320
      %742 = vmatprep.subr.mxu0 0.0
      %743 = vmatpush1.msra.mxu0 %v319
      %744 = vmatprep.subr.mxu0 0.0
      %745 = vmatpush1.msra.mxu0 %v318
      %746 = vmatprep.subr.mxu0 0.0
      %747 = vmatpush1.msra.mxu0 %v317
      %748 = vmatprep.subr.mxu0 0.0
      %749 = vmatpush1.msra.mxu0 %v316
      %750 = vmatprep.subr.mxu0 0.0
      %751 = vmatpush1.msra.mxu0 %v315
      %752 = vmatprep.subr.mxu0 0.0
      %753 = vmatpush1.msra.mxu0 %v314
      %754 = vmatprep.subr.mxu0 0.0
      %755 = vmatpush1.msra.mxu0 %v313
      %756 = vmatprep.subr.mxu0 0.0
      %757 = vmatpush1.msra.mxu0 %v312
      %758 = vmatprep.subr.mxu0 0.0
      %759 = vmatpush1.msra.mxu0 %v311
      %760 = vmatprep.subr.mxu0 0.0
      %761 = vmatpush1.msra.mxu0 %v310
      %762 = vmatprep.subr.mxu0 0.0
      %763 = vmatpush2.msra.mxu0 %v341
      %764 = vmatprep.subr.mxu0 0.0
      %765 = vmatpush2.msra.mxu0 %v340
      %766 = vmatprep.subr.mxu0 0.0
      %767 = vmatpush2.msra.mxu0 %v339
      %768 = vmatprep.subr.mxu0 0.0
      %769 = vmatpush2.msra.mxu0 %v338
      %770 = vmatprep.subr.mxu0 0.0
      %771 = vmatpush2.msra.mxu0 %v337
      %772 = vmatprep.subr.mxu0 0.0
      %773 = vmatpush2.msra.mxu0 %v336
      %774 = vmatprep.subr.mxu0 0.0
      %775 = vmatpush2.msra.mxu0 %v335
      %776 = vmatprep.subr.mxu0 0.0
      %777 = vmatpush2.msra.mxu0 %v334
      %778 = vmatprep.subr.mxu0 0.0
      %779 = vmatpush2.msra.mxu0 %v333
      %780 = vmatprep.subr.mxu0 0.0
      %781 = vmatpush2.msra.mxu0 %v332
      %782 = vmatprep.subr.mxu0 0.0
      %783 = vmatpush2.msra.mxu0 %v331
      %784 = vmatprep.subr.mxu0 0.0
      %785 = vmatpush2.msra.mxu0 %v330
      %786 = vmatprep.subr.mxu0 0.0
      %787 = vmatpush2.msra.mxu0 %v329
      %788 = vmatprep.subr.mxu0 0.0
      %789 = vmatpush2.msra.mxu0 %v328
      %790 = vmatprep.subr.mxu0 0.0
      %791 = vmatpush2.msra.mxu0 %v327
      %792 = vmatprep.subr.mxu0 0.0
      %793 = vmatpush2.msra.mxu0 %v326
      %794 = vmatprep.mubr.f32.mxu0 %v538
      %795 = vmatmul.mubr.f32.gmra.mxu0 %v530
      %v796 = vpop.f32.mrf.mxu0
      %v797 = vadd.f32 %v727, %v796
      %v798 = vpop.f32.mrf.mxu0
      %799 = vdwg.mxu0
      %800 = vmatprep.subr.mxu0 0.0
      %801 = vmatpush1.msra.mxu0 %v357
      %802 = vmatprep.subr.mxu0 0.0
      %803 = vmatpush1.msra.mxu0 %v356
      %804 = vmatprep.subr.mxu0 0.0
      %805 = vmatpush1.msra.mxu0 %v355
      %806 = vmatprep.subr.mxu0 0.0
      %807 = vmatpush1.msra.mxu0 %v354
      %808 = vmatprep.subr.mxu0 0.0
      %809 = vmatpush1.msra.mxu0 %v353
      %810 = vmatprep.subr.mxu0 0.0
      %811 = vmatpush1.msra.mxu0 %v352
      %812 = vmatprep.subr.mxu0 0.0
      %813 = vmatpush1.msra.mxu0 %v351
      %814 = vmatprep.subr.mxu0 0.0
      %815 = vmatpush1.msra.mxu0 %v350
      %816 = vmatprep.subr.mxu0 0.0
      %817 = vmatpush1.msra.mxu0 %v349
      %818 = vmatprep.subr.mxu0 0.0
      %819 = vmatpush1.msra.mxu0 %v348
      %820 = vmatprep.subr.mxu0 0.0
      %821 = vmatpush1.msra.mxu0 %v347
      %822 = vmatprep.subr.mxu0 0.0
      %823 = vmatpush1.msra.mxu0 %v346
      %824 = vmatprep.subr.mxu0 0.0
      %825 = vmatpush1.msra.mxu0 %v345
      %826 = vmatprep.subr.mxu0 0.0
      %827 = vmatpush1.msra.mxu0 %v344
      %828 = vmatprep.subr.mxu0 0.0
      %829 = vmatpush1.msra.mxu0 %v343
      %830 = vmatprep.subr.mxu0 0.0
      %831 = vmatpush1.msra.mxu0 %v342
      %832 = vmatprep.subr.mxu0 0.0
      %833 = vmatpush2.msra.mxu0 %v373
      %834 = vmatprep.subr.mxu0 0.0
      %835 = vmatpush2.msra.mxu0 %v372
      %836 = vmatprep.subr.mxu0 0.0
      %837 = vmatpush2.msra.mxu0 %v371
      %838 = vmatprep.subr.mxu0 0.0
      %839 = vmatpush2.msra.mxu0 %v370
      %840 = vmatprep.subr.mxu0 0.0
      %841 = vmatpush2.msra.mxu0 %v369
      %842 = vmatprep.subr.mxu0 0.0
      %843 = vmatpush2.msra.mxu0 %v368
      %844 = vmatprep.subr.mxu0 0.0
      %845 = vmatpush2.msra.mxu0 %v367
      %846 = vmatprep.subr.mxu0 0.0
      %847 = vmatpush2.msra.mxu0 %v366
      %848 = vmatprep.subr.mxu0 0.0
      %849 = vmatpush2.msra.mxu0 %v365
      %850 = vmatprep.subr.mxu0 0.0
      %851 = vmatpush2.msra.mxu0 %v364
      %852 = vmatprep.subr.mxu0 0.0
      %853 = vmatpush2.msra.mxu0 %v363
      %854 = vmatprep.subr.mxu0 0.0
      %855 = vmatpush2.msra.mxu0 %v362
      %856 = vmatprep.subr.mxu0 0.0
      %857 = vmatpush2.msra.mxu0 %v361
      %858 = vmatprep.subr.mxu0 0.0
      %859 = vmatpush2.msra.mxu0 %v360
      %860 = vmatprep.subr.mxu0 0.0
      %861 = vmatpush2.msra.mxu0 %v359
      %862 = vmatprep.subr.mxu0 0.0
      %863 = vmatpush2.msra.mxu0 %v358
      %864 = vmatprep.mubr.f32.mxu0 %v539
      %865 = vmatmul.mubr.f32.gmra.mxu0 %v537
      %v866 = vpop.f32.mrf.mxu0
      %v867 = vadd.f32 %v797, %v866
      %v868 = vpop.f32.mrf.mxu0
      %869 = vdwg.mxu0
      %870 = vmatprep.subr.mxu0 0.0
      %871 = vmatpush1.msra.mxu0 %v389
      %872 = vmatprep.subr.mxu0 0.0
      %873 = vmatpush1.msra.mxu0 %v388
      %874 = vmatprep.subr.mxu0 0.0
      %875 = vmatpush1.msra.mxu0 %v387
      %876 = vmatprep.subr.mxu0 0.0
      %877 = vmatpush1.msra.mxu0 %v386
      %878 = vmatprep.subr.mxu0 0.0
      %879 = vmatpush1.msra.mxu0 %v385
      %880 = vmatprep.subr.mxu0 0.0
      %881 = vmatpush1.msra.mxu0 %v384
      %882 = vmatprep.subr.mxu0 0.0
      %883 = vmatpush1.msra.mxu0 %v383
      %884 = vmatprep.subr.mxu0 0.0
      %885 = vmatpush1.msra.mxu0 %v382
      %886 = vmatprep.subr.mxu0 0.0
      %887 = vmatpush1.msra.mxu0 %v381
      %888 = vmatprep.subr.mxu0 0.0
      %889 = vmatpush1.msra.mxu0 %v380
      %890 = vmatprep.subr.mxu0 0.0
      %891 = vmatpush1.msra.mxu0 %v379
      %892 = vmatprep.subr.mxu0 0.0
      %893 = vmatpush1.msra.mxu0 %v378
      %894 = vmatprep.subr.mxu0 0.0
      %895 = vmatpush1.msra.mxu0 %v377
      %896 = vmatprep.subr.mxu0 0.0
      %897 = vmatpush1.msra.mxu0 %v376
      %898 = vmatprep.subr.mxu0 0.0
      %899 = vmatpush1.msra.mxu0 %v375
      %900 = vmatprep.subr.mxu0 0.0
      %901 = vmatpush1.msra.mxu0 %v374
      %902 = vmatprep.subr.mxu0 0.0
      %903 = vmatpush2.msra.mxu0 %v405
      %904 = vmatprep.subr.mxu0 0.0
      %905 = vmatpush2.msra.mxu0 %v404
      %906 = vmatprep.subr.mxu0 0.0
      %907 = vmatpush2.msra.mxu0 %v403
      %908 = vmatprep.subr.mxu0 0.0
      %909 = vmatpush2.msra.mxu0 %v402
      %910 = vmatprep.subr.mxu0 0.0
      %911 = vmatpush2.msra.mxu0 %v401
      %912 = vmatprep.subr.mxu0 0.0
      %913 = vmatpush2.msra.mxu0 %v400
      %914 = vmatprep.subr.mxu0 0.0
      %915 = vmatpush2.msra.mxu0 %v399
      %916 = vmatprep.subr.mxu0 0.0
      %917 = vmatpush2.msra.mxu0 %v398
      %918 = vmatprep.subr.mxu0 0.0
      %919 = vmatpush2.msra.mxu0 %v397
      %920 = vmatprep.subr.mxu0 0.0
      %921 = vmatpush2.msra.mxu0 %v396
      %922 = vmatprep.subr.mxu0 0.0
      %923 = vmatpush2.msra.mxu0 %v395
      %924 = vmatprep.subr.mxu0 0.0
      %925 = vmatpush2.msra.mxu0 %v394
      %926 = vmatprep.subr.mxu0 0.0
      %927 = vmatpush2.msra.mxu0 %v393
      %928 = vmatprep.subr.mxu0 0.0
      %929 = vmatpush2.msra.mxu0 %v392
      %930 = vmatprep.subr.mxu0 0.0
      %931 = vmatpush2.msra.mxu0 %v391
      %932 = vmatprep.subr.mxu0 0.0
      %933 = vmatpush2.msra.mxu0 %v390
      %934 = vmatprep.mubr.f32.mxu0 %v555
      %935 = vmatmul.mubr.f32.gmra.mxu0 %v547
      %v936 = vpop.f32.mrf.mxu0
      %v937 = vadd.f32 %v867, %v936
      %v938 = vpop.f32.mrf.mxu0
      %939 = vdwg.mxu0
      %940 = vmatprep.subr.mxu0 0.0
      %941 = vmatpush1.msra.mxu0 %v421
      %942 = vmatprep.subr.mxu0 0.0
      %943 = vmatpush1.msra.mxu0 %v420
      %944 = vmatprep.subr.mxu0 0.0
      %945 = vmatpush1.msra.mxu0 %v419
      %946 = vmatprep.subr.mxu0 0.0
      %947 = vmatpush1.msra.mxu0 %v418
      %948 = vmatprep.subr.mxu0 0.0
      %949 = vmatpush1.msra.mxu0 %v417
      %950 = vmatprep.subr.mxu0 0.0
      %951 = vmatpush1.msra.mxu0 %v416
      %952 = vmatprep.subr.mxu0 0.0
      %953 = vmatpush1.msra.mxu0 %v415
      %954 = vmatprep.subr.mxu0 0.0
      %955 = vmatpush1.msra.mxu0 %v414
      %956 = vmatprep.subr.mxu0 0.0
      %957 = vmatpush1.msra.mxu0 %v413
      %958 = vmatprep.subr.mxu0 0.0
      %959 = vmatpush1.msra.mxu0 %v412
      %960 = vmatprep.subr.mxu0 0.0
      %961 = vmatpush1.msra.mxu0 %v411
      %962 = vmatprep.subr.mxu0 0.0
      %963 = vmatpush1.msra.mxu0 %v410
      %964 = vmatprep.subr.mxu0 0.0
      %965 = vmatpush1.msra.mxu0 %v409
      %966 = vmatprep.subr.mxu0 0.0
      %967 = vmatpush1.msra.mxu0 %v408
      %968 = vmatprep.subr.mxu0 0.0
      %969 = vmatpush1.msra.mxu0 %v407
      %970 = vmatprep.subr.mxu0 0.0
      %971 = vmatpush1.msra.mxu0 %v406
      %972 = vmatprep.subr.mxu0 0.0
      %973 = vmatpush2.msra.mxu0 %v437
      %974 = vmatprep.subr.mxu0 0.0
      %975 = vmatpush2.msra.mxu0 %v436
      %976 = vmatprep.subr.mxu0 0.0
      %977 = vmatpush2.msra.mxu0 %v435
      %978 = vmatprep.subr.mxu0 0.0
      %979 = vmatpush2.msra.mxu0 %v434
      %980 = vmatprep.subr.mxu0 0.0
      %981 = vmatpush2.msra.mxu0 %v433
      %982 = vmatprep.subr.mxu0 0.0
      %983 = vmatpush2.msra.mxu0 %v432
      %984 = vmatprep.subr.mxu0 0.0
      %985 = vmatpush2.msra.mxu0 %v431
      %986 = vmatprep.subr.mxu0 0.0
      %987 = vmatpush2.msra.mxu0 %v430
      %988 = vmatprep.subr.mxu0 0.0
      %989 = vmatpush2.msra.mxu0 %v429
      %990 = vmatprep.subr.mxu0 0.0
      %991 = vmatpush2.msra.mxu0 %v428
      %992 = vmatprep.subr.mxu0 0.0
      %993 = vmatpush2.msra.mxu0 %v427
      %994 = vmatprep.subr.mxu0 0.0
      %995 = vmatpush2.msra.mxu0 %v426
      %996 = vmatprep.subr.mxu0 0.0
      %997 = vmatpush2.msra.mxu0 %v425
      %998 = vmatprep.subr.mxu0 0.0
      %999 = vmatpush2.msra.mxu0 %v424
      %1000 = vmatprep.subr.mxu0 0.0
      %1001 = vmatpush2.msra.mxu0 %v423
      %1002 = vmatprep.subr.mxu0 0.0
      %1003 = vmatpush2.msra.mxu0 %v422
      %1004 = vmatprep.mubr.f32.mxu0 %v556
      %1005 = vmatmul.mubr.f32.gmra.mxu0 %v554
      %v1006 = vpop.f32.mrf.mxu0
      %v1007 = vadd.f32 %v937, %v1006
      %v1008 = vpop.f32.mrf.mxu0
      %1009 = vdwg.mxu0
      %1010 = vmatprep.subr.mxu0 0.0
      %1011 = vmatpush1.msra.mxu0 %v453
      %1012 = vmatprep.subr.mxu0 0.0
      %1013 = vmatpush1.msra.mxu0 %v452
      %1014 = vmatprep.subr.mxu0 0.0
      %1015 = vmatpush1.msra.mxu0 %v451
      %1016 = vmatprep.subr.mxu0 0.0
      %1017 = vmatpush1.msra.mxu0 %v450
      %1018 = vmatprep.subr.mxu0 0.0
      %1019 = vmatpush1.msra.mxu0 %v449
      %1020 = vmatprep.subr.mxu0 0.0
      %1021 = vmatpush1.msra.mxu0 %v448
      %1022 = vmatprep.subr.mxu0 0.0
      %1023 = vmatpush1.msra.mxu0 %v447
      %1024 = vmatprep.subr.mxu0 0.0
      %1025 = vmatpush1.msra.mxu0 %v446
      %1026 = vmatprep.subr.mxu0 0.0
      %1027 = vmatpush1.msra.mxu0 %v445
      %1028 = vmatprep.subr.mxu0 0.0
      %1029 = vmatpush1.msra.mxu0 %v444
      %1030 = vmatprep.subr.mxu0 0.0
      %1031 = vmatpush1.msra.mxu0 %v443
      %1032 = vmatprep.subr.mxu0 0.0
      %1033 = vmatpush1.msra.mxu0 %v442
      %1034 = vmatprep.subr.mxu0 0.0
      %1035 = vmatpush1.msra.mxu0 %v441
      %1036 = vmatprep.subr.mxu0 0.0
      %1037 = vmatpush1.msra.mxu0 %v440
      %1038 = vmatprep.subr.mxu0 0.0
      %1039 = vmatpush1.msra.mxu0 %v439
      %1040 = vmatprep.subr.mxu0 0.0
      %1041 = vmatpush1.msra.mxu0 %v438
      %1042 = vmatprep.subr.mxu0 0.0
      %1043 = vmatpush2.msra.mxu0 %v469
      %1044 = vmatprep.subr.mxu0 0.0
      %1045 = vmatpush2.msra.mxu0 %v468
      %1046 = vmatprep.subr.mxu0 0.0
      %1047 = vmatpush2.msra.mxu0 %v467
      %1048 = vmatprep.subr.mxu0 0.0
      %1049 = vmatpush2.msra.mxu0 %v466
      %1050 = vmatprep.subr.mxu0 0.0
      %1051 = vmatpush2.msra.mxu0 %v465
      %1052 = vmatprep.subr.mxu0 0.0
      %1053 = vmatpush2.msra.mxu0 %v464
      %1054 = vmatprep.subr.mxu0 0.0
      %1055 = vmatpush2.msra.mxu0 %v463
      %1056 = vmatprep.subr.mxu0 0.0
      %1057 = vmatpush2.msra.mxu0 %v462
      %1058 = vmatprep.subr.mxu0 0.0
      %1059 = vmatpush2.msra.mxu0 %v461
      %1060 = vmatprep.subr.mxu0 0.0
      %1061 = vmatpush2.msra.mxu0 %v460
      %1062 = vmatprep.subr.mxu0 0.0
      %1063 = vmatpush2.msra.mxu0 %v459
      %1064 = vmatprep.subr.mxu0 0.0
      %1065 = vmatpush2.msra.mxu0 %v458
      %1066 = vmatprep.subr.mxu0 0.0
      %1067 = vmatpush2.msra.mxu0 %v457
      %1068 = vmatprep.subr.mxu0 0.0
      %1069 = vmatpush2.msra.mxu0 %v456
      %1070 = vmatprep.subr.mxu0 0.0
      %1071 = vmatpush2.msra.mxu0 %v455
      %1072 = vmatprep.subr.mxu0 0.0
      %1073 = vmatpush2.msra.mxu0 %v454
      %1074 = vmatprep.mubr.f32.mxu0 %v572
      %1075 = vmatmul.mubr.f32.gmra.mxu0 %v564
      %v1076 = vpop.f32.mrf.mxu0
      %v1077 = vadd.f32 %v1007, %v1076
      %v1078 = vpop.f32.mrf.mxu0
      %1079 = vdwg.mxu0
      %1080 = vmatprep.subr.mxu0 0.0
      %1081 = vmatpush1.msra.mxu0 %v485
      %1082 = vmatprep.subr.mxu0 0.0
      %1083 = vmatpush1.msra.mxu0 %v484
      %1084 = vmatprep.subr.mxu0 0.0
      %1085 = vmatpush1.msra.mxu0 %v483
      %1086 = vmatprep.subr.mxu0 0.0
      %1087 = vmatpush1.msra.mxu0 %v482
      %1088 = vmatprep.subr.mxu0 0.0
      %1089 = vmatpush1.msra.mxu0 %v481
      %1090 = vmatprep.subr.mxu0 0.0
      %1091 = vmatpush1.msra.mxu0 %v480
      %1092 = vmatprep.subr.mxu0 0.0
      %1093 = vmatpush1.msra.mxu0 %v479
      %1094 = vmatprep.subr.mxu0 0.0
      %1095 = vmatpush1.msra.mxu0 %v478
      %1096 = vmatprep.subr.mxu0 0.0
      %1097 = vmatpush1.msra.mxu0 %v477
      %1098 = vmatprep.subr.mxu0 0.0
      %1099 = vmatpush1.msra.mxu0 %v476
      %1100 = vmatprep.subr.mxu0 0.0
      %1101 = vmatpush1.msra.mxu0 %v475
      %1102 = vmatprep.subr.mxu0 0.0
      %1103 = vmatpush1.msra.mxu0 %v474
      %1104 = vmatprep.subr.mxu0 0.0
      %1105 = vmatpush1.msra.mxu0 %v473
      %1106 = vmatprep.subr.mxu0 0.0
      %1107 = vmatpush1.msra.mxu0 %v472
      %1108 = vmatprep.subr.mxu0 0.0
      %1109 = vmatpush1.msra.mxu0 %v471
      %1110 = vmatprep.subr.mxu0 0.0
      %1111 = vmatpush1.msra.mxu0 %v470
      %1112 = vmatprep.subr.mxu0 0.0
      %1113 = vmatpush2.msra.mxu0 %v501
      %1114 = vmatprep.subr.mxu0 0.0
      %1115 = vmatpush2.msra.mxu0 %v500
      %1116 = vmatprep.subr.mxu0 0.0
      %1117 = vmatpush2.msra.mxu0 %v499
      %1118 = vmatprep.subr.mxu0 0.0
      %1119 = vmatpush2.msra.mxu0 %v498
      %1120 = vmatprep.subr.mxu0 0.0
      %1121 = vmatpush2.msra.mxu0 %v497
      %1122 = vmatprep.subr.mxu0 0.0
      %1123 = vmatpush2.msra.mxu0 %v496
      %1124 = vmatprep.subr.mxu0 0.0
      %1125 = vmatpush2.msra.mxu0 %v495
      %1126 = vmatprep.subr.mxu0 0.0
      %1127 = vmatpush2.msra.mxu0 %v494
      %1128 = vmatprep.subr.mxu0 0.0
      %1129 = vmatpush2.msra.mxu0 %v493
      %1130 = vmatprep.subr.mxu0 0.0
      %1131 = vmatpush2.msra.mxu0 %v492
      %1132 = vmatprep.subr.mxu0 0.0
      %1133 = vmatpush2.msra.mxu0 %v491
      %1134 = vmatprep.subr.mxu0 0.0
      %1135 = vmatpush2.msra.mxu0 %v490
      %1136 = vmatprep.subr.mxu0 0.0
      %1137 = vmatpush2.msra.mxu0 %v489
      %1138 = vmatprep.subr.mxu0 0.0
      %1139 = vmatpush2.msra.mxu0 %v488
      %1140 = vmatprep.subr.mxu0 0.0
      %1141 = vmatpush2.msra.mxu0 %v487
      %1142 = vmatprep.subr.mxu0 0.0
      %1143 = vmatpush2.msra.mxu0 %v486
      %1144 = vmatprep.mubr.f32.mxu0 %v573
      %1145 = vmatmul.mubr.f32.gmra.mxu0 %v571
      %v1146 = vpop.f32.mrf.mxu0
      %v1147 = vadd.f32 %v1077, %v1146
      %v1148 = vpop.f32.mrf.mxu0
      %1149 = vdwg.mxu0
      %v1150 = vadd.f32 %v241, %v1147
      %1151 = vst [vmem:[#allocation2] sm:$0x3] %v1150
      %p1152 = scmp.eq.s32.totalorder %s18, 7
      // Predicated region
      $region45: #{_lambda_.5} parent=39 // pred_check
        %p1153 = pneg %p1152
      $region46: #{_lambda_.5} parent=39 // pred_check_branch
        %1155 = sbr.rel (%p1153) target = $region48
      $region47: #{_lambda_.5} parent=39 // pred_region
        %v1156 = vld [vmem:[#allocation2] sm:$0x3]
        %v1157 = vld [vmem:[%s2] sm:$0x1]
        %v1159 = vlaneseq
        %v1160 = vshrl.u32 %v1159, 7
        %v1161 = vsub.s32 0, %v1160
        %v1162 = vrot.slane %v1157, %v1161
        %v1164 = vadd.f32 %v1156, %v1162
        %v1165 = vmax.f32 %v1164, 0.0
        %v1166 = vld [vmem:[%s3] sm:$0xff]
        %v1167 = vld [vmem:[%s3 + $0x8] sm:$0xff]
        %v1168 = vld [vmem:[%s3 + $0x10] sm:$0xff]
        %v1169 = vld [vmem:[%s3 + $0x18] sm:$0xff]
        %v1170 = vld [vmem:[%s3 + $0x20] sm:$0xff]
        %v1171 = vld [vmem:[%s3 + $0x28] sm:$0xff]
        %v1172 = vld [vmem:[%s3 + $0x30] sm:$0xff]
        %v1173 = vld [vmem:[%s3 + $0x38] sm:$0xff]
        %v1174 = vld [vmem:[%s3 + $0x40] sm:$0xff]
        %v1175 = vld [vmem:[%s3 + $0x48] sm:$0xff]
        %v1176 = vld [vmem:[%s3 + $0x50] sm:$0xff]
        %v1177 = vld [vmem:[%s3 + $0x58] sm:$0xff]
        %v1178 = vld [vmem:[%s3 + $0x60] sm:$0xff]
        %v1179 = vld [vmem:[%s3 + $0x68] sm:$0xff]
        %v1180 = vld [vmem:[%s3 + $0x70] sm:$0xff]
        %v1181 = vld [vmem:[%s3 + $0x78] sm:$0xff]
        %v1182 = vld [vmem:[#allocation3] sm:$0x1]
        %v1184 = vlaneseq
        %v1185 = vshrl.u32 %v1184, 7
        %v1186 = vsub.s32 0, %v1185
        %v1187 = vrot.slane %v1182, %v1186
        %1189 = vmatprep.subr.mxu0 0.0
        %1190 = vmatpush1.msra.mxu0 %v1181
        %1191 = vmatprep.subr.mxu0 0.0
        %1192 = vmatpush1.msra.mxu0 %v1180
        %1193 = vmatprep.subr.mxu0 0.0
        %1194 = vmatpush1.msra.mxu0 %v1179
        %1195 = vmatprep.subr.mxu0 0.0
        %1196 = vmatpush1.msra.mxu0 %v1178
        %1197 = vmatprep.subr.mxu0 0.0
        %1198 = vmatpush1.msra.mxu0 %v1177
        %1199 = vmatprep.subr.mxu0 0.0
        %1200 = vmatpush1.msra.mxu0 %v1176
        %1201 = vmatprep.subr.mxu0 0.0
        %1202 = vmatpush1.msra.mxu0 %v1175
        %1203 = vmatprep.subr.mxu0 0.0
        %1204 = vmatpush1.msra.mxu0 %v1174
        %1205 = vmatprep.subr.mxu0 0.0
        %1206 = vmatpush1.msra.mxu0 %v1173
        %1207 = vmatprep.subr.mxu0 0.0
        %1208 = vmatpush1.msra.mxu0 %v1172
        %1209 = vmatprep.subr.mxu0 0.0
        %1210 = vmatpush1.msra.mxu0 %v1171
        %1211 = vmatprep.subr.mxu0 0.0
        %1212 = vmatpush1.msra.mxu0 %v1170
        %1213 = vmatprep.subr.mxu0 0.0
        %1214 = vmatpush1.msra.mxu0 %v1169
        %1215 = vmatprep.subr.mxu0 0.0
        %1216 = vmatpush1.msra.mxu0 %v1168
        %1217 = vmatprep.subr.mxu0 0.0
        %1218 = vmatpush1.msra.mxu0 %v1167
        %1219 = vmatprep.subr.mxu0 0.0
        %1220 = vmatpush1.msra.mxu0 %v1166
        %1221 = vmatprep.subr.mxu0 0.0
        %1222 = vmatpush2.msra.mxu0 0.0
        %1223 = vmatprep.subr.mxu0 0.0
        %1224 = vmatpush2.msra.mxu0 0.0
        %1225 = vmatprep.subr.mxu0 0.0
        %1226 = vmatpush2.msra.mxu0 0.0
        %1227 = vmatprep.subr.mxu0 0.0
        %1228 = vmatpush2.msra.mxu0 0.0
        %1229 = vmatprep.subr.mxu0 0.0
        %1230 = vmatpush2.msra.mxu0 0.0
        %1231 = vmatprep.subr.mxu0 0.0
        %1232 = vmatpush2.msra.mxu0 0.0
        %1233 = vmatprep.subr.mxu0 0.0
        %1234 = vmatpush2.msra.mxu0 0.0
        %1235 = vmatprep.subr.mxu0 0.0
        %1236 = vmatpush2.msra.mxu0 0.0
        %1237 = vmatprep.subr.mxu0 0.0
        %1238 = vmatpush2.msra.mxu0 0.0
        %1239 = vmatprep.subr.mxu0 0.0
        %1240 = vmatpush2.msra.mxu0 0.0
        %1241 = vmatprep.subr.mxu0 0.0
        %1242 = vmatpush2.msra.mxu0 0.0
        %1243 = vmatprep.subr.mxu0 0.0
        %1244 = vmatpush2.msra.mxu0 0.0
        %1245 = vmatprep.subr.mxu0 0.0
        %1246 = vmatpush2.msra.mxu0 0.0
        %1247 = vmatprep.subr.mxu0 0.0
        %1248 = vmatpush2.msra.mxu0 0.0
        %1249 = vmatprep.subr.mxu0 0.0
        %1250 = vmatpush2.msra.mxu0 0.0
        %1251 = vmatprep.subr.mxu0 0.0
        %1252 = vmatpush2.msra.mxu0 0.0
        %1253 = vmatprep.mubr.f32.mxu0 0.0
        %1254 = vmatmul.mubr.f32.gmra.mxu0 %v1165
        %v1255 = vpop.f32.mrf.mxu0
        %v1256 = vadd.f32 %v1187, %v1255
        %v1257 = vpop.f32.mrf.mxu0
        %1258 = vdwg.mxu0
        %v1259 = vmul.f32 %v1256, 0.5
        %v1260 = vtanh.pop %v1259
        %v1261 = vadd.f32 %v1260, 1.0
        %v1262 = vmul.f32 %v1261, 0.5
        %vm1263 = vcmask 1024
        %1264 = vst.msk [vmem:[%s5] sm:$0x3] %vm1263, %v1262
      $region48: #{_lambda_.5} parent=39 // pred_fallthru
        _
      // Predicated region
      $region49: #{_lambda_.5} parent=39 // pred_check
        %p1265 = pneg %p146
      $region50: #{_lambda_.5} parent=39 // pred_check_branch
        %1267 = sbr.rel (%p1265) target = $region52
      $region51: #{_lambda_.5} parent=39 // pred_region
        _
      $region52: #{_lambda_.5} parent=39 // pred_fallthru
        _
      // Predicated region
      $region53: #{_lambda_.5} parent=39 // pred_check
        %p1268 = pneg %p146
      $region54: #{_lambda_.5} parent=39 // pred_check_branch
        %1270 = sbr.rel (%p1268) target = $region56
      $region55: #{_lambda_.5} parent=39 // pred_region
        _
      $region56: #{_lambda_.5} parent=39 // pred_fallthru
        _
    $region40: #{_lambda_.5} parent=5 // pred_fallthru
      _
    %p1271 = scmp.le.s32.totalorder 2, %s13
    // Predicated region
    $region57: #{_lambda_.5} parent=5 // pred_check
      %p1272 = pneg %p1271
    $region58: #{_lambda_.5} parent=5 // pred_check_branch
      %1274 = sbr.rel (%p1272) target = $region60
    $region59: #{_lambda_.5} parent=5 // pred_region
      %s1275 = ssub.s32 %s13, 2
    $region60: #{_lambda_.5} parent=5 // pred_fallthru
      _
  $region6: #{_lambda_.5} parent=0 // loop_footer
    %s17 = sadd.s32 1, %s13
  $region7: #{_lambda_.5} parent=0 // loop_footer_branch
    %12 = sbr.rel target = $region3
  $region8: #{_lambda_.5} parent=0 // loop_exit
    _

</llo_original>
